<compile_context>
chip_gen: v7x
topology: tpu7x:2x2x1
jax: 0.10.0
libtpu: 0.0.40
codegen_flags: <defaults>
</compile_context>

<pallas_src>
import math

import numpy as np
import jax
import jax.numpy as jnp
from jax.experimental import pallas as pl
from jax.experimental.pallas import tpu as pltpu


# ----------------------------------------------------------------------------
# Quantum-circuit fixed-unitary construction (parameter setup, plain numpy glue)
# ----------------------------------------------------------------------------
def _rx(t):
    c, s = math.cos(t / 2.0), math.sin(t / 2.0)
    return np.array([[c, -1j * s], [-1j * s, c]], dtype=np.complex128)


def _ry(t):
    c, s = math.cos(t / 2.0), math.sin(t / 2.0)
    return np.array([[c, -s], [s, c]], dtype=np.complex128)


def _rz(t):
    return np.array([[np.exp(-1j * t / 2.0), 0.0], [0.0, np.exp(1j * t / 2.0)]],
                    dtype=np.complex128)


def _single_qubit_op(gate, wire, n):
    # PennyLane default.qubit convention: wire 0 is the most-significant bit.
    full = np.eye(1, dtype=np.complex128)
    for w in range(n):
        full = np.kron(full, gate if w == wire else np.eye(2, dtype=np.complex128))
    return full


def _cnot_adjacent(control, n):
    cnot = np.array([[1, 0, 0, 0],
                     [0, 1, 0, 0],
                     [0, 0, 0, 1],
                     [0, 0, 1, 0]], dtype=np.complex128)
    full = np.eye(1, dtype=np.complex128)
    w = 0
    while w < n:
        if w == control:
            full = np.kron(full, cnot)
            w += 2
        else:
            full = np.kron(full, np.eye(2, dtype=np.complex128))
            w += 1
    return full


def build_circuit_unitary(rx_p, ry_p, rz_p, ent_p, n_qubits, n_layers):
    U = np.eye(2 ** n_qubits, dtype=np.complex128)
    for layer in range(n_layers):
        for i in range(n_qubits):
            U = _single_qubit_op(_rx(rx_p[layer, i]), i, n_qubits) @ U
            U = _single_qubit_op(_ry(ry_p[layer, i]), i, n_qubits) @ U
            U = _single_qubit_op(_rz(rz_p[layer, i]), i, n_qubits) @ U
        for i in range(n_qubits - 1):
            U = _cnot_adjacent(i, n_qubits) @ U
            U = _single_qubit_op(_rz(ent_p[layer, i]), i + 1, n_qubits) @ U
    return U


# ----------------------------------------------------------------------------
# Pallas kernel: one layer, full sequence in a single invocation.
# Grid = batch shards only ("parallel"); time loop is inside the body.
# ----------------------------------------------------------------------------
def _qodelstm_layer_kernel(x_ref, wx_ref, wh_ref, b_ref,
                           wqi_ref, bqi_ref, ucat_ref, m_ref, bqo_ref, sel_ref,
                           out_ref, hn_ref, cn_ref, prex_ref):
    f32 = jnp.float32
    B = x_ref.shape[0]
    H = hn_ref.shape[1]
    T = out_ref.shape[1] // H
    I = x_ref.shape[1] // T
    GH = 4 * H
    nq = sel_ref.shape[0] // 2
    dim = sel_ref.shape[1] // nq

    # Hoist all weight loads out of the time loop (grid-invariant tiles).
    wx = wx_ref[...]          # (I, 4H)   f32 or bf16 (MXU operand)
    wh = wh_ref[...]          # (H, 4H)   f32 or bf16 (MXU operand)
    bias = b_ref[...]         # (1, 4H)   f32
    wqi = wqi_ref[...]        # (H, nq)   f32  (quantum path stays f32)
    bqi = bqi_ref[...]        # (1, nq)   f32
    ucat = ucat_ref[...]      # (dim, 2*dim) = [Re(U)^T | Im(U)^T], f32
    m = m_ref[...]            # (dim, H)  = zmat @ Wq_out (fused readout), f32
    bqo = bqo_ref[...]        # (1, H)    f32
    sel = sel_ref[...]        # (2*nq, nq*dim) 0/1 selection matrix, f32
    mxu = wx.dtype            # gate-matmul operand dtype; accumulation is f32

    # ---- Phase 1: data-independent input projection, hoisted out of the
    # recurrence.  T back-to-back MXU matmuls, results parked in VMEM scratch.
    for t in range(T):
        x_t = x_ref[:, t * I:(t + 1) * I].astype(mxu)           # (B, I)
        prex_ref[:, t * GH:(t + 1) * GH] = (
            jnp.dot(x_t, wx, preferred_element_type=f32) + bias)

    h = jnp.zeros((B, H), f32)
    c = jnp.zeros((B, H), f32)

    # ---- Phase 2: serial recurrence.  Static unroll (T is small here).
    # TODO(synk): for large T switch to lax.fori_loop(unroll=2-4) with
    # pl.ds(pl.multiple_of(t*GH, GH), GH) indexing to bound vreg live ranges.
    # TODO(synk): advanced — hold wh in the MXU across steps via
    # pltpu.matmul_push_rhs / matmul_acc_lhs / matmul_pop.
    for t in range(T):
        pre = (prex_ref[:, t * GH:(t + 1) * GH]
               + jnp.dot(h.astype(mxu), wh, preferred_element_type=f32))  # (B,4H)

        # full-width sigmoid: one EUP push covers the i and f gates
        sig = jax.nn.sigmoid(pre)
        i_g = sig[:, 0:H]
        f_g = sig[:, H:2 * H]
        g_g = jnp.tanh(pre[:, 2 * H:3 * H])
        o_pre = pre[:, 3 * H:4 * H]

        c = f_g * c + i_g * g_g

        # --- quantum circuit: RY-encoded product state, fixed unitary, <Z_i> ---
        q_in = jnp.dot(c, wqi, preferred_element_type=f32) + bqi   # (B, nq) f32
        theta = jnp.tanh(q_in) * jnp.pi
        ch = jnp.cos(0.5 * theta)
        sh = jnp.sin(0.5 * theta)

        # vectorized qubit product: one selection matmul replaces nq lane-splats
        chsh = jnp.concatenate([ch, sh], axis=-1)                  # (B, 2*nq)
        factors = jnp.dot(chsh, sel, preferred_element_type=f32)   # (B, nq*dim)
        groups = [factors[:, q * dim:(q + 1) * dim] for q in range(nq)]
        while len(groups) > 1:                                     # tree of VPU mults
            nxt = [a * b for a, b in zip(groups[0::2], groups[1::2])]
            if len(groups) % 2:
                nxt.append(groups[-1])
            groups = nxt
        psi0 = groups[0]                                           # (B, dim)

        # one MXU pass for [re | im], then fused readout probs @ (zmat @ Wq_out)
        reim = jnp.dot(psi0, ucat, preferred_element_type=f32)     # (B, 2*dim)
        re = reim[:, :dim]
        im = reim[:, dim:]
        probs = re * re + im * im                                  # (B, dim)
        qc = jnp.dot(probs, m, preferred_element_type=f32) + bqo   # (B, H)

        o_g = jax.nn.sigmoid(o_pre + qc)
        h = o_g * jnp.tanh(c)

        # store into the lane-dense (B, T*H) VMEM output slab; one HBM DMA at end
        out_ref[:, t * H:(t + 1) * H] = h

    hn_ref[...] = h
    cn_ref[...] = c


def run_layer(x2d, p, seq_len, hidden_size, *, mxu_dtype=jnp.float32, batch_shard=8):
    """Run one QuantumODELSTM layer. x2d: (B_pad, T*I) f32, lane-dense sequence slab."""
    Bp, TI = x2d.shape
    T = seq_len
    I = TI // T
    H = hidden_size
    GH = 4 * H
    nq = p['bq_in'].shape[1]
    dim = p['ucat'].shape[0]
    assert Bp % batch_shard == 0
    nshards = Bp // batch_shard

    # bf16 MXU operands only pay off once the MXU is throughput-bound; below
    # 128 rows the recurrence is latency-bound and converts just add work.
    if batch_shard < 128:
        mxu_dtype = jnp.float32
    wx = p['wx'].astype(mxu_dtype)
    wh = p['wh'].astype(mxu_dtype)

    # Explicit VMEM budget (double-buffered slabs + pre_x scratch + weights),
    # with headroom; capped at v7x's 64 MiB physical VMEM.
    slab_elems = batch_shard * (T * I + T * H + 2 * H)
    weight_elems = (I * GH + H * GH + GH + H * nq + nq
                    + dim * 2 * dim + dim * H + H + 2 * nq * nq * dim)
    est_bytes = 4 * (2 * slab_elems + batch_shard * T * GH + weight_elems)
    vmem_limit = int(min(max(2 * est_bytes + (2 << 20), 8 << 20), 64 << 20))

    kernel = pl.pallas_call(
        _qodelstm_layer_kernel,
        out_shape=(jax.ShapeDtypeStruct((Bp, T * H), jnp.float32),
                   jax.ShapeDtypeStruct((Bp, H), jnp.float32),
                   jax.ShapeDtypeStruct((Bp, H), jnp.float32)),
        grid_spec=pltpu.PrefetchScalarGridSpec(
            num_scalar_prefetch=0,
            grid=(nshards,),                                    # batch shards only
            in_specs=[
                pl.BlockSpec((batch_shard, TI), lambda b: (b, 0)),   # x slab
                pl.BlockSpec((I, GH), lambda b: (0, 0)),             # fused Wx (i|f|g|o)
                pl.BlockSpec((H, GH), lambda b: (0, 0)),             # fused Wh (i|f|g|o)
                pl.BlockSpec((1, GH), lambda b: (0, 0)),             # fused gate bias
                pl.BlockSpec((H, nq), lambda b: (0, 0)),             # q_projection_in W
                pl.BlockSpec((1, nq), lambda b: (0, 0)),             # q_projection_in b
                pl.BlockSpec((dim, 2 * dim), lambda b: (0, 0)),      # [Re(U)^T | Im(U)^T]
                pl.BlockSpec((dim, H), lambda b: (0, 0)),            # zmat @ Wq_out
                pl.BlockSpec((1, H), lambda b: (0, 0)),              # q_projection_out b
                pl.BlockSpec((2 * nq, nq * dim), lambda b: (0, 0)),  # qubit selection S
            ],
            out_specs=(
                pl.BlockSpec((batch_shard, T * H), lambda b: (b, 0)),  # output slab
                pl.BlockSpec((batch_shard, H), lambda b: (b, 0)),      # h_n
                pl.BlockSpec((batch_shard, H), lambda b: (b, 0)),      # c_n
            ),
            scratch_shapes=[pltpu.VMEM((batch_shard, T * GH), jnp.float32)],  # pre_x
        ),
        compiler_params=pltpu.CompilerParams(
            dimension_semantics=("parallel",),                  # shards → TCs on v7x
            vmem_limit_bytes=vmem_limit),
    )
    return kernel(x2d, wx, wh, p['b'], p['wq_in'], p['bq_in'],
                  p['ucat'], p['m'], p['bq_out'], p['sel'])


def quantum_ode_lstm_forward(x_bti, layer_params, hidden_size, *,
                             mxu_dtype=jnp.float32, batch_shard=None):
    """Equivalent of QuantumODELSTM.forward with batch_first=True, zero init state."""
    x = jnp.asarray(x_bti, jnp.float32)
    if x.ndim == 2:
        x = x[:, None, :]                        # matches the module's unsqueeze(1)
    B, T, I = x.shape

    if batch_shard is None:
        # Fill MXU rows (up to 128); keep small shards only for genuinely tiny B.
        batch_shard = int(min(max(8, -(-B // 8) * 8), 128))
    assert batch_shard % 8 == 0, "batch_shard must be a multiple of the f32 sublane tile"
    Bp = -(-B // batch_shard) * batch_shard      # pad batch to shard size
    # TODO(synk): on v7x, when B is large enough, pick batch_shard <= Bp // 2 so
    # the "parallel" grid has >= 2 shards and both TensorCores are used.

    x2d = x.reshape(B, T * I)                    # free reshape, no transpose
    if Bp != B:
        x2d = jnp.pad(x2d, ((0, Bp - B), (0, 0)))

    # TODO(synk): for num_layers > 1 the inter-layer (Bp, T*H) slab round-trips HBM;
    # a fused multi-layer kernel (or bf16 inter-layer slab) would avoid that.
    cur = x2d
    h_list, c_list = [], []
    for p in layer_params:
        out2d, h_n, c_n = run_layer(cur, p, T, hidden_size,
                                    mxu_dtype=mxu_dtype, batch_shard=batch_shard)
        h_list.append(h_n[:B])
        c_list.append(c_n[:B])
        cur = out2d
    output = cur.reshape(Bp, T, hidden_size)[:B]                 # (B, T, H), batch-first
    return output, (jnp.stack(h_list, 0), jnp.stack(c_list, 0))


# ----------------------------------------------------------------------------
# Deterministic parameter initialization (same shapes as the PyTorch module)
# ----------------------------------------------------------------------------
def init_layer_params(key, input_size, hidden_size, n_qubits, n_qlayers=2):
    keys = jax.random.split(key, 11)

    def lin(k, fan_in, fan_out):
        bound = 1.0 / math.sqrt(fan_in)
        kw, kb = jax.random.split(k)
        w = jax.random.uniform(kw, (fan_in, fan_out), jnp.float32, -bound, bound)
        b = jax.random.uniform(kb, (1, fan_out), jnp.float32, -bound, bound)
        return w, b

    # gate linears W_i*, W_h* fused along lanes in order [i, f, g, o]
    wx_parts, wh_parts, b_parts = [], [], []
    for idx in range(4):
        wxi, bxi = lin(keys[idx], input_size, hidden_size)
        whi, bhi = lin(keys[4 + idx], hidden_size, hidden_size)
        wx_parts.append(wxi)
        wh_parts.append(whi)
        b_parts.append(bxi + bhi)
    wx = jnp.concatenate(wx_parts, axis=1)
    wh = jnp.concatenate(wh_parts, axis=1)
    b = jnp.concatenate(b_parts, axis=1)

    wq_in, bq_in = lin(keys[8], hidden_size, n_qubits)
    wq_out, bq_out = lin(keys[9], n_qubits, hidden_size)

    # quantum circuit trainable params (randn, as in the PyTorch module)
    qk = jax.random.split(keys[10], 4)
    rx_p = np.asarray(jax.random.normal(qk[0], (n_qlayers, n_qubits)), np.float64)
    ry_p = np.asarray(jax.random.normal(qk[1], (n_qlayers, n_qubits)), np.float64)
    rz_p = np.asarray(jax.random.normal(qk[2], (n_qlayers, n_qubits)), np.float64)
    ent_p = np.asarray(jax.random.normal(qk[3], (n_qlayers, n_qubits - 1)), np.float64)

    U = build_circuit_unitary(rx_p, ry_p, rz_p, ent_p, n_qubits, n_qlayers)
    urT = jnp.asarray(np.real(U).T, jnp.float32)
    uiT = jnp.asarray(np.imag(U).T, jnp.float32)

    dim = 2 ** n_qubits
    s = np.arange(dim)
    bits_np = np.stack([(s >> (n_qubits - 1 - i)) & 1 for i in range(n_qubits)],
                       axis=0).astype(np.float32)               # (nq, dim)
    zmat = jnp.asarray((1.0 - 2.0 * bits_np).T, jnp.float32)    # (dim, nq) PauliZ eigvals
    bits = jnp.asarray(bits_np, jnp.float32)

    # fused quantum readout (kills 4-lane intermediates in-kernel)
    ucat = jnp.concatenate([urT, uiT], axis=1)                  # (dim, 2*dim)
    m = jnp.dot(zmat, wq_out)                                   # (dim, H) = zmat @ Wq_out

    # qubit-product selection matrix: factors = [ch | sh] @ sel gives, for each
    # qubit q and basis state s, ch_q if bit(q,s)==0 else sh_q, laid out in
    # nq contiguous dim-wide lane groups.
    sel_np = np.zeros((2 * n_qubits, n_qubits * dim), np.float32)
    for q in range(n_qubits):
        sel_np[q, q * dim:(q + 1) * dim] = 1.0 - bits_np[q]
        sel_np[n_qubits + q, q * dim:(q + 1) * dim] = bits_np[q]
    sel = jnp.asarray(sel_np, jnp.float32)

    return dict(wx=wx, wh=wh, b=b, wq_in=wq_in, bq_in=bq_in,
                wq_out=wq_out, bq_out=bq_out,
                urT=urT, uiT=uiT, zmat=zmat, bits=bits,
                ucat=ucat, m=m, sel=sel)


# ----------------------------------------------------------------------------
# Pure-JAX reference (same math, unfused readout, no Pallas) for correctness
# ----------------------------------------------------------------------------
def reference_forward(x_bti, layer_params, hidden_size):
    B, T, _ = x_bti.shape
    x = x_bti.astype(jnp.float32)
    h = [jnp.zeros((B, hidden_size), jnp.float32) for _ in layer_params]
    c = [jnp.zeros((B, hidden_size), jnp.float32) for _ in layer_params]
    outs = []
    for t in range(T):
        x_t = x[:, t, :]
        for li, p in enumerate(layer_params):
            H = hidden_size
            pre = x_t @ p['wx'] + h[li] @ p['wh'] + p['b']
            i_g = jax.nn.sigmoid(pre[:, :H])
            f_g = jax.nn.sigmoid(pre[:, H:2 * H])
            g_g = jnp.tanh(pre[:, 2 * H:3 * H])
            o_pre = pre[:, 3 * H:]
            c_next = f_g * c[li] + i_g * g_g
            q_in = c_next @ p['wq_in'] + p['bq_in']
            theta = jnp.tanh(q_in) * jnp.pi
            ch, sh = jnp.cos(theta / 2), jnp.sin(theta / 2)
            bits = p['bits']
            psi0 = jnp.ones((B, bits.shape[1]), jnp.float32)
            for q in range(bits.shape[0]):
                bq = bits[q:q + 1]
                psi0 = psi0 * (ch[:, q:q + 1] * (1 - bq) + sh[:, q:q + 1] * bq)
            re = psi0 @ p['urT']
            im = psi0 @ p['uiT']
            q_out = (re * re + im * im) @ p['zmat']
            qc = q_out @ p['wq_out'] + p['bq_out']
            o_g = jax.nn.sigmoid(o_pre + qc)
            h[li] = o_g * jnp.tanh(c_next)
            c[li] = c_next
            x_t = h[li]
        outs.append(h[-1][:, None, :])
    return jnp.concatenate(outs, axis=1), (jnp.stack(h, 0), jnp.stack(c, 0))


if __name__ == "__main__":
    B, T, I, H, NQ = 2, 8, 16, 32, 4
    key = jax.random.PRNGKey(0)
    k_x, k_p, k_x2 = jax.random.split(key, 3)

    x = jax.random.normal(k_x, (B, T, I), jnp.float32)
    layer_params = [init_layer_params(k_p, I, H, NQ)]   # num_layers = 1

    # Small batch (exercises padding to the 8-row shard) vs pure-JAX reference.
    out, (h_n, c_n) = quantum_ode_lstm_forward(x, layer_params, H)
    jax.block_until_ready((out, h_n, c_n))

    with jax.default_matmul_precision("highest"):
        ref_out, (ref_h, ref_c) = reference_forward(x, layer_params, H)
    np.testing.assert_allclose(np.asarray(out), np.asarray(ref_out), rtol=2e-3, atol=2e-3)
    np.testing.assert_allclose(np.asarray(h_n), np.asarray(ref_h), rtol=2e-3, atol=2e-3)
    np.testing.assert_allclose(np.asarray(c_n), np.asarray(ref_c), rtol=2e-3, atol=2e-3)

    # Larger batch: exercises the auto 128-row shards and the multi-shard
    # "parallel" grid path (nshards = 2).
    B2 = 256
    x2 = jax.random.normal(k_x2, (B2, T, I), jnp.float32)
    out2, (h2, c2) = quantum_ode_lstm_forward(x2, layer_params, H)
    jax.block_until_ready((out2, h2, c2))
    with jax.default_matmul_precision("highest"):
        ref_out2, (ref_h2, ref_c2) = reference_forward(x2, layer_params, H)
    np.testing.assert_allclose(np.asarray(out2), np.asarray(ref_out2), rtol=5e-3, atol=5e-3)
    np.testing.assert_allclose(np.asarray(h2), np.asarray(ref_h2), rtol=5e-3, atol=5e-3)
    np.testing.assert_allclose(np.asarray(c2), np.asarray(ref_c2), rtol=5e-3, atol=5e-3)

    print("KERNEL_OK")
</pallas_src>

<mosaic_0001>
module attributes {stable_mosaic.version = 11 : i64} {
  func.func @_qodelstm_layer_kernel(%arg0: i32, %arg1: memref<8x128xf32, #tpu.memory_space<vmem>>, %arg2: memref<16x128xf32, #tpu.memory_space<vmem>>, %arg3: memref<32x128xf32, #tpu.memory_space<vmem>>, %arg4: memref<1x128xf32, #tpu.memory_space<vmem>>, %arg5: memref<32x4xf32, #tpu.memory_space<vmem>>, %arg6: memref<1x4xf32, #tpu.memory_space<vmem>>, %arg7: memref<16x32xf32, #tpu.memory_space<vmem>>, %arg8: memref<16x32xf32, #tpu.memory_space<vmem>>, %arg9: memref<1x32xf32, #tpu.memory_space<vmem>>, %arg10: memref<8x64xf32, #tpu.memory_space<vmem>>, %arg11: memref<8x256xf32, #tpu.memory_space<vmem>>, %arg12: memref<8x32xf32, #tpu.memory_space<vmem>>, %arg13: memref<8x32xf32, #tpu.memory_space<vmem>>, %arg14: memref<8x1024xf32, #tpu.memory_space<vmem>>) attributes {dimension_semantics = [#tpu.dimension_semantics<parallel>], iteration_bounds = array<i64: 1>, scalar_prefetch = 0 : i64, scratch_operands = 1 : i64, tpu.core_type = #tpu.core_type<tc>, window_params = [{transform_indices = @transform_0, window_bounds = array<i64: 8, 128>}, {pipeline_mode = #tpu.pipeline_mode<synchronous>, transform_indices = @transform_1, window_bounds = array<i64: 16, 128>}, {pipeline_mode = #tpu.pipeline_mode<synchronous>, transform_indices = @transform_2, window_bounds = array<i64: 32, 128>}, {pipeline_mode = #tpu.pipeline_mode<synchronous>, transform_indices = @transform_3, window_bounds = array<i64: 1, 128>}, {pipeline_mode = #tpu.pipeline_mode<synchronous>, transform_indices = @transform_4, window_bounds = array<i64: 32, 4>}, {pipeline_mode = #tpu.pipeline_mode<synchronous>, transform_indices = @transform_5, window_bounds = array<i64: 1, 4>}, {pipeline_mode = #tpu.pipeline_mode<synchronous>, transform_indices = @transform_6, window_bounds = array<i64: 16, 32>}, {pipeline_mode = #tpu.pipeline_mode<synchronous>, transform_indices = @transform_7, window_bounds = array<i64: 16, 32>}, {pipeline_mode = #tpu.pipeline_mode<synchronous>, transform_indices = @transform_8, window_bounds = array<i64: 1, 32>}, {pipeline_mode = #tpu.pipeline_mode<synchronous>, transform_indices = @transform_9, window_bounds = array<i64: 8, 64>}, {transform_indices = @transform_10, window_bounds = array<i64: 8, 256>}, {transform_indices = @transform_11, window_bounds = array<i64: 8, 32>}, {transform_indices = @transform_12, window_bounds = array<i64: 8, 32>}]} {
    %c0 = arith.constant 0 : index
    %c0_0 = arith.constant 0 : index
    %0 = vector.load %arg2[%c0, %c0_0] : memref<16x128xf32, #tpu.memory_space<vmem>>, vector<16x128xf32>
    %c0_1 = arith.constant 0 : index
    %c0_2 = arith.constant 0 : index
    %1 = vector.load %arg3[%c0_1, %c0_2] : memref<32x128xf32, #tpu.memory_space<vmem>>, vector<32x128xf32>
    %c0_3 = arith.constant 0 : index
    %c0_4 = arith.constant 0 : index
    %2 = vector.load %arg4[%c0_3, %c0_4] : memref<1x128xf32, #tpu.memory_space<vmem>>, vector<1x128xf32>
    %c0_5 = arith.constant 0 : index
    %c0_6 = arith.constant 0 : index
    %3 = vector.load %arg5[%c0_5, %c0_6] : memref<32x4xf32, #tpu.memory_space<vmem>>, vector<32x4xf32>
    %c0_7 = arith.constant 0 : index
    %c0_8 = arith.constant 0 : index
    %4 = vector.load %arg6[%c0_7, %c0_8] : memref<1x4xf32, #tpu.memory_space<vmem>>, vector<1x4xf32>
    %c0_9 = arith.constant 0 : index
    %c0_10 = arith.constant 0 : index
    %5 = vector.load %arg7[%c0_9, %c0_10] : memref<16x32xf32, #tpu.memory_space<vmem>>, vector<16x32xf32>
    %c0_11 = arith.constant 0 : index
    %c0_12 = arith.constant 0 : index
    %6 = vector.load %arg8[%c0_11, %c0_12] : memref<16x32xf32, #tpu.memory_space<vmem>>, vector<16x32xf32>
    %c0_13 = arith.constant 0 : index
    %c0_14 = arith.constant 0 : index
    %7 = vector.load %arg9[%c0_13, %c0_14] : memref<1x32xf32, #tpu.memory_space<vmem>>, vector<1x32xf32>
    %c0_15 = arith.constant 0 : index
    %c0_16 = arith.constant 0 : index
    %8 = vector.load %arg10[%c0_15, %c0_16] : memref<8x64xf32, #tpu.memory_space<vmem>>, vector<8x64xf32>
    %c0_17 = arith.constant 0 : index
    %c0_18 = arith.constant 0 : index
    %9 = vector.load %arg1[%c0_17, %c0_18] : memref<8x128xf32, #tpu.memory_space<vmem>>, vector<8x16xf32>
    %cst = arith.constant dense<0.000000e+00> : vector<8x128xf32>
    %10 = tpu.matmul %9, %0, %cst {dimension_numbers = #tpu.dot_dimension_numbers<[1], [0], [0], [1], [0, 0, 1, 1], [], []>} : vector<8x16xf32>, vector<16x128xf32>, vector<8x128xf32> -> vector<8x128xf32>
    %11 = vector.broadcast %2 : vector<1x128xf32> to vector<8x128xf32>
    %12 = arith.addf %10, %11 : vector<8x128xf32>
    %c0_19 = arith.constant 0 : index
    %c0_20 = arith.constant 0 : index
    %13 = vector.load %arg14[%c0_19, %c0_20] : memref<8x1024xf32, #tpu.memory_space<vmem>>, vector<8x128xf32>
    tpu.vector_store %arg14[%c0_19, %c0_20], %12 {strides = array<i32>} : memref<8x1024xf32, #tpu.memory_space<vmem>>, vector<8x128xf32>,
    %c0_21 = arith.constant 0 : index
    %c16 = arith.constant 16 : index
    %14 = vector.load %arg1[%c0_21, %c16] : memref<8x128xf32, #tpu.memory_space<vmem>>, vector<8x16xf32>
    %cst_22 = arith.constant dense<0.000000e+00> : vector<8x128xf32>
    %15 = tpu.matmul %14, %0, %cst_22 {dimension_numbers = #tpu.dot_dimension_numbers<[1], [0], [0], [1], [0, 0, 1, 1], [], []>} : vector<8x16xf32>, vector<16x128xf32>, vector<8x128xf32> -> vector<8x128xf32>
    %16 = vector.broadcast %2 : vector<1x128xf32> to vector<8x128xf32>
    %17 = arith.addf %15, %16 : vector<8x128xf32>
    %c0_23 = arith.constant 0 : index
    %c128 = arith.constant 128 : index
    %18 = vector.load %arg14[%c0_23, %c128] : memref<8x1024xf32, #tpu.memory_space<vmem>>, vector<8x128xf32>
    tpu.vector_store %arg14[%c0_23, %c128], %17 {strides = array<i32>} : memref<8x1024xf32, #tpu.memory_space<vmem>>, vector<8x128xf32>,
    %c0_24 = arith.constant 0 : index
    %c32 = arith.constant 32 : index
    %19 = vector.load %arg1[%c0_24, %c32] : memref<8x128xf32, #tpu.memory_space<vmem>>, vector<8x16xf32>
    %cst_25 = arith.constant dense<0.000000e+00> : vector<8x128xf32>
    %20 = tpu.matmul %19, %0, %cst_25 {dimension_numbers = #tpu.dot_dimension_numbers<[1], [0], [0], [1], [0, 0, 1, 1], [], []>} : vector<8x16xf32>, vector<16x128xf32>, vector<8x128xf32> -> vector<8x128xf32>
    %21 = vector.broadcast %2 : vector<1x128xf32> to vector<8x128xf32>
    %22 = arith.addf %20, %21 : vector<8x128xf32>
    %c0_26 = arith.constant 0 : index
    %c256 = arith.constant 256 : index
    %23 = vector.load %arg14[%c0_26, %c256] : memref<8x1024xf32, #tpu.memory_space<vmem>>, vector<8x128xf32>
    tpu.vector_store %arg14[%c0_26, %c256], %22 {strides = array<i32>} : memref<8x1024xf32, #tpu.memory_space<vmem>>, vector<8x128xf32>,
    %c0_27 = arith.constant 0 : index
    %c48 = arith.constant 48 : index
    %24 = vector.load %arg1[%c0_27, %c48] : memref<8x128xf32, #tpu.memory_space<vmem>>, vector<8x16xf32>
    %cst_28 = arith.constant dense<0.000000e+00> : vector<8x128xf32>
    %25 = tpu.matmul %24, %0, %cst_28 {dimension_numbers = #tpu.dot_dimension_numbers<[1], [0], [0], [1], [0, 0, 1, 1], [], []>} : vector<8x16xf32>, vector<16x128xf32>, vector<8x128xf32> -> vector<8x128xf32>
    %26 = vector.broadcast %2 : vector<1x128xf32> to vector<8x128xf32>
    %27 = arith.addf %25, %26 : vector<8x128xf32>
    %c0_29 = arith.constant 0 : index
    %c384 = arith.constant 384 : index
    %28 = vector.load %arg14[%c0_29, %c384] : memref<8x1024xf32, #tpu.memory_space<vmem>>, vector<8x128xf32>
    tpu.vector_store %arg14[%c0_29, %c384], %27 {strides = array<i32>} : memref<8x1024xf32, #tpu.memory_space<vmem>>, vector<8x128xf32>,
    %c0_30 = arith.constant 0 : index
    %c64 = arith.constant 64 : index
    %29 = vector.load %arg1[%c0_30, %c64] : memref<8x128xf32, #tpu.memory_space<vmem>>, vector<8x16xf32>
    %cst_31 = arith.constant dense<0.000000e+00> : vector<8x128xf32>
    %30 = tpu.matmul %29, %0, %cst_31 {dimension_numbers = #tpu.dot_dimension_numbers<[1], [0], [0], [1], [0, 0, 1, 1], [], []>} : vector<8x16xf32>, vector<16x128xf32>, vector<8x128xf32> -> vector<8x128xf32>
    %31 = vector.broadcast %2 : vector<1x128xf32> to vector<8x128xf32>
    %32 = arith.addf %30, %31 : vector<8x128xf32>
    %c0_32 = arith.constant 0 : index
    %c512 = arith.constant 512 : index
    %33 = vector.load %arg14[%c0_32, %c512] : memref<8x1024xf32, #tpu.memory_space<vmem>>, vector<8x128xf32>
    tpu.vector_store %arg14[%c0_32, %c512], %32 {strides = array<i32>} : memref<8x1024xf32, #tpu.memory_space<vmem>>, vector<8x128xf32>,
    %c0_33 = arith.constant 0 : index
    %c80 = arith.constant 80 : index
    %34 = vector.load %arg1[%c0_33, %c80] : memref<8x128xf32, #tpu.memory_space<vmem>>, vector<8x16xf32>
    %cst_34 = arith.constant dense<0.000000e+00> : vector<8x128xf32>
    %35 = tpu.matmul %34, %0, %cst_34 {dimension_numbers = #tpu.dot_dimension_numbers<[1], [0], [0], [1], [0, 0, 1, 1], [], []>} : vector<8x16xf32>, vector<16x128xf32>, vector<8x128xf32> -> vector<8x128xf32>
    %36 = vector.broadcast %2 : vector<1x128xf32> to vector<8x128xf32>
    %37 = arith.addf %35, %36 : vector<8x128xf32>
    %c0_35 = arith.constant 0 : index
    %c640 = arith.constant 640 : index
    %38 = vector.load %arg14[%c0_35, %c640] : memref<8x1024xf32, #tpu.memory_space<vmem>>, vector<8x128xf32>
    tpu.vector_store %arg14[%c0_35, %c640], %37 {strides = array<i32>} : memref<8x1024xf32, #tpu.memory_space<vmem>>, vector<8x128xf32>,
    %c0_36 = arith.constant 0 : index
    %c96 = arith.constant 96 : index
    %39 = vector.load %arg1[%c0_36, %c96] : memref<8x128xf32, #tpu.memory_space<vmem>>, vector<8x16xf32>
    %cst_37 = arith.constant dense<0.000000e+00> : vector<8x128xf32>
    %40 = tpu.matmul %39, %0, %cst_37 {dimension_numbers = #tpu.dot_dimension_numbers<[1], [0], [0], [1], [0, 0, 1, 1], [], []>} : vector<8x16xf32>, vector<16x128xf32>, vector<8x128xf32> -> vector<8x128xf32>
    %41 = vector.broadcast %2 : vector<1x128xf32> to vector<8x128xf32>
    %42 = arith.addf %40, %41 : vector<8x128xf32>
    %c0_38 = arith.constant 0 : index
    %c768 = arith.constant 768 : index
    %43 = vector.load %arg14[%c0_38, %c768] : memref<8x1024xf32, #tpu.memory_space<vmem>>, vector<8x128xf32>
    tpu.vector_store %arg14[%c0_38, %c768], %42 {strides = array<i32>} : memref<8x1024xf32, #tpu.memory_space<vmem>>, vector<8x128xf32>,
    %c0_39 = arith.constant 0 : index
    %c112 = arith.constant 112 : index
    %44 = vector.load %arg1[%c0_39, %c112] : memref<8x128xf32, #tpu.memory_space<vmem>>, vector<8x16xf32>
    %cst_40 = arith.constant dense<0.000000e+00> : vector<8x128xf32>
    %45 = tpu.matmul %44, %0, %cst_40 {dimension_numbers = #tpu.dot_dimension_numbers<[1], [0], [0], [1], [0, 0, 1, 1], [], []>} : vector<8x16xf32>, vector<16x128xf32>, vector<8x128xf32> -> vector<8x128xf32>
    %46 = vector.broadcast %2 : vector<1x128xf32> to vector<8x128xf32>
    %47 = arith.addf %45, %46 : vector<8x128xf32>
    %c0_41 = arith.constant 0 : index
    %c896 = arith.constant 896 : index
    %48 = vector.load %arg14[%c0_41, %c896] : memref<8x1024xf32, #tpu.memory_space<vmem>>, vector<8x128xf32>
    tpu.vector_store %arg14[%c0_41, %c896], %47 {strides = array<i32>} : memref<8x1024xf32, #tpu.memory_space<vmem>>, vector<8x128xf32>,
    %cst_42 = arith.constant 0.000000e+00 : f32
    %49 = vector.broadcast %cst_42 : f32 to vector<8x32xf32>
    %cst_43 = arith.constant 0.000000e+00 : f32
    %50 = vector.broadcast %cst_43 : f32 to vector<8x32xf32>
    %c0_44 = arith.constant 0 : index
    %c0_45 = arith.constant 0 : index
    %51 = vector.load %arg14[%c0_44, %c0_45] : memref<8x1024xf32, #tpu.memory_space<vmem>>, vector<8x128xf32>
    %cst_46 = arith.constant dense<0.000000e+00> : vector<8x128xf32>
    %52 = tpu.matmul %49, %1, %cst_46 {dimension_numbers = #tpu.dot_dimension_numbers<[1], [0], [0], [1], [0, 0, 1, 1], [], []>} : vector<8x32xf32>, vector<32x128xf32>, vector<8x128xf32> -> vector<8x128xf32>
    %53 = arith.addf %51, %52 : vector<8x128xf32>
    %54 = arith.negf %53 : vector<8x128xf32>
    %55 = math.exp %54 : vector<8x128xf32>
    %cst_47 = arith.constant 1.000000e+00 : f32
    %56 = vector.broadcast %cst_47 : f32 to vector<8x128xf32>
    %57 = arith.addf %56, %55 : vector<8x128xf32>
    %58 = arith.divf %56, %57 : vector<8x128xf32>
    %59 = vector.extract_strided_slice %58 {offsets = [0, 0], sizes = [8, 32], strides = [1, 1]} : vector<8x128xf32> to vector<8x32xf32>
    %60 = vector.extract_strided_slice %58 {offsets = [0, 32], sizes = [8, 32], strides = [1, 1]} : vector<8x128xf32> to vector<8x32xf32>
    %61 = vector.extract_strided_slice %53 {offsets = [0, 64], sizes = [8, 32], strides = [1, 1]} : vector<8x128xf32> to vector<8x32xf32>
    %62 = math.tanh %61 : vector<8x32xf32>
    %63 = vector.extract_strided_slice %53 {offsets = [0, 96], sizes = [8, 32], strides = [1, 1]} : vector<8x128xf32> to vector<8x32xf32>
    %64 = arith.mulf %60, %50 : vector<8x32xf32>
    %65 = arith.mulf %59, %62 : vector<8x32xf32>
    %66 = arith.addf %64, %65 : vector<8x32xf32>
    %cst_48 = arith.constant dense<0.000000e+00> : vector<8x4xf32>
    %67 = tpu.matmul %66, %3, %cst_48 {dimension_numbers = #tpu.dot_dimension_numbers<[1], [0], [0], [1], [0, 0, 1, 1], [], []>} : vector<8x32xf32>, vector<32x4xf32>, vector<8x4xf32> -> vector<8x4xf32>
    %68 = vector.broadcast %4 : vector<1x4xf32> to vector<8x4xf32>
    %69 = arith.addf %67, %68 : vector<8x4xf32>
    %70 = math.tanh %69 : vector<8x4xf32>
    %cst_49 = arith.constant 3.14159274 : f32
    %71 = vector.broadcast %cst_49 : f32 to vector<8x4xf32>
    %72 = arith.mulf %70, %71 : vector<8x4xf32>
    %cst_50 = arith.constant 5.000000e-01 : f32
    %73 = vector.broadcast %cst_50 : f32 to vector<8x4xf32>
    %74 = arith.mulf %73, %72 : vector<8x4xf32>
    %75 = math.cos %74 : vector<8x4xf32>
    %cst_51 = arith.constant 5.000000e-01 : f32
    %76 = vector.broadcast %cst_51 : f32 to vector<8x4xf32>
    %77 = arith.mulf %76, %72 : vector<8x4xf32>
    %78 = math.sin %77 : vector<8x4xf32>
    %79 = tpu.concatenate %75, %78 in 1 : vector<8x4xf32>, vector<8x4xf32> -> vector<8x8xf32>
    %cst_52 = arith.constant dense<0.000000e+00> : vector<8x64xf32>
    %80 = tpu.matmul %79, %8, %cst_52 {dimension_numbers = #tpu.dot_dimension_numbers<[1], [0], [0], [1], [0, 0, 1, 1], [], []>} : vector<8x8xf32>, vector<8x64xf32>, vector<8x64xf32> -> vector<8x64xf32>
    %81 = vector.extract_strided_slice %80 {offsets = [0, 0], sizes = [8, 16], strides = [1, 1]} : vector<8x64xf32> to vector<8x16xf32>
    %82 = vector.extract_strided_slice %80 {offsets = [0, 16], sizes = [8, 16], strides = [1, 1]} : vector<8x64xf32> to vector<8x16xf32>
    %83 = vector.extract_strided_slice %80 {offsets = [0, 32], sizes = [8, 16], strides = [1, 1]} : vector<8x64xf32> to vector<8x16xf32>
    %84 = vector.extract_strided_slice %80 {offsets = [0, 48], sizes = [8, 16], strides = [1, 1]} : vector<8x64xf32> to vector<8x16xf32>
    %85 = arith.mulf %81, %82 : vector<8x16xf32>
    %86 = arith.mulf %83, %84 : vector<8x16xf32>
    %87 = arith.mulf %85, %86 : vector<8x16xf32>
    %cst_53 = arith.constant dense<0.000000e+00> : vector<8x32xf32>
    %88 = tpu.matmul %87, %5, %cst_53 {dimension_numbers = #tpu.dot_dimension_numbers<[1], [0], [0], [1], [0, 0, 1, 1], [], []>} : vector<8x16xf32>, vector<16x32xf32>, vector<8x32xf32> -> vector<8x32xf32>
    %89 = vector.extract_strided_slice %88 {offsets = [0, 0], sizes = [8, 16], strides = [1, 1]} : vector<8x32xf32> to vector<8x16xf32>
    %90 = vector.extract_strided_slice %88 {offsets = [0, 16], sizes = [8, 16], strides = [1, 1]} : vector<8x32xf32> to vector<8x16xf32>
    %91 = arith.mulf %89, %89 : vector<8x16xf32>
    %92 = arith.mulf %90, %90 : vector<8x16xf32>
    %93 = arith.addf %91, %92 : vector<8x16xf32>
    %cst_54 = arith.constant dense<0.000000e+00> : vector<8x32xf32>
    %94 = tpu.matmul %93, %6, %cst_54 {dimension_numbers = #tpu.dot_dimension_numbers<[1], [0], [0], [1], [0, 0, 1, 1], [], []>} : vector<8x16xf32>, vector<16x32xf32>, vector<8x32xf32> -> vector<8x32xf32>
    %95 = vector.broadcast %7 : vector<1x32xf32> to vector<8x32xf32>
    %96 = arith.addf %94, %95 : vector<8x32xf32>
    %97 = arith.addf %63, %96 : vector<8x32xf32>
    %98 = arith.negf %97 : vector<8x32xf32>
    %99 = math.exp %98 : vector<8x32xf32>
    %cst_55 = arith.constant 1.000000e+00 : f32
    %100 = vector.broadcast %cst_55 : f32 to vector<8x32xf32>
    %101 = arith.addf %100, %99 : vector<8x32xf32>
    %102 = arith.divf %100, %101 : vector<8x32xf32>
    %103 = math.tanh %66 : vector<8x32xf32>
    %104 = arith.mulf %102, %103 : vector<8x32xf32>
    %c0_56 = arith.constant 0 : index
    %c0_57 = arith.constant 0 : index
    %105 = vector.load %arg11[%c0_56, %c0_57] : memref<8x256xf32, #tpu.memory_space<vmem>>, vector<8x32xf32>
    tpu.vector_store %arg11[%c0_56, %c0_57], %104 {strides = array<i32>} : memref<8x256xf32, #tpu.memory_space<vmem>>, vector<8x32xf32>,
    %c0_58 = arith.constant 0 : index
    %c128_59 = arith.constant 128 : index
    %106 = vector.load %arg14[%c0_58, %c128_59] : memref<8x1024xf32, #tpu.memory_space<vmem>>, vector<8x128xf32>
    %cst_60 = arith.constant dense<0.000000e+00> : vector<8x128xf32>
    %107 = tpu.matmul %104, %1, %cst_60 {dimension_numbers = #tpu.dot_dimension_numbers<[1], [0], [0], [1], [0, 0, 1, 1], [], []>} : vector<8x32xf32>, vector<32x128xf32>, vector<8x128xf32> -> vector<8x128xf32>
    %108 = arith.addf %106, %107 : vector<8x128xf32>
    %109 = arith.negf %108 : vector<8x128xf32>
    %110 = math.exp %109 : vector<8x128xf32>
    %cst_61 = arith.constant 1.000000e+00 : f32
    %111 = vector.broadcast %cst_61 : f32 to vector<8x128xf32>
    %112 = arith.addf %111, %110 : vector<8x128xf32>
    %113 = arith.divf %111, %112 : vector<8x128xf32>
    %114 = vector.extract_strided_slice %113 {offsets = [0, 0], sizes = [8, 32], strides = [1, 1]} : vector<8x128xf32> to vector<8x32xf32>
    %115 = vector.extract_strided_slice %113 {offsets = [0, 32], sizes = [8, 32], strides = [1, 1]} : vector<8x128xf32> to vector<8x32xf32>
    %116 = vector.extract_strided_slice %108 {offsets = [0, 64], sizes = [8, 32], strides = [1, 1]} : vector<8x128xf32> to vector<8x32xf32>
    %117 = math.tanh %116 : vector<8x32xf32>
    %118 = vector.extract_strided_slice %108 {offsets = [0, 96], sizes = [8, 32], strides = [1, 1]} : vector<8x128xf32> to vector<8x32xf32>
    %119 = arith.mulf %115, %66 : vector<8x32xf32>
    %120 = arith.mulf %114, %117 : vector<8x32xf32>
    %121 = arith.addf %119, %120 : vector<8x32xf32>
    %cst_62 = arith.constant dense<0.000000e+00> : vector<8x4xf32>
    %122 = tpu.matmul %121, %3, %cst_62 {dimension_numbers = #tpu.dot_dimension_numbers<[1], [0], [0], [1], [0, 0, 1, 1], [], []>} : vector<8x32xf32>, vector<32x4xf32>, vector<8x4xf32> -> vector<8x4xf32>
    %123 = vector.broadcast %4 : vector<1x4xf32> to vector<8x4xf32>
    %124 = arith.addf %122, %123 : vector<8x4xf32>
    %125 = math.tanh %124 : vector<8x4xf32>
    %cst_63 = arith.constant 3.14159274 : f32
    %126 = vector.broadcast %cst_63 : f32 to vector<8x4xf32>
    %127 = arith.mulf %125, %126 : vector<8x4xf32>
    %cst_64 = arith.constant 5.000000e-01 : f32
    %128 = vector.broadcast %cst_64 : f32 to vector<8x4xf32>
    %129 = arith.mulf %128, %127 : vector<8x4xf32>
    %130 = math.cos %129 : vector<8x4xf32>
    %cst_65 = arith.constant 5.000000e-01 : f32
    %131 = vector.broadcast %cst_65 : f32 to vector<8x4xf32>
    %132 = arith.mulf %131, %127 : vector<8x4xf32>
    %133 = math.sin %132 : vector<8x4xf32>
    %134 = tpu.concatenate %130, %133 in 1 : vector<8x4xf32>, vector<8x4xf32> -> vector<8x8xf32>
    %cst_66 = arith.constant dense<0.000000e+00> : vector<8x64xf32>
    %135 = tpu.matmul %134, %8, %cst_66 {dimension_numbers = #tpu.dot_dimension_numbers<[1], [0], [0], [1], [0, 0, 1, 1], [], []>} : vector<8x8xf32>, vector<8x64xf32>, vector<8x64xf32> -> vector<8x64xf32>
    %136 = vector.extract_strided_slice %135 {offsets = [0, 0], sizes = [8, 16], strides = [1, 1]} : vector<8x64xf32> to vector<8x16xf32>
    %137 = vector.extract_strided_slice %135 {offsets = [0, 16], sizes = [8, 16], strides = [1, 1]} : vector<8x64xf32> to vector<8x16xf32>
    %138 = vector.extract_strided_slice %135 {offsets = [0, 32], sizes = [8, 16], strides = [1, 1]} : vector<8x64xf32> to vector<8x16xf32>
    %139 = vector.extract_strided_slice %135 {offsets = [0, 48], sizes = [8, 16], strides = [1, 1]} : vector<8x64xf32> to vector<8x16xf32>
    %140 = arith.mulf %136, %137 : vector<8x16xf32>
    %141 = arith.mulf %138, %139 : vector<8x16xf32>
    %142 = arith.mulf %140, %141 : vector<8x16xf32>
    %cst_67 = arith.constant dense<0.000000e+00> : vector<8x32xf32>
    %143 = tpu.matmul %142, %5, %cst_67 {dimension_numbers = #tpu.dot_dimension_numbers<[1], [0], [0], [1], [0, 0, 1, 1], [], []>} : vector<8x16xf32>, vector<16x32xf32>, vector<8x32xf32> -> vector<8x32xf32>
    %144 = vector.extract_strided_slice %143 {offsets = [0, 0], sizes = [8, 16], strides = [1, 1]} : vector<8x32xf32> to vector<8x16xf32>
    %145 = vector.extract_strided_slice %143 {offsets = [0, 16], sizes = [8, 16], strides = [1, 1]} : vector<8x32xf32> to vector<8x16xf32>
    %146 = arith.mulf %144, %144 : vector<8x16xf32>
    %147 = arith.mulf %145, %145 : vector<8x16xf32>
    %148 = arith.addf %146, %147 : vector<8x16xf32>
    %cst_68 = arith.constant dense<0.000000e+00> : vector<8x32xf32>
    %149 = tpu.matmul %148, %6, %cst_68 {dimension_numbers = #tpu.dot_dimension_numbers<[1], [0], [0], [1], [0, 0, 1, 1], [], []>} : vector<8x16xf32>, vector<16x32xf32>, vector<8x32xf32> -> vector<8x32xf32>
    %150 = vector.broadcast %7 : vector<1x32xf32> to vector<8x32xf32>
    %151 = arith.addf %149, %150 : vector<8x32xf32>
    %152 = arith.addf %118, %151 : vector<8x32xf32>
    %153 = arith.negf %152 : vector<8x32xf32>
    %154 = math.exp %153 : vector<8x32xf32>
    %cst_69 = arith.constant 1.000000e+00 : f32
    %155 = vector.broadcast %cst_69 : f32 to vector<8x32xf32>
    %156 = arith.addf %155, %154 : vector<8x32xf32>
    %157 = arith.divf %155, %156 : vector<8x32xf32>
    %158 = math.tanh %121 : vector<8x32xf32>
    %159 = arith.mulf %157, %158 : vector<8x32xf32>
    %c0_70 = arith.constant 0 : index
    %c32_71 = arith.constant 32 : index
    %160 = vector.load %arg11[%c0_70, %c32_71] : memref<8x256xf32, #tpu.memory_space<vmem>>, vector<8x32xf32>
    tpu.vector_store %arg11[%c0_70, %c32_71], %159 {strides = array<i32>} : memref<8x256xf32, #tpu.memory_space<vmem>>, vector<8x32xf32>,
    %c0_72 = arith.constant 0 : index
    %c256_73 = arith.constant 256 : index
    %161 = vector.load %arg14[%c0_72, %c256_73] : memref<8x1024xf32, #tpu.memory_space<vmem>>, vector<8x128xf32>
    %cst_74 = arith.constant dense<0.000000e+00> : vector<8x128xf32>
    %162 = tpu.matmul %159, %1, %cst_74 {dimension_numbers = #tpu.dot_dimension_numbers<[1], [0], [0], [1], [0, 0, 1, 1], [], []>} : vector<8x32xf32>, vector<32x128xf32>, vector<8x128xf32> -> vector<8x128xf32>
    %163 = arith.addf %161, %162 : vector<8x128xf32>
    %164 = arith.negf %163 : vector<8x128xf32>
    %165 = math.exp %164 : vector<8x128xf32>
    %cst_75 = arith.constant 1.000000e+00 : f32
    %166 = vector.broadcast %cst_75 : f32 to vector<8x128xf32>
    %167 = arith.addf %166, %165 : vector<8x128xf32>
    %168 = arith.divf %166, %167 : vector<8x128xf32>
    %169 = vector.extract_strided_slice %168 {offsets = [0, 0], sizes = [8, 32], strides = [1, 1]} : vector<8x128xf32> to vector<8x32xf32>
    %170 = vector.extract_strided_slice %168 {offsets = [0, 32], sizes = [8, 32], strides = [1, 1]} : vector<8x128xf32> to vector<8x32xf32>
    %171 = vector.extract_strided_slice %163 {offsets = [0, 64], sizes = [8, 32], strides = [1, 1]} : vector<8x128xf32> to vector<8x32xf32>
    %172 = math.tanh %171 : vector<8x32xf32>
    %173 = vector.extract_strided_slice %163 {offsets = [0, 96], sizes = [8, 32], strides = [1, 1]} : vector<8x128xf32> to vector<8x32xf32>
    %174 = arith.mulf %170, %121 : vector<8x32xf32>
    %175 = arith.mulf %169, %172 : vector<8x32xf32>
    %176 = arith.addf %174, %175 : vector<8x32xf32>
    %cst_76 = arith.constant dense<0.000000e+00> : vector<8x4xf32>
    %177 = tpu.matmul %176, %3, %cst_76 {dimension_numbers = #tpu.dot_dimension_numbers<[1], [0], [0], [1], [0, 0, 1, 1], [], []>} : vector<8x32xf32>, vector<32x4xf32>, vector<8x4xf32> -> vector<8x4xf32>
    %178 = vector.broadcast %4 : vector<1x4xf32> to vector<8x4xf32>
    %179 = arith.addf %177, %178 : vector<8x4xf32>
    %180 = math.tanh %179 : vector<8x4xf32>
    %cst_77 = arith.constant 3.14159274 : f32
    %181 = vector.broadcast %cst_77 : f32 to vector<8x4xf32>
    %182 = arith.mulf %180, %181 : vector<8x4xf32>
    %cst_78 = arith.constant 5.000000e-01 : f32
    %183 = vector.broadcast %cst_78 : f32 to vector<8x4xf32>
    %184 = arith.mulf %183, %182 : vector<8x4xf32>
    %185 = math.cos %184 : vector<8x4xf32>
    %cst_79 = arith.constant 5.000000e-01 : f32
    %186 = vector.broadcast %cst_79 : f32 to vector<8x4xf32>
    %187 = arith.mulf %186, %182 : vector<8x4xf32>
    %188 = math.sin %187 : vector<8x4xf32>
    %189 = tpu.concatenate %185, %188 in 1 : vector<8x4xf32>, vector<8x4xf32> -> vector<8x8xf32>
    %cst_80 = arith.constant dense<0.000000e+00> : vector<8x64xf32>
    %190 = tpu.matmul %189, %8, %cst_80 {dimension_numbers = #tpu.dot_dimension_numbers<[1], [0], [0], [1], [0, 0, 1, 1], [], []>} : vector<8x8xf32>, vector<8x64xf32>, vector<8x64xf32> -> vector<8x64xf32>
    %191 = vector.extract_strided_slice %190 {offsets = [0, 0], sizes = [8, 16], strides = [1, 1]} : vector<8x64xf32> to vector<8x16xf32>
    %192 = vector.extract_strided_slice %190 {offsets = [0, 16], sizes = [8, 16], strides = [1, 1]} : vector<8x64xf32> to vector<8x16xf32>
    %193 = vector.extract_strided_slice %190 {offsets = [0, 32], sizes = [8, 16], strides = [1, 1]} : vector<8x64xf32> to vector<8x16xf32>
    %194 = vector.extract_strided_slice %190 {offsets = [0, 48], sizes = [8, 16], strides = [1, 1]} : vector<8x64xf32> to vector<8x16xf32>
    %195 = arith.mulf %191, %192 : vector<8x16xf32>
    %196 = arith.mulf %193, %194 : vector<8x16xf32>
    %197 = arith.mulf %195, %196 : vector<8x16xf32>
    %cst_81 = arith.constant dense<0.000000e+00> : vector<8x32xf32>
    %198 = tpu.matmul %197, %5, %cst_81 {dimension_numbers = #tpu.dot_dimension_numbers<[1], [0], [0], [1], [0, 0, 1, 1], [], []>} : vector<8x16xf32>, vector<16x32xf32>, vector<8x32xf32> -> vector<8x32xf32>
    %199 = vector.extract_strided_slice %198 {offsets = [0, 0], sizes = [8, 16], strides = [1, 1]} : vector<8x32xf32> to vector<8x16xf32>
    %200 = vector.extract_strided_slice %198 {offsets = [0, 16], sizes = [8, 16], strides = [1, 1]} : vector<8x32xf32> to vector<8x16xf32>
    %201 = arith.mulf %199, %199 : vector<8x16xf32>
    %202 = arith.mulf %200, %200 : vector<8x16xf32>
    %203 = arith.addf %201, %202 : vector<8x16xf32>
    %cst_82 = arith.constant dense<0.000000e+00> : vector<8x32xf32>
    %204 = tpu.matmul %203, %6, %cst_82 {dimension_numbers = #tpu.dot_dimension_numbers<[1], [0], [0], [1], [0, 0, 1, 1], [], []>} : vector<8x16xf32>, vector<16x32xf32>, vector<8x32xf32> -> vector<8x32xf32>
    %205 = vector.broadcast %7 : vector<1x32xf32> to vector<8x32xf32>
    %206 = arith.addf %204, %205 : vector<8x32xf32>
    %207 = arith.addf %173, %206 : vector<8x32xf32>
    %208 = arith.negf %207 : vector<8x32xf32>
    %209 = math.exp %208 : vector<8x32xf32>
    %cst_83 = arith.constant 1.000000e+00 : f32
    %210 = vector.broadcast %cst_83 : f32 to vector<8x32xf32>
    %211 = arith.addf %210, %209 : vector<8x32xf32>
    %212 = arith.divf %210, %211 : vector<8x32xf32>
    %213 = math.tanh %176 : vector<8x32xf32>
    %214 = arith.mulf %212, %213 : vector<8x32xf32>
    %c0_84 = arith.constant 0 : index
    %c64_85 = arith.constant 64 : index
    %215 = vector.load %arg11[%c0_84, %c64_85] : memref<8x256xf32, #tpu.memory_space<vmem>>, vector<8x32xf32>
    tpu.vector_store %arg11[%c0_84, %c64_85], %214 {strides = array<i32>} : memref<8x256xf32, #tpu.memory_space<vmem>>, vector<8x32xf32>,
    %c0_86 = arith.constant 0 : index
    %c384_87 = arith.constant 384 : index
    %216 = vector.load %arg14[%c0_86, %c384_87] : memref<8x1024xf32, #tpu.memory_space<vmem>>, vector<8x128xf32>
    %cst_88 = arith.constant dense<0.000000e+00> : vector<8x128xf32>
    %217 = tpu.matmul %214, %1, %cst_88 {dimension_numbers = #tpu.dot_dimension_numbers<[1], [0], [0], [1], [0, 0, 1, 1], [], []>} : vector<8x32xf32>, vector<32x128xf32>, vector<8x128xf32> -> vector<8x128xf32>
    %218 = arith.addf %216, %217 : vector<8x128xf32>
    %219 = arith.negf %218 : vector<8x128xf32>
    %220 = math.exp %219 : vector<8x128xf32>
    %cst_89 = arith.constant 1.000000e+00 : f32
    %221 = vector.broadcast %cst_89 : f32 to vector<8x128xf32>
    %222 = arith.addf %221, %220 : vector<8x128xf32>
    %223 = arith.divf %221, %222 : vector<8x128xf32>
    %224 = vector.extract_strided_slice %223 {offsets = [0, 0], sizes = [8, 32], strides = [1, 1]} : vector<8x128xf32> to vector<8x32xf32>
    %225 = vector.extract_strided_slice %223 {offsets = [0, 32], sizes = [8, 32], strides = [1, 1]} : vector<8x128xf32> to vector<8x32xf32>
    %226 = vector.extract_strided_slice %218 {offsets = [0, 64], sizes = [8, 32], strides = [1, 1]} : vector<8x128xf32> to vector<8x32xf32>
    %227 = math.tanh %226 : vector<8x32xf32>
    %228 = vector.extract_strided_slice %218 {offsets = [0, 96], sizes = [8, 32], strides = [1, 1]} : vector<8x128xf32> to vector<8x32xf32>
    %229 = arith.mulf %225, %176 : vector<8x32xf32>
    %230 = arith.mulf %224, %227 : vector<8x32xf32>
    %231 = arith.addf %229, %230 : vector<8x32xf32>
    %cst_90 = arith.constant dense<0.000000e+00> : vector<8x4xf32>
    %232 = tpu.matmul %231, %3, %cst_90 {dimension_numbers = #tpu.dot_dimension_numbers<[1], [0], [0], [1], [0, 0, 1, 1], [], []>} : vector<8x32xf32>, vector<32x4xf32>, vector<8x4xf32> -> vector<8x4xf32>
    %233 = vector.broadcast %4 : vector<1x4xf32> to vector<8x4xf32>
    %234 = arith.addf %232, %233 : vector<8x4xf32>
    %235 = math.tanh %234 : vector<8x4xf32>
    %cst_91 = arith.constant 3.14159274 : f32
    %236 = vector.broadcast %cst_91 : f32 to vector<8x4xf32>
    %237 = arith.mulf %235, %236 : vector<8x4xf32>
    %cst_92 = arith.constant 5.000000e-01 : f32
    %238 = vector.broadcast %cst_92 : f32 to vector<8x4xf32>
    %239 = arith.mulf %238, %237 : vector<8x4xf32>
    %240 = math.cos %239 : vector<8x4xf32>
    %cst_93 = arith.constant 5.000000e-01 : f32
    %241 = vector.broadcast %cst_93 : f32 to vector<8x4xf32>
    %242 = arith.mulf %241, %237 : vector<8x4xf32>
    %243 = math.sin %242 : vector<8x4xf32>
    %244 = tpu.concatenate %240, %243 in 1 : vector<8x4xf32>, vector<8x4xf32> -> vector<8x8xf32>
    %cst_94 = arith.constant dense<0.000000e+00> : vector<8x64xf32>
    %245 = tpu.matmul %244, %8, %cst_94 {dimension_numbers = #tpu.dot_dimension_numbers<[1], [0], [0], [1], [0, 0, 1, 1], [], []>} : vector<8x8xf32>, vector<8x64xf32>, vector<8x64xf32> -> vector<8x64xf32>
    %246 = vector.extract_strided_slice %245 {offsets = [0, 0], sizes = [8, 16], strides = [1, 1]} : vector<8x64xf32> to vector<8x16xf32>
    %247 = vector.extract_strided_slice %245 {offsets = [0, 16], sizes = [8, 16], strides = [1, 1]} : vector<8x64xf32> to vector<8x16xf32>
    %248 = vector.extract_strided_slice %245 {offsets = [0, 32], sizes = [8, 16], strides = [1, 1]} : vector<8x64xf32> to vector<8x16xf32>
    %249 = vector.extract_strided_slice %245 {offsets = [0, 48], sizes = [8, 16], strides = [1, 1]} : vector<8x64xf32> to vector<8x16xf32>
    %250 = arith.mulf %246, %247 : vector<8x16xf32>
    %251 = arith.mulf %248, %249 : vector<8x16xf32>
    %252 = arith.mulf %250, %251 : vector<8x16xf32>
    %cst_95 = arith.constant dense<0.000000e+00> : vector<8x32xf32>
    %253 = tpu.matmul %252, %5, %cst_95 {dimension_numbers = #tpu.dot_dimension_numbers<[1], [0], [0], [1], [0, 0, 1, 1], [], []>} : vector<8x16xf32>, vector<16x32xf32>, vector<8x32xf32> -> vector<8x32xf32>
    %254 = vector.extract_strided_slice %253 {offsets = [0, 0], sizes = [8, 16], strides = [1, 1]} : vector<8x32xf32> to vector<8x16xf32>
    %255 = vector.extract_strided_slice %253 {offsets = [0, 16], sizes = [8, 16], strides = [1, 1]} : vector<8x32xf32> to vector<8x16xf32>
    %256 = arith.mulf %254, %254 : vector<8x16xf32>
    %257 = arith.mulf %255, %255 : vector<8x16xf32>
    %258 = arith.addf %256, %257 : vector<8x16xf32>
    %cst_96 = arith.constant dense<0.000000e+00> : vector<8x32xf32>
    %259 = tpu.matmul %258, %6, %cst_96 {dimension_numbers = #tpu.dot_dimension_numbers<[1], [0], [0], [1], [0, 0, 1, 1], [], []>} : vector<8x16xf32>, vector<16x32xf32>, vector<8x32xf32> -> vector<8x32xf32>
    %260 = vector.broadcast %7 : vector<1x32xf32> to vector<8x32xf32>
    %261 = arith.addf %259, %260 : vector<8x32xf32>
    %262 = arith.addf %228, %261 : vector<8x32xf32>
    %263 = arith.negf %262 : vector<8x32xf32>
    %264 = math.exp %263 : vector<8x32xf32>
    %cst_97 = arith.constant 1.000000e+00 : f32
    %265 = vector.broadcast %cst_97 : f32 to vector<8x32xf32>
    %266 = arith.addf %265, %264 : vector<8x32xf32>
    %267 = arith.divf %265, %266 : vector<8x32xf32>
    %268 = math.tanh %231 : vector<8x32xf32>
    %269 = arith.mulf %267, %268 : vector<8x32xf32>
    %c0_98 = arith.constant 0 : index
    %c96_99 = arith.constant 96 : index
    %270 = vector.load %arg11[%c0_98, %c96_99] : memref<8x256xf32, #tpu.memory_space<vmem>>, vector<8x32xf32>
    tpu.vector_store %arg11[%c0_98, %c96_99], %269 {strides = array<i32>} : memref<8x256xf32, #tpu.memory_space<vmem>>, vector<8x32xf32>,
    %c0_100 = arith.constant 0 : index
    %c512_101 = arith.constant 512 : index
    %271 = vector.load %arg14[%c0_100, %c512_101] : memref<8x1024xf32, #tpu.memory_space<vmem>>, vector<8x128xf32>
    %cst_102 = arith.constant dense<0.000000e+00> : vector<8x128xf32>
    %272 = tpu.matmul %269, %1, %cst_102 {dimension_numbers = #tpu.dot_dimension_numbers<[1], [0], [0], [1], [0, 0, 1, 1], [], []>} : vector<8x32xf32>, vector<32x128xf32>, vector<8x128xf32> -> vector<8x128xf32>
    %273 = arith.addf %271, %272 : vector<8x128xf32>
    %274 = arith.negf %273 : vector<8x128xf32>
    %275 = math.exp %274 : vector<8x128xf32>
    %cst_103 = arith.constant 1.000000e+00 : f32
    %276 = vector.broadcast %cst_103 : f32 to vector<8x128xf32>
    %277 = arith.addf %276, %275 : vector<8x128xf32>
    %278 = arith.divf %276, %277 : vector<8x128xf32>
    %279 = vector.extract_strided_slice %278 {offsets = [0, 0], sizes = [8, 32], strides = [1, 1]} : vector<8x128xf32> to vector<8x32xf32>
    %280 = vector.extract_strided_slice %278 {offsets = [0, 32], sizes = [8, 32], strides = [1, 1]} : vector<8x128xf32> to vector<8x32xf32>
    %281 = vector.extract_strided_slice %273 {offsets = [0, 64], sizes = [8, 32], strides = [1, 1]} : vector<8x128xf32> to vector<8x32xf32>
    %282 = math.tanh %281 : vector<8x32xf32>
    %283 = vector.extract_strided_slice %273 {offsets = [0, 96], sizes = [8, 32], strides = [1, 1]} : vector<8x128xf32> to vector<8x32xf32>
    %284 = arith.mulf %280, %231 : vector<8x32xf32>
    %285 = arith.mulf %279, %282 : vector<8x32xf32>
    %286 = arith.addf %284, %285 : vector<8x32xf32>
    %cst_104 = arith.constant dense<0.000000e+00> : vector<8x4xf32>
    %287 = tpu.matmul %286, %3, %cst_104 {dimension_numbers = #tpu.dot_dimension_numbers<[1], [0], [0], [1], [0, 0, 1, 1], [], []>} : vector<8x32xf32>, vector<32x4xf32>, vector<8x4xf32> -> vector<8x4xf32>
    %288 = vector.broadcast %4 : vector<1x4xf32> to vector<8x4xf32>
    %289 = arith.addf %287, %288 : vector<8x4xf32>
    %290 = math.tanh %289 : vector<8x4xf32>
    %cst_105 = arith.constant 3.14159274 : f32
    %291 = vector.broadcast %cst_105 : f32 to vector<8x4xf32>
    %292 = arith.mulf %290, %291 : vector<8x4xf32>
    %cst_106 = arith.constant 5.000000e-01 : f32
    %293 = vector.broadcast %cst_106 : f32 to vector<8x4xf32>
    %294 = arith.mulf %293, %292 : vector<8x4xf32>
    %295 = math.cos %294 : vector<8x4xf32>
    %cst_107 = arith.constant 5.000000e-01 : f32
    %296 = vector.broadcast %cst_107 : f32 to vector<8x4xf32>
    %297 = arith.mulf %296, %292 : vector<8x4xf32>
    %298 = math.sin %297 : vector<8x4xf32>
    %299 = tpu.concatenate %295, %298 in 1 : vector<8x4xf32>, vector<8x4xf32> -> vector<8x8xf32>
    %cst_108 = arith.constant dense<0.000000e+00> : vector<8x64xf32>
    %300 = tpu.matmul %299, %8, %cst_108 {dimension_numbers = #tpu.dot_dimension_numbers<[1], [0], [0], [1], [0, 0, 1, 1], [], []>} : vector<8x8xf32>, vector<8x64xf32>, vector<8x64xf32> -> vector<8x64xf32>
    %301 = vector.extract_strided_slice %300 {offsets = [0, 0], sizes = [8, 16], strides = [1, 1]} : vector<8x64xf32> to vector<8x16xf32>
    %302 = vector.extract_strided_slice %300 {offsets = [0, 16], sizes = [8, 16], strides = [1, 1]} : vector<8x64xf32> to vector<8x16xf32>
    %303 = vector.extract_strided_slice %300 {offsets = [0, 32], sizes = [8, 16], strides = [1, 1]} : vector<8x64xf32> to vector<8x16xf32>
    %304 = vector.extract_strided_slice %300 {offsets = [0, 48], sizes = [8, 16], strides = [1, 1]} : vector<8x64xf32> to vector<8x16xf32>
    %305 = arith.mulf %301, %302 : vector<8x16xf32>
    %306 = arith.mulf %303, %304 : vector<8x16xf32>
    %307 = arith.mulf %305, %306 : vector<8x16xf32>
    %cst_109 = arith.constant dense<0.000000e+00> : vector<8x32xf32>
    %308 = tpu.matmul %307, %5, %cst_109 {dimension_numbers = #tpu.dot_dimension_numbers<[1], [0], [0], [1], [0, 0, 1, 1], [], []>} : vector<8x16xf32>, vector<16x32xf32>, vector<8x32xf32> -> vector<8x32xf32>
    %309 = vector.extract_strided_slice %308 {offsets = [0, 0], sizes = [8, 16], strides = [1, 1]} : vector<8x32xf32> to vector<8x16xf32>
    %310 = vector.extract_strided_slice %308 {offsets = [0, 16], sizes = [8, 16], strides = [1, 1]} : vector<8x32xf32> to vector<8x16xf32>
    %311 = arith.mulf %309, %309 : vector<8x16xf32>
    %312 = arith.mulf %310, %310 : vector<8x16xf32>
    %313 = arith.addf %311, %312 : vector<8x16xf32>
    %cst_110 = arith.constant dense<0.000000e+00> : vector<8x32xf32>
    %314 = tpu.matmul %313, %6, %cst_110 {dimension_numbers = #tpu.dot_dimension_numbers<[1], [0], [0], [1], [0, 0, 1, 1], [], []>} : vector<8x16xf32>, vector<16x32xf32>, vector<8x32xf32> -> vector<8x32xf32>
    %315 = vector.broadcast %7 : vector<1x32xf32> to vector<8x32xf32>
    %316 = arith.addf %314, %315 : vector<8x32xf32>
    %317 = arith.addf %283, %316 : vector<8x32xf32>
    %318 = arith.negf %317 : vector<8x32xf32>
    %319 = math.exp %318 : vector<8x32xf32>
    %cst_111 = arith.constant 1.000000e+00 : f32
    %320 = vector.broadcast %cst_111 : f32 to vector<8x32xf32>
    %321 = arith.addf %320, %319 : vector<8x32xf32>
    %322 = arith.divf %320, %321 : vector<8x32xf32>
    %323 = math.tanh %286 : vector<8x32xf32>
    %324 = arith.mulf %322, %323 : vector<8x32xf32>
    %c0_112 = arith.constant 0 : index
    %c128_113 = arith.constant 128 : index
    %325 = vector.load %arg11[%c0_112, %c128_113] : memref<8x256xf32, #tpu.memory_space<vmem>>, vector<8x32xf32>
    tpu.vector_store %arg11[%c0_112, %c128_113], %324 {strides = array<i32>} : memref<8x256xf32, #tpu.memory_space<vmem>>, vector<8x32xf32>,
    %c0_114 = arith.constant 0 : index
    %c640_115 = arith.constant 640 : index
    %326 = vector.load %arg14[%c0_114, %c640_115] : memref<8x1024xf32, #tpu.memory_space<vmem>>, vector<8x128xf32>
    %cst_116 = arith.constant dense<0.000000e+00> : vector<8x128xf32>
    %327 = tpu.matmul %324, %1, %cst_116 {dimension_numbers = #tpu.dot_dimension_numbers<[1], [0], [0], [1], [0, 0, 1, 1], [], []>} : vector<8x32xf32>, vector<32x128xf32>, vector<8x128xf32> -> vector<8x128xf32>
    %328 = arith.addf %326, %327 : vector<8x128xf32>
    %329 = arith.negf %328 : vector<8x128xf32>
    %330 = math.exp %329 : vector<8x128xf32>
    %cst_117 = arith.constant 1.000000e+00 : f32
    %331 = vector.broadcast %cst_117 : f32 to vector<8x128xf32>
    %332 = arith.addf %331, %330 : vector<8x128xf32>
    %333 = arith.divf %331, %332 : vector<8x128xf32>
    %334 = vector.extract_strided_slice %333 {offsets = [0, 0], sizes = [8, 32], strides = [1, 1]} : vector<8x128xf32> to vector<8x32xf32>
    %335 = vector.extract_strided_slice %333 {offsets = [0, 32], sizes = [8, 32], strides = [1, 1]} : vector<8x128xf32> to vector<8x32xf32>
    %336 = vector.extract_strided_slice %328 {offsets = [0, 64], sizes = [8, 32], strides = [1, 1]} : vector<8x128xf32> to vector<8x32xf32>
    %337 = math.tanh %336 : vector<8x32xf32>
    %338 = vector.extract_strided_slice %328 {offsets = [0, 96], sizes = [8, 32], strides = [1, 1]} : vector<8x128xf32> to vector<8x32xf32>
    %339 = arith.mulf %335, %286 : vector<8x32xf32>
    %340 = arith.mulf %334, %337 : vector<8x32xf32>
    %341 = arith.addf %339, %340 : vector<8x32xf32>
    %cst_118 = arith.constant dense<0.000000e+00> : vector<8x4xf32>
    %342 = tpu.matmul %341, %3, %cst_118 {dimension_numbers = #tpu.dot_dimension_numbers<[1], [0], [0], [1], [0, 0, 1, 1], [], []>} : vector<8x32xf32>, vector<32x4xf32>, vector<8x4xf32> -> vector<8x4xf32>
    %343 = vector.broadcast %4 : vector<1x4xf32> to vector<8x4xf32>
    %344 = arith.addf %342, %343 : vector<8x4xf32>
    %345 = math.tanh %344 : vector<8x4xf32>
    %cst_119 = arith.constant 3.14159274 : f32
    %346 = vector.broadcast %cst_119 : f32 to vector<8x4xf32>
    %347 = arith.mulf %345, %346 : vector<8x4xf32>
    %cst_120 = arith.constant 5.000000e-01 : f32
    %348 = vector.broadcast %cst_120 : f32 to vector<8x4xf32>
    %349 = arith.mulf %348, %347 : vector<8x4xf32>
    %350 = math.cos %349 : vector<8x4xf32>
    %cst_121 = arith.constant 5.000000e-01 : f32
    %351 = vector.broadcast %cst_121 : f32 to vector<8x4xf32>
    %352 = arith.mulf %351, %347 : vector<8x4xf32>
    %353 = math.sin %352 : vector<8x4xf32>
    %354 = tpu.concatenate %350, %353 in 1 : vector<8x4xf32>, vector<8x4xf32> -> vector<8x8xf32>
    %cst_122 = arith.constant dense<0.000000e+00> : vector<8x64xf32>
    %355 = tpu.matmul %354, %8, %cst_122 {dimension_numbers = #tpu.dot_dimension_numbers<[1], [0], [0], [1], [0, 0, 1, 1], [], []>} : vector<8x8xf32>, vector<8x64xf32>, vector<8x64xf32> -> vector<8x64xf32>
    %356 = vector.extract_strided_slice %355 {offsets = [0, 0], sizes = [8, 16], strides = [1, 1]} : vector<8x64xf32> to vector<8x16xf32>
    %357 = vector.extract_strided_slice %355 {offsets = [0, 16], sizes = [8, 16], strides = [1, 1]} : vector<8x64xf32> to vector<8x16xf32>
    %358 = vector.extract_strided_slice %355 {offsets = [0, 32], sizes = [8, 16], strides = [1, 1]} : vector<8x64xf32> to vector<8x16xf32>
    %359 = vector.extract_strided_slice %355 {offsets = [0, 48], sizes = [8, 16], strides = [1, 1]} : vector<8x64xf32> to vector<8x16xf32>
    %360 = arith.mulf %356, %357 : vector<8x16xf32>
    %361 = arith.mulf %358, %359 : vector<8x16xf32>
    %362 = arith.mulf %360, %361 : vector<8x16xf32>
    %cst_123 = arith.constant dense<0.000000e+00> : vector<8x32xf32>
    %363 = tpu.matmul %362, %5, %cst_123 {dimension_numbers = #tpu.dot_dimension_numbers<[1], [0], [0], [1], [0, 0, 1, 1], [], []>} : vector<8x16xf32>, vector<16x32xf32>, vector<8x32xf32> -> vector<8x32xf32>
    %364 = vector.extract_strided_slice %363 {offsets = [0, 0], sizes = [8, 16], strides = [1, 1]} : vector<8x32xf32> to vector<8x16xf32>
    %365 = vector.extract_strided_slice %363 {offsets = [0, 16], sizes = [8, 16], strides = [1, 1]} : vector<8x32xf32> to vector<8x16xf32>
    %366 = arith.mulf %364, %364 : vector<8x16xf32>
    %367 = arith.mulf %365, %365 : vector<8x16xf32>
    %368 = arith.addf %366, %367 : vector<8x16xf32>
    %cst_124 = arith.constant dense<0.000000e+00> : vector<8x32xf32>
    %369 = tpu.matmul %368, %6, %cst_124 {dimension_numbers = #tpu.dot_dimension_numbers<[1], [0], [0], [1], [0, 0, 1, 1], [], []>} : vector<8x16xf32>, vector<16x32xf32>, vector<8x32xf32> -> vector<8x32xf32>
    %370 = vector.broadcast %7 : vector<1x32xf32> to vector<8x32xf32>
    %371 = arith.addf %369, %370 : vector<8x32xf32>
    %372 = arith.addf %338, %371 : vector<8x32xf32>
    %373 = arith.negf %372 : vector<8x32xf32>
    %374 = math.exp %373 : vector<8x32xf32>
    %cst_125 = arith.constant 1.000000e+00 : f32
    %375 = vector.broadcast %cst_125 : f32 to vector<8x32xf32>
    %376 = arith.addf %375, %374 : vector<8x32xf32>
    %377 = arith.divf %375, %376 : vector<8x32xf32>
    %378 = math.tanh %341 : vector<8x32xf32>
    %379 = arith.mulf %377, %378 : vector<8x32xf32>
    %c0_126 = arith.constant 0 : index
    %c160 = arith.constant 160 : index
    %380 = vector.load %arg11[%c0_126, %c160] : memref<8x256xf32, #tpu.memory_space<vmem>>, vector<8x32xf32>
    tpu.vector_store %arg11[%c0_126, %c160], %379 {strides = array<i32>} : memref<8x256xf32, #tpu.memory_space<vmem>>, vector<8x32xf32>,
    %c0_127 = arith.constant 0 : index
    %c768_128 = arith.constant 768 : index
    %381 = vector.load %arg14[%c0_127, %c768_128] : memref<8x1024xf32, #tpu.memory_space<vmem>>, vector<8x128xf32>
    %cst_129 = arith.constant dense<0.000000e+00> : vector<8x128xf32>
    %382 = tpu.matmul %379, %1, %cst_129 {dimension_numbers = #tpu.dot_dimension_numbers<[1], [0], [0], [1], [0, 0, 1, 1], [], []>} : vector<8x32xf32>, vector<32x128xf32>, vector<8x128xf32> -> vector<8x128xf32>
    %383 = arith.addf %381, %382 : vector<8x128xf32>
    %384 = arith.negf %383 : vector<8x128xf32>
    %385 = math.exp %384 : vector<8x128xf32>
    %cst_130 = arith.constant 1.000000e+00 : f32
    %386 = vector.broadcast %cst_130 : f32 to vector<8x128xf32>
    %387 = arith.addf %386, %385 : vector<8x128xf32>
    %388 = arith.divf %386, %387 : vector<8x128xf32>
    %389 = vector.extract_strided_slice %388 {offsets = [0, 0], sizes = [8, 32], strides = [1, 1]} : vector<8x128xf32> to vector<8x32xf32>
    %390 = vector.extract_strided_slice %388 {offsets = [0, 32], sizes = [8, 32], strides = [1, 1]} : vector<8x128xf32> to vector<8x32xf32>
    %391 = vector.extract_strided_slice %383 {offsets = [0, 64], sizes = [8, 32], strides = [1, 1]} : vector<8x128xf32> to vector<8x32xf32>
    %392 = math.tanh %391 : vector<8x32xf32>
    %393 = vector.extract_strided_slice %383 {offsets = [0, 96], sizes = [8, 32], strides = [1, 1]} : vector<8x128xf32> to vector<8x32xf32>
    %394 = arith.mulf %390, %341 : vector<8x32xf32>
    %395 = arith.mulf %389, %392 : vector<8x32xf32>
    %396 = arith.addf %394, %395 : vector<8x32xf32>
    %cst_131 = arith.constant dense<0.000000e+00> : vector<8x4xf32>
    %397 = tpu.matmul %396, %3, %cst_131 {dimension_numbers = #tpu.dot_dimension_numbers<[1], [0], [0], [1], [0, 0, 1, 1], [], []>} : vector<8x32xf32>, vector<32x4xf32>, vector<8x4xf32> -> vector<8x4xf32>
    %398 = vector.broadcast %4 : vector<1x4xf32> to vector<8x4xf32>
    %399 = arith.addf %397, %398 : vector<8x4xf32>
    %400 = math.tanh %399 : vector<8x4xf32>
    %cst_132 = arith.constant 3.14159274 : f32
    %401 = vector.broadcast %cst_132 : f32 to vector<8x4xf32>
    %402 = arith.mulf %400, %401 : vector<8x4xf32>
    %cst_133 = arith.constant 5.000000e-01 : f32
    %403 = vector.broadcast %cst_133 : f32 to vector<8x4xf32>
    %404 = arith.mulf %403, %402 : vector<8x4xf32>
    %405 = math.cos %404 : vector<8x4xf32>
    %cst_134 = arith.constant 5.000000e-01 : f32
    %406 = vector.broadcast %cst_134 : f32 to vector<8x4xf32>
    %407 = arith.mulf %406, %402 : vector<8x4xf32>
    %408 = math.sin %407 : vector<8x4xf32>
    %409 = tpu.concatenate %405, %408 in 1 : vector<8x4xf32>, vector<8x4xf32> -> vector<8x8xf32>
    %cst_135 = arith.constant dense<0.000000e+00> : vector<8x64xf32>
    %410 = tpu.matmul %409, %8, %cst_135 {dimension_numbers = #tpu.dot_dimension_numbers<[1], [0], [0], [1], [0, 0, 1, 1], [], []>} : vector<8x8xf32>, vector<8x64xf32>, vector<8x64xf32> -> vector<8x64xf32>
    %411 = vector.extract_strided_slice %410 {offsets = [0, 0], sizes = [8, 16], strides = [1, 1]} : vector<8x64xf32> to vector<8x16xf32>
    %412 = vector.extract_strided_slice %410 {offsets = [0, 16], sizes = [8, 16], strides = [1, 1]} : vector<8x64xf32> to vector<8x16xf32>
    %413 = vector.extract_strided_slice %410 {offsets = [0, 32], sizes = [8, 16], strides = [1, 1]} : vector<8x64xf32> to vector<8x16xf32>
    %414 = vector.extract_strided_slice %410 {offsets = [0, 48], sizes = [8, 16], strides = [1, 1]} : vector<8x64xf32> to vector<8x16xf32>
    %415 = arith.mulf %411, %412 : vector<8x16xf32>
    %416 = arith.mulf %413, %414 : vector<8x16xf32>
    %417 = arith.mulf %415, %416 : vector<8x16xf32>
    %cst_136 = arith.constant dense<0.000000e+00> : vector<8x32xf32>
    %418 = tpu.matmul %417, %5, %cst_136 {dimension_numbers = #tpu.dot_dimension_numbers<[1], [0], [0], [1], [0, 0, 1, 1], [], []>} : vector<8x16xf32>, vector<16x32xf32>, vector<8x32xf32> -> vector<8x32xf32>
    %419 = vector.extract_strided_slice %418 {offsets = [0, 0], sizes = [8, 16], strides = [1, 1]} : vector<8x32xf32> to vector<8x16xf32>
    %420 = vector.extract_strided_slice %418 {offsets = [0, 16], sizes = [8, 16], strides = [1, 1]} : vector<8x32xf32> to vector<8x16xf32>
    %421 = arith.mulf %419, %419 : vector<8x16xf32>
    %422 = arith.mulf %420, %420 : vector<8x16xf32>
    %423 = arith.addf %421, %422 : vector<8x16xf32>
    %cst_137 = arith.constant dense<0.000000e+00> : vector<8x32xf32>
    %424 = tpu.matmul %423, %6, %cst_137 {dimension_numbers = #tpu.dot_dimension_numbers<[1], [0], [0], [1], [0, 0, 1, 1], [], []>} : vector<8x16xf32>, vector<16x32xf32>, vector<8x32xf32> -> vector<8x32xf32>
    %425 = vector.broadcast %7 : vector<1x32xf32> to vector<8x32xf32>
    %426 = arith.addf %424, %425 : vector<8x32xf32>
    %427 = arith.addf %393, %426 : vector<8x32xf32>
    %428 = arith.negf %427 : vector<8x32xf32>
    %429 = math.exp %428 : vector<8x32xf32>
    %cst_138 = arith.constant 1.000000e+00 : f32
    %430 = vector.broadcast %cst_138 : f32 to vector<8x32xf32>
    %431 = arith.addf %430, %429 : vector<8x32xf32>
    %432 = arith.divf %430, %431 : vector<8x32xf32>
    %433 = math.tanh %396 : vector<8x32xf32>
    %434 = arith.mulf %432, %433 : vector<8x32xf32>
    %c0_139 = arith.constant 0 : index
    %c192 = arith.constant 192 : index
    %435 = vector.load %arg11[%c0_139, %c192] : memref<8x256xf32, #tpu.memory_space<vmem>>, vector<8x32xf32>
    tpu.vector_store %arg11[%c0_139, %c192], %434 {strides = array<i32>} : memref<8x256xf32, #tpu.memory_space<vmem>>, vector<8x32xf32>,
    %c0_140 = arith.constant 0 : index
    %c896_141 = arith.constant 896 : index
    %436 = vector.load %arg14[%c0_140, %c896_141] : memref<8x1024xf32, #tpu.memory_space<vmem>>, vector<8x128xf32>
    %cst_142 = arith.constant dense<0.000000e+00> : vector<8x128xf32>
    %437 = tpu.matmul %434, %1, %cst_142 {dimension_numbers = #tpu.dot_dimension_numbers<[1], [0], [0], [1], [0, 0, 1, 1], [], []>} : vector<8x32xf32>, vector<32x128xf32>, vector<8x128xf32> -> vector<8x128xf32>
    %438 = arith.addf %436, %437 : vector<8x128xf32>
    %439 = arith.negf %438 : vector<8x128xf32>
    %440 = math.exp %439 : vector<8x128xf32>
    %cst_143 = arith.constant 1.000000e+00 : f32
    %441 = vector.broadcast %cst_143 : f32 to vector<8x128xf32>
    %442 = arith.addf %441, %440 : vector<8x128xf32>
    %443 = arith.divf %441, %442 : vector<8x128xf32>
    %444 = vector.extract_strided_slice %443 {offsets = [0, 0], sizes = [8, 32], strides = [1, 1]} : vector<8x128xf32> to vector<8x32xf32>
    %445 = vector.extract_strided_slice %443 {offsets = [0, 32], sizes = [8, 32], strides = [1, 1]} : vector<8x128xf32> to vector<8x32xf32>
    %446 = vector.extract_strided_slice %438 {offsets = [0, 64], sizes = [8, 32], strides = [1, 1]} : vector<8x128xf32> to vector<8x32xf32>
    %447 = math.tanh %446 : vector<8x32xf32>
    %448 = vector.extract_strided_slice %438 {offsets = [0, 96], sizes = [8, 32], strides = [1, 1]} : vector<8x128xf32> to vector<8x32xf32>
    %449 = arith.mulf %445, %396 : vector<8x32xf32>
    %450 = arith.mulf %444, %447 : vector<8x32xf32>
    %451 = arith.addf %449, %450 : vector<8x32xf32>
    %cst_144 = arith.constant dense<0.000000e+00> : vector<8x4xf32>
    %452 = tpu.matmul %451, %3, %cst_144 {dimension_numbers = #tpu.dot_dimension_numbers<[1], [0], [0], [1], [0, 0, 1, 1], [], []>} : vector<8x32xf32>, vector<32x4xf32>, vector<8x4xf32> -> vector<8x4xf32>
    %453 = vector.broadcast %4 : vector<1x4xf32> to vector<8x4xf32>
    %454 = arith.addf %452, %453 : vector<8x4xf32>
    %455 = math.tanh %454 : vector<8x4xf32>
    %cst_145 = arith.constant 3.14159274 : f32
    %456 = vector.broadcast %cst_145 : f32 to vector<8x4xf32>
    %457 = arith.mulf %455, %456 : vector<8x4xf32>
    %cst_146 = arith.constant 5.000000e-01 : f32
    %458 = vector.broadcast %cst_146 : f32 to vector<8x4xf32>
    %459 = arith.mulf %458, %457 : vector<8x4xf32>
    %460 = math.cos %459 : vector<8x4xf32>
    %cst_147 = arith.constant 5.000000e-01 : f32
    %461 = vector.broadcast %cst_147 : f32 to vector<8x4xf32>
    %462 = arith.mulf %461, %457 : vector<8x4xf32>
    %463 = math.sin %462 : vector<8x4xf32>
    %464 = tpu.concatenate %460, %463 in 1 : vector<8x4xf32>, vector<8x4xf32> -> vector<8x8xf32>
    %cst_148 = arith.constant dense<0.000000e+00> : vector<8x64xf32>
    %465 = tpu.matmul %464, %8, %cst_148 {dimension_numbers = #tpu.dot_dimension_numbers<[1], [0], [0], [1], [0, 0, 1, 1], [], []>} : vector<8x8xf32>, vector<8x64xf32>, vector<8x64xf32> -> vector<8x64xf32>
    %466 = vector.extract_strided_slice %465 {offsets = [0, 0], sizes = [8, 16], strides = [1, 1]} : vector<8x64xf32> to vector<8x16xf32>
    %467 = vector.extract_strided_slice %465 {offsets = [0, 16], sizes = [8, 16], strides = [1, 1]} : vector<8x64xf32> to vector<8x16xf32>
    %468 = vector.extract_strided_slice %465 {offsets = [0, 32], sizes = [8, 16], strides = [1, 1]} : vector<8x64xf32> to vector<8x16xf32>
    %469 = vector.extract_strided_slice %465 {offsets = [0, 48], sizes = [8, 16], strides = [1, 1]} : vector<8x64xf32> to vector<8x16xf32>
    %470 = arith.mulf %466, %467 : vector<8x16xf32>
    %471 = arith.mulf %468, %469 : vector<8x16xf32>
    %472 = arith.mulf %470, %471 : vector<8x16xf32>
    %cst_149 = arith.constant dense<0.000000e+00> : vector<8x32xf32>
    %473 = tpu.matmul %472, %5, %cst_149 {dimension_numbers = #tpu.dot_dimension_numbers<[1], [0], [0], [1], [0, 0, 1, 1], [], []>} : vector<8x16xf32>, vector<16x32xf32>, vector<8x32xf32> -> vector<8x32xf32>
    %474 = vector.extract_strided_slice %473 {offsets = [0, 0], sizes = [8, 16], strides = [1, 1]} : vector<8x32xf32> to vector<8x16xf32>
    %475 = vector.extract_strided_slice %473 {offsets = [0, 16], sizes = [8, 16], strides = [1, 1]} : vector<8x32xf32> to vector<8x16xf32>
    %476 = arith.mulf %474, %474 : vector<8x16xf32>
    %477 = arith.mulf %475, %475 : vector<8x16xf32>
    %478 = arith.addf %476, %477 : vector<8x16xf32>
    %cst_150 = arith.constant dense<0.000000e+00> : vector<8x32xf32>
    %479 = tpu.matmul %478, %6, %cst_150 {dimension_numbers = #tpu.dot_dimension_numbers<[1], [0], [0], [1], [0, 0, 1, 1], [], []>} : vector<8x16xf32>, vector<16x32xf32>, vector<8x32xf32> -> vector<8x32xf32>
    %480 = vector.broadcast %7 : vector<1x32xf32> to vector<8x32xf32>
    %481 = arith.addf %479, %480 : vector<8x32xf32>
    %482 = arith.addf %448, %481 : vector<8x32xf32>
    %483 = arith.negf %482 : vector<8x32xf32>
    %484 = math.exp %483 : vector<8x32xf32>
    %cst_151 = arith.constant 1.000000e+00 : f32
    %485 = vector.broadcast %cst_151 : f32 to vector<8x32xf32>
    %486 = arith.addf %485, %484 : vector<8x32xf32>
    %487 = arith.divf %485, %486 : vector<8x32xf32>
    %488 = math.tanh %451 : vector<8x32xf32>
    %489 = arith.mulf %487, %488 : vector<8x32xf32>
    %c0_152 = arith.constant 0 : index
    %c224 = arith.constant 224 : index
    %490 = vector.load %arg11[%c0_152, %c224] : memref<8x256xf32, #tpu.memory_space<vmem>>, vector<8x32xf32>
    tpu.vector_store %arg11[%c0_152, %c224], %489 {strides = array<i32>} : memref<8x256xf32, #tpu.memory_space<vmem>>, vector<8x32xf32>,
    %c0_153 = arith.constant 0 : index
    %c0_154 = arith.constant 0 : index
    %491 = vector.load %arg12[%c0_153, %c0_154] : memref<8x32xf32, #tpu.memory_space<vmem>>, vector<8x32xf32>
    tpu.vector_store %arg12[%c0_153, %c0_154], %489 {strides = array<i32>} : memref<8x32xf32, #tpu.memory_space<vmem>>, vector<8x32xf32>,
    %c0_155 = arith.constant 0 : index
    %c0_156 = arith.constant 0 : index
    %492 = vector.load %arg13[%c0_155, %c0_156] : memref<8x32xf32, #tpu.memory_space<vmem>>, vector<8x32xf32>
    tpu.vector_store %arg13[%c0_155, %c0_156], %451 {strides = array<i32>} : memref<8x32xf32, #tpu.memory_space<vmem>>, vector<8x32xf32>,
    return
  }
  func.func @transform_0(%arg0: i32) -> (i32, i32) {
    %c0_i32 = arith.constant 0 : i32
    %c0_i32_0 = arith.constant 0 : i32
    return %arg0, %c0_i32 : i32, i32
  }
  func.func @transform_1(%arg0: i32) -> (i32, i32) {
    %c0_i32 = arith.constant 0 : i32
    %c0_i32_0 = arith.constant 0 : i32
    %c0_i32_1 = arith.constant 0 : i32
    return %c0_i32, %c0_i32_0 : i32, i32
  }
  func.func @transform_2(%arg0: i32) -> (i32, i32) {
    %c0_i32 = arith.constant 0 : i32
    %c0_i32_0 = arith.constant 0 : i32
    %c0_i32_1 = arith.constant 0 : i32
    return %c0_i32, %c0_i32_0 : i32, i32
  }
  func.func @transform_3(%arg0: i32) -> (i32, i32) {
    %c0_i32 = arith.constant 0 : i32
    %c0_i32_0 = arith.constant 0 : i32
    %c0_i32_1 = arith.constant 0 : i32
    return %c0_i32, %c0_i32_0 : i32, i32
  }
  func.func @transform_4(%arg0: i32) -> (i32, i32) {
    %c0_i32 = arith.constant 0 : i32
    %c0_i32_0 = arith.constant 0 : i32
    %c0_i32_1 = arith.constant 0 : i32
    return %c0_i32, %c0_i32_0 : i32, i32
  }
  func.func @transform_5(%arg0: i32) -> (i32, i32) {
    %c0_i32 = arith.constant 0 : i32
    %c0_i32_0 = arith.constant 0 : i32
    %c0_i32_1 = arith.constant 0 : i32
    return %c0_i32, %c0_i32_0 : i32, i32
  }
  func.func @transform_6(%arg0: i32) -> (i32, i32) {
    %c0_i32 = arith.constant 0 : i32
    %c0_i32_0 = arith.constant 0 : i32
    %c0_i32_1 = arith.constant 0 : i32
    return %c0_i32, %c0_i32_0 : i32, i32
  }
  func.func @transform_7(%arg0: i32) -> (i32, i32) {
    %c0_i32 = arith.constant 0 : i32
    %c0_i32_0 = arith.constant 0 : i32
    %c0_i32_1 = arith.constant 0 : i32
    return %c0_i32, %c0_i32_0 : i32, i32
  }
  func.func @transform_8(%arg0: i32) -> (i32, i32) {
    %c0_i32 = arith.constant 0 : i32
    %c0_i32_0 = arith.constant 0 : i32
    %c0_i32_1 = arith.constant 0 : i32
    return %c0_i32, %c0_i32_0 : i32, i32
  }
  func.func @transform_9(%arg0: i32) -> (i32, i32) {
    %c0_i32 = arith.constant 0 : i32
    %c0_i32_0 = arith.constant 0 : i32
    %c0_i32_1 = arith.constant 0 : i32
    return %c0_i32, %c0_i32_0 : i32, i32
  }
  func.func @transform_10(%arg0: i32) -> (i32, i32) {
    %c0_i32 = arith.constant 0 : i32
    %c0_i32_0 = arith.constant 0 : i32
    return %arg0, %c0_i32 : i32, i32
  }
  func.func @transform_11(%arg0: i32) -> (i32, i32) {
    %c0_i32 = arith.constant 0 : i32
    %c0_i32_0 = arith.constant 0 : i32
    return %arg0, %c0_i32 : i32, i32
  }
  func.func @transform_12(%arg0: i32) -> (i32, i32) {
    %c0_i32 = arith.constant 0 : i32
    %c0_i32_0 = arith.constant 0 : i32
    return %arg0, %c0_i32 : i32, i32
  }
}

</mosaic_0001>

<llo_original>
// kernel: tpu_custom_call.1
$region0: #{tpu_custom_call.1}
  #allocation0 [shape = 'u32[]', space=smem, size = 0x4, offset = 0x4, fixed_abs, tag = 'smem constant byte address 0x4 - core index']
  #allocation1 [shape = 'u32[144,128]{1,0:T(1,128)}', space=vmem, size = 0x12000, scoped, tag = 'internal scratch']
  #allocation2 [shape = 'f32[8,1024]{1,0:T(8,128)}', space=vmem, size = 0x8000, scoped, tag = 'scratch operand']
  %s0 = inlined_call_operand.hbm [shape: f32[8,128], index: 0, kind: input, shape index: {}]
  %s1 = inlined_call_operand.hbm [shape: f32[16,128], index: 1, kind: input, shape index: {}]
  %s2 = inlined_call_operand.vmem [shape: f32[32,128], index: 2, kind: input, shape index: {}]
  %s3 = inlined_call_operand.vmem [shape: f32[1,128], index: 3, kind: input, shape index: {}]
  %s4 = inlined_call_operand.vmem [shape: f32[32,4], index: 4, kind: input, shape index: {}]
  %s5 = inlined_call_operand.vmem [shape: f32[1,4], index: 5, kind: input, shape index: {}]
  %s6 = inlined_call_operand.vmem [shape: f32[16,32], index: 6, kind: input, shape index: {}]
  %s7 = inlined_call_operand.hbm [shape: f32[16,32], index: 7, kind: input, shape index: {}]
  %s8 = inlined_call_operand.vmem [shape: f32[1,32], index: 8, kind: input, shape index: {}]
  %s9 = inlined_call_operand.vmem [shape: f32[8,64], index: 9, kind: input, shape index: {}]
  %s10 = inlined_call_operand.hbm [shape: f32[8,256], index: 10, kind: output, shape index: {0}]
  %s11 = inlined_call_operand.hbm [shape: f32[8,32], index: 11, kind: output, shape index: {1}]
  %s12 = inlined_call_operand.hbm [shape: f32[8,32], index: 12, kind: output, shape index: {2}]
  %13 = xla_tuple %s10, %s11, %s12
  %s14 = sld [smem:[#allocation0]]
  $region78: #{tpu_custom_call.1} parent=0
    _
  %s16 = ssub.s32 1, %s14
  %s17 = scalar_select 0, %s16, %s14
  $region1: #{tpu_custom_call.1} parent=0
    #allocation3 [shape = 'u8[4096]{0}', space=vmem, size = 0x1000, scoped, tag = 'input window, operand 0, single buffered']
    #allocation4 [shape = 's32[1]{0}', space=sflag, size = 0x4, scoped, tag = 'scoped memory for tpu_custom_call.1']
    #allocation5 [shape = 's32[1]{0}', space=sflag, size = 0x4, scoped, tag = 'scoped memory for tpu_custom_call.1']
    #allocation6 [shape = 'u8[8192]{0}', space=vmem, size = 0x2000, scoped, tag = 'input window, operand 1, single buffered']
    #allocation7 [shape = 's32[1]{0}', space=sflag, size = 0x4, scoped, tag = 'scoped memory for tpu_custom_call.1']
    #allocation8 [shape = 'u8[8192]{0}', space=vmem, size = 0x2000, scoped, tag = 'input window, operand 7, single buffered']
    #allocation9 [shape = 'u8[8192]{0}', space=vmem, size = 0x2000, scoped, tag = 'output window, operand 0, single buffered']
    #allocation10 [shape = 'u8[4096]{0}', space=vmem, size = 0x1000, scoped, tag = 'output window, operand 1, single buffered']
    #allocation11 [shape = 's32[1]{0}', space=sflag, size = 0x4, scoped, tag = 'scoped memory for tpu_custom_call.1']
    #allocation12 [shape = 'u8[4096]{0}', space=vmem, size = 0x1000, scoped, tag = 'output window, operand 2, single buffered']
    %18 = vsyncpa [#allocation4], 0
    %19 = vsyncpa [#allocation7], 0
    %20 = vsyncpa [#allocation5], 0
    %21 = vsyncpa [#allocation11], 0
    // Predicated region
    $region2: #{tpu_custom_call.1} parent=1 // pred_check
      _
    $region3: #{tpu_custom_call.1} parent=1 // pred_check_branch
      %23 = sbr.rel (0) target = $region5
    $region4: #{tpu_custom_call.1} parent=1 // pred_region
      %s25 = ssub.s32 128, 128
      %26 = vsyncadd [#allocation4], %s25
      %s28 = sshll.u32 [#allocation3], 4
      %s29 = int_to_ptr.vmem [resolvable:$true] %s28
      %31 = dma.hbm_to_vmem [thread:$0]  %s0, 128, %s29, [#allocation4]
    $region5: #{tpu_custom_call.1} parent=1 // pred_fallthru
      _
    // Predicated region
    $region6: #{tpu_custom_call.1} parent=1 // pred_check
      _
    $region7: #{tpu_custom_call.1} parent=1 // pred_check_branch
      %33 = sbr.rel (0) target = $region9
    $region8: #{tpu_custom_call.1} parent=1 // pred_region
      %s35 = ssub.s32 256, 256
      %36 = vsyncadd [#allocation7], %s35
      %s37 = sshll.u32 [#allocation6], 4
      %s38 = int_to_ptr.vmem [resolvable:$true] %s37
      %43 = dma.hbm_to_vmem [thread:$0]  %s1, 256, %s38, [#allocation7], 128, 128, 8
    $region9: #{tpu_custom_call.1} parent=1 // pred_fallthru
      _
    // Predicated region
    $region10: #{tpu_custom_call.1} parent=1 // pred_check
      _
    $region11: #{tpu_custom_call.1} parent=1 // pred_check_branch
      %45 = sbr.rel (0) target = $region13
    $region12: #{tpu_custom_call.1} parent=1 // pred_region
      _
    $region13: #{tpu_custom_call.1} parent=1 // pred_fallthru
      _
    // Predicated region
    $region14: #{tpu_custom_call.1} parent=1 // pred_check
      _
    $region15: #{tpu_custom_call.1} parent=1 // pred_check_branch
      %47 = sbr.rel (0) target = $region17
    $region16: #{tpu_custom_call.1} parent=1 // pred_region
      _
    $region17: #{tpu_custom_call.1} parent=1 // pred_fallthru
      _
    // Predicated region
    $region18: #{tpu_custom_call.1} parent=1 // pred_check
      _
    $region19: #{tpu_custom_call.1} parent=1 // pred_check_branch
      %49 = sbr.rel (0) target = $region21
    $region20: #{tpu_custom_call.1} parent=1 // pred_region
      _
    $region21: #{tpu_custom_call.1} parent=1 // pred_fallthru
      _
    // Predicated region
    $region22: #{tpu_custom_call.1} parent=1 // pred_check
      _
    $region23: #{tpu_custom_call.1} parent=1 // pred_check_branch
      %51 = sbr.rel (0) target = $region25
    $region24: #{tpu_custom_call.1} parent=1 // pred_region
      _
    $region25: #{tpu_custom_call.1} parent=1 // pred_fallthru
      _
    // Predicated region
    $region26: #{tpu_custom_call.1} parent=1 // pred_check
      _
    $region27: #{tpu_custom_call.1} parent=1 // pred_check_branch
      %53 = sbr.rel (0) target = $region29
    $region28: #{tpu_custom_call.1} parent=1 // pred_region
      _
    $region29: #{tpu_custom_call.1} parent=1 // pred_fallthru
      _
    // Predicated region
    $region30: #{tpu_custom_call.1} parent=1 // pred_check
      _
    $region31: #{tpu_custom_call.1} parent=1 // pred_check_branch
      %55 = sbr.rel (0) target = $region33
    $region32: #{tpu_custom_call.1} parent=1 // pred_region
      %s57 = ssub.s32 256, 256
      %58 = vsyncadd [#allocation7], %s57
      %s59 = sshll.u32 [#allocation8], 4
      %s60 = int_to_ptr.vmem [resolvable:$true] %s59
      %65 = dma.hbm_to_vmem [thread:$0]  %s7, 256, %s60, [#allocation7], 128, 128, 8
    $region33: #{tpu_custom_call.1} parent=1 // pred_fallthru
      _
    // Predicated region
    $region34: #{tpu_custom_call.1} parent=1 // pred_check
      _
    $region35: #{tpu_custom_call.1} parent=1 // pred_check_branch
      %67 = sbr.rel (0) target = $region37
    $region36: #{tpu_custom_call.1} parent=1 // pred_region
      _
    $region37: #{tpu_custom_call.1} parent=1 // pred_fallthru
      _
    // Predicated region
    $region38: #{tpu_custom_call.1} parent=1 // pred_check
      _
    $region39: #{tpu_custom_call.1} parent=1 // pred_check_branch
      %69 = sbr.rel (0) target = $region41
    $region40: #{tpu_custom_call.1} parent=1 // pred_region
      _
    $region41: #{tpu_custom_call.1} parent=1 // pred_fallthru
      _
    // Predicated region
    $region42: #{tpu_custom_call.1} parent=1 // pred_check
      _
    $region43: #{tpu_custom_call.1} parent=1 // pred_check_branch
      %71 = sbr.rel (0) target = $region45
    $region44: #{tpu_custom_call.1} parent=1 // pred_region
      %72 = dma.done [#allocation4], 128
    $region45: #{tpu_custom_call.1} parent=1 // pred_fallthru
      _
    // Predicated region
    $region46: #{tpu_custom_call.1} parent=1 // pred_check
      _
    $region47: #{tpu_custom_call.1} parent=1 // pred_check_branch
      %74 = sbr.rel (0) target = $region49
    $region48: #{tpu_custom_call.1} parent=1 // pred_region
      %75 = dma.done [#allocation7], 256
    $region49: #{tpu_custom_call.1} parent=1 // pred_fallthru
      _
    // Predicated region
    $region50: #{tpu_custom_call.1} parent=1 // pred_check
      _
    $region51: #{tpu_custom_call.1} parent=1 // pred_check_branch
      %77 = sbr.rel (0) target = $region53
    $region52: #{tpu_custom_call.1} parent=1 // pred_region
      %78 = dma.done [#allocation7], 256
    $region53: #{tpu_custom_call.1} parent=1 // pred_fallthru
      _
    %v79 = vld [vmem:[#allocation6] sm:$0xff]
    %v80 = vld [vmem:[#allocation6 + $0x8] sm:$0xff]
    %v81 = vld [vmem:[%s2] sm:$0xff]
    %v82 = vld [vmem:[%s2 + $0x8] sm:$0xff]
    %v83 = vld [vmem:[%s2 + $0x10] sm:$0xff]
    %v84 = vld [vmem:[%s2 + $0x18] sm:$0xff]
    %v85 = vld [vmem:[%s3] sm:$0x1]
    %v86 = vld [vmem:[%s4] sm:$0xff]
    %v87 = vld [vmem:[%s4 + $0x8] sm:$0xff]
    %v88 = vld [vmem:[%s4 + $0x10] sm:$0xff]
    %v89 = vld [vmem:[%s4 + $0x18] sm:$0xff]
    %v90 = vld [vmem:[%s5] sm:$0x1]
    %v91 = vld [vmem:[%s6] sm:$0xff]
    %v92 = vld [vmem:[%s6 + $0x8] sm:$0xff]
    %v93 = vld [vmem:[#allocation8] sm:$0xff]
    %v94 = vld [vmem:[#allocation8 + $0x8] sm:$0xff]
    %v95 = vld [vmem:[%s8] sm:$0x1]
    %v96 = vld [vmem:[%s9] sm:$0xff]
    %v97 = vld [vmem:[#allocation3] sm:$0xff]
    %v99 = vlaneseq
    %v100 = vshrl.u32 %v99, 7
    %v101 = vsub.s32 0, %v100
    %v102 = vrot.slane %v85, %v101
    %vm104 = vcmask 130048
    %v106 = vsel %vm104, %v97, 0
    %108 = vmatprep.subr.mxu0 0.0
    %109 = vmatpush1.msra.mxu0 %v79
    %110 = vmatprep.subr.mxu0 0.0
    %111 = vmatpush1.msra.mxu0 %v80
    %112 = vmatprep.subr.mxu0 0.0
    %113 = vmatpush1.msra.mxu0 0.0
    %114 = vmatprep.subr.mxu0 0.0
    %115 = vmatpush1.msra.mxu0 0.0
    %116 = vmatprep.subr.mxu0 0.0
    %117 = vmatpush1.msra.mxu0 0.0
    %118 = vmatprep.subr.mxu0 0.0
    %119 = vmatpush1.msra.mxu0 0.0
    %120 = vmatprep.subr.mxu0 0.0
    %121 = vmatpush1.msra.mxu0 0.0
    %122 = vmatprep.subr.mxu0 0.0
    %123 = vmatpush1.msra.mxu0 0.0
    %124 = vmatprep.subr.mxu0 0.0
    %125 = vmatpush1.msra.mxu0 0.0
    %126 = vmatprep.subr.mxu0 0.0
    %127 = vmatpush1.msra.mxu0 0.0
    %128 = vmatprep.subr.mxu0 0.0
    %129 = vmatpush1.msra.mxu0 0.0
    %130 = vmatprep.subr.mxu0 0.0
    %131 = vmatpush1.msra.mxu0 0.0
    %132 = vmatprep.subr.mxu0 0.0
    %133 = vmatpush1.msra.mxu0 0.0
    %134 = vmatprep.subr.mxu0 0.0
    %135 = vmatpush1.msra.mxu0 0.0
    %136 = vmatprep.subr.mxu0 0.0
    %137 = vmatpush1.msra.mxu0 0.0
    %138 = vmatprep.subr.mxu0 0.0
    %139 = vmatpush1.msra.mxu0 0.0
    %140 = vmatprep.subr.mxu0 0.0
    %141 = vmatpush1.msra.mxu0 0.0
    %142 = vmatprep.subr.mxu0 0.0
    %143 = vmatpush1.msra.mxu0 0.0
    %144 = vmatprep.subr.mxu0 0.0
    %145 = vmatpush1.msra.mxu0 0.0
    %146 = vmatprep.subr.mxu0 0.0
    %147 = vmatpush1.msra.mxu0 0.0
    %148 = vmatprep.subr.mxu0 0.0
    %149 = vmatpush1.msra.mxu0 0.0
    %150 = vmatprep.subr.mxu0 0.0
    %151 = vmatpush1.msra.mxu0 0.0
    %152 = vmatprep.subr.mxu0 0.0
    %153 = vmatpush1.msra.mxu0 0.0
    %154 = vmatprep.subr.mxu0 0.0
    %155 = vmatpush1.msra.mxu0 0.0
    %156 = vmatprep.subr.mxu0 0.0
    %157 = vmatpush1.msra.mxu0 0.0
    %158 = vmatprep.subr.mxu0 0.0
    %159 = vmatpush1.msra.mxu0 0.0
    %160 = vmatprep.subr.mxu0 0.0
    %161 = vmatpush1.msra.mxu0 0.0
    %162 = vmatprep.subr.mxu0 0.0
    %163 = vmatpush1.msra.mxu0 0.0
    %164 = vmatprep.subr.mxu0 0.0
    %165 = vmatpush1.msra.mxu0 0.0
    %166 = vmatprep.subr.mxu0 0.0
    %167 = vmatpush1.msra.mxu0 0.0
    %168 = vmatprep.subr.mxu0 0.0
    %169 = vmatpush1.msra.mxu0 0.0
    %170 = vmatprep.subr.mxu0 0.0
    %171 = vmatpush1.msra.mxu0 0.0
    %172 = vmatprep.mubr.f32.mxu0 0.0
    %173 = vmatmul.mubr.f32.gmra.mrb[0].mxu0 %v106
    %v174 = vpop.f32.mrb[0].mxu0
    %v175 = vadd.f32 %v102, %v174
    %v176 = vpop.f32.mrb[0].mxu0
    %177 = vdwg.mxu0
    %178 = vst [vmem:[#allocation2] sm:$0xff] %v175
    %v179 = vld [vmem:[#allocation3] sm:$0xff]
    %181 = vrot.lane.b32.xlu0 %v179, 112
    %v182 = vpop.permute.xlu0 %181
    %v183 = vsel %vm104, %v182, 0
    %185 = vmatprep.subr.mxu0 0.0
    %186 = vmatpush1.msra.mxu0 %v79
    %187 = vmatprep.subr.mxu0 0.0
    %188 = vmatpush1.msra.mxu0 %v80
    %189 = vmatprep.subr.mxu0 0.0
    %190 = vmatpush1.msra.mxu0 0.0
    %191 = vmatprep.subr.mxu0 0.0
    %192 = vmatpush1.msra.mxu0 0.0
    %193 = vmatprep.subr.mxu0 0.0
    %194 = vmatpush1.msra.mxu0 0.0
    %195 = vmatprep.subr.mxu0 0.0
    %196 = vmatpush1.msra.mxu0 0.0
    %197 = vmatprep.subr.mxu0 0.0
    %198 = vmatpush1.msra.mxu0 0.0
    %199 = vmatprep.subr.mxu0 0.0
    %200 = vmatpush1.msra.mxu0 0.0
    %201 = vmatprep.subr.mxu0 0.0
    %202 = vmatpush1.msra.mxu0 0.0
    %203 = vmatprep.subr.mxu0 0.0
    %204 = vmatpush1.msra.mxu0 0.0
    %205 = vmatprep.subr.mxu0 0.0
    %206 = vmatpush1.msra.mxu0 0.0
    %207 = vmatprep.subr.mxu0 0.0
    %208 = vmatpush1.msra.mxu0 0.0
    %209 = vmatprep.subr.mxu0 0.0
    %210 = vmatpush1.msra.mxu0 0.0
    %211 = vmatprep.subr.mxu0 0.0
    %212 = vmatpush1.msra.mxu0 0.0
    %213 = vmatprep.subr.mxu0 0.0
    %214 = vmatpush1.msra.mxu0 0.0
    %215 = vmatprep.subr.mxu0 0.0
    %216 = vmatpush1.msra.mxu0 0.0
    %217 = vmatprep.subr.mxu0 0.0
    %218 = vmatpush1.msra.mxu0 0.0
    %219 = vmatprep.subr.mxu0 0.0
    %220 = vmatpush1.msra.mxu0 0.0
    %221 = vmatprep.subr.mxu0 0.0
    %222 = vmatpush1.msra.mxu0 0.0
    %223 = vmatprep.subr.mxu0 0.0
    %224 = vmatpush1.msra.mxu0 0.0
    %225 = vmatprep.subr.mxu0 0.0
    %226 = vmatpush1.msra.mxu0 0.0
    %227 = vmatprep.subr.mxu0 0.0
    %228 = vmatpush1.msra.mxu0 0.0
    %229 = vmatprep.subr.mxu0 0.0
    %230 = vmatpush1.msra.mxu0 0.0
    %231 = vmatprep.subr.mxu0 0.0
    %232 = vmatpush1.msra.mxu0 0.0
    %233 = vmatprep.subr.mxu0 0.0
    %234 = vmatpush1.msra.mxu0 0.0
    %235 = vmatprep.subr.mxu0 0.0
    %236 = vmatpush1.msra.mxu0 0.0
    %237 = vmatprep.subr.mxu0 0.0
    %238 = vmatpush1.msra.mxu0 0.0
    %239 = vmatprep.subr.mxu0 0.0
    %240 = vmatpush1.msra.mxu0 0.0
    %241 = vmatprep.subr.mxu0 0.0
    %242 = vmatpush1.msra.mxu0 0.0
    %243 = vmatprep.subr.mxu0 0.0
    %244 = vmatpush1.msra.mxu0 0.0
    %245 = vmatprep.subr.mxu0 0.0
    %246 = vmatpush1.msra.mxu0 0.0
    %247 = vmatprep.subr.mxu0 0.0
    %248 = vmatpush1.msra.mxu0 0.0
    %249 = vmatprep.mubr.f32.mxu0 0.0
    %250 = vmatmul.mubr.f32.gmra.mrb[0].mxu0 %v183
    %v251 = vpop.f32.mrb[0].mxu0
    %v252 = vadd.f32 %v102, %v251
    %v253 = vpop.f32.mrb[0].mxu0
    %254 = vdwg.mxu0
    %255 = vst [vmem:[#allocation2 + $0x8] sm:$0xff] %v252
    %v256 = vld [vmem:[#allocation3] sm:$0xff]
    %258 = vrot.lane.b32.xlu0 %v256, 96
    %v259 = vpop.permute.xlu0 %258
    %v260 = vsel %vm104, %v259, 0
    %262 = vmatprep.subr.mxu0 0.0
    %263 = vmatpush1.msra.mxu0 %v79
    %264 = vmatprep.subr.mxu0 0.0
    %265 = vmatpush1.msra.mxu0 %v80
    %266 = vmatprep.subr.mxu0 0.0
    %267 = vmatpush1.msra.mxu0 0.0
    %268 = vmatprep.subr.mxu0 0.0
    %269 = vmatpush1.msra.mxu0 0.0
    %270 = vmatprep.subr.mxu0 0.0
    %271 = vmatpush1.msra.mxu0 0.0
    %272 = vmatprep.subr.mxu0 0.0
    %273 = vmatpush1.msra.mxu0 0.0
    %274 = vmatprep.subr.mxu0 0.0
    %275 = vmatpush1.msra.mxu0 0.0
    %276 = vmatprep.subr.mxu0 0.0
    %277 = vmatpush1.msra.mxu0 0.0
    %278 = vmatprep.subr.mxu0 0.0
    %279 = vmatpush1.msra.mxu0 0.0
    %280 = vmatprep.subr.mxu0 0.0
    %281 = vmatpush1.msra.mxu0 0.0
    %282 = vmatprep.subr.mxu0 0.0
    %283 = vmatpush1.msra.mxu0 0.0
    %284 = vmatprep.subr.mxu0 0.0
    %285 = vmatpush1.msra.mxu0 0.0
    %286 = vmatprep.subr.mxu0 0.0
    %287 = vmatpush1.msra.mxu0 0.0
    %288 = vmatprep.subr.mxu0 0.0
    %289 = vmatpush1.msra.mxu0 0.0
    %290 = vmatprep.subr.mxu0 0.0
    %291 = vmatpush1.msra.mxu0 0.0
    %292 = vmatprep.subr.mxu0 0.0
    %293 = vmatpush1.msra.mxu0 0.0
    %294 = vmatprep.subr.mxu0 0.0
    %295 = vmatpush1.msra.mxu0 0.0
    %296 = vmatprep.subr.mxu0 0.0
    %297 = vmatpush1.msra.mxu0 0.0
    %298 = vmatprep.subr.mxu0 0.0
    %299 = vmatpush1.msra.mxu0 0.0
    %300 = vmatprep.subr.mxu0 0.0
    %301 = vmatpush1.msra.mxu0 0.0
    %302 = vmatprep.subr.mxu0 0.0
    %303 = vmatpush1.msra.mxu0 0.0
    %304 = vmatprep.subr.mxu0 0.0
    %305 = vmatpush1.msra.mxu0 0.0
    %306 = vmatprep.subr.mxu0 0.0
    %307 = vmatpush1.msra.mxu0 0.0
    %308 = vmatprep.subr.mxu0 0.0
    %309 = vmatpush1.msra.mxu0 0.0
    %310 = vmatprep.subr.mxu0 0.0
    %311 = vmatpush1.msra.mxu0 0.0
    %312 = vmatprep.subr.mxu0 0.0
    %313 = vmatpush1.msra.mxu0 0.0
    %314 = vmatprep.subr.mxu0 0.0
    %315 = vmatpush1.msra.mxu0 0.0
    %316 = vmatprep.subr.mxu0 0.0
    %317 = vmatpush1.msra.mxu0 0.0
    %318 = vmatprep.subr.mxu0 0.0
    %319 = vmatpush1.msra.mxu0 0.0
    %320 = vmatprep.subr.mxu0 0.0
    %321 = vmatpush1.msra.mxu0 0.0
    %322 = vmatprep.subr.mxu0 0.0
    %323 = vmatpush1.msra.mxu0 0.0
    %324 = vmatprep.subr.mxu0 0.0
    %325 = vmatpush1.msra.mxu0 0.0
    %326 = vmatprep.mubr.f32.mxu0 0.0
    %327 = vmatmul.mubr.f32.gmra.mrb[0].mxu0 %v260
    %v328 = vpop.f32.mrb[0].mxu0
    %v329 = vadd.f32 %v102, %v328
    %v330 = vpop.f32.mrb[0].mxu0
    %331 = vdwg.mxu0
    %332 = vst [vmem:[#allocation2 + $0x10] sm:$0xff] %v329
    %v333 = vld [vmem:[#allocation3] sm:$0xff]
    %335 = vrot.lane.b32.xlu0 %v333, 80
    %v336 = vpop.permute.xlu0 %335
    %v337 = vsel %vm104, %v336, 0
    %339 = vmatprep.subr.mxu0 0.0
    %340 = vmatpush1.msra.mxu0 %v79
    %341 = vmatprep.subr.mxu0 0.0
    %342 = vmatpush1.msra.mxu0 %v80
    %343 = vmatprep.subr.mxu0 0.0
    %344 = vmatpush1.msra.mxu0 0.0
    %345 = vmatprep.subr.mxu0 0.0
    %346 = vmatpush1.msra.mxu0 0.0
    %347 = vmatprep.subr.mxu0 0.0
    %348 = vmatpush1.msra.mxu0 0.0
    %349 = vmatprep.subr.mxu0 0.0
    %350 = vmatpush1.msra.mxu0 0.0
    %351 = vmatprep.subr.mxu0 0.0
    %352 = vmatpush1.msra.mxu0 0.0
    %353 = vmatprep.subr.mxu0 0.0
    %354 = vmatpush1.msra.mxu0 0.0
    %355 = vmatprep.subr.mxu0 0.0
    %356 = vmatpush1.msra.mxu0 0.0
    %357 = vmatprep.subr.mxu0 0.0
    %358 = vmatpush1.msra.mxu0 0.0
    %359 = vmatprep.subr.mxu0 0.0
    %360 = vmatpush1.msra.mxu0 0.0
    %361 = vmatprep.subr.mxu0 0.0
    %362 = vmatpush1.msra.mxu0 0.0
    %363 = vmatprep.subr.mxu0 0.0
    %364 = vmatpush1.msra.mxu0 0.0
    %365 = vmatprep.subr.mxu0 0.0
    %366 = vmatpush1.msra.mxu0 0.0
    %367 = vmatprep.subr.mxu0 0.0
    %368 = vmatpush1.msra.mxu0 0.0
    %369 = vmatprep.subr.mxu0 0.0
    %370 = vmatpush1.msra.mxu0 0.0
    %371 = vmatprep.subr.mxu0 0.0
    %372 = vmatpush1.msra.mxu0 0.0
    %373 = vmatprep.subr.mxu0 0.0
    %374 = vmatpush1.msra.mxu0 0.0
    %375 = vmatprep.subr.mxu0 0.0
    %376 = vmatpush1.msra.mxu0 0.0
    %377 = vmatprep.subr.mxu0 0.0
    %378 = vmatpush1.msra.mxu0 0.0
    %379 = vmatprep.subr.mxu0 0.0
    %380 = vmatpush1.msra.mxu0 0.0
    %381 = vmatprep.subr.mxu0 0.0
    %382 = vmatpush1.msra.mxu0 0.0
    %383 = vmatprep.subr.mxu0 0.0
    %384 = vmatpush1.msra.mxu0 0.0
    %385 = vmatprep.subr.mxu0 0.0
    %386 = vmatpush1.msra.mxu0 0.0
    %387 = vmatprep.subr.mxu0 0.0
    %388 = vmatpush1.msra.mxu0 0.0
    %389 = vmatprep.subr.mxu0 0.0
    %390 = vmatpush1.msra.mxu0 0.0
    %391 = vmatprep.subr.mxu0 0.0
    %392 = vmatpush1.msra.mxu0 0.0
    %393 = vmatprep.subr.mxu0 0.0
    %394 = vmatpush1.msra.mxu0 0.0
    %395 = vmatprep.subr.mxu0 0.0
    %396 = vmatpush1.msra.mxu0 0.0
    %397 = vmatprep.subr.mxu0 0.0
    %398 = vmatpush1.msra.mxu0 0.0
    %399 = vmatprep.subr.mxu0 0.0
    %400 = vmatpush1.msra.mxu0 0.0
    %401 = vmatprep.subr.mxu0 0.0
    %402 = vmatpush1.msra.mxu0 0.0
    %403 = vmatprep.mubr.f32.mxu0 0.0
    %404 = vmatmul.mubr.f32.gmra.mrb[0].mxu0 %v337
    %v405 = vpop.f32.mrb[0].mxu0
    %v406 = vadd.f32 %v102, %v405
    %v407 = vpop.f32.mrb[0].mxu0
    %408 = vdwg.mxu0
    %409 = vst [vmem:[#allocation2 + $0x18] sm:$0xff] %v406
    %v410 = vld [vmem:[#allocation3] sm:$0xff]
    %412 = vrot.lane.b32.xlu0 %v410, 64
    %v413 = vpop.permute.xlu0 %412
    %v414 = vsel %vm104, %v413, 0
    %416 = vmatprep.subr.mxu0 0.0
    %417 = vmatpush1.msra.mxu0 %v79
    %418 = vmatprep.subr.mxu0 0.0
    %419 = vmatpush1.msra.mxu0 %v80
    %420 = vmatprep.subr.mxu0 0.0
    %421 = vmatpush1.msra.mxu0 0.0
    %422 = vmatprep.subr.mxu0 0.0
    %423 = vmatpush1.msra.mxu0 0.0
    %424 = vmatprep.subr.mxu0 0.0
    %425 = vmatpush1.msra.mxu0 0.0
    %426 = vmatprep.subr.mxu0 0.0
    %427 = vmatpush1.msra.mxu0 0.0
    %428 = vmatprep.subr.mxu0 0.0
    %429 = vmatpush1.msra.mxu0 0.0
    %430 = vmatprep.subr.mxu0 0.0
    %431 = vmatpush1.msra.mxu0 0.0
    %432 = vmatprep.subr.mxu0 0.0
    %433 = vmatpush1.msra.mxu0 0.0
    %434 = vmatprep.subr.mxu0 0.0
    %435 = vmatpush1.msra.mxu0 0.0
    %436 = vmatprep.subr.mxu0 0.0
    %437 = vmatpush1.msra.mxu0 0.0
    %438 = vmatprep.subr.mxu0 0.0
    %439 = vmatpush1.msra.mxu0 0.0
    %440 = vmatprep.subr.mxu0 0.0
    %441 = vmatpush1.msra.mxu0 0.0
    %442 = vmatprep.subr.mxu0 0.0
    %443 = vmatpush1.msra.mxu0 0.0
    %444 = vmatprep.subr.mxu0 0.0
    %445 = vmatpush1.msra.mxu0 0.0
    %446 = vmatprep.subr.mxu0 0.0
    %447 = vmatpush1.msra.mxu0 0.0
    %448 = vmatprep.subr.mxu0 0.0
    %449 = vmatpush1.msra.mxu0 0.0
    %450 = vmatprep.subr.mxu0 0.0
    %451 = vmatpush1.msra.mxu0 0.0
    %452 = vmatprep.subr.mxu0 0.0
    %453 = vmatpush1.msra.mxu0 0.0
    %454 = vmatprep.subr.mxu0 0.0
    %455 = vmatpush1.msra.mxu0 0.0
    %456 = vmatprep.subr.mxu0 0.0
    %457 = vmatpush1.msra.mxu0 0.0
    %458 = vmatprep.subr.mxu0 0.0
    %459 = vmatpush1.msra.mxu0 0.0
    %460 = vmatprep.subr.mxu0 0.0
    %461 = vmatpush1.msra.mxu0 0.0
    %462 = vmatprep.subr.mxu0 0.0
    %463 = vmatpush1.msra.mxu0 0.0
    %464 = vmatprep.subr.mxu0 0.0
    %465 = vmatpush1.msra.mxu0 0.0
    %466 = vmatprep.subr.mxu0 0.0
    %467 = vmatpush1.msra.mxu0 0.0
    %468 = vmatprep.subr.mxu0 0.0
    %469 = vmatpush1.msra.mxu0 0.0
    %470 = vmatprep.subr.mxu0 0.0
    %471 = vmatpush1.msra.mxu0 0.0
    %472 = vmatprep.subr.mxu0 0.0
    %473 = vmatpush1.msra.mxu0 0.0
    %474 = vmatprep.subr.mxu0 0.0
    %475 = vmatpush1.msra.mxu0 0.0
    %476 = vmatprep.subr.mxu0 0.0
    %477 = vmatpush1.msra.mxu0 0.0
    %478 = vmatprep.subr.mxu0 0.0
    %479 = vmatpush1.msra.mxu0 0.0
    %480 = vmatprep.mubr.f32.mxu0 0.0
    %481 = vmatmul.mubr.f32.gmra.mrb[0].mxu0 %v414
    %v482 = vpop.f32.mrb[0].mxu0
    %v483 = vadd.f32 %v102, %v482
    %v484 = vpop.f32.mrb[0].mxu0
    %485 = vdwg.mxu0
    %486 = vst [vmem:[#allocation2 + $0x20] sm:$0xff] %v483
    %v487 = vld [vmem:[#allocation3] sm:$0xff]
    %489 = vrot.lane.b32.xlu0 %v487, 48
    %v490 = vpop.permute.xlu0 %489
    %v491 = vsel %vm104, %v490, 0
    %493 = vmatprep.subr.mxu0 0.0
    %494 = vmatpush1.msra.mxu0 %v79
    %495 = vmatprep.subr.mxu0 0.0
    %496 = vmatpush1.msra.mxu0 %v80
    %497 = vmatprep.subr.mxu0 0.0
    %498 = vmatpush1.msra.mxu0 0.0
    %499 = vmatprep.subr.mxu0 0.0
    %500 = vmatpush1.msra.mxu0 0.0
    %501 = vmatprep.subr.mxu0 0.0
    %502 = vmatpush1.msra.mxu0 0.0
    %503 = vmatprep.subr.mxu0 0.0
    %504 = vmatpush1.msra.mxu0 0.0
    %505 = vmatprep.subr.mxu0 0.0
    %506 = vmatpush1.msra.mxu0 0.0
    %507 = vmatprep.subr.mxu0 0.0
    %508 = vmatpush1.msra.mxu0 0.0
    %509 = vmatprep.subr.mxu0 0.0
    %510 = vmatpush1.msra.mxu0 0.0
    %511 = vmatprep.subr.mxu0 0.0
    %512 = vmatpush1.msra.mxu0 0.0
    %513 = vmatprep.subr.mxu0 0.0
    %514 = vmatpush1.msra.mxu0 0.0
    %515 = vmatprep.subr.mxu0 0.0
    %516 = vmatpush1.msra.mxu0 0.0
    %517 = vmatprep.subr.mxu0 0.0
    %518 = vmatpush1.msra.mxu0 0.0
    %519 = vmatprep.subr.mxu0 0.0
    %520 = vmatpush1.msra.mxu0 0.0
    %521 = vmatprep.subr.mxu0 0.0
    %522 = vmatpush1.msra.mxu0 0.0
    %523 = vmatprep.subr.mxu0 0.0
    %524 = vmatpush1.msra.mxu0 0.0
    %525 = vmatprep.subr.mxu0 0.0
    %526 = vmatpush1.msra.mxu0 0.0
    %527 = vmatprep.subr.mxu0 0.0
    %528 = vmatpush1.msra.mxu0 0.0
    %529 = vmatprep.subr.mxu0 0.0
    %530 = vmatpush1.msra.mxu0 0.0
    %531 = vmatprep.subr.mxu0 0.0
    %532 = vmatpush1.msra.mxu0 0.0
    %533 = vmatprep.subr.mxu0 0.0
    %534 = vmatpush1.msra.mxu0 0.0
    %535 = vmatprep.subr.mxu0 0.0
    %536 = vmatpush1.msra.mxu0 0.0
    %537 = vmatprep.subr.mxu0 0.0
    %538 = vmatpush1.msra.mxu0 0.0
    %539 = vmatprep.subr.mxu0 0.0
    %540 = vmatpush1.msra.mxu0 0.0
    %541 = vmatprep.subr.mxu0 0.0
    %542 = vmatpush1.msra.mxu0 0.0
    %543 = vmatprep.subr.mxu0 0.0
    %544 = vmatpush1.msra.mxu0 0.0
    %545 = vmatprep.subr.mxu0 0.0
    %546 = vmatpush1.msra.mxu0 0.0
    %547 = vmatprep.subr.mxu0 0.0
    %548 = vmatpush1.msra.mxu0 0.0
    %549 = vmatprep.subr.mxu0 0.0
    %550 = vmatpush1.msra.mxu0 0.0
    %551 = vmatprep.subr.mxu0 0.0
    %552 = vmatpush1.msra.mxu0 0.0
    %553 = vmatprep.subr.mxu0 0.0
    %554 = vmatpush1.msra.mxu0 0.0
    %555 = vmatprep.subr.mxu0 0.0
    %556 = vmatpush1.msra.mxu0 0.0
    %557 = vmatprep.mubr.f32.mxu0 0.0
    %558 = vmatmul.mubr.f32.gmra.mrb[0].mxu0 %v491
    %v559 = vpop.f32.mrb[0].mxu0
    %v560 = vadd.f32 %v102, %v559
    %v561 = vpop.f32.mrb[0].mxu0
    %562 = vdwg.mxu0
    %563 = vst [vmem:[#allocation2 + $0x28] sm:$0xff] %v560
    %v564 = vld [vmem:[#allocation3] sm:$0xff]
    %566 = vrot.lane.b32.xlu0 %v564, 32
    %v567 = vpop.permute.xlu0 %566
    %v568 = vsel %vm104, %v567, 0
    %570 = vmatprep.subr.mxu0 0.0
    %571 = vmatpush1.msra.mxu0 %v79
    %572 = vmatprep.subr.mxu0 0.0
    %573 = vmatpush1.msra.mxu0 %v80
    %574 = vmatprep.subr.mxu0 0.0
    %575 = vmatpush1.msra.mxu0 0.0
    %576 = vmatprep.subr.mxu0 0.0
    %577 = vmatpush1.msra.mxu0 0.0
    %578 = vmatprep.subr.mxu0 0.0
    %579 = vmatpush1.msra.mxu0 0.0
    %580 = vmatprep.subr.mxu0 0.0
    %581 = vmatpush1.msra.mxu0 0.0
    %582 = vmatprep.subr.mxu0 0.0
    %583 = vmatpush1.msra.mxu0 0.0
    %584 = vmatprep.subr.mxu0 0.0
    %585 = vmatpush1.msra.mxu0 0.0
    %586 = vmatprep.subr.mxu0 0.0
    %587 = vmatpush1.msra.mxu0 0.0
    %588 = vmatprep.subr.mxu0 0.0
    %589 = vmatpush1.msra.mxu0 0.0
    %590 = vmatprep.subr.mxu0 0.0
    %591 = vmatpush1.msra.mxu0 0.0
    %592 = vmatprep.subr.mxu0 0.0
    %593 = vmatpush1.msra.mxu0 0.0
    %594 = vmatprep.subr.mxu0 0.0
    %595 = vmatpush1.msra.mxu0 0.0
    %596 = vmatprep.subr.mxu0 0.0
    %597 = vmatpush1.msra.mxu0 0.0
    %598 = vmatprep.subr.mxu0 0.0
    %599 = vmatpush1.msra.mxu0 0.0
    %600 = vmatprep.subr.mxu0 0.0
    %601 = vmatpush1.msra.mxu0 0.0
    %602 = vmatprep.subr.mxu0 0.0
    %603 = vmatpush1.msra.mxu0 0.0
    %604 = vmatprep.subr.mxu0 0.0
    %605 = vmatpush1.msra.mxu0 0.0
    %606 = vmatprep.subr.mxu0 0.0
    %607 = vmatpush1.msra.mxu0 0.0
    %608 = vmatprep.subr.mxu0 0.0
    %609 = vmatpush1.msra.mxu0 0.0
    %610 = vmatprep.subr.mxu0 0.0
    %611 = vmatpush1.msra.mxu0 0.0
    %612 = vmatprep.subr.mxu0 0.0
    %613 = vmatpush1.msra.mxu0 0.0
    %614 = vmatprep.subr.mxu0 0.0
    %615 = vmatpush1.msra.mxu0 0.0
    %616 = vmatprep.subr.mxu0 0.0
    %617 = vmatpush1.msra.mxu0 0.0
    %618 = vmatprep.subr.mxu0 0.0
    %619 = vmatpush1.msra.mxu0 0.0
    %620 = vmatprep.subr.mxu0 0.0
    %621 = vmatpush1.msra.mxu0 0.0
    %622 = vmatprep.subr.mxu0 0.0
    %623 = vmatpush1.msra.mxu0 0.0
    %624 = vmatprep.subr.mxu0 0.0
    %625 = vmatpush1.msra.mxu0 0.0
    %626 = vmatprep.subr.mxu0 0.0
    %627 = vmatpush1.msra.mxu0 0.0
    %628 = vmatprep.subr.mxu0 0.0
    %629 = vmatpush1.msra.mxu0 0.0
    %630 = vmatprep.subr.mxu0 0.0
    %631 = vmatpush1.msra.mxu0 0.0
    %632 = vmatprep.subr.mxu0 0.0
    %633 = vmatpush1.msra.mxu0 0.0
    %634 = vmatprep.mubr.f32.mxu0 0.0
    %635 = vmatmul.mubr.f32.gmra.mrb[0].mxu0 %v568
    %v636 = vpop.f32.mrb[0].mxu0
    %v637 = vadd.f32 %v102, %v636
    %v638 = vpop.f32.mrb[0].mxu0
    %639 = vdwg.mxu0
    %640 = vst [vmem:[#allocation2 + $0x30] sm:$0xff] %v637
    %v641 = vld [vmem:[#allocation3] sm:$0xff]
    %643 = vrot.lane.b32.xlu0 %v641, 16
    %v644 = vpop.permute.xlu0 %643
    %v645 = vsel %vm104, %v644, 0
    %647 = vmatprep.subr.mxu0 0.0
    %648 = vmatpush1.msra.mxu0 %v79
    %649 = vmatprep.subr.mxu0 0.0
    %650 = vmatpush1.msra.mxu0 %v80
    %651 = vmatprep.subr.mxu0 0.0
    %652 = vmatpush1.msra.mxu0 0.0
    %653 = vmatprep.subr.mxu0 0.0
    %654 = vmatpush1.msra.mxu0 0.0
    %655 = vmatprep.subr.mxu0 0.0
    %656 = vmatpush1.msra.mxu0 0.0
    %657 = vmatprep.subr.mxu0 0.0
    %658 = vmatpush1.msra.mxu0 0.0
    %659 = vmatprep.subr.mxu0 0.0
    %660 = vmatpush1.msra.mxu0 0.0
    %661 = vmatprep.subr.mxu0 0.0
    %662 = vmatpush1.msra.mxu0 0.0
    %663 = vmatprep.subr.mxu0 0.0
    %664 = vmatpush1.msra.mxu0 0.0
    %665 = vmatprep.subr.mxu0 0.0
    %666 = vmatpush1.msra.mxu0 0.0
    %667 = vmatprep.subr.mxu0 0.0
    %668 = vmatpush1.msra.mxu0 0.0
    %669 = vmatprep.subr.mxu0 0.0
    %670 = vmatpush1.msra.mxu0 0.0
    %671 = vmatprep.subr.mxu0 0.0
    %672 = vmatpush1.msra.mxu0 0.0
    %673 = vmatprep.subr.mxu0 0.0
    %674 = vmatpush1.msra.mxu0 0.0
    %675 = vmatprep.subr.mxu0 0.0
    %676 = vmatpush1.msra.mxu0 0.0
    %677 = vmatprep.subr.mxu0 0.0
    %678 = vmatpush1.msra.mxu0 0.0
    %679 = vmatprep.subr.mxu0 0.0
    %680 = vmatpush1.msra.mxu0 0.0
    %681 = vmatprep.subr.mxu0 0.0
    %682 = vmatpush1.msra.mxu0 0.0
    %683 = vmatprep.subr.mxu0 0.0
    %684 = vmatpush1.msra.mxu0 0.0
    %685 = vmatprep.subr.mxu0 0.0
    %686 = vmatpush1.msra.mxu0 0.0
    %687 = vmatprep.subr.mxu0 0.0
    %688 = vmatpush1.msra.mxu0 0.0
    %689 = vmatprep.subr.mxu0 0.0
    %690 = vmatpush1.msra.mxu0 0.0
    %691 = vmatprep.subr.mxu0 0.0
    %692 = vmatpush1.msra.mxu0 0.0
    %693 = vmatprep.subr.mxu0 0.0
    %694 = vmatpush1.msra.mxu0 0.0
    %695 = vmatprep.subr.mxu0 0.0
    %696 = vmatpush1.msra.mxu0 0.0
    %697 = vmatprep.subr.mxu0 0.0
    %698 = vmatpush1.msra.mxu0 0.0
    %699 = vmatprep.subr.mxu0 0.0
    %700 = vmatpush1.msra.mxu0 0.0
    %701 = vmatprep.subr.mxu0 0.0
    %702 = vmatpush1.msra.mxu0 0.0
    %703 = vmatprep.subr.mxu0 0.0
    %704 = vmatpush1.msra.mxu0 0.0
    %705 = vmatprep.subr.mxu0 0.0
    %706 = vmatpush1.msra.mxu0 0.0
    %707 = vmatprep.subr.mxu0 0.0
    %708 = vmatpush1.msra.mxu0 0.0
    %709 = vmatprep.subr.mxu0 0.0
    %710 = vmatpush1.msra.mxu0 0.0
    %711 = vmatprep.mubr.f32.mxu0 0.0
    %712 = vmatmul.mubr.f32.gmra.mrb[0].mxu0 %v645
    %v713 = vpop.f32.mrb[0].mxu0
    %v714 = vadd.f32 %v102, %v713
    %v715 = vpop.f32.mrb[0].mxu0
    %716 = vdwg.mxu0
    %717 = vst [vmem:[#allocation2 + $0x38] sm:$0xff] %v714
    %v718 = vld [vmem:[#allocation2] sm:$0xff]
    %vm719 = vcmask 261120
    %v721 = vsel %vm719, 0.0, 0
    %723 = vmatprep.subr.mxu0 0.0
    %724 = vmatpush1.msra.mxu0 %v81
    %725 = vmatprep.subr.mxu0 0.0
    %726 = vmatpush1.msra.mxu0 %v82
    %727 = vmatprep.subr.mxu0 0.0
    %728 = vmatpush1.msra.mxu0 %v83
    %729 = vmatprep.subr.mxu0 0.0
    %730 = vmatpush1.msra.mxu0 %v84
    %731 = vmatprep.subr.mxu0 0.0
    %732 = vmatpush1.msra.mxu0 0.0
    %733 = vmatprep.subr.mxu0 0.0
    %734 = vmatpush1.msra.mxu0 0.0
    %735 = vmatprep.subr.mxu0 0.0
    %736 = vmatpush1.msra.mxu0 0.0
    %737 = vmatprep.subr.mxu0 0.0
    %738 = vmatpush1.msra.mxu0 0.0
    %739 = vmatprep.subr.mxu0 0.0
    %740 = vmatpush1.msra.mxu0 0.0
    %741 = vmatprep.subr.mxu0 0.0
    %742 = vmatpush1.msra.mxu0 0.0
    %743 = vmatprep.subr.mxu0 0.0
    %744 = vmatpush1.msra.mxu0 0.0
    %745 = vmatprep.subr.mxu0 0.0
    %746 = vmatpush1.msra.mxu0 0.0
    %747 = vmatprep.subr.mxu0 0.0
    %748 = vmatpush1.msra.mxu0 0.0
    %749 = vmatprep.subr.mxu0 0.0
    %750 = vmatpush1.msra.mxu0 0.0
    %751 = vmatprep.subr.mxu0 0.0
    %752 = vmatpush1.msra.mxu0 0.0
    %753 = vmatprep.subr.mxu0 0.0
    %754 = vmatpush1.msra.mxu0 0.0
    %755 = vmatprep.subr.mxu0 0.0
    %756 = vmatpush1.msra.mxu0 0.0
    %757 = vmatprep.subr.mxu0 0.0
    %758 = vmatpush1.msra.mxu0 0.0
    %759 = vmatprep.subr.mxu0 0.0
    %760 = vmatpush1.msra.mxu0 0.0
    %761 = vmatprep.subr.mxu0 0.0
    %762 = vmatpush1.msra.mxu0 0.0
    %763 = vmatprep.subr.mxu0 0.0
    %764 = vmatpush1.msra.mxu0 0.0
    %765 = vmatprep.subr.mxu0 0.0
    %766 = vmatpush1.msra.mxu0 0.0
    %767 = vmatprep.subr.mxu0 0.0
    %768 = vmatpush1.msra.mxu0 0.0
    %769 = vmatprep.subr.mxu0 0.0
    %770 = vmatpush1.msra.mxu0 0.0
    %771 = vmatprep.subr.mxu0 0.0
    %772 = vmatpush1.msra.mxu0 0.0
    %773 = vmatprep.subr.mxu0 0.0
    %774 = vmatpush1.msra.mxu0 0.0
    %775 = vmatprep.subr.mxu0 0.0
    %776 = vmatpush1.msra.mxu0 0.0
    %777 = vmatprep.subr.mxu0 0.0
    %778 = vmatpush1.msra.mxu0 0.0
    %779 = vmatprep.subr.mxu0 0.0
    %780 = vmatpush1.msra.mxu0 0.0
    %781 = vmatprep.subr.mxu0 0.0
    %782 = vmatpush1.msra.mxu0 0.0
    %783 = vmatprep.subr.mxu0 0.0
    %784 = vmatpush1.msra.mxu0 0.0
    %785 = vmatprep.subr.mxu0 0.0
    %786 = vmatpush1.msra.mxu0 0.0
    %787 = vmatprep.mubr.f32.mxu0 0.0
    %788 = vmatmul.mubr.f32.gmra.mrb[0].mxu0 %v721
    %v789 = vpop.f32.mrb[0].mxu0
    %v790 = vadd.f32 0.0, %v789
    %v791 = vpop.f32.mrb[0].mxu0
    %792 = vdwg.mxu0
    %v793 = vadd.f32 %v718, %v790
    %v794 = vxor.u32 %v793, 2147483648
    %v795 = vmul.f32 %v794, 1.442695
    %v796 = vpow.pop %v795
    %v797 = vadd.f32 %v796, 1.0
    %v798 = vrcp.pop %v797
    %v799 = vmul.f32 1.0, %v798
    %v800 = vtanh.pop %v793
    %v801 = vmul.f32 %v799, 0.0
    %803 = vrot.lane.b32.xlu0 %v800, 64
    %v804 = vpop.permute.xlu0 %803
    %v806 = vmul.f32 %v799, %v804
    %808 = vrot.lane.b32.xlu0 %v806, 32
    %v809 = vpop.permute.xlu0 %808
    %v811 = vadd.f32 %v801, %v809
    %v813 = vlaneseq
    %v814 = vshrl.u32 %v813, 7
    %v815 = vsub.s32 0, %v814
    %v816 = vrot.slane %v90, %v815
    %819 = vrot.lane.b32.xlu0 %v811, 96
    %v820 = vpop.permute.xlu0 %819
    %v821 = vsel %vm719, %v820, 0
    %823 = vmatprep.subr.mxu0 0.0
    %824 = vmatpush1.msra.mxu0 %v86
    %825 = vmatprep.subr.mxu0 0.0
    %826 = vmatpush1.msra.mxu0 %v87
    %827 = vmatprep.subr.mxu0 0.0
    %828 = vmatpush1.msra.mxu0 %v88
    %829 = vmatprep.subr.mxu0 0.0
    %830 = vmatpush1.msra.mxu0 %v89
    %831 = vmatprep.subr.mxu0 0.0
    %832 = vmatpush1.msra.mxu0 0.0
    %833 = vmatprep.subr.mxu0 0.0
    %834 = vmatpush1.msra.mxu0 0.0
    %835 = vmatprep.subr.mxu0 0.0
    %836 = vmatpush1.msra.mxu0 0.0
    %837 = vmatprep.subr.mxu0 0.0
    %838 = vmatpush1.msra.mxu0 0.0
    %839 = vmatprep.subr.mxu0 0.0
    %840 = vmatpush1.msra.mxu0 0.0
    %841 = vmatprep.subr.mxu0 0.0
    %842 = vmatpush1.msra.mxu0 0.0
    %843 = vmatprep.subr.mxu0 0.0
    %844 = vmatpush1.msra.mxu0 0.0
    %845 = vmatprep.subr.mxu0 0.0
    %846 = vmatpush1.msra.mxu0 0.0
    %847 = vmatprep.subr.mxu0 0.0
    %848 = vmatpush1.msra.mxu0 0.0
    %849 = vmatprep.subr.mxu0 0.0
    %850 = vmatpush1.msra.mxu0 0.0
    %851 = vmatprep.subr.mxu0 0.0
    %852 = vmatpush1.msra.mxu0 0.0
    %853 = vmatprep.subr.mxu0 0.0
    %854 = vmatpush1.msra.mxu0 0.0
    %855 = vmatprep.subr.mxu0 0.0
    %856 = vmatpush1.msra.mxu0 0.0
    %857 = vmatprep.subr.mxu0 0.0
    %858 = vmatpush1.msra.mxu0 0.0
    %859 = vmatprep.subr.mxu0 0.0
    %860 = vmatpush1.msra.mxu0 0.0
    %861 = vmatprep.subr.mxu0 0.0
    %862 = vmatpush1.msra.mxu0 0.0
    %863 = vmatprep.subr.mxu0 0.0
    %864 = vmatpush1.msra.mxu0 0.0
    %865 = vmatprep.subr.mxu0 0.0
    %866 = vmatpush1.msra.mxu0 0.0
    %867 = vmatprep.subr.mxu0 0.0
    %868 = vmatpush1.msra.mxu0 0.0
    %869 = vmatprep.subr.mxu0 0.0
    %870 = vmatpush1.msra.mxu0 0.0
    %871 = vmatprep.subr.mxu0 0.0
    %872 = vmatpush1.msra.mxu0 0.0
    %873 = vmatprep.subr.mxu0 0.0
    %874 = vmatpush1.msra.mxu0 0.0
    %875 = vmatprep.subr.mxu0 0.0
    %876 = vmatpush1.msra.mxu0 0.0
    %877 = vmatprep.subr.mxu0 0.0
    %878 = vmatpush1.msra.mxu0 0.0
    %879 = vmatprep.subr.mxu0 0.0
    %880 = vmatpush1.msra.mxu0 0.0
    %881 = vmatprep.subr.mxu0 0.0
    %882 = vmatpush1.msra.mxu0 0.0
    %883 = vmatprep.subr.mxu0 0.0
    %884 = vmatpush1.msra.mxu0 0.0
    %885 = vmatprep.subr.mxu0 0.0
    %886 = vmatpush1.msra.mxu0 0.0
    %887 = vmatprep.mubr.f32.mxu0 0.0
    %888 = vmatmul.mubr.f32.gmra.mrb[0].mxu0 %v821
    %v889 = vpop.f32.mrb[0].mxu0
    %v890 = vadd.f32 %v816, %v889
    %v891 = vpop.f32.mrb[0].mxu0
    %892 = vdwg.mxu0
    %v893 = vtanh.pop %v890
    %v894 = vmul.f32 %v893, 3.1415927
    %v895 = vmul.f32 %v894, 0.5
    %v896 = vand.u32 2147483647, %v895
    %vm897 = vcmp.le.f32.partialorder %v896, 0.7853982
    %vm898 = vcmp.lt.s32.totalorder %v895, 0
    %v899 = vand.u32 %v895, 2139095040
    %v900 = vshrl.u32 %v899, 23
    %v901 = vsub.s32 %v900, 127
    %v902 = vand.u32 2147483647, %v895
    %v903 = vand.u32 %v902, 8388607
    %v904 = vor.u32 %v903, 8388608
    %v905 = vsub.s32 0, %v904
    %v906 = vadd.s32 %v901, 1
    %vm907 = vcmp.gt.s32.totalorder %v906, 0
    %v908 = vsel %vm907, %v906, 0
    %v909 = vshrl.u32 %v908, 5
    %v910 = vand.u32 %v908, 31
    %v911 = vsub.s32 32, %v910
    %v912 = vshrl.u32 683565275, %v911
    %v913 = vshll.u32 683565275, %v910
    %v914 = vshrl.u32 2475754826, %v911
    %v915 = vor.u32 %v913, %v914
    %v916 = vshll.u32 2475754826, %v910
    %v917 = vshrl.u32 2131351028, %v911
    %v918 = vor.u32 %v916, %v917
    %v919 = vshll.u32 2131351028, %v910
    %v920 = vshrl.u32 2102212464, %v911
    %v921 = vor.u32 %v919, %v920
    %v922 = vshll.u32 2102212464, %v910
    %v923 = vshrl.u32 920167782, %v911
    %v924 = vor.u32 %v922, %v923
    %v925 = vshll.u32 920167782, %v910
    %v926 = vshrl.u32 1326507024, %v911
    %v927 = vor.u32 %v925, %v926
    %vm928 = vcmp.lt.s32.totalorder %v909, 1
    %vm929 = vcmp.lt.s32.totalorder %v909, 2
    %vm930 = vcmp.lt.s32.totalorder %v909, 3
    %vm931 = vcmp.lt.s32.totalorder %v909, 4
    %v932 = vsel %vm928, %v912, %v915
    %v933 = vsel %vm931, %v921, 2102212464
    %v934 = vsel %vm930, %v918, %v933
    %v935 = vsel %vm929, %v932, %v934
    %v936 = vsel %vm928, %v915, %v918
    %v937 = vsel %vm931, %v924, 920167782
    %v938 = vsel %vm930, %v921, %v937
    %v939 = vsel %vm929, %v936, %v938
    %v940 = vsel %vm928, %v918, %v921
    %v941 = vsel %vm931, %v927, 1326507024
    %v942 = vsel %vm930, %v924, %v941
    %v943 = vsel %vm929, %v940, %v942
    %v944 = vshll.u32 %v904, 8
    %v945 = vmul.u32.u64.compose %v944, %v943
    %v946 = vextract.low.u32 %v945
    %v947 = vextract.high.u32 %v945
    %v948 = vmul.u32.u64.compose %v944, %v939
    %v949 = vextract.low.u32 %v948
    %v950 = vextract.high.u32 %v948
    %v951 = vmul.u32 %v944, %v935
    %v952 = vadd.s32 %v947, %v949
    %vm953 = vc.u32 %v947, %v949
    %v954 = vadd.s32 %v950, 1
    %v955 = vsel %vm953, %v954, %v950
    %v956 = vadd.s32 %v951, %v955
    %v957 = vadd.s32 %v956, 536870912
    %v958 = vshrl.u32 %v957, 30
    %v959 = vshll.u32 %v958, 30
    %v960 = vsub.s32 %v956, %v959
    %vm961 = vcmp.lt.s32.totalorder %v960, 0
    %v962 = vsub.s32 0, %v960
    %v963 = vsel %vm961, %v962, %v960
    %v964 = vclz %v963
    %v965 = vsub.s32 %v964, 2
    %vm966 = vcmp.gt.s32.totalorder 0, %v965
    %v967 = vsel %vm966, 0, %v965
    %v968 = vsub.s32 32, %v967
    %v969 = vshll.u32 %v960, %v967
    %v970 = vshrl.u32 %v952, %v968
    %v971 = vor.u32 %v969, %v970
    %v972 = vsub.s32 4294967266, %v967
    %v973 = vadd.s32 %v972, 127
    %v974 = vshll.u32 %v973, 23
    %v975 = vor.u32 4788187, %v974
    %v976 = vand.u32 2147483647, %v975
    %v978 = vcvt.s32.f32 %v971
    %v979 = vmul.f32 %v978, %v976
    %v980 = vxor.u32 %v979, 2147483648
    %v981 = vsel %vm898, %v980, %v979
    %v982 = vsub.s32 4, %v958
    %v983 = vsel %vm898, %v982, %v958
    %v984 = vsel %vm897, %v895, %v981
    %v985 = vsel %vm897, 0, %v983
    %v986 = vcosq.f32.pop %v984
    %v987 = vsinq.f32.pop %v984
    %vm988 = vweird.f32 %v895
    %v989 = vand.u32 %v985, 3
    %vm990 = vcmp.lt.s32.totalorder %v989, 2
    %vm991 = vcmp.eq.s32.totalorder %v989, 0
    %v992 = vxor.u32 %v987, 2147483648
    %v993 = vsel %vm991, %v986, %v992
    %vm994 = vcmp.eq.s32.totalorder %v989, 2
    %v995 = vxor.u32 %v986, 2147483648
    %v996 = vsel %vm994, %v995, %v987
    %v997 = vsel %vm990, %v993, %v996
    %v998 = vsel %vm988, nan, %v997
    %v999 = vand.u32 2147483647, %v895
    %vm1000 = vcmp.le.f32.partialorder %v999, 0.7853982
    %vm1001 = vcmp.lt.s32.totalorder %v895, 0
    %v1002 = vand.u32 %v895, 2139095040
    %v1003 = vshrl.u32 %v1002, 23
    %v1004 = vsub.s32 %v1003, 127
    %v1005 = vand.u32 2147483647, %v895
    %v1006 = vand.u32 %v1005, 8388607
    %v1007 = vor.u32 %v1006, 8388608
    %v1008 = vsub.s32 0, %v1007
    %v1009 = vadd.s32 %v1004, 1
    %vm1010 = vcmp.gt.s32.totalorder %v1009, 0
    %v1011 = vsel %vm1010, %v1009, 0
    %v1012 = vshrl.u32 %v1011, 5
    %v1013 = vand.u32 %v1011, 31
    %v1014 = vsub.s32 32, %v1013
    %v1015 = vshrl.u32 683565275, %v1014
    %v1016 = vshll.u32 683565275, %v1013
    %v1017 = vshrl.u32 2475754826, %v1014
    %v1018 = vor.u32 %v1016, %v1017
    %v1019 = vshll.u32 2475754826, %v1013
    %v1020 = vshrl.u32 2131351028, %v1014
    %v1021 = vor.u32 %v1019, %v1020
    %v1022 = vshll.u32 2131351028, %v1013
    %v1023 = vshrl.u32 2102212464, %v1014
    %v1024 = vor.u32 %v1022, %v1023
    %v1025 = vshll.u32 2102212464, %v1013
    %v1026 = vshrl.u32 920167782, %v1014
    %v1027 = vor.u32 %v1025, %v1026
    %v1028 = vshll.u32 920167782, %v1013
    %v1029 = vshrl.u32 1326507024, %v1014
    %v1030 = vor.u32 %v1028, %v1029
    %vm1031 = vcmp.lt.s32.totalorder %v1012, 1
    %vm1032 = vcmp.lt.s32.totalorder %v1012, 2
    %vm1033 = vcmp.lt.s32.totalorder %v1012, 3
    %vm1034 = vcmp.lt.s32.totalorder %v1012, 4
    %v1035 = vsel %vm1031, %v1015, %v1018
    %v1036 = vsel %vm1034, %v1024, 2102212464
    %v1037 = vsel %vm1033, %v1021, %v1036
    %v1038 = vsel %vm1032, %v1035, %v1037
    %v1039 = vsel %vm1031, %v1018, %v1021
    %v1040 = vsel %vm1034, %v1027, 920167782
    %v1041 = vsel %vm1033, %v1024, %v1040
    %v1042 = vsel %vm1032, %v1039, %v1041
    %v1043 = vsel %vm1031, %v1021, %v1024
    %v1044 = vsel %vm1034, %v1030, 1326507024
    %v1045 = vsel %vm1033, %v1027, %v1044
    %v1046 = vsel %vm1032, %v1043, %v1045
    %v1047 = vshll.u32 %v1007, 8
    %v1048 = vmul.u32.u64.compose %v1047, %v1046
    %v1049 = vextract.low.u32 %v1048
    %v1050 = vextract.high.u32 %v1048
    %v1051 = vmul.u32.u64.compose %v1047, %v1042
    %v1052 = vextract.low.u32 %v1051
    %v1053 = vextract.high.u32 %v1051
    %v1054 = vmul.u32 %v1047, %v1038
    %v1055 = vadd.s32 %v1050, %v1052
    %vm1056 = vc.u32 %v1050, %v1052
    %v1057 = vadd.s32 %v1053, 1
    %v1058 = vsel %vm1056, %v1057, %v1053
    %v1059 = vadd.s32 %v1054, %v1058
    %v1060 = vadd.s32 %v1059, 536870912
    %v1061 = vshrl.u32 %v1060, 30
    %v1062 = vshll.u32 %v1061, 30
    %v1063 = vsub.s32 %v1059, %v1062
    %vm1064 = vcmp.lt.s32.totalorder %v1063, 0
    %v1065 = vsub.s32 0, %v1063
    %v1066 = vsel %vm1064, %v1065, %v1063
    %v1067 = vclz %v1066
    %v1068 = vsub.s32 %v1067, 2
    %vm1069 = vcmp.gt.s32.totalorder 0, %v1068
    %v1070 = vsel %vm1069, 0, %v1068
    %v1071 = vsub.s32 32, %v1070
    %v1072 = vshll.u32 %v1063, %v1070
    %v1073 = vshrl.u32 %v1055, %v1071
    %v1074 = vor.u32 %v1072, %v1073
    %v1075 = vsub.s32 4294967266, %v1070
    %v1076 = vadd.s32 %v1075, 127
    %v1077 = vshll.u32 %v1076, 23
    %v1078 = vor.u32 4788187, %v1077
    %v1079 = vand.u32 2147483647, %v1078
    %v1081 = vcvt.s32.f32 %v1074
    %v1082 = vmul.f32 %v1081, %v1079
    %v1083 = vxor.u32 %v1082, 2147483648
    %v1084 = vsel %vm1001, %v1083, %v1082
    %v1085 = vsub.s32 4, %v1061
    %v1086 = vsel %vm1001, %v1085, %v1061
    %v1087 = vsel %vm1000, %v895, %v1084
    %v1088 = vsel %vm1000, 0, %v1086
    %v1089 = vcosq.f32.pop %v1087
    %v1090 = vsinq.f32.pop %v1087
    %vm1091 = vweird.f32 %v895
    %v1092 = vadd.s32 %v1088, 3
    %v1093 = vand.u32 %v1092, 3
    %vm1094 = vcmp.lt.s32.totalorder %v1093, 2
    %vm1095 = vcmp.eq.s32.totalorder %v1093, 0
    %v1096 = vxor.u32 %v1090, 2147483648
    %v1097 = vsel %vm1095, %v1089, %v1096
    %vm1098 = vcmp.eq.s32.totalorder %v1093, 2
    %v1099 = vxor.u32 %v1089, 2147483648
    %v1100 = vsel %vm1098, %v1099, %v1090
    %v1101 = vsel %vm1094, %v1097, %v1100
    %v1102 = vsel %vm1091, nan, %v1101
    %1104 = vrot.lane.b32.xlu0 %v1102, 4
    %v1105 = vpop.permute.xlu0 %1104
    %vm1107 = vcmask 31744
    %v1108 = vsel %vm1107, %v998, %v1105
    %vm1109 = vcmask 64512
    %v1111 = vsel %vm1109, %v1108, 0
    %1113 = vmatprep.subr.mxu0 0.0
    %1114 = vmatpush1.msra.mxu0 %v96
    %1115 = vmatprep.subr.mxu0 0.0
    %1116 = vmatpush1.msra.mxu0 0.0
    %1117 = vmatprep.subr.mxu0 0.0
    %1118 = vmatpush1.msra.mxu0 0.0
    %1119 = vmatprep.subr.mxu0 0.0
    %1120 = vmatpush1.msra.mxu0 0.0
    %1121 = vmatprep.subr.mxu0 0.0
    %1122 = vmatpush1.msra.mxu0 0.0
    %1123 = vmatprep.subr.mxu0 0.0
    %1124 = vmatpush1.msra.mxu0 0.0
    %1125 = vmatprep.subr.mxu0 0.0
    %1126 = vmatpush1.msra.mxu0 0.0
    %1127 = vmatprep.subr.mxu0 0.0
    %1128 = vmatpush1.msra.mxu0 0.0
    %1129 = vmatprep.subr.mxu0 0.0
    %1130 = vmatpush1.msra.mxu0 0.0
    %1131 = vmatprep.subr.mxu0 0.0
    %1132 = vmatpush1.msra.mxu0 0.0
    %1133 = vmatprep.subr.mxu0 0.0
    %1134 = vmatpush1.msra.mxu0 0.0
    %1135 = vmatprep.subr.mxu0 0.0
    %1136 = vmatpush1.msra.mxu0 0.0
    %1137 = vmatprep.subr.mxu0 0.0
    %1138 = vmatpush1.msra.mxu0 0.0
    %1139 = vmatprep.subr.mxu0 0.0
    %1140 = vmatpush1.msra.mxu0 0.0
    %1141 = vmatprep.subr.mxu0 0.0
    %1142 = vmatpush1.msra.mxu0 0.0
    %1143 = vmatprep.subr.mxu0 0.0
    %1144 = vmatpush1.msra.mxu0 0.0
    %1145 = vmatprep.subr.mxu0 0.0
    %1146 = vmatpush1.msra.mxu0 0.0
    %1147 = vmatprep.subr.mxu0 0.0
    %1148 = vmatpush1.msra.mxu0 0.0
    %1149 = vmatprep.subr.mxu0 0.0
    %1150 = vmatpush1.msra.mxu0 0.0
    %1151 = vmatprep.subr.mxu0 0.0
    %1152 = vmatpush1.msra.mxu0 0.0
    %1153 = vmatprep.subr.mxu0 0.0
    %1154 = vmatpush1.msra.mxu0 0.0
    %1155 = vmatprep.subr.mxu0 0.0
    %1156 = vmatpush1.msra.mxu0 0.0
    %1157 = vmatprep.subr.mxu0 0.0
    %1158 = vmatpush1.msra.mxu0 0.0
    %1159 = vmatprep.subr.mxu0 0.0
    %1160 = vmatpush1.msra.mxu0 0.0
    %1161 = vmatprep.subr.mxu0 0.0
    %1162 = vmatpush1.msra.mxu0 0.0
    %1163 = vmatprep.subr.mxu0 0.0
    %1164 = vmatpush1.msra.mxu0 0.0
    %1165 = vmatprep.subr.mxu0 0.0
    %1166 = vmatpush1.msra.mxu0 0.0
    %1167 = vmatprep.subr.mxu0 0.0
    %1168 = vmatpush1.msra.mxu0 0.0
    %1169 = vmatprep.subr.mxu0 0.0
    %1170 = vmatpush1.msra.mxu0 0.0
    %1171 = vmatprep.subr.mxu0 0.0
    %1172 = vmatpush1.msra.mxu0 0.0
    %1173 = vmatprep.subr.mxu0 0.0
    %1174 = vmatpush1.msra.mxu0 0.0
    %1175 = vmatprep.subr.mxu0 0.0
    %1176 = vmatpush1.msra.mxu0 0.0
    %1177 = vmatprep.mubr.f32.mxu0 0.0
    %1178 = vmatmul.mubr.f32.gmra.mrb[0].mxu0 %v1111
    %v1179 = vpop.f32.mrb[0].mxu0
    %v1180 = vadd.f32 0.0, %v1179
    %v1181 = vpop.f32.mrb[0].mxu0
    %1182 = vdwg.mxu0
    %1184 = vrot.lane.b32.xlu0 %v1180, 112
    %v1185 = vpop.permute.xlu0 %1184
    %v1187 = vmul.f32 %v1180, %v1185
    %1189 = vrot.lane.b32.xlu0 %v1187, 96
    %v1190 = vpop.permute.xlu0 %1189
    %v1192 = vmul.f32 %v1187, %v1190
    %v1194 = vsel %vm104, %v1192, 0
    %1196 = vmatprep.subr.mxu0 0.0
    %1197 = vmatpush1.msra.mxu0 %v91
    %1198 = vmatprep.subr.mxu0 0.0
    %1199 = vmatpush1.msra.mxu0 %v92
    %1200 = vmatprep.subr.mxu0 0.0
    %1201 = vmatpush1.msra.mxu0 0.0
    %1202 = vmatprep.subr.mxu0 0.0
    %1203 = vmatpush1.msra.mxu0 0.0
    %1204 = vmatprep.subr.mxu0 0.0
    %1205 = vmatpush1.msra.mxu0 0.0
    %1206 = vmatprep.subr.mxu0 0.0
    %1207 = vmatpush1.msra.mxu0 0.0
    %1208 = vmatprep.subr.mxu0 0.0
    %1209 = vmatpush1.msra.mxu0 0.0
    %1210 = vmatprep.subr.mxu0 0.0
    %1211 = vmatpush1.msra.mxu0 0.0
    %1212 = vmatprep.subr.mxu0 0.0
    %1213 = vmatpush1.msra.mxu0 0.0
    %1214 = vmatprep.subr.mxu0 0.0
    %1215 = vmatpush1.msra.mxu0 0.0
    %1216 = vmatprep.subr.mxu0 0.0
    %1217 = vmatpush1.msra.mxu0 0.0
    %1218 = vmatprep.subr.mxu0 0.0
    %1219 = vmatpush1.msra.mxu0 0.0
    %1220 = vmatprep.subr.mxu0 0.0
    %1221 = vmatpush1.msra.mxu0 0.0
    %1222 = vmatprep.subr.mxu0 0.0
    %1223 = vmatpush1.msra.mxu0 0.0
    %1224 = vmatprep.subr.mxu0 0.0
    %1225 = vmatpush1.msra.mxu0 0.0
    %1226 = vmatprep.subr.mxu0 0.0
    %1227 = vmatpush1.msra.mxu0 0.0
    %1228 = vmatprep.subr.mxu0 0.0
    %1229 = vmatpush1.msra.mxu0 0.0
    %1230 = vmatprep.subr.mxu0 0.0
    %1231 = vmatpush1.msra.mxu0 0.0
    %1232 = vmatprep.subr.mxu0 0.0
    %1233 = vmatpush1.msra.mxu0 0.0
    %1234 = vmatprep.subr.mxu0 0.0
    %1235 = vmatpush1.msra.mxu0 0.0
    %1236 = vmatprep.subr.mxu0 0.0
    %1237 = vmatpush1.msra.mxu0 0.0
    %1238 = vmatprep.subr.mxu0 0.0
    %1239 = vmatpush1.msra.mxu0 0.0
    %1240 = vmatprep.subr.mxu0 0.0
    %1241 = vmatpush1.msra.mxu0 0.0
    %1242 = vmatprep.subr.mxu0 0.0
    %1243 = vmatpush1.msra.mxu0 0.0
    %1244 = vmatprep.subr.mxu0 0.0
    %1245 = vmatpush1.msra.mxu0 0.0
    %1246 = vmatprep.subr.mxu0 0.0
    %1247 = vmatpush1.msra.mxu0 0.0
    %1248 = vmatprep.subr.mxu0 0.0
    %1249 = vmatpush1.msra.mxu0 0.0
    %1250 = vmatprep.subr.mxu0 0.0
    %1251 = vmatpush1.msra.mxu0 0.0
    %1252 = vmatprep.subr.mxu0 0.0
    %1253 = vmatpush1.msra.mxu0 0.0
    %1254 = vmatprep.subr.mxu0 0.0
    %1255 = vmatpush1.msra.mxu0 0.0
    %1256 = vmatprep.subr.mxu0 0.0
    %1257 = vmatpush1.msra.mxu0 0.0
    %1258 = vmatprep.subr.mxu0 0.0
    %1259 = vmatpush1.msra.mxu0 0.0
    %1260 = vmatprep.mubr.f32.mxu0 0.0
    %1261 = vmatmul.mubr.f32.gmra.mrb[0].mxu0 %v1194
    %v1262 = vpop.f32.mrb[0].mxu0
    %v1263 = vadd.f32 0.0, %v1262
    %v1264 = vpop.f32.mrb[0].mxu0
    %1265 = vdwg.mxu0
    %v1266 = vmul.f32 %v1263, %v1263
    %1268 = vrot.lane.b32.xlu0 %v1266, 112
    %v1269 = vpop.permute.xlu0 %1268
    %v1271 = vadd.f32 %v1266, %v1269
    %v1273 = vlaneseq
    %v1274 = vshrl.u32 %v1273, 7
    %v1275 = vsub.s32 0, %v1274
    %v1276 = vrot.slane %v95, %v1275
    %v1279 = vsel %vm104, %v1271, 0
    %1281 = vmatprep.subr.mxu0 0.0
    %1282 = vmatpush1.msra.mxu0 %v93
    %1283 = vmatprep.subr.mxu0 0.0
    %1284 = vmatpush1.msra.mxu0 %v94
    %1285 = vmatprep.subr.mxu0 0.0
    %1286 = vmatpush1.msra.mxu0 0.0
    %1287 = vmatprep.subr.mxu0 0.0
    %1288 = vmatpush1.msra.mxu0 0.0
    %1289 = vmatprep.subr.mxu0 0.0
    %1290 = vmatpush1.msra.mxu0 0.0
    %1291 = vmatprep.subr.mxu0 0.0
    %1292 = vmatpush1.msra.mxu0 0.0
    %1293 = vmatprep.subr.mxu0 0.0
    %1294 = vmatpush1.msra.mxu0 0.0
    %1295 = vmatprep.subr.mxu0 0.0
    %1296 = vmatpush1.msra.mxu0 0.0
    %1297 = vmatprep.subr.mxu0 0.0
    %1298 = vmatpush1.msra.mxu0 0.0
    %1299 = vmatprep.subr.mxu0 0.0
    %1300 = vmatpush1.msra.mxu0 0.0
    %1301 = vmatprep.subr.mxu0 0.0
    %1302 = vmatpush1.msra.mxu0 0.0
    %1303 = vmatprep.subr.mxu0 0.0
    %1304 = vmatpush1.msra.mxu0 0.0
    %1305 = vmatprep.subr.mxu0 0.0
    %1306 = vmatpush1.msra.mxu0 0.0
    %1307 = vmatprep.subr.mxu0 0.0
    %1308 = vmatpush1.msra.mxu0 0.0
    %1309 = vmatprep.subr.mxu0 0.0
    %1310 = vmatpush1.msra.mxu0 0.0
    %1311 = vmatprep.subr.mxu0 0.0
    %1312 = vmatpush1.msra.mxu0 0.0
    %1313 = vmatprep.subr.mxu0 0.0
    %1314 = vmatpush1.msra.mxu0 0.0
    %1315 = vmatprep.subr.mxu0 0.0
    %1316 = vmatpush1.msra.mxu0 0.0
    %1317 = vmatprep.subr.mxu0 0.0
    %1318 = vmatpush1.msra.mxu0 0.0
    %1319 = vmatprep.subr.mxu0 0.0
    %1320 = vmatpush1.msra.mxu0 0.0
    %1321 = vmatprep.subr.mxu0 0.0
    %1322 = vmatpush1.msra.mxu0 0.0
    %1323 = vmatprep.subr.mxu0 0.0
    %1324 = vmatpush1.msra.mxu0 0.0
    %1325 = vmatprep.subr.mxu0 0.0
    %1326 = vmatpush1.msra.mxu0 0.0
    %1327 = vmatprep.subr.mxu0 0.0
    %1328 = vmatpush1.msra.mxu0 0.0
    %1329 = vmatprep.subr.mxu0 0.0
    %1330 = vmatpush1.msra.mxu0 0.0
    %1331 = vmatprep.subr.mxu0 0.0
    %1332 = vmatpush1.msra.mxu0 0.0
    %1333 = vmatprep.subr.mxu0 0.0
    %1334 = vmatpush1.msra.mxu0 0.0
    %1335 = vmatprep.subr.mxu0 0.0
    %1336 = vmatpush1.msra.mxu0 0.0
    %1337 = vmatprep.subr.mxu0 0.0
    %1338 = vmatpush1.msra.mxu0 0.0
    %1339 = vmatprep.subr.mxu0 0.0
    %1340 = vmatpush1.msra.mxu0 0.0
    %1341 = vmatprep.subr.mxu0 0.0
    %1342 = vmatpush1.msra.mxu0 0.0
    %1343 = vmatprep.subr.mxu0 0.0
    %1344 = vmatpush1.msra.mxu0 0.0
    %1345 = vmatprep.mubr.f32.mxu0 0.0
    %1346 = vmatmul.mubr.f32.gmra.mrb[0].mxu0 %v1279
    %v1347 = vpop.f32.mrb[0].mxu0
    %v1348 = vadd.f32 %v1276, %v1347
    %v1349 = vpop.f32.mrb[0].mxu0
    %1350 = vdwg.mxu0
    %1352 = vrot.lane.b32.xlu0 %v1348, 96
    %v1353 = vpop.permute.xlu0 %1352
    %v1355 = vadd.f32 %v793, %v1353
    %v1356 = vxor.u32 %v1355, 2147483648
    %v1357 = vmul.f32 %v1356, 1.442695
    %v1358 = vpow.pop %v1357
    %v1359 = vadd.f32 %v1358, 1.0
    %v1360 = vrcp.pop %v1359
    %v1361 = vmul.f32 1.0, %v1360
    %v1362 = vtanh.pop %v811
    %1364 = vrot.lane.b32.xlu0 %v1362, 64
    %v1365 = vpop.permute.xlu0 %1364
    %v1367 = vmul.f32 %v1361, %v1365
    %1369 = vrot.lane.b32.xlu0 %v1367, 32
    %v1370 = vpop.permute.xlu0 %1369
    %1372 = vst.msk [vmem:[#allocation9] sm:$0xff] %vm719, %v1370
    %v1373 = vld [vmem:[#allocation2 + $0x8] sm:$0xff]
    %v1374 = vsel %vm719, %v1370, 0
    %1376 = vmatprep.subr.mxu0 0.0
    %1377 = vmatpush1.msra.mxu0 %v81
    %1378 = vmatprep.subr.mxu0 0.0
    %1379 = vmatpush1.msra.mxu0 %v82
    %1380 = vmatprep.subr.mxu0 0.0
    %1381 = vmatpush1.msra.mxu0 %v83
    %1382 = vmatprep.subr.mxu0 0.0
    %1383 = vmatpush1.msra.mxu0 %v84
    %1384 = vmatprep.subr.mxu0 0.0
    %1385 = vmatpush1.msra.mxu0 0.0
    %1386 = vmatprep.subr.mxu0 0.0
    %1387 = vmatpush1.msra.mxu0 0.0
    %1388 = vmatprep.subr.mxu0 0.0
    %1389 = vmatpush1.msra.mxu0 0.0
    %1390 = vmatprep.subr.mxu0 0.0
    %1391 = vmatpush1.msra.mxu0 0.0
    %1392 = vmatprep.subr.mxu0 0.0
    %1393 = vmatpush1.msra.mxu0 0.0
    %1394 = vmatprep.subr.mxu0 0.0
    %1395 = vmatpush1.msra.mxu0 0.0
    %1396 = vmatprep.subr.mxu0 0.0
    %1397 = vmatpush1.msra.mxu0 0.0
    %1398 = vmatprep.subr.mxu0 0.0
    %1399 = vmatpush1.msra.mxu0 0.0
    %1400 = vmatprep.subr.mxu0 0.0
    %1401 = vmatpush1.msra.mxu0 0.0
    %1402 = vmatprep.subr.mxu0 0.0
    %1403 = vmatpush1.msra.mxu0 0.0
    %1404 = vmatprep.subr.mxu0 0.0
    %1405 = vmatpush1.msra.mxu0 0.0
    %1406 = vmatprep.subr.mxu0 0.0
    %1407 = vmatpush1.msra.mxu0 0.0
    %1408 = vmatprep.subr.mxu0 0.0
    %1409 = vmatpush1.msra.mxu0 0.0
    %1410 = vmatprep.subr.mxu0 0.0
    %1411 = vmatpush1.msra.mxu0 0.0
    %1412 = vmatprep.subr.mxu0 0.0
    %1413 = vmatpush1.msra.mxu0 0.0
    %1414 = vmatprep.subr.mxu0 0.0
    %1415 = vmatpush1.msra.mxu0 0.0
    %1416 = vmatprep.subr.mxu0 0.0
    %1417 = vmatpush1.msra.mxu0 0.0
    %1418 = vmatprep.subr.mxu0 0.0
    %1419 = vmatpush1.msra.mxu0 0.0
    %1420 = vmatprep.subr.mxu0 0.0
    %1421 = vmatpush1.msra.mxu0 0.0
    %1422 = vmatprep.subr.mxu0 0.0
    %1423 = vmatpush1.msra.mxu0 0.0
    %1424 = vmatprep.subr.mxu0 0.0
    %1425 = vmatpush1.msra.mxu0 0.0
    %1426 = vmatprep.subr.mxu0 0.0
    %1427 = vmatpush1.msra.mxu0 0.0
    %1428 = vmatprep.subr.mxu0 0.0
    %1429 = vmatpush1.msra.mxu0 0.0
    %1430 = vmatprep.subr.mxu0 0.0
    %1431 = vmatpush1.msra.mxu0 0.0
    %1432 = vmatprep.subr.mxu0 0.0
    %1433 = vmatpush1.msra.mxu0 0.0
    %1434 = vmatprep.subr.mxu0 0.0
    %1435 = vmatpush1.msra.mxu0 0.0
    %1436 = vmatprep.subr.mxu0 0.0
    %1437 = vmatpush1.msra.mxu0 0.0
    %1438 = vmatprep.subr.mxu0 0.0
    %1439 = vmatpush1.msra.mxu0 0.0
    %1440 = vmatprep.mubr.f32.mxu0 0.0
    %1441 = vmatmul.mubr.f32.gmra.mrb[0].mxu0 %v1374
    %v1442 = vpop.f32.mrb[0].mxu0
    %v1443 = vadd.f32 0.0, %v1442
    %v1444 = vpop.f32.mrb[0].mxu0
    %1445 = vdwg.mxu0
    %v1446 = vadd.f32 %v1373, %v1443
    %v1447 = vxor.u32 %v1446, 2147483648
    %v1448 = vmul.f32 %v1447, 1.442695
    %v1449 = vpow.pop %v1448
    %v1450 = vadd.f32 %v1449, 1.0
    %v1451 = vrcp.pop %v1450
    %v1452 = vmul.f32 1.0, %v1451
    %v1453 = vtanh.pop %v1446
    %v1454 = vmul.f32 %v1452, %v811
    %1456 = vrot.lane.b32.xlu0 %v1453, 64
    %v1457 = vpop.permute.xlu0 %1456
    %v1459 = vmul.f32 %v1452, %v1457
    %1461 = vrot.lane.b32.xlu0 %v1459, 32
    %v1462 = vpop.permute.xlu0 %1461
    %v1464 = vadd.f32 %v1454, %v1462
    %1466 = vrot.lane.b32.xlu0 %v1464, 96
    %v1467 = vpop.permute.xlu0 %1466
    %v1468 = vsel %vm719, %v1467, 0
    %1470 = vmatprep.subr.mxu0 0.0
    %1471 = vmatpush1.msra.mxu0 %v86
    %1472 = vmatprep.subr.mxu0 0.0
    %1473 = vmatpush1.msra.mxu0 %v87
    %1474 = vmatprep.subr.mxu0 0.0
    %1475 = vmatpush1.msra.mxu0 %v88
    %1476 = vmatprep.subr.mxu0 0.0
    %1477 = vmatpush1.msra.mxu0 %v89
    %1478 = vmatprep.subr.mxu0 0.0
    %1479 = vmatpush1.msra.mxu0 0.0
    %1480 = vmatprep.subr.mxu0 0.0
    %1481 = vmatpush1.msra.mxu0 0.0
    %1482 = vmatprep.subr.mxu0 0.0
    %1483 = vmatpush1.msra.mxu0 0.0
    %1484 = vmatprep.subr.mxu0 0.0
    %1485 = vmatpush1.msra.mxu0 0.0
    %1486 = vmatprep.subr.mxu0 0.0
    %1487 = vmatpush1.msra.mxu0 0.0
    %1488 = vmatprep.subr.mxu0 0.0
    %1489 = vmatpush1.msra.mxu0 0.0
    %1490 = vmatprep.subr.mxu0 0.0
    %1491 = vmatpush1.msra.mxu0 0.0
    %1492 = vmatprep.subr.mxu0 0.0
    %1493 = vmatpush1.msra.mxu0 0.0
    %1494 = vmatprep.subr.mxu0 0.0
    %1495 = vmatpush1.msra.mxu0 0.0
    %1496 = vmatprep.subr.mxu0 0.0
    %1497 = vmatpush1.msra.mxu0 0.0
    %1498 = vmatprep.subr.mxu0 0.0
    %1499 = vmatpush1.msra.mxu0 0.0
    %1500 = vmatprep.subr.mxu0 0.0
    %1501 = vmatpush1.msra.mxu0 0.0
    %1502 = vmatprep.subr.mxu0 0.0
    %1503 = vmatpush1.msra.mxu0 0.0
    %1504 = vmatprep.subr.mxu0 0.0
    %1505 = vmatpush1.msra.mxu0 0.0
    %1506 = vmatprep.subr.mxu0 0.0
    %1507 = vmatpush1.msra.mxu0 0.0
    %1508 = vmatprep.subr.mxu0 0.0
    %1509 = vmatpush1.msra.mxu0 0.0
    %1510 = vmatprep.subr.mxu0 0.0
    %1511 = vmatpush1.msra.mxu0 0.0
    %1512 = vmatprep.subr.mxu0 0.0
    %1513 = vmatpush1.msra.mxu0 0.0
    %1514 = vmatprep.subr.mxu0 0.0
    %1515 = vmatpush1.msra.mxu0 0.0
    %1516 = vmatprep.subr.mxu0 0.0
    %1517 = vmatpush1.msra.mxu0 0.0
    %1518 = vmatprep.subr.mxu0 0.0
    %1519 = vmatpush1.msra.mxu0 0.0
    %1520 = vmatprep.subr.mxu0 0.0
    %1521 = vmatpush1.msra.mxu0 0.0
    %1522 = vmatprep.subr.mxu0 0.0
    %1523 = vmatpush1.msra.mxu0 0.0
    %1524 = vmatprep.subr.mxu0 0.0
    %1525 = vmatpush1.msra.mxu0 0.0
    %1526 = vmatprep.subr.mxu0 0.0
    %1527 = vmatpush1.msra.mxu0 0.0
    %1528 = vmatprep.subr.mxu0 0.0
    %1529 = vmatpush1.msra.mxu0 0.0
    %1530 = vmatprep.subr.mxu0 0.0
    %1531 = vmatpush1.msra.mxu0 0.0
    %1532 = vmatprep.subr.mxu0 0.0
    %1533 = vmatpush1.msra.mxu0 0.0
    %1534 = vmatprep.mubr.f32.mxu0 0.0
    %1535 = vmatmul.mubr.f32.gmra.mrb[0].mxu0 %v1468
    %v1536 = vpop.f32.mrb[0].mxu0
    %v1537 = vadd.f32 %v816, %v1536
    %v1538 = vpop.f32.mrb[0].mxu0
    %1539 = vdwg.mxu0
    %v1540 = vtanh.pop %v1537
    %v1541 = vmul.f32 %v1540, 3.1415927
    %v1542 = vmul.f32 %v1541, 0.5
    %v1543 = vand.u32 2147483647, %v1542
    %vm1544 = vcmp.le.f32.partialorder %v1543, 0.7853982
    %vm1545 = vcmp.lt.s32.totalorder %v1542, 0
    %v1546 = vand.u32 %v1542, 2139095040
    %v1547 = vshrl.u32 %v1546, 23
    %v1548 = vsub.s32 %v1547, 127
    %v1549 = vand.u32 2147483647, %v1542
    %v1550 = vand.u32 %v1549, 8388607
    %v1551 = vor.u32 %v1550, 8388608
    %v1552 = vsub.s32 0, %v1551
    %v1553 = vadd.s32 %v1548, 1
    %vm1554 = vcmp.gt.s32.totalorder %v1553, 0
    %v1555 = vsel %vm1554, %v1553, 0
    %v1556 = vshrl.u32 %v1555, 5
    %v1557 = vand.u32 %v1555, 31
    %v1558 = vsub.s32 32, %v1557
    %v1559 = vshrl.u32 683565275, %v1558
    %v1560 = vshll.u32 683565275, %v1557
    %v1561 = vshrl.u32 2475754826, %v1558
    %v1562 = vor.u32 %v1560, %v1561
    %v1563 = vshll.u32 2475754826, %v1557
    %v1564 = vshrl.u32 2131351028, %v1558
    %v1565 = vor.u32 %v1563, %v1564
    %v1566 = vshll.u32 2131351028, %v1557
    %v1567 = vshrl.u32 2102212464, %v1558
    %v1568 = vor.u32 %v1566, %v1567
    %v1569 = vshll.u32 2102212464, %v1557
    %v1570 = vshrl.u32 920167782, %v1558
    %v1571 = vor.u32 %v1569, %v1570
    %v1572 = vshll.u32 920167782, %v1557
    %v1573 = vshrl.u32 1326507024, %v1558
    %v1574 = vor.u32 %v1572, %v1573
    %vm1575 = vcmp.lt.s32.totalorder %v1556, 1
    %vm1576 = vcmp.lt.s32.totalorder %v1556, 2
    %vm1577 = vcmp.lt.s32.totalorder %v1556, 3
    %vm1578 = vcmp.lt.s32.totalorder %v1556, 4
    %v1579 = vsel %vm1575, %v1559, %v1562
    %v1580 = vsel %vm1578, %v1568, 2102212464
    %v1581 = vsel %vm1577, %v1565, %v1580
    %v1582 = vsel %vm1576, %v1579, %v1581
    %v1583 = vsel %vm1575, %v1562, %v1565
    %v1584 = vsel %vm1578, %v1571, 920167782
    %v1585 = vsel %vm1577, %v1568, %v1584
    %v1586 = vsel %vm1576, %v1583, %v1585
    %v1587 = vsel %vm1575, %v1565, %v1568
    %v1588 = vsel %vm1578, %v1574, 1326507024
    %v1589 = vsel %vm1577, %v1571, %v1588
    %v1590 = vsel %vm1576, %v1587, %v1589
    %v1591 = vshll.u32 %v1551, 8
    %v1592 = vmul.u32.u64.compose %v1591, %v1590
    %v1593 = vextract.low.u32 %v1592
    %v1594 = vextract.high.u32 %v1592
    %v1595 = vmul.u32.u64.compose %v1591, %v1586
    %v1596 = vextract.low.u32 %v1595
    %v1597 = vextract.high.u32 %v1595
    %v1598 = vmul.u32 %v1591, %v1582
    %v1599 = vadd.s32 %v1594, %v1596
    %vm1600 = vc.u32 %v1594, %v1596
    %v1601 = vadd.s32 %v1597, 1
    %v1602 = vsel %vm1600, %v1601, %v1597
    %v1603 = vadd.s32 %v1598, %v1602
    %v1604 = vadd.s32 %v1603, 536870912
    %v1605 = vshrl.u32 %v1604, 30
    %v1606 = vshll.u32 %v1605, 30
    %v1607 = vsub.s32 %v1603, %v1606
    %vm1608 = vcmp.lt.s32.totalorder %v1607, 0
    %v1609 = vsub.s32 0, %v1607
    %v1610 = vsel %vm1608, %v1609, %v1607
    %v1611 = vclz %v1610
    %v1612 = vsub.s32 %v1611, 2
    %vm1613 = vcmp.gt.s32.totalorder 0, %v1612
    %v1614 = vsel %vm1613, 0, %v1612
    %v1615 = vsub.s32 32, %v1614
    %v1616 = vshll.u32 %v1607, %v1614
    %v1617 = vshrl.u32 %v1599, %v1615
    %v1618 = vor.u32 %v1616, %v1617
    %v1619 = vsub.s32 4294967266, %v1614
    %v1620 = vadd.s32 %v1619, 127
    %v1621 = vshll.u32 %v1620, 23
    %v1622 = vor.u32 4788187, %v1621
    %v1623 = vand.u32 2147483647, %v1622
    %v1625 = vcvt.s32.f32 %v1618
    %v1626 = vmul.f32 %v1625, %v1623
    %v1627 = vxor.u32 %v1626, 2147483648
    %v1628 = vsel %vm1545, %v1627, %v1626
    %v1629 = vsub.s32 4, %v1605
    %v1630 = vsel %vm1545, %v1629, %v1605
    %v1631 = vsel %vm1544, %v1542, %v1628
    %v1632 = vsel %vm1544, 0, %v1630
    %v1633 = vcosq.f32.pop %v1631
    %v1634 = vsinq.f32.pop %v1631
    %vm1635 = vweird.f32 %v1542
    %v1636 = vand.u32 %v1632, 3
    %vm1637 = vcmp.lt.s32.totalorder %v1636, 2
    %vm1638 = vcmp.eq.s32.totalorder %v1636, 0
    %v1639 = vxor.u32 %v1634, 2147483648
    %v1640 = vsel %vm1638, %v1633, %v1639
    %vm1641 = vcmp.eq.s32.totalorder %v1636, 2
    %v1642 = vxor.u32 %v1633, 2147483648
    %v1643 = vsel %vm1641, %v1642, %v1634
    %v1644 = vsel %vm1637, %v1640, %v1643
    %v1645 = vsel %vm1635, nan, %v1644
    %v1646 = vand.u32 2147483647, %v1542
    %vm1647 = vcmp.le.f32.partialorder %v1646, 0.7853982
    %vm1648 = vcmp.lt.s32.totalorder %v1542, 0
    %v1649 = vand.u32 %v1542, 2139095040
    %v1650 = vshrl.u32 %v1649, 23
    %v1651 = vsub.s32 %v1650, 127
    %v1652 = vand.u32 2147483647, %v1542
    %v1653 = vand.u32 %v1652, 8388607
    %v1654 = vor.u32 %v1653, 8388608
    %v1655 = vsub.s32 0, %v1654
    %v1656 = vadd.s32 %v1651, 1
    %vm1657 = vcmp.gt.s32.totalorder %v1656, 0
    %v1658 = vsel %vm1657, %v1656, 0
    %v1659 = vshrl.u32 %v1658, 5
    %v1660 = vand.u32 %v1658, 31
    %v1661 = vsub.s32 32, %v1660
    %v1662 = vshrl.u32 683565275, %v1661
    %v1663 = vshll.u32 683565275, %v1660
    %v1664 = vshrl.u32 2475754826, %v1661
    %v1665 = vor.u32 %v1663, %v1664
    %v1666 = vshll.u32 2475754826, %v1660
    %v1667 = vshrl.u32 2131351028, %v1661
    %v1668 = vor.u32 %v1666, %v1667
    %v1669 = vshll.u32 2131351028, %v1660
    %v1670 = vshrl.u32 2102212464, %v1661
    %v1671 = vor.u32 %v1669, %v1670
    %v1672 = vshll.u32 2102212464, %v1660
    %v1673 = vshrl.u32 920167782, %v1661
    %v1674 = vor.u32 %v1672, %v1673
    %v1675 = vshll.u32 920167782, %v1660
    %v1676 = vshrl.u32 1326507024, %v1661
    %v1677 = vor.u32 %v1675, %v1676
    %vm1678 = vcmp.lt.s32.totalorder %v1659, 1
    %vm1679 = vcmp.lt.s32.totalorder %v1659, 2
    %vm1680 = vcmp.lt.s32.totalorder %v1659, 3
    %vm1681 = vcmp.lt.s32.totalorder %v1659, 4
    %v1682 = vsel %vm1678, %v1662, %v1665
    %v1683 = vsel %vm1681, %v1671, 2102212464
    %v1684 = vsel %vm1680, %v1668, %v1683
    %v1685 = vsel %vm1679, %v1682, %v1684
    %v1686 = vsel %vm1678, %v1665, %v1668
    %v1687 = vsel %vm1681, %v1674, 920167782
    %v1688 = vsel %vm1680, %v1671, %v1687
    %v1689 = vsel %vm1679, %v1686, %v1688
    %v1690 = vsel %vm1678, %v1668, %v1671
    %v1691 = vsel %vm1681, %v1677, 1326507024
    %v1692 = vsel %vm1680, %v1674, %v1691
    %v1693 = vsel %vm1679, %v1690, %v1692
    %v1694 = vshll.u32 %v1654, 8
    %v1695 = vmul.u32.u64.compose %v1694, %v1693
    %v1696 = vextract.low.u32 %v1695
    %v1697 = vextract.high.u32 %v1695
    %v1698 = vmul.u32.u64.compose %v1694, %v1689
    %v1699 = vextract.low.u32 %v1698
    %v1700 = vextract.high.u32 %v1698
    %v1701 = vmul.u32 %v1694, %v1685
    %v1702 = vadd.s32 %v1697, %v1699
    %vm1703 = vc.u32 %v1697, %v1699
    %v1704 = vadd.s32 %v1700, 1
    %v1705 = vsel %vm1703, %v1704, %v1700
    %v1706 = vadd.s32 %v1701, %v1705
    %v1707 = vadd.s32 %v1706, 536870912
    %v1708 = vshrl.u32 %v1707, 30
    %v1709 = vshll.u32 %v1708, 30
    %v1710 = vsub.s32 %v1706, %v1709
    %vm1711 = vcmp.lt.s32.totalorder %v1710, 0
    %v1712 = vsub.s32 0, %v1710
    %v1713 = vsel %vm1711, %v1712, %v1710
    %v1714 = vclz %v1713
    %v1715 = vsub.s32 %v1714, 2
    %vm1716 = vcmp.gt.s32.totalorder 0, %v1715
    %v1717 = vsel %vm1716, 0, %v1715
    %v1718 = vsub.s32 32, %v1717
    %v1719 = vshll.u32 %v1710, %v1717
    %v1720 = vshrl.u32 %v1702, %v1718
    %v1721 = vor.u32 %v1719, %v1720
    %v1722 = vsub.s32 4294967266, %v1717
    %v1723 = vadd.s32 %v1722, 127
    %v1724 = vshll.u32 %v1723, 23
    %v1725 = vor.u32 4788187, %v1724
    %v1726 = vand.u32 2147483647, %v1725
    %v1728 = vcvt.s32.f32 %v1721
    %v1729 = vmul.f32 %v1728, %v1726
    %v1730 = vxor.u32 %v1729, 2147483648
    %v1731 = vsel %vm1648, %v1730, %v1729
    %v1732 = vsub.s32 4, %v1708
    %v1733 = vsel %vm1648, %v1732, %v1708
    %v1734 = vsel %vm1647, %v1542, %v1731
    %v1735 = vsel %vm1647, 0, %v1733
    %v1736 = vcosq.f32.pop %v1734
    %v1737 = vsinq.f32.pop %v1734
    %vm1738 = vweird.f32 %v1542
    %v1739 = vadd.s32 %v1735, 3
    %v1740 = vand.u32 %v1739, 3
    %vm1741 = vcmp.lt.s32.totalorder %v1740, 2
    %vm1742 = vcmp.eq.s32.totalorder %v1740, 0
    %v1743 = vxor.u32 %v1737, 2147483648
    %v1744 = vsel %vm1742, %v1736, %v1743
    %vm1745 = vcmp.eq.s32.totalorder %v1740, 2
    %v1746 = vxor.u32 %v1736, 2147483648
    %v1747 = vsel %vm1745, %v1746, %v1737
    %v1748 = vsel %vm1741, %v1744, %v1747
    %v1749 = vsel %vm1738, nan, %v1748
    %1751 = vrot.lane.b32.xlu0 %v1749, 4
    %v1752 = vpop.permute.xlu0 %1751
    %v1754 = vsel %vm1107, %v1645, %v1752
    %v1756 = vsel %vm1109, %v1754, 0
    %1758 = vmatprep.subr.mxu0 0.0
    %1759 = vmatpush1.msra.mxu0 %v96
    %1760 = vmatprep.subr.mxu0 0.0
    %1761 = vmatpush1.msra.mxu0 0.0
    %1762 = vmatprep.subr.mxu0 0.0
    %1763 = vmatpush1.msra.mxu0 0.0
    %1764 = vmatprep.subr.mxu0 0.0
    %1765 = vmatpush1.msra.mxu0 0.0
    %1766 = vmatprep.subr.mxu0 0.0
    %1767 = vmatpush1.msra.mxu0 0.0
    %1768 = vmatprep.subr.mxu0 0.0
    %1769 = vmatpush1.msra.mxu0 0.0
    %1770 = vmatprep.subr.mxu0 0.0
    %1771 = vmatpush1.msra.mxu0 0.0
    %1772 = vmatprep.subr.mxu0 0.0
    %1773 = vmatpush1.msra.mxu0 0.0
    %1774 = vmatprep.subr.mxu0 0.0
    %1775 = vmatpush1.msra.mxu0 0.0
    %1776 = vmatprep.subr.mxu0 0.0
    %1777 = vmatpush1.msra.mxu0 0.0
    %1778 = vmatprep.subr.mxu0 0.0
    %1779 = vmatpush1.msra.mxu0 0.0
    %1780 = vmatprep.subr.mxu0 0.0
    %1781 = vmatpush1.msra.mxu0 0.0
    %1782 = vmatprep.subr.mxu0 0.0
    %1783 = vmatpush1.msra.mxu0 0.0
    %1784 = vmatprep.subr.mxu0 0.0
    %1785 = vmatpush1.msra.mxu0 0.0
    %1786 = vmatprep.subr.mxu0 0.0
    %1787 = vmatpush1.msra.mxu0 0.0
    %1788 = vmatprep.subr.mxu0 0.0
    %1789 = vmatpush1.msra.mxu0 0.0
    %1790 = vmatprep.subr.mxu0 0.0
    %1791 = vmatpush1.msra.mxu0 0.0
    %1792 = vmatprep.subr.mxu0 0.0
    %1793 = vmatpush1.msra.mxu0 0.0
    %1794 = vmatprep.subr.mxu0 0.0
    %1795 = vmatpush1.msra.mxu0 0.0
    %1796 = vmatprep.subr.mxu0 0.0
    %1797 = vmatpush1.msra.mxu0 0.0
    %1798 = vmatprep.subr.mxu0 0.0
    %1799 = vmatpush1.msra.mxu0 0.0
    %1800 = vmatprep.subr.mxu0 0.0
    %1801 = vmatpush1.msra.mxu0 0.0
    %1802 = vmatprep.subr.mxu0 0.0
    %1803 = vmatpush1.msra.mxu0 0.0
    %1804 = vmatprep.subr.mxu0 0.0
    %1805 = vmatpush1.msra.mxu0 0.0
    %1806 = vmatprep.subr.mxu0 0.0
    %1807 = vmatpush1.msra.mxu0 0.0
    %1808 = vmatprep.subr.mxu0 0.0
    %1809 = vmatpush1.msra.mxu0 0.0
    %1810 = vmatprep.subr.mxu0 0.0
    %1811 = vmatpush1.msra.mxu0 0.0
    %1812 = vmatprep.subr.mxu0 0.0
    %1813 = vmatpush1.msra.mxu0 0.0
    %1814 = vmatprep.subr.mxu0 0.0
    %1815 = vmatpush1.msra.mxu0 0.0
    %1816 = vmatprep.subr.mxu0 0.0
    %1817 = vmatpush1.msra.mxu0 0.0
    %1818 = vmatprep.subr.mxu0 0.0
    %1819 = vmatpush1.msra.mxu0 0.0
    %1820 = vmatprep.subr.mxu0 0.0
    %1821 = vmatpush1.msra.mxu0 0.0
    %1822 = vmatprep.mubr.f32.mxu0 0.0
    %1823 = vmatmul.mubr.f32.gmra.mrb[0].mxu0 %v1756
    %v1824 = vpop.f32.mrb[0].mxu0
    %v1825 = vadd.f32 0.0, %v1824
    %v1826 = vpop.f32.mrb[0].mxu0
    %1827 = vdwg.mxu0
    %1829 = vrot.lane.b32.xlu0 %v1825, 112
    %v1830 = vpop.permute.xlu0 %1829
    %v1832 = vmul.f32 %v1825, %v1830
    %1834 = vrot.lane.b32.xlu0 %v1832, 96
    %v1835 = vpop.permute.xlu0 %1834
    %v1837 = vmul.f32 %v1832, %v1835
    %v1839 = vsel %vm104, %v1837, 0
    %1841 = vmatprep.subr.mxu0 0.0
    %1842 = vmatpush1.msra.mxu0 %v91
    %1843 = vmatprep.subr.mxu0 0.0
    %1844 = vmatpush1.msra.mxu0 %v92
    %1845 = vmatprep.subr.mxu0 0.0
    %1846 = vmatpush1.msra.mxu0 0.0
    %1847 = vmatprep.subr.mxu0 0.0
    %1848 = vmatpush1.msra.mxu0 0.0
    %1849 = vmatprep.subr.mxu0 0.0
    %1850 = vmatpush1.msra.mxu0 0.0
    %1851 = vmatprep.subr.mxu0 0.0
    %1852 = vmatpush1.msra.mxu0 0.0
    %1853 = vmatprep.subr.mxu0 0.0
    %1854 = vmatpush1.msra.mxu0 0.0
    %1855 = vmatprep.subr.mxu0 0.0
    %1856 = vmatpush1.msra.mxu0 0.0
    %1857 = vmatprep.subr.mxu0 0.0
    %1858 = vmatpush1.msra.mxu0 0.0
    %1859 = vmatprep.subr.mxu0 0.0
    %1860 = vmatpush1.msra.mxu0 0.0
    %1861 = vmatprep.subr.mxu0 0.0
    %1862 = vmatpush1.msra.mxu0 0.0
    %1863 = vmatprep.subr.mxu0 0.0
    %1864 = vmatpush1.msra.mxu0 0.0
    %1865 = vmatprep.subr.mxu0 0.0
    %1866 = vmatpush1.msra.mxu0 0.0
    %1867 = vmatprep.subr.mxu0 0.0
    %1868 = vmatpush1.msra.mxu0 0.0
    %1869 = vmatprep.subr.mxu0 0.0
    %1870 = vmatpush1.msra.mxu0 0.0
    %1871 = vmatprep.subr.mxu0 0.0
    %1872 = vmatpush1.msra.mxu0 0.0
    %1873 = vmatprep.subr.mxu0 0.0
    %1874 = vmatpush1.msra.mxu0 0.0
    %1875 = vmatprep.subr.mxu0 0.0
    %1876 = vmatpush1.msra.mxu0 0.0
    %1877 = vmatprep.subr.mxu0 0.0
    %1878 = vmatpush1.msra.mxu0 0.0
    %1879 = vmatprep.subr.mxu0 0.0
    %1880 = vmatpush1.msra.mxu0 0.0
    %1881 = vmatprep.subr.mxu0 0.0
    %1882 = vmatpush1.msra.mxu0 0.0
    %1883 = vmatprep.subr.mxu0 0.0
    %1884 = vmatpush1.msra.mxu0 0.0
    %1885 = vmatprep.subr.mxu0 0.0
    %1886 = vmatpush1.msra.mxu0 0.0
    %1887 = vmatprep.subr.mxu0 0.0
    %1888 = vmatpush1.msra.mxu0 0.0
    %1889 = vmatprep.subr.mxu0 0.0
    %1890 = vmatpush1.msra.mxu0 0.0
    %1891 = vmatprep.subr.mxu0 0.0
    %1892 = vmatpush1.msra.mxu0 0.0
    %1893 = vmatprep.subr.mxu0 0.0
    %1894 = vmatpush1.msra.mxu0 0.0
    %1895 = vmatprep.subr.mxu0 0.0
    %1896 = vmatpush1.msra.mxu0 0.0
    %1897 = vmatprep.subr.mxu0 0.0
    %1898 = vmatpush1.msra.mxu0 0.0
    %1899 = vmatprep.subr.mxu0 0.0
    %1900 = vmatpush1.msra.mxu0 0.0
    %1901 = vmatprep.subr.mxu0 0.0
    %1902 = vmatpush1.msra.mxu0 0.0
    %1903 = vmatprep.subr.mxu0 0.0
    %1904 = vmatpush1.msra.mxu0 0.0
    %1905 = vmatprep.mubr.f32.mxu0 0.0
    %1906 = vmatmul.mubr.f32.gmra.mrb[0].mxu0 %v1839
    %v1907 = vpop.f32.mrb[0].mxu0
    %v1908 = vadd.f32 0.0, %v1907
    %v1909 = vpop.f32.mrb[0].mxu0
    %1910 = vdwg.mxu0
    %v1911 = vmul.f32 %v1908, %v1908
    %1913 = vrot.lane.b32.xlu0 %v1911, 112
    %v1914 = vpop.permute.xlu0 %1913
    %v1916 = vadd.f32 %v1911, %v1914
    %v1918 = vsel %vm104, %v1916, 0
    %1920 = vmatprep.subr.mxu0 0.0
    %1921 = vmatpush1.msra.mxu0 %v93
    %1922 = vmatprep.subr.mxu0 0.0
    %1923 = vmatpush1.msra.mxu0 %v94
    %1924 = vmatprep.subr.mxu0 0.0
    %1925 = vmatpush1.msra.mxu0 0.0
    %1926 = vmatprep.subr.mxu0 0.0
    %1927 = vmatpush1.msra.mxu0 0.0
    %1928 = vmatprep.subr.mxu0 0.0
    %1929 = vmatpush1.msra.mxu0 0.0
    %1930 = vmatprep.subr.mxu0 0.0
    %1931 = vmatpush1.msra.mxu0 0.0
    %1932 = vmatprep.subr.mxu0 0.0
    %1933 = vmatpush1.msra.mxu0 0.0
    %1934 = vmatprep.subr.mxu0 0.0
    %1935 = vmatpush1.msra.mxu0 0.0
    %1936 = vmatprep.subr.mxu0 0.0
    %1937 = vmatpush1.msra.mxu0 0.0
    %1938 = vmatprep.subr.mxu0 0.0
    %1939 = vmatpush1.msra.mxu0 0.0
    %1940 = vmatprep.subr.mxu0 0.0
    %1941 = vmatpush1.msra.mxu0 0.0
    %1942 = vmatprep.subr.mxu0 0.0
    %1943 = vmatpush1.msra.mxu0 0.0
    %1944 = vmatprep.subr.mxu0 0.0
    %1945 = vmatpush1.msra.mxu0 0.0
    %1946 = vmatprep.subr.mxu0 0.0
    %1947 = vmatpush1.msra.mxu0 0.0
    %1948 = vmatprep.subr.mxu0 0.0
    %1949 = vmatpush1.msra.mxu0 0.0
    %1950 = vmatprep.subr.mxu0 0.0
    %1951 = vmatpush1.msra.mxu0 0.0
    %1952 = vmatprep.subr.mxu0 0.0
    %1953 = vmatpush1.msra.mxu0 0.0
    %1954 = vmatprep.subr.mxu0 0.0
    %1955 = vmatpush1.msra.mxu0 0.0
    %1956 = vmatprep.subr.mxu0 0.0
    %1957 = vmatpush1.msra.mxu0 0.0
    %1958 = vmatprep.subr.mxu0 0.0
    %1959 = vmatpush1.msra.mxu0 0.0
    %1960 = vmatprep.subr.mxu0 0.0
    %1961 = vmatpush1.msra.mxu0 0.0
    %1962 = vmatprep.subr.mxu0 0.0
    %1963 = vmatpush1.msra.mxu0 0.0
    %1964 = vmatprep.subr.mxu0 0.0
    %1965 = vmatpush1.msra.mxu0 0.0
    %1966 = vmatprep.subr.mxu0 0.0
    %1967 = vmatpush1.msra.mxu0 0.0
    %1968 = vmatprep.subr.mxu0 0.0
    %1969 = vmatpush1.msra.mxu0 0.0
    %1970 = vmatprep.subr.mxu0 0.0
    %1971 = vmatpush1.msra.mxu0 0.0
    %1972 = vmatprep.subr.mxu0 0.0
    %1973 = vmatpush1.msra.mxu0 0.0
    %1974 = vmatprep.subr.mxu0 0.0
    %1975 = vmatpush1.msra.mxu0 0.0
    %1976 = vmatprep.subr.mxu0 0.0
    %1977 = vmatpush1.msra.mxu0 0.0
    %1978 = vmatprep.subr.mxu0 0.0
    %1979 = vmatpush1.msra.mxu0 0.0
    %1980 = vmatprep.subr.mxu0 0.0
    %1981 = vmatpush1.msra.mxu0 0.0
    %1982 = vmatprep.subr.mxu0 0.0
    %1983 = vmatpush1.msra.mxu0 0.0
    %1984 = vmatprep.mubr.f32.mxu0 0.0
    %1985 = vmatmul.mubr.f32.gmra.mrb[0].mxu0 %v1918
    %v1986 = vpop.f32.mrb[0].mxu0
    %v1987 = vadd.f32 %v1276, %v1986
    %v1988 = vpop.f32.mrb[0].mxu0
    %1989 = vdwg.mxu0
    %1991 = vrot.lane.b32.xlu0 %v1987, 96
    %v1992 = vpop.permute.xlu0 %1991
    %v1994 = vadd.f32 %v1446, %v1992
    %v1995 = vxor.u32 %v1994, 2147483648
    %v1996 = vmul.f32 %v1995, 1.442695
    %v1997 = vpow.pop %v1996
    %v1998 = vadd.f32 %v1997, 1.0
    %v1999 = vrcp.pop %v1998
    %v2000 = vmul.f32 1.0, %v1999
    %v2001 = vtanh.pop %v1464
    %2003 = vrot.lane.b32.xlu0 %v2001, 64
    %v2004 = vpop.permute.xlu0 %2003
    %v2006 = vmul.f32 %v2000, %v2004
    %2008 = vrot.lane.b32.xlu0 %v2006, 64
    %v2009 = vpop.permute.xlu0 %2008
    %vm2011 = vcmask 523520
    %2012 = vst.msk [vmem:[#allocation9] sm:$0xff] %vm2011, %v2009
    %v2013 = vld [vmem:[#allocation2 + $0x10] sm:$0xff]
    %2014 = vrot.lane.b32.xlu0 %v2006, 32
    %v2015 = vpop.permute.xlu0 %2014
    %v2016 = vsel %vm719, %v2015, 0
    %2018 = vmatprep.subr.mxu0 0.0
    %2019 = vmatpush1.msra.mxu0 %v81
    %2020 = vmatprep.subr.mxu0 0.0
    %2021 = vmatpush1.msra.mxu0 %v82
    %2022 = vmatprep.subr.mxu0 0.0
    %2023 = vmatpush1.msra.mxu0 %v83
    %2024 = vmatprep.subr.mxu0 0.0
    %2025 = vmatpush1.msra.mxu0 %v84
    %2026 = vmatprep.subr.mxu0 0.0
    %2027 = vmatpush1.msra.mxu0 0.0
    %2028 = vmatprep.subr.mxu0 0.0
    %2029 = vmatpush1.msra.mxu0 0.0
    %2030 = vmatprep.subr.mxu0 0.0
    %2031 = vmatpush1.msra.mxu0 0.0
    %2032 = vmatprep.subr.mxu0 0.0
    %2033 = vmatpush1.msra.mxu0 0.0
    %2034 = vmatprep.subr.mxu0 0.0
    %2035 = vmatpush1.msra.mxu0 0.0
    %2036 = vmatprep.subr.mxu0 0.0
    %2037 = vmatpush1.msra.mxu0 0.0
    %2038 = vmatprep.subr.mxu0 0.0
    %2039 = vmatpush1.msra.mxu0 0.0
    %2040 = vmatprep.subr.mxu0 0.0
    %2041 = vmatpush1.msra.mxu0 0.0
    %2042 = vmatprep.subr.mxu0 0.0
    %2043 = vmatpush1.msra.mxu0 0.0
    %2044 = vmatprep.subr.mxu0 0.0
    %2045 = vmatpush1.msra.mxu0 0.0
    %2046 = vmatprep.subr.mxu0 0.0
    %2047 = vmatpush1.msra.mxu0 0.0
    %2048 = vmatprep.subr.mxu0 0.0
    %2049 = vmatpush1.msra.mxu0 0.0
    %2050 = vmatprep.subr.mxu0 0.0
    %2051 = vmatpush1.msra.mxu0 0.0
    %2052 = vmatprep.subr.mxu0 0.0
    %2053 = vmatpush1.msra.mxu0 0.0
    %2054 = vmatprep.subr.mxu0 0.0
    %2055 = vmatpush1.msra.mxu0 0.0
    %2056 = vmatprep.subr.mxu0 0.0
    %2057 = vmatpush1.msra.mxu0 0.0
    %2058 = vmatprep.subr.mxu0 0.0
    %2059 = vmatpush1.msra.mxu0 0.0
    %2060 = vmatprep.subr.mxu0 0.0
    %2061 = vmatpush1.msra.mxu0 0.0
    %2062 = vmatprep.subr.mxu0 0.0
    %2063 = vmatpush1.msra.mxu0 0.0
    %2064 = vmatprep.subr.mxu0 0.0
    %2065 = vmatpush1.msra.mxu0 0.0
    %2066 = vmatprep.subr.mxu0 0.0
    %2067 = vmatpush1.msra.mxu0 0.0
    %2068 = vmatprep.subr.mxu0 0.0
    %2069 = vmatpush1.msra.mxu0 0.0
    %2070 = vmatprep.subr.mxu0 0.0
    %2071 = vmatpush1.msra.mxu0 0.0
    %2072 = vmatprep.subr.mxu0 0.0
    %2073 = vmatpush1.msra.mxu0 0.0
    %2074 = vmatprep.subr.mxu0 0.0
    %2075 = vmatpush1.msra.mxu0 0.0
    %2076 = vmatprep.subr.mxu0 0.0
    %2077 = vmatpush1.msra.mxu0 0.0
    %2078 = vmatprep.subr.mxu0 0.0
    %2079 = vmatpush1.msra.mxu0 0.0
    %2080 = vmatprep.subr.mxu0 0.0
    %2081 = vmatpush1.msra.mxu0 0.0
    %2082 = vmatprep.mubr.f32.mxu0 0.0
    %2083 = vmatmul.mubr.f32.gmra.mrb[0].mxu0 %v2016
    %v2084 = vpop.f32.mrb[0].mxu0
    %v2085 = vadd.f32 0.0, %v2084
    %v2086 = vpop.f32.mrb[0].mxu0
    %2087 = vdwg.mxu0
    %v2088 = vadd.f32 %v2013, %v2085
    %v2089 = vxor.u32 %v2088, 2147483648
    %v2090 = vmul.f32 %v2089, 1.442695
    %v2091 = vpow.pop %v2090
    %v2092 = vadd.f32 %v2091, 1.0
    %v2093 = vrcp.pop %v2092
    %v2094 = vmul.f32 1.0, %v2093
    %v2095 = vtanh.pop %v2088
    %v2096 = vmul.f32 %v2094, %v1464
    %2098 = vrot.lane.b32.xlu0 %v2095, 64
    %v2099 = vpop.permute.xlu0 %2098
    %v2101 = vmul.f32 %v2094, %v2099
    %2103 = vrot.lane.b32.xlu0 %v2101, 32
    %v2104 = vpop.permute.xlu0 %2103
    %v2106 = vadd.f32 %v2096, %v2104
    %2108 = vrot.lane.b32.xlu0 %v2106, 96
    %v2109 = vpop.permute.xlu0 %2108
    %v2110 = vsel %vm719, %v2109, 0
    %2112 = vmatprep.subr.mxu0 0.0
    %2113 = vmatpush1.msra.mxu0 %v86
    %2114 = vmatprep.subr.mxu0 0.0
    %2115 = vmatpush1.msra.mxu0 %v87
    %2116 = vmatprep.subr.mxu0 0.0
    %2117 = vmatpush1.msra.mxu0 %v88
    %2118 = vmatprep.subr.mxu0 0.0
    %2119 = vmatpush1.msra.mxu0 %v89
    %2120 = vmatprep.subr.mxu0 0.0
    %2121 = vmatpush1.msra.mxu0 0.0
    %2122 = vmatprep.subr.mxu0 0.0
    %2123 = vmatpush1.msra.mxu0 0.0
    %2124 = vmatprep.subr.mxu0 0.0
    %2125 = vmatpush1.msra.mxu0 0.0
    %2126 = vmatprep.subr.mxu0 0.0
    %2127 = vmatpush1.msra.mxu0 0.0
    %2128 = vmatprep.subr.mxu0 0.0
    %2129 = vmatpush1.msra.mxu0 0.0
    %2130 = vmatprep.subr.mxu0 0.0
    %2131 = vmatpush1.msra.mxu0 0.0
    %2132 = vmatprep.subr.mxu0 0.0
    %2133 = vmatpush1.msra.mxu0 0.0
    %2134 = vmatprep.subr.mxu0 0.0
    %2135 = vmatpush1.msra.mxu0 0.0
    %2136 = vmatprep.subr.mxu0 0.0
    %2137 = vmatpush1.msra.mxu0 0.0
    %2138 = vmatprep.subr.mxu0 0.0
    %2139 = vmatpush1.msra.mxu0 0.0
    %2140 = vmatprep.subr.mxu0 0.0
    %2141 = vmatpush1.msra.mxu0 0.0
    %2142 = vmatprep.subr.mxu0 0.0
    %2143 = vmatpush1.msra.mxu0 0.0
    %2144 = vmatprep.subr.mxu0 0.0
    %2145 = vmatpush1.msra.mxu0 0.0
    %2146 = vmatprep.subr.mxu0 0.0
    %2147 = vmatpush1.msra.mxu0 0.0
    %2148 = vmatprep.subr.mxu0 0.0
    %2149 = vmatpush1.msra.mxu0 0.0
    %2150 = vmatprep.subr.mxu0 0.0
    %2151 = vmatpush1.msra.mxu0 0.0
    %2152 = vmatprep.subr.mxu0 0.0
    %2153 = vmatpush1.msra.mxu0 0.0
    %2154 = vmatprep.subr.mxu0 0.0
    %2155 = vmatpush1.msra.mxu0 0.0
    %2156 = vmatprep.subr.mxu0 0.0
    %2157 = vmatpush1.msra.mxu0 0.0
    %2158 = vmatprep.subr.mxu0 0.0
    %2159 = vmatpush1.msra.mxu0 0.0
    %2160 = vmatprep.subr.mxu0 0.0
    %2161 = vmatpush1.msra.mxu0 0.0
    %2162 = vmatprep.subr.mxu0 0.0
    %2163 = vmatpush1.msra.mxu0 0.0
    %2164 = vmatprep.subr.mxu0 0.0
    %2165 = vmatpush1.msra.mxu0 0.0
    %2166 = vmatprep.subr.mxu0 0.0
    %2167 = vmatpush1.msra.mxu0 0.0
    %2168 = vmatprep.subr.mxu0 0.0
    %2169 = vmatpush1.msra.mxu0 0.0
    %2170 = vmatprep.subr.mxu0 0.0
    %2171 = vmatpush1.msra.mxu0 0.0
    %2172 = vmatprep.subr.mxu0 0.0
    %2173 = vmatpush1.msra.mxu0 0.0
    %2174 = vmatprep.subr.mxu0 0.0
    %2175 = vmatpush1.msra.mxu0 0.0
    %2176 = vmatprep.mubr.f32.mxu0 0.0
    %2177 = vmatmul.mubr.f32.gmra.mrb[0].mxu0 %v2110
    %v2178 = vpop.f32.mrb[0].mxu0
    %v2179 = vadd.f32 %v816, %v2178
    %v2180 = vpop.f32.mrb[0].mxu0
    %2181 = vdwg.mxu0
    %v2182 = vtanh.pop %v2179
    %v2183 = vmul.f32 %v2182, 3.1415927
    %v2184 = vmul.f32 %v2183, 0.5
    %v2185 = vand.u32 2147483647, %v2184
    %vm2186 = vcmp.le.f32.partialorder %v2185, 0.7853982
    %vm2187 = vcmp.lt.s32.totalorder %v2184, 0
    %v2188 = vand.u32 %v2184, 2139095040
    %v2189 = vshrl.u32 %v2188, 23
    %v2190 = vsub.s32 %v2189, 127
    %v2191 = vand.u32 2147483647, %v2184
    %v2192 = vand.u32 %v2191, 8388607
    %v2193 = vor.u32 %v2192, 8388608
    %v2194 = vsub.s32 0, %v2193
    %v2195 = vadd.s32 %v2190, 1
    %vm2196 = vcmp.gt.s32.totalorder %v2195, 0
    %v2197 = vsel %vm2196, %v2195, 0
    %v2198 = vshrl.u32 %v2197, 5
    %v2199 = vand.u32 %v2197, 31
    %v2200 = vsub.s32 32, %v2199
    %v2201 = vshrl.u32 683565275, %v2200
    %v2202 = vshll.u32 683565275, %v2199
    %v2203 = vshrl.u32 2475754826, %v2200
    %v2204 = vor.u32 %v2202, %v2203
    %v2205 = vshll.u32 2475754826, %v2199
    %v2206 = vshrl.u32 2131351028, %v2200
    %v2207 = vor.u32 %v2205, %v2206
    %v2208 = vshll.u32 2131351028, %v2199
    %v2209 = vshrl.u32 2102212464, %v2200
    %v2210 = vor.u32 %v2208, %v2209
    %v2211 = vshll.u32 2102212464, %v2199
    %v2212 = vshrl.u32 920167782, %v2200
    %v2213 = vor.u32 %v2211, %v2212
    %v2214 = vshll.u32 920167782, %v2199
    %v2215 = vshrl.u32 1326507024, %v2200
    %v2216 = vor.u32 %v2214, %v2215
    %vm2217 = vcmp.lt.s32.totalorder %v2198, 1
    %vm2218 = vcmp.lt.s32.totalorder %v2198, 2
    %vm2219 = vcmp.lt.s32.totalorder %v2198, 3
    %vm2220 = vcmp.lt.s32.totalorder %v2198, 4
    %v2221 = vsel %vm2217, %v2201, %v2204
    %v2222 = vsel %vm2220, %v2210, 2102212464
    %v2223 = vsel %vm2219, %v2207, %v2222
    %v2224 = vsel %vm2218, %v2221, %v2223
    %v2225 = vsel %vm2217, %v2204, %v2207
    %v2226 = vsel %vm2220, %v2213, 920167782
    %v2227 = vsel %vm2219, %v2210, %v2226
    %v2228 = vsel %vm2218, %v2225, %v2227
    %v2229 = vsel %vm2217, %v2207, %v2210
    %v2230 = vsel %vm2220, %v2216, 1326507024
    %v2231 = vsel %vm2219, %v2213, %v2230
    %v2232 = vsel %vm2218, %v2229, %v2231
    %v2233 = vshll.u32 %v2193, 8
    %v2234 = vmul.u32.u64.compose %v2233, %v2232
    %v2235 = vextract.low.u32 %v2234
    %v2236 = vextract.high.u32 %v2234
    %v2237 = vmul.u32.u64.compose %v2233, %v2228
    %v2238 = vextract.low.u32 %v2237
    %v2239 = vextract.high.u32 %v2237
    %v2240 = vmul.u32 %v2233, %v2224
    %v2241 = vadd.s32 %v2236, %v2238
    %vm2242 = vc.u32 %v2236, %v2238
    %v2243 = vadd.s32 %v2239, 1
    %v2244 = vsel %vm2242, %v2243, %v2239
    %v2245 = vadd.s32 %v2240, %v2244
    %v2246 = vadd.s32 %v2245, 536870912
    %v2247 = vshrl.u32 %v2246, 30
    %v2248 = vshll.u32 %v2247, 30
    %v2249 = vsub.s32 %v2245, %v2248
    %vm2250 = vcmp.lt.s32.totalorder %v2249, 0
    %v2251 = vsub.s32 0, %v2249
    %v2252 = vsel %vm2250, %v2251, %v2249
    %v2253 = vclz %v2252
    %v2254 = vsub.s32 %v2253, 2
    %vm2255 = vcmp.gt.s32.totalorder 0, %v2254
    %v2256 = vsel %vm2255, 0, %v2254
    %v2257 = vsub.s32 32, %v2256
    %v2258 = vshll.u32 %v2249, %v2256
    %v2259 = vshrl.u32 %v2241, %v2257
    %v2260 = vor.u32 %v2258, %v2259
    %v2261 = vsub.s32 4294967266, %v2256
    %v2262 = vadd.s32 %v2261, 127
    %v2263 = vshll.u32 %v2262, 23
    %v2264 = vor.u32 4788187, %v2263
    %v2265 = vand.u32 2147483647, %v2264
    %v2267 = vcvt.s32.f32 %v2260
    %v2268 = vmul.f32 %v2267, %v2265
    %v2269 = vxor.u32 %v2268, 2147483648
    %v2270 = vsel %vm2187, %v2269, %v2268
    %v2271 = vsub.s32 4, %v2247
    %v2272 = vsel %vm2187, %v2271, %v2247
    %v2273 = vsel %vm2186, %v2184, %v2270
    %v2274 = vsel %vm2186, 0, %v2272
    %v2275 = vcosq.f32.pop %v2273
    %v2276 = vsinq.f32.pop %v2273
    %vm2277 = vweird.f32 %v2184
    %v2278 = vand.u32 %v2274, 3
    %vm2279 = vcmp.lt.s32.totalorder %v2278, 2
    %vm2280 = vcmp.eq.s32.totalorder %v2278, 0
    %v2281 = vxor.u32 %v2276, 2147483648
    %v2282 = vsel %vm2280, %v2275, %v2281
    %vm2283 = vcmp.eq.s32.totalorder %v2278, 2
    %v2284 = vxor.u32 %v2275, 2147483648
    %v2285 = vsel %vm2283, %v2284, %v2276
    %v2286 = vsel %vm2279, %v2282, %v2285
    %v2287 = vsel %vm2277, nan, %v2286
    %v2288 = vand.u32 2147483647, %v2184
    %vm2289 = vcmp.le.f32.partialorder %v2288, 0.7853982
    %vm2290 = vcmp.lt.s32.totalorder %v2184, 0
    %v2291 = vand.u32 %v2184, 2139095040
    %v2292 = vshrl.u32 %v2291, 23
    %v2293 = vsub.s32 %v2292, 127
    %v2294 = vand.u32 2147483647, %v2184
    %v2295 = vand.u32 %v2294, 8388607
    %v2296 = vor.u32 %v2295, 8388608
    %v2297 = vsub.s32 0, %v2296
    %v2298 = vadd.s32 %v2293, 1
    %vm2299 = vcmp.gt.s32.totalorder %v2298, 0
    %v2300 = vsel %vm2299, %v2298, 0
    %v2301 = vshrl.u32 %v2300, 5
    %v2302 = vand.u32 %v2300, 31
    %v2303 = vsub.s32 32, %v2302
    %v2304 = vshrl.u32 683565275, %v2303
    %v2305 = vshll.u32 683565275, %v2302
    %v2306 = vshrl.u32 2475754826, %v2303
    %v2307 = vor.u32 %v2305, %v2306
    %v2308 = vshll.u32 2475754826, %v2302
    %v2309 = vshrl.u32 2131351028, %v2303
    %v2310 = vor.u32 %v2308, %v2309
    %v2311 = vshll.u32 2131351028, %v2302
    %v2312 = vshrl.u32 2102212464, %v2303
    %v2313 = vor.u32 %v2311, %v2312
    %v2314 = vshll.u32 2102212464, %v2302
    %v2315 = vshrl.u32 920167782, %v2303
    %v2316 = vor.u32 %v2314, %v2315
    %v2317 = vshll.u32 920167782, %v2302
    %v2318 = vshrl.u32 1326507024, %v2303
    %v2319 = vor.u32 %v2317, %v2318
    %vm2320 = vcmp.lt.s32.totalorder %v2301, 1
    %vm2321 = vcmp.lt.s32.totalorder %v2301, 2
    %vm2322 = vcmp.lt.s32.totalorder %v2301, 3
    %vm2323 = vcmp.lt.s32.totalorder %v2301, 4
    %v2324 = vsel %vm2320, %v2304, %v2307
    %v2325 = vsel %vm2323, %v2313, 2102212464
    %v2326 = vsel %vm2322, %v2310, %v2325
    %v2327 = vsel %vm2321, %v2324, %v2326
    %v2328 = vsel %vm2320, %v2307, %v2310
    %v2329 = vsel %vm2323, %v2316, 920167782
    %v2330 = vsel %vm2322, %v2313, %v2329
    %v2331 = vsel %vm2321, %v2328, %v2330
    %v2332 = vsel %vm2320, %v2310, %v2313
    %v2333 = vsel %vm2323, %v2319, 1326507024
    %v2334 = vsel %vm2322, %v2316, %v2333
    %v2335 = vsel %vm2321, %v2332, %v2334
    %v2336 = vshll.u32 %v2296, 8
    %v2337 = vmul.u32.u64.compose %v2336, %v2335
    %v2338 = vextract.low.u32 %v2337
    %v2339 = vextract.high.u32 %v2337
    %v2340 = vmul.u32.u64.compose %v2336, %v2331
    %v2341 = vextract.low.u32 %v2340
    %v2342 = vextract.high.u32 %v2340
    %v2343 = vmul.u32 %v2336, %v2327
    %v2344 = vadd.s32 %v2339, %v2341
    %vm2345 = vc.u32 %v2339, %v2341
    %v2346 = vadd.s32 %v2342, 1
    %v2347 = vsel %vm2345, %v2346, %v2342
    %v2348 = vadd.s32 %v2343, %v2347
    %v2349 = vadd.s32 %v2348, 536870912
    %v2350 = vshrl.u32 %v2349, 30
    %v2351 = vshll.u32 %v2350, 30
    %v2352 = vsub.s32 %v2348, %v2351
    %vm2353 = vcmp.lt.s32.totalorder %v2352, 0
    %v2354 = vsub.s32 0, %v2352
    %v2355 = vsel %vm2353, %v2354, %v2352
    %v2356 = vclz %v2355
    %v2357 = vsub.s32 %v2356, 2
    %vm2358 = vcmp.gt.s32.totalorder 0, %v2357
    %v2359 = vsel %vm2358, 0, %v2357
    %v2360 = vsub.s32 32, %v2359
    %v2361 = vshll.u32 %v2352, %v2359
    %v2362 = vshrl.u32 %v2344, %v2360
    %v2363 = vor.u32 %v2361, %v2362
    %v2364 = vsub.s32 4294967266, %v2359
    %v2365 = vadd.s32 %v2364, 127
    %v2366 = vshll.u32 %v2365, 23
    %v2367 = vor.u32 4788187, %v2366
    %v2368 = vand.u32 2147483647, %v2367
    %v2370 = vcvt.s32.f32 %v2363
    %v2371 = vmul.f32 %v2370, %v2368
    %v2372 = vxor.u32 %v2371, 2147483648
    %v2373 = vsel %vm2290, %v2372, %v2371
    %v2374 = vsub.s32 4, %v2350
    %v2375 = vsel %vm2290, %v2374, %v2350
    %v2376 = vsel %vm2289, %v2184, %v2373
    %v2377 = vsel %vm2289, 0, %v2375
    %v2378 = vcosq.f32.pop %v2376
    %v2379 = vsinq.f32.pop %v2376
    %vm2380 = vweird.f32 %v2184
    %v2381 = vadd.s32 %v2377, 3
    %v2382 = vand.u32 %v2381, 3
    %vm2383 = vcmp.lt.s32.totalorder %v2382, 2
    %vm2384 = vcmp.eq.s32.totalorder %v2382, 0
    %v2385 = vxor.u32 %v2379, 2147483648
    %v2386 = vsel %vm2384, %v2378, %v2385
    %vm2387 = vcmp.eq.s32.totalorder %v2382, 2
    %v2388 = vxor.u32 %v2378, 2147483648
    %v2389 = vsel %vm2387, %v2388, %v2379
    %v2390 = vsel %vm2383, %v2386, %v2389
    %v2391 = vsel %vm2380, nan, %v2390
    %2393 = vrot.lane.b32.xlu0 %v2391, 4
    %v2394 = vpop.permute.xlu0 %2393
    %v2396 = vsel %vm1107, %v2287, %v2394
    %v2398 = vsel %vm1109, %v2396, 0
    %2400 = vmatprep.subr.mxu0 0.0
    %2401 = vmatpush1.msra.mxu0 %v96
    %2402 = vmatprep.subr.mxu0 0.0
    %2403 = vmatpush1.msra.mxu0 0.0
    %2404 = vmatprep.subr.mxu0 0.0
    %2405 = vmatpush1.msra.mxu0 0.0
    %2406 = vmatprep.subr.mxu0 0.0
    %2407 = vmatpush1.msra.mxu0 0.0
    %2408 = vmatprep.subr.mxu0 0.0
    %2409 = vmatpush1.msra.mxu0 0.0
    %2410 = vmatprep.subr.mxu0 0.0
    %2411 = vmatpush1.msra.mxu0 0.0
    %2412 = vmatprep.subr.mxu0 0.0
    %2413 = vmatpush1.msra.mxu0 0.0
    %2414 = vmatprep.subr.mxu0 0.0
    %2415 = vmatpush1.msra.mxu0 0.0
    %2416 = vmatprep.subr.mxu0 0.0
    %2417 = vmatpush1.msra.mxu0 0.0
    %2418 = vmatprep.subr.mxu0 0.0
    %2419 = vmatpush1.msra.mxu0 0.0
    %2420 = vmatprep.subr.mxu0 0.0
    %2421 = vmatpush1.msra.mxu0 0.0
    %2422 = vmatprep.subr.mxu0 0.0
    %2423 = vmatpush1.msra.mxu0 0.0
    %2424 = vmatprep.subr.mxu0 0.0
    %2425 = vmatpush1.msra.mxu0 0.0
    %2426 = vmatprep.subr.mxu0 0.0
    %2427 = vmatpush1.msra.mxu0 0.0
    %2428 = vmatprep.subr.mxu0 0.0
    %2429 = vmatpush1.msra.mxu0 0.0
    %2430 = vmatprep.subr.mxu0 0.0
    %2431 = vmatpush1.msra.mxu0 0.0
    %2432 = vmatprep.subr.mxu0 0.0
    %2433 = vmatpush1.msra.mxu0 0.0
    %2434 = vmatprep.subr.mxu0 0.0
    %2435 = vmatpush1.msra.mxu0 0.0
    %2436 = vmatprep.subr.mxu0 0.0
    %2437 = vmatpush1.msra.mxu0 0.0
    %2438 = vmatprep.subr.mxu0 0.0
    %2439 = vmatpush1.msra.mxu0 0.0
    %2440 = vmatprep.subr.mxu0 0.0
    %2441 = vmatpush1.msra.mxu0 0.0
    %2442 = vmatprep.subr.mxu0 0.0
    %2443 = vmatpush1.msra.mxu0 0.0
    %2444 = vmatprep.subr.mxu0 0.0
    %2445 = vmatpush1.msra.mxu0 0.0
    %2446 = vmatprep.subr.mxu0 0.0
    %2447 = vmatpush1.msra.mxu0 0.0
    %2448 = vmatprep.subr.mxu0 0.0
    %2449 = vmatpush1.msra.mxu0 0.0
    %2450 = vmatprep.subr.mxu0 0.0
    %2451 = vmatpush1.msra.mxu0 0.0
    %2452 = vmatprep.subr.mxu0 0.0
    %2453 = vmatpush1.msra.mxu0 0.0
    %2454 = vmatprep.subr.mxu0 0.0
    %2455 = vmatpush1.msra.mxu0 0.0
    %2456 = vmatprep.subr.mxu0 0.0
    %2457 = vmatpush1.msra.mxu0 0.0
    %2458 = vmatprep.subr.mxu0 0.0
    %2459 = vmatpush1.msra.mxu0 0.0
    %2460 = vmatprep.subr.mxu0 0.0
    %2461 = vmatpush1.msra.mxu0 0.0
    %2462 = vmatprep.subr.mxu0 0.0
    %2463 = vmatpush1.msra.mxu0 0.0
    %2464 = vmatprep.mubr.f32.mxu0 0.0
    %2465 = vmatmul.mubr.f32.gmra.mrb[0].mxu0 %v2398
    %v2466 = vpop.f32.mrb[0].mxu0
    %v2467 = vadd.f32 0.0, %v2466
    %v2468 = vpop.f32.mrb[0].mxu0
    %2469 = vdwg.mxu0
    %2471 = vrot.lane.b32.xlu0 %v2467, 112
    %v2472 = vpop.permute.xlu0 %2471
    %v2474 = vmul.f32 %v2467, %v2472
    %2476 = vrot.lane.b32.xlu0 %v2474, 96
    %v2477 = vpop.permute.xlu0 %2476
    %v2479 = vmul.f32 %v2474, %v2477
    %v2481 = vsel %vm104, %v2479, 0
    %2483 = vmatprep.subr.mxu0 0.0
    %2484 = vmatpush1.msra.mxu0 %v91
    %2485 = vmatprep.subr.mxu0 0.0
    %2486 = vmatpush1.msra.mxu0 %v92
    %2487 = vmatprep.subr.mxu0 0.0
    %2488 = vmatpush1.msra.mxu0 0.0
    %2489 = vmatprep.subr.mxu0 0.0
    %2490 = vmatpush1.msra.mxu0 0.0
    %2491 = vmatprep.subr.mxu0 0.0
    %2492 = vmatpush1.msra.mxu0 0.0
    %2493 = vmatprep.subr.mxu0 0.0
    %2494 = vmatpush1.msra.mxu0 0.0
    %2495 = vmatprep.subr.mxu0 0.0
    %2496 = vmatpush1.msra.mxu0 0.0
    %2497 = vmatprep.subr.mxu0 0.0
    %2498 = vmatpush1.msra.mxu0 0.0
    %2499 = vmatprep.subr.mxu0 0.0
    %2500 = vmatpush1.msra.mxu0 0.0
    %2501 = vmatprep.subr.mxu0 0.0
    %2502 = vmatpush1.msra.mxu0 0.0
    %2503 = vmatprep.subr.mxu0 0.0
    %2504 = vmatpush1.msra.mxu0 0.0
    %2505 = vmatprep.subr.mxu0 0.0
    %2506 = vmatpush1.msra.mxu0 0.0
    %2507 = vmatprep.subr.mxu0 0.0
    %2508 = vmatpush1.msra.mxu0 0.0
    %2509 = vmatprep.subr.mxu0 0.0
    %2510 = vmatpush1.msra.mxu0 0.0
    %2511 = vmatprep.subr.mxu0 0.0
    %2512 = vmatpush1.msra.mxu0 0.0
    %2513 = vmatprep.subr.mxu0 0.0
    %2514 = vmatpush1.msra.mxu0 0.0
    %2515 = vmatprep.subr.mxu0 0.0
    %2516 = vmatpush1.msra.mxu0 0.0
    %2517 = vmatprep.subr.mxu0 0.0
    %2518 = vmatpush1.msra.mxu0 0.0
    %2519 = vmatprep.subr.mxu0 0.0
    %2520 = vmatpush1.msra.mxu0 0.0
    %2521 = vmatprep.subr.mxu0 0.0
    %2522 = vmatpush1.msra.mxu0 0.0
    %2523 = vmatprep.subr.mxu0 0.0
    %2524 = vmatpush1.msra.mxu0 0.0
    %2525 = vmatprep.subr.mxu0 0.0
    %2526 = vmatpush1.msra.mxu0 0.0
    %2527 = vmatprep.subr.mxu0 0.0
    %2528 = vmatpush1.msra.mxu0 0.0
    %2529 = vmatprep.subr.mxu0 0.0
    %2530 = vmatpush1.msra.mxu0 0.0
    %2531 = vmatprep.subr.mxu0 0.0
    %2532 = vmatpush1.msra.mxu0 0.0
    %2533 = vmatprep.subr.mxu0 0.0
    %2534 = vmatpush1.msra.mxu0 0.0
    %2535 = vmatprep.subr.mxu0 0.0
    %2536 = vmatpush1.msra.mxu0 0.0
    %2537 = vmatprep.subr.mxu0 0.0
    %2538 = vmatpush1.msra.mxu0 0.0
    %2539 = vmatprep.subr.mxu0 0.0
    %2540 = vmatpush1.msra.mxu0 0.0
    %2541 = vmatprep.subr.mxu0 0.0
    %2542 = vmatpush1.msra.mxu0 0.0
    %2543 = vmatprep.subr.mxu0 0.0
    %2544 = vmatpush1.msra.mxu0 0.0
    %2545 = vmatprep.subr.mxu0 0.0
    %2546 = vmatpush1.msra.mxu0 0.0
    %2547 = vmatprep.mubr.f32.mxu0 0.0
    %2548 = vmatmul.mubr.f32.gmra.mrb[0].mxu0 %v2481
    %v2549 = vpop.f32.mrb[0].mxu0
    %v2550 = vadd.f32 0.0, %v2549
    %v2551 = vpop.f32.mrb[0].mxu0
    %2552 = vdwg.mxu0
    %v2553 = vmul.f32 %v2550, %v2550
    %2555 = vrot.lane.b32.xlu0 %v2553, 112
    %v2556 = vpop.permute.xlu0 %2555
    %v2558 = vadd.f32 %v2553, %v2556
    %v2560 = vsel %vm104, %v2558, 0
    %2562 = vmatprep.subr.mxu0 0.0
    %2563 = vmatpush1.msra.mxu0 %v93
    %2564 = vmatprep.subr.mxu0 0.0
    %2565 = vmatpush1.msra.mxu0 %v94
    %2566 = vmatprep.subr.mxu0 0.0
    %2567 = vmatpush1.msra.mxu0 0.0
    %2568 = vmatprep.subr.mxu0 0.0
    %2569 = vmatpush1.msra.mxu0 0.0
    %2570 = vmatprep.subr.mxu0 0.0
    %2571 = vmatpush1.msra.mxu0 0.0
    %2572 = vmatprep.subr.mxu0 0.0
    %2573 = vmatpush1.msra.mxu0 0.0
    %2574 = vmatprep.subr.mxu0 0.0
    %2575 = vmatpush1.msra.mxu0 0.0
    %2576 = vmatprep.subr.mxu0 0.0
    %2577 = vmatpush1.msra.mxu0 0.0
    %2578 = vmatprep.subr.mxu0 0.0
    %2579 = vmatpush1.msra.mxu0 0.0
    %2580 = vmatprep.subr.mxu0 0.0
    %2581 = vmatpush1.msra.mxu0 0.0
    %2582 = vmatprep.subr.mxu0 0.0
    %2583 = vmatpush1.msra.mxu0 0.0
    %2584 = vmatprep.subr.mxu0 0.0
    %2585 = vmatpush1.msra.mxu0 0.0
    %2586 = vmatprep.subr.mxu0 0.0
    %2587 = vmatpush1.msra.mxu0 0.0
    %2588 = vmatprep.subr.mxu0 0.0
    %2589 = vmatpush1.msra.mxu0 0.0
    %2590 = vmatprep.subr.mxu0 0.0
    %2591 = vmatpush1.msra.mxu0 0.0
    %2592 = vmatprep.subr.mxu0 0.0
    %2593 = vmatpush1.msra.mxu0 0.0
    %2594 = vmatprep.subr.mxu0 0.0
    %2595 = vmatpush1.msra.mxu0 0.0
    %2596 = vmatprep.subr.mxu0 0.0
    %2597 = vmatpush1.msra.mxu0 0.0
    %2598 = vmatprep.subr.mxu0 0.0
    %2599 = vmatpush1.msra.mxu0 0.0
    %2600 = vmatprep.subr.mxu0 0.0
    %2601 = vmatpush1.msra.mxu0 0.0
    %2602 = vmatprep.subr.mxu0 0.0
    %2603 = vmatpush1.msra.mxu0 0.0
    %2604 = vmatprep.subr.mxu0 0.0
    %2605 = vmatpush1.msra.mxu0 0.0
    %2606 = vmatprep.subr.mxu0 0.0
    %2607 = vmatpush1.msra.mxu0 0.0
    %2608 = vmatprep.subr.mxu0 0.0
    %2609 = vmatpush1.msra.mxu0 0.0
    %2610 = vmatprep.subr.mxu0 0.0
    %2611 = vmatpush1.msra.mxu0 0.0
    %2612 = vmatprep.subr.mxu0 0.0
    %2613 = vmatpush1.msra.mxu0 0.0
    %2614 = vmatprep.subr.mxu0 0.0
    %2615 = vmatpush1.msra.mxu0 0.0
    %2616 = vmatprep.subr.mxu0 0.0
    %2617 = vmatpush1.msra.mxu0 0.0
    %2618 = vmatprep.subr.mxu0 0.0
    %2619 = vmatpush1.msra.mxu0 0.0
    %2620 = vmatprep.subr.mxu0 0.0
    %2621 = vmatpush1.msra.mxu0 0.0
    %2622 = vmatprep.subr.mxu0 0.0
    %2623 = vmatpush1.msra.mxu0 0.0
    %2624 = vmatprep.subr.mxu0 0.0
    %2625 = vmatpush1.msra.mxu0 0.0
    %2626 = vmatprep.mubr.f32.mxu0 0.0
    %2627 = vmatmul.mubr.f32.gmra.mrb[0].mxu0 %v2560
    %v2628 = vpop.f32.mrb[0].mxu0
    %v2629 = vadd.f32 %v1276, %v2628
    %v2630 = vpop.f32.mrb[0].mxu0
    %2631 = vdwg.mxu0
    %2633 = vrot.lane.b32.xlu0 %v2629, 96
    %v2634 = vpop.permute.xlu0 %2633
    %v2636 = vadd.f32 %v2088, %v2634
    %v2637 = vxor.u32 %v2636, 2147483648
    %v2638 = vmul.f32 %v2637, 1.442695
    %v2639 = vpow.pop %v2638
    %v2640 = vadd.f32 %v2639, 1.0
    %v2641 = vrcp.pop %v2640
    %v2642 = vmul.f32 1.0, %v2641
    %v2643 = vtanh.pop %v2106
    %2645 = vrot.lane.b32.xlu0 %v2643, 64
    %v2646 = vpop.permute.xlu0 %2645
    %v2648 = vmul.f32 %v2642, %v2646
    %2650 = vrot.lane.b32.xlu0 %v2648, 96
    %v2651 = vpop.permute.xlu0 %2650
    %vm2653 = vcmask 785920
    %2654 = vst.msk [vmem:[#allocation9] sm:$0xff] %vm2653, %v2651
    %v2655 = vld [vmem:[#allocation2 + $0x18] sm:$0xff]
    %2656 = vrot.lane.b32.xlu0 %v2648, 32
    %v2657 = vpop.permute.xlu0 %2656
    %v2658 = vsel %vm719, %v2657, 0
    %2660 = vmatprep.subr.mxu0 0.0
    %2661 = vmatpush1.msra.mxu0 %v81
    %2662 = vmatprep.subr.mxu0 0.0
    %2663 = vmatpush1.msra.mxu0 %v82
    %2664 = vmatprep.subr.mxu0 0.0
    %2665 = vmatpush1.msra.mxu0 %v83
    %2666 = vmatprep.subr.mxu0 0.0
    %2667 = vmatpush1.msra.mxu0 %v84
    %2668 = vmatprep.subr.mxu0 0.0
    %2669 = vmatpush1.msra.mxu0 0.0
    %2670 = vmatprep.subr.mxu0 0.0
    %2671 = vmatpush1.msra.mxu0 0.0
    %2672 = vmatprep.subr.mxu0 0.0
    %2673 = vmatpush1.msra.mxu0 0.0
    %2674 = vmatprep.subr.mxu0 0.0
    %2675 = vmatpush1.msra.mxu0 0.0
    %2676 = vmatprep.subr.mxu0 0.0
    %2677 = vmatpush1.msra.mxu0 0.0
    %2678 = vmatprep.subr.mxu0 0.0
    %2679 = vmatpush1.msra.mxu0 0.0
    %2680 = vmatprep.subr.mxu0 0.0
    %2681 = vmatpush1.msra.mxu0 0.0
    %2682 = vmatprep.subr.mxu0 0.0
    %2683 = vmatpush1.msra.mxu0 0.0
    %2684 = vmatprep.subr.mxu0 0.0
    %2685 = vmatpush1.msra.mxu0 0.0
    %2686 = vmatprep.subr.mxu0 0.0
    %2687 = vmatpush1.msra.mxu0 0.0
    %2688 = vmatprep.subr.mxu0 0.0
    %2689 = vmatpush1.msra.mxu0 0.0
    %2690 = vmatprep.subr.mxu0 0.0
    %2691 = vmatpush1.msra.mxu0 0.0
    %2692 = vmatprep.subr.mxu0 0.0
    %2693 = vmatpush1.msra.mxu0 0.0
    %2694 = vmatprep.subr.mxu0 0.0
    %2695 = vmatpush1.msra.mxu0 0.0
    %2696 = vmatprep.subr.mxu0 0.0
    %2697 = vmatpush1.msra.mxu0 0.0
    %2698 = vmatprep.subr.mxu0 0.0
    %2699 = vmatpush1.msra.mxu0 0.0
    %2700 = vmatprep.subr.mxu0 0.0
    %2701 = vmatpush1.msra.mxu0 0.0
    %2702 = vmatprep.subr.mxu0 0.0
    %2703 = vmatpush1.msra.mxu0 0.0
    %2704 = vmatprep.subr.mxu0 0.0
    %2705 = vmatpush1.msra.mxu0 0.0
    %2706 = vmatprep.subr.mxu0 0.0
    %2707 = vmatpush1.msra.mxu0 0.0
    %2708 = vmatprep.subr.mxu0 0.0
    %2709 = vmatpush1.msra.mxu0 0.0
    %2710 = vmatprep.subr.mxu0 0.0
    %2711 = vmatpush1.msra.mxu0 0.0
    %2712 = vmatprep.subr.mxu0 0.0
    %2713 = vmatpush1.msra.mxu0 0.0
    %2714 = vmatprep.subr.mxu0 0.0
    %2715 = vmatpush1.msra.mxu0 0.0
    %2716 = vmatprep.subr.mxu0 0.0
    %2717 = vmatpush1.msra.mxu0 0.0
    %2718 = vmatprep.subr.mxu0 0.0
    %2719 = vmatpush1.msra.mxu0 0.0
    %2720 = vmatprep.subr.mxu0 0.0
    %2721 = vmatpush1.msra.mxu0 0.0
    %2722 = vmatprep.subr.mxu0 0.0
    %2723 = vmatpush1.msra.mxu0 0.0
    %2724 = vmatprep.mubr.f32.mxu0 0.0
    %2725 = vmatmul.mubr.f32.gmra.mrb[0].mxu0 %v2658
    %v2726 = vpop.f32.mrb[0].mxu0
    %v2727 = vadd.f32 0.0, %v2726
    %v2728 = vpop.f32.mrb[0].mxu0
    %2729 = vdwg.mxu0
    %v2730 = vadd.f32 %v2655, %v2727
    %v2731 = vxor.u32 %v2730, 2147483648
    %v2732 = vmul.f32 %v2731, 1.442695
    %v2733 = vpow.pop %v2732
    %v2734 = vadd.f32 %v2733, 1.0
    %v2735 = vrcp.pop %v2734
    %v2736 = vmul.f32 1.0, %v2735
    %v2737 = vtanh.pop %v2730
    %v2738 = vmul.f32 %v2736, %v2106
    %2740 = vrot.lane.b32.xlu0 %v2737, 64
    %v2741 = vpop.permute.xlu0 %2740
    %v2743 = vmul.f32 %v2736, %v2741
    %2745 = vrot.lane.b32.xlu0 %v2743, 32
    %v2746 = vpop.permute.xlu0 %2745
    %v2748 = vadd.f32 %v2738, %v2746
    %2750 = vrot.lane.b32.xlu0 %v2748, 96
    %v2751 = vpop.permute.xlu0 %2750
    %v2752 = vsel %vm719, %v2751, 0
    %2754 = vmatprep.subr.mxu0 0.0
    %2755 = vmatpush1.msra.mxu0 %v86
    %2756 = vmatprep.subr.mxu0 0.0
    %2757 = vmatpush1.msra.mxu0 %v87
    %2758 = vmatprep.subr.mxu0 0.0
    %2759 = vmatpush1.msra.mxu0 %v88
    %2760 = vmatprep.subr.mxu0 0.0
    %2761 = vmatpush1.msra.mxu0 %v89
    %2762 = vmatprep.subr.mxu0 0.0
    %2763 = vmatpush1.msra.mxu0 0.0
    %2764 = vmatprep.subr.mxu0 0.0
    %2765 = vmatpush1.msra.mxu0 0.0
    %2766 = vmatprep.subr.mxu0 0.0
    %2767 = vmatpush1.msra.mxu0 0.0
    %2768 = vmatprep.subr.mxu0 0.0
    %2769 = vmatpush1.msra.mxu0 0.0
    %2770 = vmatprep.subr.mxu0 0.0
    %2771 = vmatpush1.msra.mxu0 0.0
    %2772 = vmatprep.subr.mxu0 0.0
    %2773 = vmatpush1.msra.mxu0 0.0
    %2774 = vmatprep.subr.mxu0 0.0
    %2775 = vmatpush1.msra.mxu0 0.0
    %2776 = vmatprep.subr.mxu0 0.0
    %2777 = vmatpush1.msra.mxu0 0.0
    %2778 = vmatprep.subr.mxu0 0.0
    %2779 = vmatpush1.msra.mxu0 0.0
    %2780 = vmatprep.subr.mxu0 0.0
    %2781 = vmatpush1.msra.mxu0 0.0
    %2782 = vmatprep.subr.mxu0 0.0
    %2783 = vmatpush1.msra.mxu0 0.0
    %2784 = vmatprep.subr.mxu0 0.0
    %2785 = vmatpush1.msra.mxu0 0.0
    %2786 = vmatprep.subr.mxu0 0.0
    %2787 = vmatpush1.msra.mxu0 0.0
    %2788 = vmatprep.subr.mxu0 0.0
    %2789 = vmatpush1.msra.mxu0 0.0
    %2790 = vmatprep.subr.mxu0 0.0
    %2791 = vmatpush1.msra.mxu0 0.0
    %2792 = vmatprep.subr.mxu0 0.0
    %2793 = vmatpush1.msra.mxu0 0.0
    %2794 = vmatprep.subr.mxu0 0.0
    %2795 = vmatpush1.msra.mxu0 0.0
    %2796 = vmatprep.subr.mxu0 0.0
    %2797 = vmatpush1.msra.mxu0 0.0
    %2798 = vmatprep.subr.mxu0 0.0
    %2799 = vmatpush1.msra.mxu0 0.0
    %2800 = vmatprep.subr.mxu0 0.0
    %2801 = vmatpush1.msra.mxu0 0.0
    %2802 = vmatprep.subr.mxu0 0.0
    %2803 = vmatpush1.msra.mxu0 0.0
    %2804 = vmatprep.subr.mxu0 0.0
    %2805 = vmatpush1.msra.mxu0 0.0
    %2806 = vmatprep.subr.mxu0 0.0
    %2807 = vmatpush1.msra.mxu0 0.0
    %2808 = vmatprep.subr.mxu0 0.0
    %2809 = vmatpush1.msra.mxu0 0.0
    %2810 = vmatprep.subr.mxu0 0.0
    %2811 = vmatpush1.msra.mxu0 0.0
    %2812 = vmatprep.subr.mxu0 0.0
    %2813 = vmatpush1.msra.mxu0 0.0
    %2814 = vmatprep.subr.mxu0 0.0
    %2815 = vmatpush1.msra.mxu0 0.0
    %2816 = vmatprep.subr.mxu0 0.0
    %2817 = vmatpush1.msra.mxu0 0.0
    %2818 = vmatprep.mubr.f32.mxu0 0.0
    %2819 = vmatmul.mubr.f32.gmra.mrb[0].mxu0 %v2752
    %v2820 = vpop.f32.mrb[0].mxu0
    %v2821 = vadd.f32 %v816, %v2820
    %v2822 = vpop.f32.mrb[0].mxu0
    %2823 = vdwg.mxu0
    %v2824 = vtanh.pop %v2821
    %v2825 = vmul.f32 %v2824, 3.1415927
    %v2826 = vmul.f32 %v2825, 0.5
    %v2827 = vand.u32 2147483647, %v2826
    %vm2828 = vcmp.le.f32.partialorder %v2827, 0.7853982
    %vm2829 = vcmp.lt.s32.totalorder %v2826, 0
    %v2830 = vand.u32 %v2826, 2139095040
    %v2831 = vshrl.u32 %v2830, 23
    %v2832 = vsub.s32 %v2831, 127
    %v2833 = vand.u32 2147483647, %v2826
    %v2834 = vand.u32 %v2833, 8388607
    %v2835 = vor.u32 %v2834, 8388608
    %v2836 = vsub.s32 0, %v2835
    %v2837 = vadd.s32 %v2832, 1
    %vm2838 = vcmp.gt.s32.totalorder %v2837, 0
    %v2839 = vsel %vm2838, %v2837, 0
    %v2840 = vshrl.u32 %v2839, 5
    %v2841 = vand.u32 %v2839, 31
    %v2842 = vsub.s32 32, %v2841
    %v2843 = vshrl.u32 683565275, %v2842
    %v2844 = vshll.u32 683565275, %v2841
    %v2845 = vshrl.u32 2475754826, %v2842
    %v2846 = vor.u32 %v2844, %v2845
    %v2847 = vshll.u32 2475754826, %v2841
    %v2848 = vshrl.u32 2131351028, %v2842
    %v2849 = vor.u32 %v2847, %v2848
    %v2850 = vshll.u32 2131351028, %v2841
    %v2851 = vshrl.u32 2102212464, %v2842
    %v2852 = vor.u32 %v2850, %v2851
    %v2853 = vshll.u32 2102212464, %v2841
    %v2854 = vshrl.u32 920167782, %v2842
    %v2855 = vor.u32 %v2853, %v2854
    %v2856 = vshll.u32 920167782, %v2841
    %v2857 = vshrl.u32 1326507024, %v2842
    %v2858 = vor.u32 %v2856, %v2857
    %vm2859 = vcmp.lt.s32.totalorder %v2840, 1
    %vm2860 = vcmp.lt.s32.totalorder %v2840, 2
    %vm2861 = vcmp.lt.s32.totalorder %v2840, 3
    %vm2862 = vcmp.lt.s32.totalorder %v2840, 4
    %v2863 = vsel %vm2859, %v2843, %v2846
    %v2864 = vsel %vm2862, %v2852, 2102212464
    %v2865 = vsel %vm2861, %v2849, %v2864
    %v2866 = vsel %vm2860, %v2863, %v2865
    %v2867 = vsel %vm2859, %v2846, %v2849
    %v2868 = vsel %vm2862, %v2855, 920167782
    %v2869 = vsel %vm2861, %v2852, %v2868
    %v2870 = vsel %vm2860, %v2867, %v2869
    %v2871 = vsel %vm2859, %v2849, %v2852
    %v2872 = vsel %vm2862, %v2858, 1326507024
    %v2873 = vsel %vm2861, %v2855, %v2872
    %v2874 = vsel %vm2860, %v2871, %v2873
    %v2875 = vshll.u32 %v2835, 8
    %v2876 = vmul.u32.u64.compose %v2875, %v2874
    %v2877 = vextract.low.u32 %v2876
    %v2878 = vextract.high.u32 %v2876
    %v2879 = vmul.u32.u64.compose %v2875, %v2870
    %v2880 = vextract.low.u32 %v2879
    %v2881 = vextract.high.u32 %v2879
    %v2882 = vmul.u32 %v2875, %v2866
    %v2883 = vadd.s32 %v2878, %v2880
    %vm2884 = vc.u32 %v2878, %v2880
    %v2885 = vadd.s32 %v2881, 1
    %v2886 = vsel %vm2884, %v2885, %v2881
    %v2887 = vadd.s32 %v2882, %v2886
    %v2888 = vadd.s32 %v2887, 536870912
    %v2889 = vshrl.u32 %v2888, 30
    %v2890 = vshll.u32 %v2889, 30
    %v2891 = vsub.s32 %v2887, %v2890
    %vm2892 = vcmp.lt.s32.totalorder %v2891, 0
    %v2893 = vsub.s32 0, %v2891
    %v2894 = vsel %vm2892, %v2893, %v2891
    %v2895 = vclz %v2894
    %v2896 = vsub.s32 %v2895, 2
    %vm2897 = vcmp.gt.s32.totalorder 0, %v2896
    %v2898 = vsel %vm2897, 0, %v2896
    %v2899 = vsub.s32 32, %v2898
    %v2900 = vshll.u32 %v2891, %v2898
    %v2901 = vshrl.u32 %v2883, %v2899
    %v2902 = vor.u32 %v2900, %v2901
    %v2903 = vsub.s32 4294967266, %v2898
    %v2904 = vadd.s32 %v2903, 127
    %v2905 = vshll.u32 %v2904, 23
    %v2906 = vor.u32 4788187, %v2905
    %v2907 = vand.u32 2147483647, %v2906
    %v2909 = vcvt.s32.f32 %v2902
    %v2910 = vmul.f32 %v2909, %v2907
    %v2911 = vxor.u32 %v2910, 2147483648
    %v2912 = vsel %vm2829, %v2911, %v2910
    %v2913 = vsub.s32 4, %v2889
    %v2914 = vsel %vm2829, %v2913, %v2889
    %v2915 = vsel %vm2828, %v2826, %v2912
    %v2916 = vsel %vm2828, 0, %v2914
    %v2917 = vcosq.f32.pop %v2915
    %v2918 = vsinq.f32.pop %v2915
    %vm2919 = vweird.f32 %v2826
    %v2920 = vand.u32 %v2916, 3
    %vm2921 = vcmp.lt.s32.totalorder %v2920, 2
    %vm2922 = vcmp.eq.s32.totalorder %v2920, 0
    %v2923 = vxor.u32 %v2918, 2147483648
    %v2924 = vsel %vm2922, %v2917, %v2923
    %vm2925 = vcmp.eq.s32.totalorder %v2920, 2
    %v2926 = vxor.u32 %v2917, 2147483648
    %v2927 = vsel %vm2925, %v2926, %v2918
    %v2928 = vsel %vm2921, %v2924, %v2927
    %v2929 = vsel %vm2919, nan, %v2928
    %v2930 = vand.u32 2147483647, %v2826
    %vm2931 = vcmp.le.f32.partialorder %v2930, 0.7853982
    %vm2932 = vcmp.lt.s32.totalorder %v2826, 0
    %v2933 = vand.u32 %v2826, 2139095040
    %v2934 = vshrl.u32 %v2933, 23
    %v2935 = vsub.s32 %v2934, 127
    %v2936 = vand.u32 2147483647, %v2826
    %v2937 = vand.u32 %v2936, 8388607
    %v2938 = vor.u32 %v2937, 8388608
    %v2939 = vsub.s32 0, %v2938
    %v2940 = vadd.s32 %v2935, 1
    %vm2941 = vcmp.gt.s32.totalorder %v2940, 0
    %v2942 = vsel %vm2941, %v2940, 0
    %v2943 = vshrl.u32 %v2942, 5
    %v2944 = vand.u32 %v2942, 31
    %v2945 = vsub.s32 32, %v2944
    %v2946 = vshrl.u32 683565275, %v2945
    %v2947 = vshll.u32 683565275, %v2944
    %v2948 = vshrl.u32 2475754826, %v2945
    %v2949 = vor.u32 %v2947, %v2948
    %v2950 = vshll.u32 2475754826, %v2944
    %v2951 = vshrl.u32 2131351028, %v2945
    %v2952 = vor.u32 %v2950, %v2951
    %v2953 = vshll.u32 2131351028, %v2944
    %v2954 = vshrl.u32 2102212464, %v2945
    %v2955 = vor.u32 %v2953, %v2954
    %v2956 = vshll.u32 2102212464, %v2944
    %v2957 = vshrl.u32 920167782, %v2945
    %v2958 = vor.u32 %v2956, %v2957
    %v2959 = vshll.u32 920167782, %v2944
    %v2960 = vshrl.u32 1326507024, %v2945
    %v2961 = vor.u32 %v2959, %v2960
    %vm2962 = vcmp.lt.s32.totalorder %v2943, 1
    %vm2963 = vcmp.lt.s32.totalorder %v2943, 2
    %vm2964 = vcmp.lt.s32.totalorder %v2943, 3
    %vm2965 = vcmp.lt.s32.totalorder %v2943, 4
    %v2966 = vsel %vm2962, %v2946, %v2949
    %v2967 = vsel %vm2965, %v2955, 2102212464
    %v2968 = vsel %vm2964, %v2952, %v2967
    %v2969 = vsel %vm2963, %v2966, %v2968
    %v2970 = vsel %vm2962, %v2949, %v2952
    %v2971 = vsel %vm2965, %v2958, 920167782
    %v2972 = vsel %vm2964, %v2955, %v2971
    %v2973 = vsel %vm2963, %v2970, %v2972
    %v2974 = vsel %vm2962, %v2952, %v2955
    %v2975 = vsel %vm2965, %v2961, 1326507024
    %v2976 = vsel %vm2964, %v2958, %v2975
    %v2977 = vsel %vm2963, %v2974, %v2976
    %v2978 = vshll.u32 %v2938, 8
    %v2979 = vmul.u32.u64.compose %v2978, %v2977
    %v2980 = vextract.low.u32 %v2979
    %v2981 = vextract.high.u32 %v2979
    %v2982 = vmul.u32.u64.compose %v2978, %v2973
    %v2983 = vextract.low.u32 %v2982
    %v2984 = vextract.high.u32 %v2982
    %v2985 = vmul.u32 %v2978, %v2969
    %v2986 = vadd.s32 %v2981, %v2983
    %vm2987 = vc.u32 %v2981, %v2983
    %v2988 = vadd.s32 %v2984, 1
    %v2989 = vsel %vm2987, %v2988, %v2984
    %v2990 = vadd.s32 %v2985, %v2989
    %v2991 = vadd.s32 %v2990, 536870912
    %v2992 = vshrl.u32 %v2991, 30
    %v2993 = vshll.u32 %v2992, 30
    %v2994 = vsub.s32 %v2990, %v2993
    %vm2995 = vcmp.lt.s32.totalorder %v2994, 0
    %v2996 = vsub.s32 0, %v2994
    %v2997 = vsel %vm2995, %v2996, %v2994
    %v2998 = vclz %v2997
    %v2999 = vsub.s32 %v2998, 2
    %vm3000 = vcmp.gt.s32.totalorder 0, %v2999
    %v3001 = vsel %vm3000, 0, %v2999
    %v3002 = vsub.s32 32, %v3001
    %v3003 = vshll.u32 %v2994, %v3001
    %v3004 = vshrl.u32 %v2986, %v3002
    %v3005 = vor.u32 %v3003, %v3004
    %v3006 = vsub.s32 4294967266, %v3001
    %v3007 = vadd.s32 %v3006, 127
    %v3008 = vshll.u32 %v3007, 23
    %v3009 = vor.u32 4788187, %v3008
    %v3010 = vand.u32 2147483647, %v3009
    %v3012 = vcvt.s32.f32 %v3005
    %v3013 = vmul.f32 %v3012, %v3010
    %v3014 = vxor.u32 %v3013, 2147483648
    %v3015 = vsel %vm2932, %v3014, %v3013
    %v3016 = vsub.s32 4, %v2992
    %v3017 = vsel %vm2932, %v3016, %v2992
    %v3018 = vsel %vm2931, %v2826, %v3015
    %v3019 = vsel %vm2931, 0, %v3017
    %v3020 = vcosq.f32.pop %v3018
    %v3021 = vsinq.f32.pop %v3018
    %vm3022 = vweird.f32 %v2826
    %v3023 = vadd.s32 %v3019, 3
    %v3024 = vand.u32 %v3023, 3
    %vm3025 = vcmp.lt.s32.totalorder %v3024, 2
    %vm3026 = vcmp.eq.s32.totalorder %v3024, 0
    %v3027 = vxor.u32 %v3021, 2147483648
    %v3028 = vsel %vm3026, %v3020, %v3027
    %vm3029 = vcmp.eq.s32.totalorder %v3024, 2
    %v3030 = vxor.u32 %v3020, 2147483648
    %v3031 = vsel %vm3029, %v3030, %v3021
    %v3032 = vsel %vm3025, %v3028, %v3031
    %v3033 = vsel %vm3022, nan, %v3032
    %3035 = vrot.lane.b32.xlu0 %v3033, 4
    %v3036 = vpop.permute.xlu0 %3035
    %v3038 = vsel %vm1107, %v2929, %v3036
    %v3040 = vsel %vm1109, %v3038, 0
    %3042 = vmatprep.subr.mxu0 0.0
    %3043 = vmatpush1.msra.mxu0 %v96
    %3044 = vmatprep.subr.mxu0 0.0
    %3045 = vmatpush1.msra.mxu0 0.0
    %3046 = vmatprep.subr.mxu0 0.0
    %3047 = vmatpush1.msra.mxu0 0.0
    %3048 = vmatprep.subr.mxu0 0.0
    %3049 = vmatpush1.msra.mxu0 0.0
    %3050 = vmatprep.subr.mxu0 0.0
    %3051 = vmatpush1.msra.mxu0 0.0
    %3052 = vmatprep.subr.mxu0 0.0
    %3053 = vmatpush1.msra.mxu0 0.0
    %3054 = vmatprep.subr.mxu0 0.0
    %3055 = vmatpush1.msra.mxu0 0.0
    %3056 = vmatprep.subr.mxu0 0.0
    %3057 = vmatpush1.msra.mxu0 0.0
    %3058 = vmatprep.subr.mxu0 0.0
    %3059 = vmatpush1.msra.mxu0 0.0
    %3060 = vmatprep.subr.mxu0 0.0
    %3061 = vmatpush1.msra.mxu0 0.0
    %3062 = vmatprep.subr.mxu0 0.0
    %3063 = vmatpush1.msra.mxu0 0.0
    %3064 = vmatprep.subr.mxu0 0.0
    %3065 = vmatpush1.msra.mxu0 0.0
    %3066 = vmatprep.subr.mxu0 0.0
    %3067 = vmatpush1.msra.mxu0 0.0
    %3068 = vmatprep.subr.mxu0 0.0
    %3069 = vmatpush1.msra.mxu0 0.0
    %3070 = vmatprep.subr.mxu0 0.0
    %3071 = vmatpush1.msra.mxu0 0.0
    %3072 = vmatprep.subr.mxu0 0.0
    %3073 = vmatpush1.msra.mxu0 0.0
    %3074 = vmatprep.subr.mxu0 0.0
    %3075 = vmatpush1.msra.mxu0 0.0
    %3076 = vmatprep.subr.mxu0 0.0
    %3077 = vmatpush1.msra.mxu0 0.0
    %3078 = vmatprep.subr.mxu0 0.0
    %3079 = vmatpush1.msra.mxu0 0.0
    %3080 = vmatprep.subr.mxu0 0.0
    %3081 = vmatpush1.msra.mxu0 0.0
    %3082 = vmatprep.subr.mxu0 0.0
    %3083 = vmatpush1.msra.mxu0 0.0
    %3084 = vmatprep.subr.mxu0 0.0
    %3085 = vmatpush1.msra.mxu0 0.0
    %3086 = vmatprep.subr.mxu0 0.0
    %3087 = vmatpush1.msra.mxu0 0.0
    %3088 = vmatprep.subr.mxu0 0.0
    %3089 = vmatpush1.msra.mxu0 0.0
    %3090 = vmatprep.subr.mxu0 0.0
    %3091 = vmatpush1.msra.mxu0 0.0
    %3092 = vmatprep.subr.mxu0 0.0
    %3093 = vmatpush1.msra.mxu0 0.0
    %3094 = vmatprep.subr.mxu0 0.0
    %3095 = vmatpush1.msra.mxu0 0.0
    %3096 = vmatprep.subr.mxu0 0.0
    %3097 = vmatpush1.msra.mxu0 0.0
    %3098 = vmatprep.subr.mxu0 0.0
    %3099 = vmatpush1.msra.mxu0 0.0
    %3100 = vmatprep.subr.mxu0 0.0
    %3101 = vmatpush1.msra.mxu0 0.0
    %3102 = vmatprep.subr.mxu0 0.0
    %3103 = vmatpush1.msra.mxu0 0.0
    %3104 = vmatprep.subr.mxu0 0.0
    %3105 = vmatpush1.msra.mxu0 0.0
    %3106 = vmatprep.mubr.f32.mxu0 0.0
    %3107 = vmatmul.mubr.f32.gmra.mrb[0].mxu0 %v3040
    %v3108 = vpop.f32.mrb[0].mxu0
    %v3109 = vadd.f32 0.0, %v3108
    %v3110 = vpop.f32.mrb[0].mxu0
    %3111 = vdwg.mxu0
    %3113 = vrot.lane.b32.xlu0 %v3109, 112
    %v3114 = vpop.permute.xlu0 %3113
    %v3116 = vmul.f32 %v3109, %v3114
    %3118 = vrot.lane.b32.xlu0 %v3116, 96
    %v3119 = vpop.permute.xlu0 %3118
    %v3121 = vmul.f32 %v3116, %v3119
    %v3123 = vsel %vm104, %v3121, 0
    %3125 = vmatprep.subr.mxu0 0.0
    %3126 = vmatpush1.msra.mxu0 %v91
    %3127 = vmatprep.subr.mxu0 0.0
    %3128 = vmatpush1.msra.mxu0 %v92
    %3129 = vmatprep.subr.mxu0 0.0
    %3130 = vmatpush1.msra.mxu0 0.0
    %3131 = vmatprep.subr.mxu0 0.0
    %3132 = vmatpush1.msra.mxu0 0.0
    %3133 = vmatprep.subr.mxu0 0.0
    %3134 = vmatpush1.msra.mxu0 0.0
    %3135 = vmatprep.subr.mxu0 0.0
    %3136 = vmatpush1.msra.mxu0 0.0
    %3137 = vmatprep.subr.mxu0 0.0
    %3138 = vmatpush1.msra.mxu0 0.0
    %3139 = vmatprep.subr.mxu0 0.0
    %3140 = vmatpush1.msra.mxu0 0.0
    %3141 = vmatprep.subr.mxu0 0.0
    %3142 = vmatpush1.msra.mxu0 0.0
    %3143 = vmatprep.subr.mxu0 0.0
    %3144 = vmatpush1.msra.mxu0 0.0
    %3145 = vmatprep.subr.mxu0 0.0
    %3146 = vmatpush1.msra.mxu0 0.0
    %3147 = vmatprep.subr.mxu0 0.0
    %3148 = vmatpush1.msra.mxu0 0.0
    %3149 = vmatprep.subr.mxu0 0.0
    %3150 = vmatpush1.msra.mxu0 0.0
    %3151 = vmatprep.subr.mxu0 0.0
    %3152 = vmatpush1.msra.mxu0 0.0
    %3153 = vmatprep.subr.mxu0 0.0
    %3154 = vmatpush1.msra.mxu0 0.0
    %3155 = vmatprep.subr.mxu0 0.0
    %3156 = vmatpush1.msra.mxu0 0.0
    %3157 = vmatprep.subr.mxu0 0.0
    %3158 = vmatpush1.msra.mxu0 0.0
    %3159 = vmatprep.subr.mxu0 0.0
    %3160 = vmatpush1.msra.mxu0 0.0
    %3161 = vmatprep.subr.mxu0 0.0
    %3162 = vmatpush1.msra.mxu0 0.0
    %3163 = vmatprep.subr.mxu0 0.0
    %3164 = vmatpush1.msra.mxu0 0.0
    %3165 = vmatprep.subr.mxu0 0.0
    %3166 = vmatpush1.msra.mxu0 0.0
    %3167 = vmatprep.subr.mxu0 0.0
    %3168 = vmatpush1.msra.mxu0 0.0
    %3169 = vmatprep.subr.mxu0 0.0
    %3170 = vmatpush1.msra.mxu0 0.0
    %3171 = vmatprep.subr.mxu0 0.0
    %3172 = vmatpush1.msra.mxu0 0.0
    %3173 = vmatprep.subr.mxu0 0.0
    %3174 = vmatpush1.msra.mxu0 0.0
    %3175 = vmatprep.subr.mxu0 0.0
    %3176 = vmatpush1.msra.mxu0 0.0
    %3177 = vmatprep.subr.mxu0 0.0
    %3178 = vmatpush1.msra.mxu0 0.0
    %3179 = vmatprep.subr.mxu0 0.0
    %3180 = vmatpush1.msra.mxu0 0.0
    %3181 = vmatprep.subr.mxu0 0.0
    %3182 = vmatpush1.msra.mxu0 0.0
    %3183 = vmatprep.subr.mxu0 0.0
    %3184 = vmatpush1.msra.mxu0 0.0
    %3185 = vmatprep.subr.mxu0 0.0
    %3186 = vmatpush1.msra.mxu0 0.0
    %3187 = vmatprep.subr.mxu0 0.0
    %3188 = vmatpush1.msra.mxu0 0.0
    %3189 = vmatprep.mubr.f32.mxu0 0.0
    %3190 = vmatmul.mubr.f32.gmra.mrb[0].mxu0 %v3123
    %v3191 = vpop.f32.mrb[0].mxu0
    %v3192 = vadd.f32 0.0, %v3191
    %v3193 = vpop.f32.mrb[0].mxu0
    %3194 = vdwg.mxu0
    %v3195 = vmul.f32 %v3192, %v3192
    %3197 = vrot.lane.b32.xlu0 %v3195, 112
    %v3198 = vpop.permute.xlu0 %3197
    %v3200 = vadd.f32 %v3195, %v3198
    %v3202 = vsel %vm104, %v3200, 0
    %3204 = vmatprep.subr.mxu0 0.0
    %3205 = vmatpush1.msra.mxu0 %v93
    %3206 = vmatprep.subr.mxu0 0.0
    %3207 = vmatpush1.msra.mxu0 %v94
    %3208 = vmatprep.subr.mxu0 0.0
    %3209 = vmatpush1.msra.mxu0 0.0
    %3210 = vmatprep.subr.mxu0 0.0
    %3211 = vmatpush1.msra.mxu0 0.0
    %3212 = vmatprep.subr.mxu0 0.0
    %3213 = vmatpush1.msra.mxu0 0.0
    %3214 = vmatprep.subr.mxu0 0.0
    %3215 = vmatpush1.msra.mxu0 0.0
    %3216 = vmatprep.subr.mxu0 0.0
    %3217 = vmatpush1.msra.mxu0 0.0
    %3218 = vmatprep.subr.mxu0 0.0
    %3219 = vmatpush1.msra.mxu0 0.0
    %3220 = vmatprep.subr.mxu0 0.0
    %3221 = vmatpush1.msra.mxu0 0.0
    %3222 = vmatprep.subr.mxu0 0.0
    %3223 = vmatpush1.msra.mxu0 0.0
    %3224 = vmatprep.subr.mxu0 0.0
    %3225 = vmatpush1.msra.mxu0 0.0
    %3226 = vmatprep.subr.mxu0 0.0
    %3227 = vmatpush1.msra.mxu0 0.0
    %3228 = vmatprep.subr.mxu0 0.0
    %3229 = vmatpush1.msra.mxu0 0.0
    %3230 = vmatprep.subr.mxu0 0.0
    %3231 = vmatpush1.msra.mxu0 0.0
    %3232 = vmatprep.subr.mxu0 0.0
    %3233 = vmatpush1.msra.mxu0 0.0
    %3234 = vmatprep.subr.mxu0 0.0
    %3235 = vmatpush1.msra.mxu0 0.0
    %3236 = vmatprep.subr.mxu0 0.0
    %3237 = vmatpush1.msra.mxu0 0.0
    %3238 = vmatprep.subr.mxu0 0.0
    %3239 = vmatpush1.msra.mxu0 0.0
    %3240 = vmatprep.subr.mxu0 0.0
    %3241 = vmatpush1.msra.mxu0 0.0
    %3242 = vmatprep.subr.mxu0 0.0
    %3243 = vmatpush1.msra.mxu0 0.0
    %3244 = vmatprep.subr.mxu0 0.0
    %3245 = vmatpush1.msra.mxu0 0.0
    %3246 = vmatprep.subr.mxu0 0.0
    %3247 = vmatpush1.msra.mxu0 0.0
    %3248 = vmatprep.subr.mxu0 0.0
    %3249 = vmatpush1.msra.mxu0 0.0
    %3250 = vmatprep.subr.mxu0 0.0
    %3251 = vmatpush1.msra.mxu0 0.0
    %3252 = vmatprep.subr.mxu0 0.0
    %3253 = vmatpush1.msra.mxu0 0.0
    %3254 = vmatprep.subr.mxu0 0.0
    %3255 = vmatpush1.msra.mxu0 0.0
    %3256 = vmatprep.subr.mxu0 0.0
    %3257 = vmatpush1.msra.mxu0 0.0
    %3258 = vmatprep.subr.mxu0 0.0
    %3259 = vmatpush1.msra.mxu0 0.0
    %3260 = vmatprep.subr.mxu0 0.0
    %3261 = vmatpush1.msra.mxu0 0.0
    %3262 = vmatprep.subr.mxu0 0.0
    %3263 = vmatpush1.msra.mxu0 0.0
    %3264 = vmatprep.subr.mxu0 0.0
    %3265 = vmatpush1.msra.mxu0 0.0
    %3266 = vmatprep.subr.mxu0 0.0
    %3267 = vmatpush1.msra.mxu0 0.0
    %3268 = vmatprep.mubr.f32.mxu0 0.0
    %3269 = vmatmul.mubr.f32.gmra.mrb[0].mxu0 %v3202
    %v3270 = vpop.f32.mrb[0].mxu0
    %v3271 = vadd.f32 %v1276, %v3270
    %v3272 = vpop.f32.mrb[0].mxu0
    %3273 = vdwg.mxu0
    %3275 = vrot.lane.b32.xlu0 %v3271, 96
    %v3276 = vpop.permute.xlu0 %3275
    %v3278 = vadd.f32 %v2730, %v3276
    %v3279 = vxor.u32 %v3278, 2147483648
    %v3280 = vmul.f32 %v3279, 1.442695
    %v3281 = vpow.pop %v3280
    %v3282 = vadd.f32 %v3281, 1.0
    %v3283 = vrcp.pop %v3282
    %v3284 = vmul.f32 1.0, %v3283
    %v3285 = vtanh.pop %v2748
    %3287 = vrot.lane.b32.xlu0 %v3285, 64
    %v3288 = vpop.permute.xlu0 %3287
    %v3290 = vmul.f32 %v3284, %v3288
    %vm3291 = vcmask 1048320
    %3292 = vst.msk [vmem:[#allocation9] sm:$0xff] %vm3291, %v3290
    %v3293 = vld [vmem:[#allocation2 + $0x20] sm:$0xff]
    %3295 = vrot.lane.b32.xlu0 %v3290, 32
    %v3296 = vpop.permute.xlu0 %3295
    %v3297 = vsel %vm719, %v3296, 0
    %3299 = vmatprep.subr.mxu0 0.0
    %3300 = vmatpush1.msra.mxu0 %v81
    %3301 = vmatprep.subr.mxu0 0.0
    %3302 = vmatpush1.msra.mxu0 %v82
    %3303 = vmatprep.subr.mxu0 0.0
    %3304 = vmatpush1.msra.mxu0 %v83
    %3305 = vmatprep.subr.mxu0 0.0
    %3306 = vmatpush1.msra.mxu0 %v84
    %3307 = vmatprep.subr.mxu0 0.0
    %3308 = vmatpush1.msra.mxu0 0.0
    %3309 = vmatprep.subr.mxu0 0.0
    %3310 = vmatpush1.msra.mxu0 0.0
    %3311 = vmatprep.subr.mxu0 0.0
    %3312 = vmatpush1.msra.mxu0 0.0
    %3313 = vmatprep.subr.mxu0 0.0
    %3314 = vmatpush1.msra.mxu0 0.0
    %3315 = vmatprep.subr.mxu0 0.0
    %3316 = vmatpush1.msra.mxu0 0.0
    %3317 = vmatprep.subr.mxu0 0.0
    %3318 = vmatpush1.msra.mxu0 0.0
    %3319 = vmatprep.subr.mxu0 0.0
    %3320 = vmatpush1.msra.mxu0 0.0
    %3321 = vmatprep.subr.mxu0 0.0
    %3322 = vmatpush1.msra.mxu0 0.0
    %3323 = vmatprep.subr.mxu0 0.0
    %3324 = vmatpush1.msra.mxu0 0.0
    %3325 = vmatprep.subr.mxu0 0.0
    %3326 = vmatpush1.msra.mxu0 0.0
    %3327 = vmatprep.subr.mxu0 0.0
    %3328 = vmatpush1.msra.mxu0 0.0
    %3329 = vmatprep.subr.mxu0 0.0
    %3330 = vmatpush1.msra.mxu0 0.0
    %3331 = vmatprep.subr.mxu0 0.0
    %3332 = vmatpush1.msra.mxu0 0.0
    %3333 = vmatprep.subr.mxu0 0.0
    %3334 = vmatpush1.msra.mxu0 0.0
    %3335 = vmatprep.subr.mxu0 0.0
    %3336 = vmatpush1.msra.mxu0 0.0
    %3337 = vmatprep.subr.mxu0 0.0
    %3338 = vmatpush1.msra.mxu0 0.0
    %3339 = vmatprep.subr.mxu0 0.0
    %3340 = vmatpush1.msra.mxu0 0.0
    %3341 = vmatprep.subr.mxu0 0.0
    %3342 = vmatpush1.msra.mxu0 0.0
    %3343 = vmatprep.subr.mxu0 0.0
    %3344 = vmatpush1.msra.mxu0 0.0
    %3345 = vmatprep.subr.mxu0 0.0
    %3346 = vmatpush1.msra.mxu0 0.0
    %3347 = vmatprep.subr.mxu0 0.0
    %3348 = vmatpush1.msra.mxu0 0.0
    %3349 = vmatprep.subr.mxu0 0.0
    %3350 = vmatpush1.msra.mxu0 0.0
    %3351 = vmatprep.subr.mxu0 0.0
    %3352 = vmatpush1.msra.mxu0 0.0
    %3353 = vmatprep.subr.mxu0 0.0
    %3354 = vmatpush1.msra.mxu0 0.0
    %3355 = vmatprep.subr.mxu0 0.0
    %3356 = vmatpush1.msra.mxu0 0.0
    %3357 = vmatprep.subr.mxu0 0.0
    %3358 = vmatpush1.msra.mxu0 0.0
    %3359 = vmatprep.subr.mxu0 0.0
    %3360 = vmatpush1.msra.mxu0 0.0
    %3361 = vmatprep.subr.mxu0 0.0
    %3362 = vmatpush1.msra.mxu0 0.0
    %3363 = vmatprep.mubr.f32.mxu0 0.0
    %3364 = vmatmul.mubr.f32.gmra.mrb[0].mxu0 %v3297
    %v3365 = vpop.f32.mrb[0].mxu0
    %v3366 = vadd.f32 0.0, %v3365
    %v3367 = vpop.f32.mrb[0].mxu0
    %3368 = vdwg.mxu0
    %v3369 = vadd.f32 %v3293, %v3366
    %v3370 = vxor.u32 %v3369, 2147483648
    %v3371 = vmul.f32 %v3370, 1.442695
    %v3372 = vpow.pop %v3371
    %v3373 = vadd.f32 %v3372, 1.0
    %v3374 = vrcp.pop %v3373
    %v3375 = vmul.f32 1.0, %v3374
    %v3376 = vtanh.pop %v3369
    %v3377 = vmul.f32 %v3375, %v2748
    %3379 = vrot.lane.b32.xlu0 %v3376, 64
    %v3380 = vpop.permute.xlu0 %3379
    %v3382 = vmul.f32 %v3375, %v3380
    %3384 = vrot.lane.b32.xlu0 %v3382, 32
    %v3385 = vpop.permute.xlu0 %3384
    %v3387 = vadd.f32 %v3377, %v3385
    %3389 = vrot.lane.b32.xlu0 %v3387, 96
    %v3390 = vpop.permute.xlu0 %3389
    %v3391 = vsel %vm719, %v3390, 0
    %3393 = vmatprep.subr.mxu0 0.0
    %3394 = vmatpush1.msra.mxu0 %v86
    %3395 = vmatprep.subr.mxu0 0.0
    %3396 = vmatpush1.msra.mxu0 %v87
    %3397 = vmatprep.subr.mxu0 0.0
    %3398 = vmatpush1.msra.mxu0 %v88
    %3399 = vmatprep.subr.mxu0 0.0
    %3400 = vmatpush1.msra.mxu0 %v89
    %3401 = vmatprep.subr.mxu0 0.0
    %3402 = vmatpush1.msra.mxu0 0.0
    %3403 = vmatprep.subr.mxu0 0.0
    %3404 = vmatpush1.msra.mxu0 0.0
    %3405 = vmatprep.subr.mxu0 0.0
    %3406 = vmatpush1.msra.mxu0 0.0
    %3407 = vmatprep.subr.mxu0 0.0
    %3408 = vmatpush1.msra.mxu0 0.0
    %3409 = vmatprep.subr.mxu0 0.0
    %3410 = vmatpush1.msra.mxu0 0.0
    %3411 = vmatprep.subr.mxu0 0.0
    %3412 = vmatpush1.msra.mxu0 0.0
    %3413 = vmatprep.subr.mxu0 0.0
    %3414 = vmatpush1.msra.mxu0 0.0
    %3415 = vmatprep.subr.mxu0 0.0
    %3416 = vmatpush1.msra.mxu0 0.0
    %3417 = vmatprep.subr.mxu0 0.0
    %3418 = vmatpush1.msra.mxu0 0.0
    %3419 = vmatprep.subr.mxu0 0.0
    %3420 = vmatpush1.msra.mxu0 0.0
    %3421 = vmatprep.subr.mxu0 0.0
    %3422 = vmatpush1.msra.mxu0 0.0
    %3423 = vmatprep.subr.mxu0 0.0
    %3424 = vmatpush1.msra.mxu0 0.0
    %3425 = vmatprep.subr.mxu0 0.0
    %3426 = vmatpush1.msra.mxu0 0.0
    %3427 = vmatprep.subr.mxu0 0.0
    %3428 = vmatpush1.msra.mxu0 0.0
    %3429 = vmatprep.subr.mxu0 0.0
    %3430 = vmatpush1.msra.mxu0 0.0
    %3431 = vmatprep.subr.mxu0 0.0
    %3432 = vmatpush1.msra.mxu0 0.0
    %3433 = vmatprep.subr.mxu0 0.0
    %3434 = vmatpush1.msra.mxu0 0.0
    %3435 = vmatprep.subr.mxu0 0.0
    %3436 = vmatpush1.msra.mxu0 0.0
    %3437 = vmatprep.subr.mxu0 0.0
    %3438 = vmatpush1.msra.mxu0 0.0
    %3439 = vmatprep.subr.mxu0 0.0
    %3440 = vmatpush1.msra.mxu0 0.0
    %3441 = vmatprep.subr.mxu0 0.0
    %3442 = vmatpush1.msra.mxu0 0.0
    %3443 = vmatprep.subr.mxu0 0.0
    %3444 = vmatpush1.msra.mxu0 0.0
    %3445 = vmatprep.subr.mxu0 0.0
    %3446 = vmatpush1.msra.mxu0 0.0
    %3447 = vmatprep.subr.mxu0 0.0
    %3448 = vmatpush1.msra.mxu0 0.0
    %3449 = vmatprep.subr.mxu0 0.0
    %3450 = vmatpush1.msra.mxu0 0.0
    %3451 = vmatprep.subr.mxu0 0.0
    %3452 = vmatpush1.msra.mxu0 0.0
    %3453 = vmatprep.subr.mxu0 0.0
    %3454 = vmatpush1.msra.mxu0 0.0
    %3455 = vmatprep.subr.mxu0 0.0
    %3456 = vmatpush1.msra.mxu0 0.0
    %3457 = vmatprep.mubr.f32.mxu0 0.0
    %3458 = vmatmul.mubr.f32.gmra.mrb[0].mxu0 %v3391
    %v3459 = vpop.f32.mrb[0].mxu0
    %v3460 = vadd.f32 %v816, %v3459
    %v3461 = vpop.f32.mrb[0].mxu0
    %3462 = vdwg.mxu0
    %v3463 = vtanh.pop %v3460
    %v3464 = vmul.f32 %v3463, 3.1415927
    %v3465 = vmul.f32 %v3464, 0.5
    %v3466 = vand.u32 2147483647, %v3465
    %vm3467 = vcmp.le.f32.partialorder %v3466, 0.7853982
    %vm3468 = vcmp.lt.s32.totalorder %v3465, 0
    %v3469 = vand.u32 %v3465, 2139095040
    %v3470 = vshrl.u32 %v3469, 23
    %v3471 = vsub.s32 %v3470, 127
    %v3472 = vand.u32 2147483647, %v3465
    %v3473 = vand.u32 %v3472, 8388607
    %v3474 = vor.u32 %v3473, 8388608
    %v3475 = vsub.s32 0, %v3474
    %v3476 = vadd.s32 %v3471, 1
    %vm3477 = vcmp.gt.s32.totalorder %v3476, 0
    %v3478 = vsel %vm3477, %v3476, 0
    %v3479 = vshrl.u32 %v3478, 5
    %v3480 = vand.u32 %v3478, 31
    %v3481 = vsub.s32 32, %v3480
    %v3482 = vshrl.u32 683565275, %v3481
    %v3483 = vshll.u32 683565275, %v3480
    %v3484 = vshrl.u32 2475754826, %v3481
    %v3485 = vor.u32 %v3483, %v3484
    %v3486 = vshll.u32 2475754826, %v3480
    %v3487 = vshrl.u32 2131351028, %v3481
    %v3488 = vor.u32 %v3486, %v3487
    %v3489 = vshll.u32 2131351028, %v3480
    %v3490 = vshrl.u32 2102212464, %v3481
    %v3491 = vor.u32 %v3489, %v3490
    %v3492 = vshll.u32 2102212464, %v3480
    %v3493 = vshrl.u32 920167782, %v3481
    %v3494 = vor.u32 %v3492, %v3493
    %v3495 = vshll.u32 920167782, %v3480
    %v3496 = vshrl.u32 1326507024, %v3481
    %v3497 = vor.u32 %v3495, %v3496
    %vm3498 = vcmp.lt.s32.totalorder %v3479, 1
    %vm3499 = vcmp.lt.s32.totalorder %v3479, 2
    %vm3500 = vcmp.lt.s32.totalorder %v3479, 3
    %vm3501 = vcmp.lt.s32.totalorder %v3479, 4
    %v3502 = vsel %vm3498, %v3482, %v3485
    %v3503 = vsel %vm3501, %v3491, 2102212464
    %v3504 = vsel %vm3500, %v3488, %v3503
    %v3505 = vsel %vm3499, %v3502, %v3504
    %v3506 = vsel %vm3498, %v3485, %v3488
    %v3507 = vsel %vm3501, %v3494, 920167782
    %v3508 = vsel %vm3500, %v3491, %v3507
    %v3509 = vsel %vm3499, %v3506, %v3508
    %v3510 = vsel %vm3498, %v3488, %v3491
    %v3511 = vsel %vm3501, %v3497, 1326507024
    %v3512 = vsel %vm3500, %v3494, %v3511
    %v3513 = vsel %vm3499, %v3510, %v3512
    %v3514 = vshll.u32 %v3474, 8
    %v3515 = vmul.u32.u64.compose %v3514, %v3513
    %v3516 = vextract.low.u32 %v3515
    %v3517 = vextract.high.u32 %v3515
    %v3518 = vmul.u32.u64.compose %v3514, %v3509
    %v3519 = vextract.low.u32 %v3518
    %v3520 = vextract.high.u32 %v3518
    %v3521 = vmul.u32 %v3514, %v3505
    %v3522 = vadd.s32 %v3517, %v3519
    %vm3523 = vc.u32 %v3517, %v3519
    %v3524 = vadd.s32 %v3520, 1
    %v3525 = vsel %vm3523, %v3524, %v3520
    %v3526 = vadd.s32 %v3521, %v3525
    %v3527 = vadd.s32 %v3526, 536870912
    %v3528 = vshrl.u32 %v3527, 30
    %v3529 = vshll.u32 %v3528, 30
    %v3530 = vsub.s32 %v3526, %v3529
    %vm3531 = vcmp.lt.s32.totalorder %v3530, 0
    %v3532 = vsub.s32 0, %v3530
    %v3533 = vsel %vm3531, %v3532, %v3530
    %v3534 = vclz %v3533
    %v3535 = vsub.s32 %v3534, 2
    %vm3536 = vcmp.gt.s32.totalorder 0, %v3535
    %v3537 = vsel %vm3536, 0, %v3535
    %v3538 = vsub.s32 32, %v3537
    %v3539 = vshll.u32 %v3530, %v3537
    %v3540 = vshrl.u32 %v3522, %v3538
    %v3541 = vor.u32 %v3539, %v3540
    %v3542 = vsub.s32 4294967266, %v3537
    %v3543 = vadd.s32 %v3542, 127
    %v3544 = vshll.u32 %v3543, 23
    %v3545 = vor.u32 4788187, %v3544
    %v3546 = vand.u32 2147483647, %v3545
    %v3548 = vcvt.s32.f32 %v3541
    %v3549 = vmul.f32 %v3548, %v3546
    %v3550 = vxor.u32 %v3549, 2147483648
    %v3551 = vsel %vm3468, %v3550, %v3549
    %v3552 = vsub.s32 4, %v3528
    %v3553 = vsel %vm3468, %v3552, %v3528
    %v3554 = vsel %vm3467, %v3465, %v3551
    %v3555 = vsel %vm3467, 0, %v3553
    %v3556 = vcosq.f32.pop %v3554
    %v3557 = vsinq.f32.pop %v3554
    %vm3558 = vweird.f32 %v3465
    %v3559 = vand.u32 %v3555, 3
    %vm3560 = vcmp.lt.s32.totalorder %v3559, 2
    %vm3561 = vcmp.eq.s32.totalorder %v3559, 0
    %v3562 = vxor.u32 %v3557, 2147483648
    %v3563 = vsel %vm3561, %v3556, %v3562
    %vm3564 = vcmp.eq.s32.totalorder %v3559, 2
    %v3565 = vxor.u32 %v3556, 2147483648
    %v3566 = vsel %vm3564, %v3565, %v3557
    %v3567 = vsel %vm3560, %v3563, %v3566
    %v3568 = vsel %vm3558, nan, %v3567
    %v3569 = vand.u32 2147483647, %v3465
    %vm3570 = vcmp.le.f32.partialorder %v3569, 0.7853982
    %vm3571 = vcmp.lt.s32.totalorder %v3465, 0
    %v3572 = vand.u32 %v3465, 2139095040
    %v3573 = vshrl.u32 %v3572, 23
    %v3574 = vsub.s32 %v3573, 127
    %v3575 = vand.u32 2147483647, %v3465
    %v3576 = vand.u32 %v3575, 8388607
    %v3577 = vor.u32 %v3576, 8388608
    %v3578 = vsub.s32 0, %v3577
    %v3579 = vadd.s32 %v3574, 1
    %vm3580 = vcmp.gt.s32.totalorder %v3579, 0
    %v3581 = vsel %vm3580, %v3579, 0
    %v3582 = vshrl.u32 %v3581, 5
    %v3583 = vand.u32 %v3581, 31
    %v3584 = vsub.s32 32, %v3583
    %v3585 = vshrl.u32 683565275, %v3584
    %v3586 = vshll.u32 683565275, %v3583
    %v3587 = vshrl.u32 2475754826, %v3584
    %v3588 = vor.u32 %v3586, %v3587
    %v3589 = vshll.u32 2475754826, %v3583
    %v3590 = vshrl.u32 2131351028, %v3584
    %v3591 = vor.u32 %v3589, %v3590
    %v3592 = vshll.u32 2131351028, %v3583
    %v3593 = vshrl.u32 2102212464, %v3584
    %v3594 = vor.u32 %v3592, %v3593
    %v3595 = vshll.u32 2102212464, %v3583
    %v3596 = vshrl.u32 920167782, %v3584
    %v3597 = vor.u32 %v3595, %v3596
    %v3598 = vshll.u32 920167782, %v3583
    %v3599 = vshrl.u32 1326507024, %v3584
    %v3600 = vor.u32 %v3598, %v3599
    %vm3601 = vcmp.lt.s32.totalorder %v3582, 1
    %vm3602 = vcmp.lt.s32.totalorder %v3582, 2
    %vm3603 = vcmp.lt.s32.totalorder %v3582, 3
    %vm3604 = vcmp.lt.s32.totalorder %v3582, 4
    %v3605 = vsel %vm3601, %v3585, %v3588
    %v3606 = vsel %vm3604, %v3594, 2102212464
    %v3607 = vsel %vm3603, %v3591, %v3606
    %v3608 = vsel %vm3602, %v3605, %v3607
    %v3609 = vsel %vm3601, %v3588, %v3591
    %v3610 = vsel %vm3604, %v3597, 920167782
    %v3611 = vsel %vm3603, %v3594, %v3610
    %v3612 = vsel %vm3602, %v3609, %v3611
    %v3613 = vsel %vm3601, %v3591, %v3594
    %v3614 = vsel %vm3604, %v3600, 1326507024
    %v3615 = vsel %vm3603, %v3597, %v3614
    %v3616 = vsel %vm3602, %v3613, %v3615
    %v3617 = vshll.u32 %v3577, 8
    %v3618 = vmul.u32.u64.compose %v3617, %v3616
    %v3619 = vextract.low.u32 %v3618
    %v3620 = vextract.high.u32 %v3618
    %v3621 = vmul.u32.u64.compose %v3617, %v3612
    %v3622 = vextract.low.u32 %v3621
    %v3623 = vextract.high.u32 %v3621
    %v3624 = vmul.u32 %v3617, %v3608
    %v3625 = vadd.s32 %v3620, %v3622
    %vm3626 = vc.u32 %v3620, %v3622
    %v3627 = vadd.s32 %v3623, 1
    %v3628 = vsel %vm3626, %v3627, %v3623
    %v3629 = vadd.s32 %v3624, %v3628
    %v3630 = vadd.s32 %v3629, 536870912
    %v3631 = vshrl.u32 %v3630, 30
    %v3632 = vshll.u32 %v3631, 30
    %v3633 = vsub.s32 %v3629, %v3632
    %vm3634 = vcmp.lt.s32.totalorder %v3633, 0
    %v3635 = vsub.s32 0, %v3633
    %v3636 = vsel %vm3634, %v3635, %v3633
    %v3637 = vclz %v3636
    %v3638 = vsub.s32 %v3637, 2
    %vm3639 = vcmp.gt.s32.totalorder 0, %v3638
    %v3640 = vsel %vm3639, 0, %v3638
    %v3641 = vsub.s32 32, %v3640
    %v3642 = vshll.u32 %v3633, %v3640
    %v3643 = vshrl.u32 %v3625, %v3641
    %v3644 = vor.u32 %v3642, %v3643
    %v3645 = vsub.s32 4294967266, %v3640
    %v3646 = vadd.s32 %v3645, 127
    %v3647 = vshll.u32 %v3646, 23
    %v3648 = vor.u32 4788187, %v3647
    %v3649 = vand.u32 2147483647, %v3648
    %v3651 = vcvt.s32.f32 %v3644
    %v3652 = vmul.f32 %v3651, %v3649
    %v3653 = vxor.u32 %v3652, 2147483648
    %v3654 = vsel %vm3571, %v3653, %v3652
    %v3655 = vsub.s32 4, %v3631
    %v3656 = vsel %vm3571, %v3655, %v3631
    %v3657 = vsel %vm3570, %v3465, %v3654
    %v3658 = vsel %vm3570, 0, %v3656
    %v3659 = vcosq.f32.pop %v3657
    %v3660 = vsinq.f32.pop %v3657
    %vm3661 = vweird.f32 %v3465
    %v3662 = vadd.s32 %v3658, 3
    %v3663 = vand.u32 %v3662, 3
    %vm3664 = vcmp.lt.s32.totalorder %v3663, 2
    %vm3665 = vcmp.eq.s32.totalorder %v3663, 0
    %v3666 = vxor.u32 %v3660, 2147483648
    %v3667 = vsel %vm3665, %v3659, %v3666
    %vm3668 = vcmp.eq.s32.totalorder %v3663, 2
    %v3669 = vxor.u32 %v3659, 2147483648
    %v3670 = vsel %vm3668, %v3669, %v3660
    %v3671 = vsel %vm3664, %v3667, %v3670
    %v3672 = vsel %vm3661, nan, %v3671
    %3674 = vrot.lane.b32.xlu0 %v3672, 4
    %v3675 = vpop.permute.xlu0 %3674
    %v3677 = vsel %vm1107, %v3568, %v3675
    %v3679 = vsel %vm1109, %v3677, 0
    %3681 = vmatprep.subr.mxu0 0.0
    %3682 = vmatpush1.msra.mxu0 %v96
    %3683 = vmatprep.subr.mxu0 0.0
    %3684 = vmatpush1.msra.mxu0 0.0
    %3685 = vmatprep.subr.mxu0 0.0
    %3686 = vmatpush1.msra.mxu0 0.0
    %3687 = vmatprep.subr.mxu0 0.0
    %3688 = vmatpush1.msra.mxu0 0.0
    %3689 = vmatprep.subr.mxu0 0.0
    %3690 = vmatpush1.msra.mxu0 0.0
    %3691 = vmatprep.subr.mxu0 0.0
    %3692 = vmatpush1.msra.mxu0 0.0
    %3693 = vmatprep.subr.mxu0 0.0
    %3694 = vmatpush1.msra.mxu0 0.0
    %3695 = vmatprep.subr.mxu0 0.0
    %3696 = vmatpush1.msra.mxu0 0.0
    %3697 = vmatprep.subr.mxu0 0.0
    %3698 = vmatpush1.msra.mxu0 0.0
    %3699 = vmatprep.subr.mxu0 0.0
    %3700 = vmatpush1.msra.mxu0 0.0
    %3701 = vmatprep.subr.mxu0 0.0
    %3702 = vmatpush1.msra.mxu0 0.0
    %3703 = vmatprep.subr.mxu0 0.0
    %3704 = vmatpush1.msra.mxu0 0.0
    %3705 = vmatprep.subr.mxu0 0.0
    %3706 = vmatpush1.msra.mxu0 0.0
    %3707 = vmatprep.subr.mxu0 0.0
    %3708 = vmatpush1.msra.mxu0 0.0
    %3709 = vmatprep.subr.mxu0 0.0
    %3710 = vmatpush1.msra.mxu0 0.0
    %3711 = vmatprep.subr.mxu0 0.0
    %3712 = vmatpush1.msra.mxu0 0.0
    %3713 = vmatprep.subr.mxu0 0.0
    %3714 = vmatpush1.msra.mxu0 0.0
    %3715 = vmatprep.subr.mxu0 0.0
    %3716 = vmatpush1.msra.mxu0 0.0
    %3717 = vmatprep.subr.mxu0 0.0
    %3718 = vmatpush1.msra.mxu0 0.0
    %3719 = vmatprep.subr.mxu0 0.0
    %3720 = vmatpush1.msra.mxu0 0.0
    %3721 = vmatprep.subr.mxu0 0.0
    %3722 = vmatpush1.msra.mxu0 0.0
    %3723 = vmatprep.subr.mxu0 0.0
    %3724 = vmatpush1.msra.mxu0 0.0
    %3725 = vmatprep.subr.mxu0 0.0
    %3726 = vmatpush1.msra.mxu0 0.0
    %3727 = vmatprep.subr.mxu0 0.0
    %3728 = vmatpush1.msra.mxu0 0.0
    %3729 = vmatprep.subr.mxu0 0.0
    %3730 = vmatpush1.msra.mxu0 0.0
    %3731 = vmatprep.subr.mxu0 0.0
    %3732 = vmatpush1.msra.mxu0 0.0
    %3733 = vmatprep.subr.mxu0 0.0
    %3734 = vmatpush1.msra.mxu0 0.0
    %3735 = vmatprep.subr.mxu0 0.0
    %3736 = vmatpush1.msra.mxu0 0.0
    %3737 = vmatprep.subr.mxu0 0.0
    %3738 = vmatpush1.msra.mxu0 0.0
    %3739 = vmatprep.subr.mxu0 0.0
    %3740 = vmatpush1.msra.mxu0 0.0
    %3741 = vmatprep.subr.mxu0 0.0
    %3742 = vmatpush1.msra.mxu0 0.0
    %3743 = vmatprep.subr.mxu0 0.0
    %3744 = vmatpush1.msra.mxu0 0.0
    %3745 = vmatprep.mubr.f32.mxu0 0.0
    %3746 = vmatmul.mubr.f32.gmra.mrb[0].mxu0 %v3679
    %v3747 = vpop.f32.mrb[0].mxu0
    %v3748 = vadd.f32 0.0, %v3747
    %v3749 = vpop.f32.mrb[0].mxu0
    %3750 = vdwg.mxu0
    %3752 = vrot.lane.b32.xlu0 %v3748, 112
    %v3753 = vpop.permute.xlu0 %3752
    %v3755 = vmul.f32 %v3748, %v3753
    %3757 = vrot.lane.b32.xlu0 %v3755, 96
    %v3758 = vpop.permute.xlu0 %3757
    %v3760 = vmul.f32 %v3755, %v3758
    %v3762 = vsel %vm104, %v3760, 0
    %3764 = vmatprep.subr.mxu0 0.0
    %3765 = vmatpush1.msra.mxu0 %v91
    %3766 = vmatprep.subr.mxu0 0.0
    %3767 = vmatpush1.msra.mxu0 %v92
    %3768 = vmatprep.subr.mxu0 0.0
    %3769 = vmatpush1.msra.mxu0 0.0
    %3770 = vmatprep.subr.mxu0 0.0
    %3771 = vmatpush1.msra.mxu0 0.0
    %3772 = vmatprep.subr.mxu0 0.0
    %3773 = vmatpush1.msra.mxu0 0.0
    %3774 = vmatprep.subr.mxu0 0.0
    %3775 = vmatpush1.msra.mxu0 0.0
    %3776 = vmatprep.subr.mxu0 0.0
    %3777 = vmatpush1.msra.mxu0 0.0
    %3778 = vmatprep.subr.mxu0 0.0
    %3779 = vmatpush1.msra.mxu0 0.0
    %3780 = vmatprep.subr.mxu0 0.0
    %3781 = vmatpush1.msra.mxu0 0.0
    %3782 = vmatprep.subr.mxu0 0.0
    %3783 = vmatpush1.msra.mxu0 0.0
    %3784 = vmatprep.subr.mxu0 0.0
    %3785 = vmatpush1.msra.mxu0 0.0
    %3786 = vmatprep.subr.mxu0 0.0
    %3787 = vmatpush1.msra.mxu0 0.0
    %3788 = vmatprep.subr.mxu0 0.0
    %3789 = vmatpush1.msra.mxu0 0.0
    %3790 = vmatprep.subr.mxu0 0.0
    %3791 = vmatpush1.msra.mxu0 0.0
    %3792 = vmatprep.subr.mxu0 0.0
    %3793 = vmatpush1.msra.mxu0 0.0
    %3794 = vmatprep.subr.mxu0 0.0
    %3795 = vmatpush1.msra.mxu0 0.0
    %3796 = vmatprep.subr.mxu0 0.0
    %3797 = vmatpush1.msra.mxu0 0.0
    %3798 = vmatprep.subr.mxu0 0.0
    %3799 = vmatpush1.msra.mxu0 0.0
    %3800 = vmatprep.subr.mxu0 0.0
    %3801 = vmatpush1.msra.mxu0 0.0
    %3802 = vmatprep.subr.mxu0 0.0
    %3803 = vmatpush1.msra.mxu0 0.0
    %3804 = vmatprep.subr.mxu0 0.0
    %3805 = vmatpush1.msra.mxu0 0.0
    %3806 = vmatprep.subr.mxu0 0.0
    %3807 = vmatpush1.msra.mxu0 0.0
    %3808 = vmatprep.subr.mxu0 0.0
    %3809 = vmatpush1.msra.mxu0 0.0
    %3810 = vmatprep.subr.mxu0 0.0
    %3811 = vmatpush1.msra.mxu0 0.0
    %3812 = vmatprep.subr.mxu0 0.0
    %3813 = vmatpush1.msra.mxu0 0.0
    %3814 = vmatprep.subr.mxu0 0.0
    %3815 = vmatpush1.msra.mxu0 0.0
    %3816 = vmatprep.subr.mxu0 0.0
    %3817 = vmatpush1.msra.mxu0 0.0
    %3818 = vmatprep.subr.mxu0 0.0
    %3819 = vmatpush1.msra.mxu0 0.0
    %3820 = vmatprep.subr.mxu0 0.0
    %3821 = vmatpush1.msra.mxu0 0.0
    %3822 = vmatprep.subr.mxu0 0.0
    %3823 = vmatpush1.msra.mxu0 0.0
    %3824 = vmatprep.subr.mxu0 0.0
    %3825 = vmatpush1.msra.mxu0 0.0
    %3826 = vmatprep.subr.mxu0 0.0
    %3827 = vmatpush1.msra.mxu0 0.0
    %3828 = vmatprep.mubr.f32.mxu0 0.0
    %3829 = vmatmul.mubr.f32.gmra.mrb[0].mxu0 %v3762
    %v3830 = vpop.f32.mrb[0].mxu0
    %v3831 = vadd.f32 0.0, %v3830
    %v3832 = vpop.f32.mrb[0].mxu0
    %3833 = vdwg.mxu0
    %v3834 = vmul.f32 %v3831, %v3831
    %3836 = vrot.lane.b32.xlu0 %v3834, 112
    %v3837 = vpop.permute.xlu0 %3836
    %v3839 = vadd.f32 %v3834, %v3837
    %v3841 = vsel %vm104, %v3839, 0
    %3843 = vmatprep.subr.mxu0 0.0
    %3844 = vmatpush1.msra.mxu0 %v93
    %3845 = vmatprep.subr.mxu0 0.0
    %3846 = vmatpush1.msra.mxu0 %v94
    %3847 = vmatprep.subr.mxu0 0.0
    %3848 = vmatpush1.msra.mxu0 0.0
    %3849 = vmatprep.subr.mxu0 0.0
    %3850 = vmatpush1.msra.mxu0 0.0
    %3851 = vmatprep.subr.mxu0 0.0
    %3852 = vmatpush1.msra.mxu0 0.0
    %3853 = vmatprep.subr.mxu0 0.0
    %3854 = vmatpush1.msra.mxu0 0.0
    %3855 = vmatprep.subr.mxu0 0.0
    %3856 = vmatpush1.msra.mxu0 0.0
    %3857 = vmatprep.subr.mxu0 0.0
    %3858 = vmatpush1.msra.mxu0 0.0
    %3859 = vmatprep.subr.mxu0 0.0
    %3860 = vmatpush1.msra.mxu0 0.0
    %3861 = vmatprep.subr.mxu0 0.0
    %3862 = vmatpush1.msra.mxu0 0.0
    %3863 = vmatprep.subr.mxu0 0.0
    %3864 = vmatpush1.msra.mxu0 0.0
    %3865 = vmatprep.subr.mxu0 0.0
    %3866 = vmatpush1.msra.mxu0 0.0
    %3867 = vmatprep.subr.mxu0 0.0
    %3868 = vmatpush1.msra.mxu0 0.0
    %3869 = vmatprep.subr.mxu0 0.0
    %3870 = vmatpush1.msra.mxu0 0.0
    %3871 = vmatprep.subr.mxu0 0.0
    %3872 = vmatpush1.msra.mxu0 0.0
    %3873 = vmatprep.subr.mxu0 0.0
    %3874 = vmatpush1.msra.mxu0 0.0
    %3875 = vmatprep.subr.mxu0 0.0
    %3876 = vmatpush1.msra.mxu0 0.0
    %3877 = vmatprep.subr.mxu0 0.0
    %3878 = vmatpush1.msra.mxu0 0.0
    %3879 = vmatprep.subr.mxu0 0.0
    %3880 = vmatpush1.msra.mxu0 0.0
    %3881 = vmatprep.subr.mxu0 0.0
    %3882 = vmatpush1.msra.mxu0 0.0
    %3883 = vmatprep.subr.mxu0 0.0
    %3884 = vmatpush1.msra.mxu0 0.0
    %3885 = vmatprep.subr.mxu0 0.0
    %3886 = vmatpush1.msra.mxu0 0.0
    %3887 = vmatprep.subr.mxu0 0.0
    %3888 = vmatpush1.msra.mxu0 0.0
    %3889 = vmatprep.subr.mxu0 0.0
    %3890 = vmatpush1.msra.mxu0 0.0
    %3891 = vmatprep.subr.mxu0 0.0
    %3892 = vmatpush1.msra.mxu0 0.0
    %3893 = vmatprep.subr.mxu0 0.0
    %3894 = vmatpush1.msra.mxu0 0.0
    %3895 = vmatprep.subr.mxu0 0.0
    %3896 = vmatpush1.msra.mxu0 0.0
    %3897 = vmatprep.subr.mxu0 0.0
    %3898 = vmatpush1.msra.mxu0 0.0
    %3899 = vmatprep.subr.mxu0 0.0
    %3900 = vmatpush1.msra.mxu0 0.0
    %3901 = vmatprep.subr.mxu0 0.0
    %3902 = vmatpush1.msra.mxu0 0.0
    %3903 = vmatprep.subr.mxu0 0.0
    %3904 = vmatpush1.msra.mxu0 0.0
    %3905 = vmatprep.subr.mxu0 0.0
    %3906 = vmatpush1.msra.mxu0 0.0
    %3907 = vmatprep.mubr.f32.mxu0 0.0
    %3908 = vmatmul.mubr.f32.gmra.mrb[0].mxu0 %v3841
    %v3909 = vpop.f32.mrb[0].mxu0
    %v3910 = vadd.f32 %v1276, %v3909
    %v3911 = vpop.f32.mrb[0].mxu0
    %3912 = vdwg.mxu0
    %3914 = vrot.lane.b32.xlu0 %v3910, 96
    %v3915 = vpop.permute.xlu0 %3914
    %v3917 = vadd.f32 %v3369, %v3915
    %v3918 = vxor.u32 %v3917, 2147483648
    %v3919 = vmul.f32 %v3918, 1.442695
    %v3920 = vpow.pop %v3919
    %v3921 = vadd.f32 %v3920, 1.0
    %v3922 = vrcp.pop %v3921
    %v3923 = vmul.f32 1.0, %v3922
    %v3924 = vtanh.pop %v3387
    %3926 = vrot.lane.b32.xlu0 %v3924, 64
    %v3927 = vpop.permute.xlu0 %3926
    %v3929 = vmul.f32 %v3923, %v3927
    %3931 = vrot.lane.b32.xlu0 %v3929, 32
    %v3932 = vpop.permute.xlu0 %3931
    %3934 = vst.msk [vmem:[#allocation9 + $0x8] sm:$0xff] %vm719, %v3932
    %v3935 = vld [vmem:[#allocation2 + $0x28] sm:$0xff]
    %v3936 = vsel %vm719, %v3932, 0
    %3938 = vmatprep.subr.mxu0 0.0
    %3939 = vmatpush1.msra.mxu0 %v81
    %3940 = vmatprep.subr.mxu0 0.0
    %3941 = vmatpush1.msra.mxu0 %v82
    %3942 = vmatprep.subr.mxu0 0.0
    %3943 = vmatpush1.msra.mxu0 %v83
    %3944 = vmatprep.subr.mxu0 0.0
    %3945 = vmatpush1.msra.mxu0 %v84
    %3946 = vmatprep.subr.mxu0 0.0
    %3947 = vmatpush1.msra.mxu0 0.0
    %3948 = vmatprep.subr.mxu0 0.0
    %3949 = vmatpush1.msra.mxu0 0.0
    %3950 = vmatprep.subr.mxu0 0.0
    %3951 = vmatpush1.msra.mxu0 0.0
    %3952 = vmatprep.subr.mxu0 0.0
    %3953 = vmatpush1.msra.mxu0 0.0
    %3954 = vmatprep.subr.mxu0 0.0
    %3955 = vmatpush1.msra.mxu0 0.0
    %3956 = vmatprep.subr.mxu0 0.0
    %3957 = vmatpush1.msra.mxu0 0.0
    %3958 = vmatprep.subr.mxu0 0.0
    %3959 = vmatpush1.msra.mxu0 0.0
    %3960 = vmatprep.subr.mxu0 0.0
    %3961 = vmatpush1.msra.mxu0 0.0
    %3962 = vmatprep.subr.mxu0 0.0
    %3963 = vmatpush1.msra.mxu0 0.0
    %3964 = vmatprep.subr.mxu0 0.0
    %3965 = vmatpush1.msra.mxu0 0.0
    %3966 = vmatprep.subr.mxu0 0.0
    %3967 = vmatpush1.msra.mxu0 0.0
    %3968 = vmatprep.subr.mxu0 0.0
    %3969 = vmatpush1.msra.mxu0 0.0
    %3970 = vmatprep.subr.mxu0 0.0
    %3971 = vmatpush1.msra.mxu0 0.0
    %3972 = vmatprep.subr.mxu0 0.0
    %3973 = vmatpush1.msra.mxu0 0.0
    %3974 = vmatprep.subr.mxu0 0.0
    %3975 = vmatpush1.msra.mxu0 0.0
    %3976 = vmatprep.subr.mxu0 0.0
    %3977 = vmatpush1.msra.mxu0 0.0
    %3978 = vmatprep.subr.mxu0 0.0
    %3979 = vmatpush1.msra.mxu0 0.0
    %3980 = vmatprep.subr.mxu0 0.0
    %3981 = vmatpush1.msra.mxu0 0.0
    %3982 = vmatprep.subr.mxu0 0.0
    %3983 = vmatpush1.msra.mxu0 0.0
    %3984 = vmatprep.subr.mxu0 0.0
    %3985 = vmatpush1.msra.mxu0 0.0
    %3986 = vmatprep.subr.mxu0 0.0
    %3987 = vmatpush1.msra.mxu0 0.0
    %3988 = vmatprep.subr.mxu0 0.0
    %3989 = vmatpush1.msra.mxu0 0.0
    %3990 = vmatprep.subr.mxu0 0.0
    %3991 = vmatpush1.msra.mxu0 0.0
    %3992 = vmatprep.subr.mxu0 0.0
    %3993 = vmatpush1.msra.mxu0 0.0
    %3994 = vmatprep.subr.mxu0 0.0
    %3995 = vmatpush1.msra.mxu0 0.0
    %3996 = vmatprep.subr.mxu0 0.0
    %3997 = vmatpush1.msra.mxu0 0.0
    %3998 = vmatprep.subr.mxu0 0.0
    %3999 = vmatpush1.msra.mxu0 0.0
    %4000 = vmatprep.subr.mxu0 0.0
    %4001 = vmatpush1.msra.mxu0 0.0
    %4002 = vmatprep.mubr.f32.mxu0 0.0
    %4003 = vmatmul.mubr.f32.gmra.mrb[0].mxu0 %v3936
    %v4004 = vpop.f32.mrb[0].mxu0
    %v4005 = vadd.f32 0.0, %v4004
    %v4006 = vpop.f32.mrb[0].mxu0
    %4007 = vdwg.mxu0
    %v4008 = vadd.f32 %v3935, %v4005
    %v4009 = vxor.u32 %v4008, 2147483648
    %v4010 = vmul.f32 %v4009, 1.442695
    %v4011 = vpow.pop %v4010
    %v4012 = vadd.f32 %v4011, 1.0
    %v4013 = vrcp.pop %v4012
    %v4014 = vmul.f32 1.0, %v4013
    %v4015 = vtanh.pop %v4008
    %v4016 = vmul.f32 %v4014, %v3387
    %4018 = vrot.lane.b32.xlu0 %v4015, 64
    %v4019 = vpop.permute.xlu0 %4018
    %v4021 = vmul.f32 %v4014, %v4019
    %4023 = vrot.lane.b32.xlu0 %v4021, 32
    %v4024 = vpop.permute.xlu0 %4023
    %v4026 = vadd.f32 %v4016, %v4024
    %4028 = vrot.lane.b32.xlu0 %v4026, 96
    %v4029 = vpop.permute.xlu0 %4028
    %v4030 = vsel %vm719, %v4029, 0
    %4032 = vmatprep.subr.mxu0 0.0
    %4033 = vmatpush1.msra.mxu0 %v86
    %4034 = vmatprep.subr.mxu0 0.0
    %4035 = vmatpush1.msra.mxu0 %v87
    %4036 = vmatprep.subr.mxu0 0.0
    %4037 = vmatpush1.msra.mxu0 %v88
    %4038 = vmatprep.subr.mxu0 0.0
    %4039 = vmatpush1.msra.mxu0 %v89
    %4040 = vmatprep.subr.mxu0 0.0
    %4041 = vmatpush1.msra.mxu0 0.0
    %4042 = vmatprep.subr.mxu0 0.0
    %4043 = vmatpush1.msra.mxu0 0.0
    %4044 = vmatprep.subr.mxu0 0.0
    %4045 = vmatpush1.msra.mxu0 0.0
    %4046 = vmatprep.subr.mxu0 0.0
    %4047 = vmatpush1.msra.mxu0 0.0
    %4048 = vmatprep.subr.mxu0 0.0
    %4049 = vmatpush1.msra.mxu0 0.0
    %4050 = vmatprep.subr.mxu0 0.0
    %4051 = vmatpush1.msra.mxu0 0.0
    %4052 = vmatprep.subr.mxu0 0.0
    %4053 = vmatpush1.msra.mxu0 0.0
    %4054 = vmatprep.subr.mxu0 0.0
    %4055 = vmatpush1.msra.mxu0 0.0
    %4056 = vmatprep.subr.mxu0 0.0
    %4057 = vmatpush1.msra.mxu0 0.0
    %4058 = vmatprep.subr.mxu0 0.0
    %4059 = vmatpush1.msra.mxu0 0.0
    %4060 = vmatprep.subr.mxu0 0.0
    %4061 = vmatpush1.msra.mxu0 0.0
    %4062 = vmatprep.subr.mxu0 0.0
    %4063 = vmatpush1.msra.mxu0 0.0
    %4064 = vmatprep.subr.mxu0 0.0
    %4065 = vmatpush1.msra.mxu0 0.0
    %4066 = vmatprep.subr.mxu0 0.0
    %4067 = vmatpush1.msra.mxu0 0.0
    %4068 = vmatprep.subr.mxu0 0.0
    %4069 = vmatpush1.msra.mxu0 0.0
    %4070 = vmatprep.subr.mxu0 0.0
    %4071 = vmatpush1.msra.mxu0 0.0
    %4072 = vmatprep.subr.mxu0 0.0
    %4073 = vmatpush1.msra.mxu0 0.0
    %4074 = vmatprep.subr.mxu0 0.0
    %4075 = vmatpush1.msra.mxu0 0.0
    %4076 = vmatprep.subr.mxu0 0.0
    %4077 = vmatpush1.msra.mxu0 0.0
    %4078 = vmatprep.subr.mxu0 0.0
    %4079 = vmatpush1.msra.mxu0 0.0
    %4080 = vmatprep.subr.mxu0 0.0
    %4081 = vmatpush1.msra.mxu0 0.0
    %4082 = vmatprep.subr.mxu0 0.0
    %4083 = vmatpush1.msra.mxu0 0.0
    %4084 = vmatprep.subr.mxu0 0.0
    %4085 = vmatpush1.msra.mxu0 0.0
    %4086 = vmatprep.subr.mxu0 0.0
    %4087 = vmatpush1.msra.mxu0 0.0
    %4088 = vmatprep.subr.mxu0 0.0
    %4089 = vmatpush1.msra.mxu0 0.0
    %4090 = vmatprep.subr.mxu0 0.0
    %4091 = vmatpush1.msra.mxu0 0.0
    %4092 = vmatprep.subr.mxu0 0.0
    %4093 = vmatpush1.msra.mxu0 0.0
    %4094 = vmatprep.subr.mxu0 0.0
    %4095 = vmatpush1.msra.mxu0 0.0
    %4096 = vmatprep.mubr.f32.mxu0 0.0
    %4097 = vmatmul.mubr.f32.gmra.mrb[0].mxu0 %v4030
    %v4098 = vpop.f32.mrb[0].mxu0
    %v4099 = vadd.f32 %v816, %v4098
    %v4100 = vpop.f32.mrb[0].mxu0
    %4101 = vdwg.mxu0
    %v4102 = vtanh.pop %v4099
    %v4103 = vmul.f32 %v4102, 3.1415927
    %v4104 = vmul.f32 %v4103, 0.5
    %v4105 = vand.u32 2147483647, %v4104
    %vm4106 = vcmp.le.f32.partialorder %v4105, 0.7853982
    %vm4107 = vcmp.lt.s32.totalorder %v4104, 0
    %v4108 = vand.u32 %v4104, 2139095040
    %v4109 = vshrl.u32 %v4108, 23
    %v4110 = vsub.s32 %v4109, 127
    %v4111 = vand.u32 2147483647, %v4104
    %v4112 = vand.u32 %v4111, 8388607
    %v4113 = vor.u32 %v4112, 8388608
    %v4114 = vsub.s32 0, %v4113
    %v4115 = vadd.s32 %v4110, 1
    %vm4116 = vcmp.gt.s32.totalorder %v4115, 0
    %v4117 = vsel %vm4116, %v4115, 0
    %v4118 = vshrl.u32 %v4117, 5
    %v4119 = vand.u32 %v4117, 31
    %v4120 = vsub.s32 32, %v4119
    %v4121 = vshrl.u32 683565275, %v4120
    %v4122 = vshll.u32 683565275, %v4119
    %v4123 = vshrl.u32 2475754826, %v4120
    %v4124 = vor.u32 %v4122, %v4123
    %v4125 = vshll.u32 2475754826, %v4119
    %v4126 = vshrl.u32 2131351028, %v4120
    %v4127 = vor.u32 %v4125, %v4126
    %v4128 = vshll.u32 2131351028, %v4119
    %v4129 = vshrl.u32 2102212464, %v4120
    %v4130 = vor.u32 %v4128, %v4129
    %v4131 = vshll.u32 2102212464, %v4119
    %v4132 = vshrl.u32 920167782, %v4120
    %v4133 = vor.u32 %v4131, %v4132
    %v4134 = vshll.u32 920167782, %v4119
    %v4135 = vshrl.u32 1326507024, %v4120
    %v4136 = vor.u32 %v4134, %v4135
    %vm4137 = vcmp.lt.s32.totalorder %v4118, 1
    %vm4138 = vcmp.lt.s32.totalorder %v4118, 2
    %vm4139 = vcmp.lt.s32.totalorder %v4118, 3
    %vm4140 = vcmp.lt.s32.totalorder %v4118, 4
    %v4141 = vsel %vm4137, %v4121, %v4124
    %v4142 = vsel %vm4140, %v4130, 2102212464
    %v4143 = vsel %vm4139, %v4127, %v4142
    %v4144 = vsel %vm4138, %v4141, %v4143
    %v4145 = vsel %vm4137, %v4124, %v4127
    %v4146 = vsel %vm4140, %v4133, 920167782
    %v4147 = vsel %vm4139, %v4130, %v4146
    %v4148 = vsel %vm4138, %v4145, %v4147
    %v4149 = vsel %vm4137, %v4127, %v4130
    %v4150 = vsel %vm4140, %v4136, 1326507024
    %v4151 = vsel %vm4139, %v4133, %v4150
    %v4152 = vsel %vm4138, %v4149, %v4151
    %v4153 = vshll.u32 %v4113, 8
    %v4154 = vmul.u32.u64.compose %v4153, %v4152
    %v4155 = vextract.low.u32 %v4154
    %v4156 = vextract.high.u32 %v4154
    %v4157 = vmul.u32.u64.compose %v4153, %v4148
    %v4158 = vextract.low.u32 %v4157
    %v4159 = vextract.high.u32 %v4157
    %v4160 = vmul.u32 %v4153, %v4144
    %v4161 = vadd.s32 %v4156, %v4158
    %vm4162 = vc.u32 %v4156, %v4158
    %v4163 = vadd.s32 %v4159, 1
    %v4164 = vsel %vm4162, %v4163, %v4159
    %v4165 = vadd.s32 %v4160, %v4164
    %v4166 = vadd.s32 %v4165, 536870912
    %v4167 = vshrl.u32 %v4166, 30
    %v4168 = vshll.u32 %v4167, 30
    %v4169 = vsub.s32 %v4165, %v4168
    %vm4170 = vcmp.lt.s32.totalorder %v4169, 0
    %v4171 = vsub.s32 0, %v4169
    %v4172 = vsel %vm4170, %v4171, %v4169
    %v4173 = vclz %v4172
    %v4174 = vsub.s32 %v4173, 2
    %vm4175 = vcmp.gt.s32.totalorder 0, %v4174
    %v4176 = vsel %vm4175, 0, %v4174
    %v4177 = vsub.s32 32, %v4176
    %v4178 = vshll.u32 %v4169, %v4176
    %v4179 = vshrl.u32 %v4161, %v4177
    %v4180 = vor.u32 %v4178, %v4179
    %v4181 = vsub.s32 4294967266, %v4176
    %v4182 = vadd.s32 %v4181, 127
    %v4183 = vshll.u32 %v4182, 23
    %v4184 = vor.u32 4788187, %v4183
    %v4185 = vand.u32 2147483647, %v4184
    %v4187 = vcvt.s32.f32 %v4180
    %v4188 = vmul.f32 %v4187, %v4185
    %v4189 = vxor.u32 %v4188, 2147483648
    %v4190 = vsel %vm4107, %v4189, %v4188
    %v4191 = vsub.s32 4, %v4167
    %v4192 = vsel %vm4107, %v4191, %v4167
    %v4193 = vsel %vm4106, %v4104, %v4190
    %v4194 = vsel %vm4106, 0, %v4192
    %v4195 = vcosq.f32.pop %v4193
    %v4196 = vsinq.f32.pop %v4193
    %vm4197 = vweird.f32 %v4104
    %v4198 = vand.u32 %v4194, 3
    %vm4199 = vcmp.lt.s32.totalorder %v4198, 2
    %vm4200 = vcmp.eq.s32.totalorder %v4198, 0
    %v4201 = vxor.u32 %v4196, 2147483648
    %v4202 = vsel %vm4200, %v4195, %v4201
    %vm4203 = vcmp.eq.s32.totalorder %v4198, 2
    %v4204 = vxor.u32 %v4195, 2147483648
    %v4205 = vsel %vm4203, %v4204, %v4196
    %v4206 = vsel %vm4199, %v4202, %v4205
    %v4207 = vsel %vm4197, nan, %v4206
    %v4208 = vand.u32 2147483647, %v4104
    %vm4209 = vcmp.le.f32.partialorder %v4208, 0.7853982
    %vm4210 = vcmp.lt.s32.totalorder %v4104, 0
    %v4211 = vand.u32 %v4104, 2139095040
    %v4212 = vshrl.u32 %v4211, 23
    %v4213 = vsub.s32 %v4212, 127
    %v4214 = vand.u32 2147483647, %v4104
    %v4215 = vand.u32 %v4214, 8388607
    %v4216 = vor.u32 %v4215, 8388608
    %v4217 = vsub.s32 0, %v4216
    %v4218 = vadd.s32 %v4213, 1
    %vm4219 = vcmp.gt.s32.totalorder %v4218, 0
    %v4220 = vsel %vm4219, %v4218, 0
    %v4221 = vshrl.u32 %v4220, 5
    %v4222 = vand.u32 %v4220, 31
    %v4223 = vsub.s32 32, %v4222
    %v4224 = vshrl.u32 683565275, %v4223
    %v4225 = vshll.u32 683565275, %v4222
    %v4226 = vshrl.u32 2475754826, %v4223
    %v4227 = vor.u32 %v4225, %v4226
    %v4228 = vshll.u32 2475754826, %v4222
    %v4229 = vshrl.u32 2131351028, %v4223
    %v4230 = vor.u32 %v4228, %v4229
    %v4231 = vshll.u32 2131351028, %v4222
    %v4232 = vshrl.u32 2102212464, %v4223
    %v4233 = vor.u32 %v4231, %v4232
    %v4234 = vshll.u32 2102212464, %v4222
    %v4235 = vshrl.u32 920167782, %v4223
    %v4236 = vor.u32 %v4234, %v4235
    %v4237 = vshll.u32 920167782, %v4222
    %v4238 = vshrl.u32 1326507024, %v4223
    %v4239 = vor.u32 %v4237, %v4238
    %vm4240 = vcmp.lt.s32.totalorder %v4221, 1
    %vm4241 = vcmp.lt.s32.totalorder %v4221, 2
    %vm4242 = vcmp.lt.s32.totalorder %v4221, 3
    %vm4243 = vcmp.lt.s32.totalorder %v4221, 4
    %v4244 = vsel %vm4240, %v4224, %v4227
    %v4245 = vsel %vm4243, %v4233, 2102212464
    %v4246 = vsel %vm4242, %v4230, %v4245
    %v4247 = vsel %vm4241, %v4244, %v4246
    %v4248 = vsel %vm4240, %v4227, %v4230
    %v4249 = vsel %vm4243, %v4236, 920167782
    %v4250 = vsel %vm4242, %v4233, %v4249
    %v4251 = vsel %vm4241, %v4248, %v4250
    %v4252 = vsel %vm4240, %v4230, %v4233
    %v4253 = vsel %vm4243, %v4239, 1326507024
    %v4254 = vsel %vm4242, %v4236, %v4253
    %v4255 = vsel %vm4241, %v4252, %v4254
    %v4256 = vshll.u32 %v4216, 8
    %v4257 = vmul.u32.u64.compose %v4256, %v4255
    %v4258 = vextract.low.u32 %v4257
    %v4259 = vextract.high.u32 %v4257
    %v4260 = vmul.u32.u64.compose %v4256, %v4251
    %v4261 = vextract.low.u32 %v4260
    %v4262 = vextract.high.u32 %v4260
    %v4263 = vmul.u32 %v4256, %v4247
    %v4264 = vadd.s32 %v4259, %v4261
    %vm4265 = vc.u32 %v4259, %v4261
    %v4266 = vadd.s32 %v4262, 1
    %v4267 = vsel %vm4265, %v4266, %v4262
    %v4268 = vadd.s32 %v4263, %v4267
    %v4269 = vadd.s32 %v4268, 536870912
    %v4270 = vshrl.u32 %v4269, 30
    %v4271 = vshll.u32 %v4270, 30
    %v4272 = vsub.s32 %v4268, %v4271
    %vm4273 = vcmp.lt.s32.totalorder %v4272, 0
    %v4274 = vsub.s32 0, %v4272
    %v4275 = vsel %vm4273, %v4274, %v4272
    %v4276 = vclz %v4275
    %v4277 = vsub.s32 %v4276, 2
    %vm4278 = vcmp.gt.s32.totalorder 0, %v4277
    %v4279 = vsel %vm4278, 0, %v4277
    %v4280 = vsub.s32 32, %v4279
    %v4281 = vshll.u32 %v4272, %v4279
    %v4282 = vshrl.u32 %v4264, %v4280
    %v4283 = vor.u32 %v4281, %v4282
    %v4284 = vsub.s32 4294967266, %v4279
    %v4285 = vadd.s32 %v4284, 127
    %v4286 = vshll.u32 %v4285, 23
    %v4287 = vor.u32 4788187, %v4286
    %v4288 = vand.u32 2147483647, %v4287
    %v4290 = vcvt.s32.f32 %v4283
    %v4291 = vmul.f32 %v4290, %v4288
    %v4292 = vxor.u32 %v4291, 2147483648
    %v4293 = vsel %vm4210, %v4292, %v4291
    %v4294 = vsub.s32 4, %v4270
    %v4295 = vsel %vm4210, %v4294, %v4270
    %v4296 = vsel %vm4209, %v4104, %v4293
    %v4297 = vsel %vm4209, 0, %v4295
    %v4298 = vcosq.f32.pop %v4296
    %v4299 = vsinq.f32.pop %v4296
    %vm4300 = vweird.f32 %v4104
    %v4301 = vadd.s32 %v4297, 3
    %v4302 = vand.u32 %v4301, 3
    %vm4303 = vcmp.lt.s32.totalorder %v4302, 2
    %vm4304 = vcmp.eq.s32.totalorder %v4302, 0
    %v4305 = vxor.u32 %v4299, 2147483648
    %v4306 = vsel %vm4304, %v4298, %v4305
    %vm4307 = vcmp.eq.s32.totalorder %v4302, 2
    %v4308 = vxor.u32 %v4298, 2147483648
    %v4309 = vsel %vm4307, %v4308, %v4299
    %v4310 = vsel %vm4303, %v4306, %v4309
    %v4311 = vsel %vm4300, nan, %v4310
    %4313 = vrot.lane.b32.xlu0 %v4311, 4
    %v4314 = vpop.permute.xlu0 %4313
    %v4316 = vsel %vm1107, %v4207, %v4314
    %v4318 = vsel %vm1109, %v4316, 0
    %4320 = vmatprep.subr.mxu0 0.0
    %4321 = vmatpush1.msra.mxu0 %v96
    %4322 = vmatprep.subr.mxu0 0.0
    %4323 = vmatpush1.msra.mxu0 0.0
    %4324 = vmatprep.subr.mxu0 0.0
    %4325 = vmatpush1.msra.mxu0 0.0
    %4326 = vmatprep.subr.mxu0 0.0
    %4327 = vmatpush1.msra.mxu0 0.0
    %4328 = vmatprep.subr.mxu0 0.0
    %4329 = vmatpush1.msra.mxu0 0.0
    %4330 = vmatprep.subr.mxu0 0.0
    %4331 = vmatpush1.msra.mxu0 0.0
    %4332 = vmatprep.subr.mxu0 0.0
    %4333 = vmatpush1.msra.mxu0 0.0
    %4334 = vmatprep.subr.mxu0 0.0
    %4335 = vmatpush1.msra.mxu0 0.0
    %4336 = vmatprep.subr.mxu0 0.0
    %4337 = vmatpush1.msra.mxu0 0.0
    %4338 = vmatprep.subr.mxu0 0.0
    %4339 = vmatpush1.msra.mxu0 0.0
    %4340 = vmatprep.subr.mxu0 0.0
    %4341 = vmatpush1.msra.mxu0 0.0
    %4342 = vmatprep.subr.mxu0 0.0
    %4343 = vmatpush1.msra.mxu0 0.0
    %4344 = vmatprep.subr.mxu0 0.0
    %4345 = vmatpush1.msra.mxu0 0.0
    %4346 = vmatprep.subr.mxu0 0.0
    %4347 = vmatpush1.msra.mxu0 0.0
    %4348 = vmatprep.subr.mxu0 0.0
    %4349 = vmatpush1.msra.mxu0 0.0
    %4350 = vmatprep.subr.mxu0 0.0
    %4351 = vmatpush1.msra.mxu0 0.0
    %4352 = vmatprep.subr.mxu0 0.0
    %4353 = vmatpush1.msra.mxu0 0.0
    %4354 = vmatprep.subr.mxu0 0.0
    %4355 = vmatpush1.msra.mxu0 0.0
    %4356 = vmatprep.subr.mxu0 0.0
    %4357 = vmatpush1.msra.mxu0 0.0
    %4358 = vmatprep.subr.mxu0 0.0
    %4359 = vmatpush1.msra.mxu0 0.0
    %4360 = vmatprep.subr.mxu0 0.0
    %4361 = vmatpush1.msra.mxu0 0.0
    %4362 = vmatprep.subr.mxu0 0.0
    %4363 = vmatpush1.msra.mxu0 0.0
    %4364 = vmatprep.subr.mxu0 0.0
    %4365 = vmatpush1.msra.mxu0 0.0
    %4366 = vmatprep.subr.mxu0 0.0
    %4367 = vmatpush1.msra.mxu0 0.0
    %4368 = vmatprep.subr.mxu0 0.0
    %4369 = vmatpush1.msra.mxu0 0.0
    %4370 = vmatprep.subr.mxu0 0.0
    %4371 = vmatpush1.msra.mxu0 0.0
    %4372 = vmatprep.subr.mxu0 0.0
    %4373 = vmatpush1.msra.mxu0 0.0
    %4374 = vmatprep.subr.mxu0 0.0
    %4375 = vmatpush1.msra.mxu0 0.0
    %4376 = vmatprep.subr.mxu0 0.0
    %4377 = vmatpush1.msra.mxu0 0.0
    %4378 = vmatprep.subr.mxu0 0.0
    %4379 = vmatpush1.msra.mxu0 0.0
    %4380 = vmatprep.subr.mxu0 0.0
    %4381 = vmatpush1.msra.mxu0 0.0
    %4382 = vmatprep.subr.mxu0 0.0
    %4383 = vmatpush1.msra.mxu0 0.0
    %4384 = vmatprep.mubr.f32.mxu0 0.0
    %4385 = vmatmul.mubr.f32.gmra.mrb[0].mxu0 %v4318
    %v4386 = vpop.f32.mrb[0].mxu0
    %v4387 = vadd.f32 0.0, %v4386
    %v4388 = vpop.f32.mrb[0].mxu0
    %4389 = vdwg.mxu0
    %4391 = vrot.lane.b32.xlu0 %v4387, 112
    %v4392 = vpop.permute.xlu0 %4391
    %v4394 = vmul.f32 %v4387, %v4392
    %4396 = vrot.lane.b32.xlu0 %v4394, 96
    %v4397 = vpop.permute.xlu0 %4396
    %v4399 = vmul.f32 %v4394, %v4397
    %v4401 = vsel %vm104, %v4399, 0
    %4403 = vmatprep.subr.mxu0 0.0
    %4404 = vmatpush1.msra.mxu0 %v91
    %4405 = vmatprep.subr.mxu0 0.0
    %4406 = vmatpush1.msra.mxu0 %v92
    %4407 = vmatprep.subr.mxu0 0.0
    %4408 = vmatpush1.msra.mxu0 0.0
    %4409 = vmatprep.subr.mxu0 0.0
    %4410 = vmatpush1.msra.mxu0 0.0
    %4411 = vmatprep.subr.mxu0 0.0
    %4412 = vmatpush1.msra.mxu0 0.0
    %4413 = vmatprep.subr.mxu0 0.0
    %4414 = vmatpush1.msra.mxu0 0.0
    %4415 = vmatprep.subr.mxu0 0.0
    %4416 = vmatpush1.msra.mxu0 0.0
    %4417 = vmatprep.subr.mxu0 0.0
    %4418 = vmatpush1.msra.mxu0 0.0
    %4419 = vmatprep.subr.mxu0 0.0
    %4420 = vmatpush1.msra.mxu0 0.0
    %4421 = vmatprep.subr.mxu0 0.0
    %4422 = vmatpush1.msra.mxu0 0.0
    %4423 = vmatprep.subr.mxu0 0.0
    %4424 = vmatpush1.msra.mxu0 0.0
    %4425 = vmatprep.subr.mxu0 0.0
    %4426 = vmatpush1.msra.mxu0 0.0
    %4427 = vmatprep.subr.mxu0 0.0
    %4428 = vmatpush1.msra.mxu0 0.0
    %4429 = vmatprep.subr.mxu0 0.0
    %4430 = vmatpush1.msra.mxu0 0.0
    %4431 = vmatprep.subr.mxu0 0.0
    %4432 = vmatpush1.msra.mxu0 0.0
    %4433 = vmatprep.subr.mxu0 0.0
    %4434 = vmatpush1.msra.mxu0 0.0
    %4435 = vmatprep.subr.mxu0 0.0
    %4436 = vmatpush1.msra.mxu0 0.0
    %4437 = vmatprep.subr.mxu0 0.0
    %4438 = vmatpush1.msra.mxu0 0.0
    %4439 = vmatprep.subr.mxu0 0.0
    %4440 = vmatpush1.msra.mxu0 0.0
    %4441 = vmatprep.subr.mxu0 0.0
    %4442 = vmatpush1.msra.mxu0 0.0
    %4443 = vmatprep.subr.mxu0 0.0
    %4444 = vmatpush1.msra.mxu0 0.0
    %4445 = vmatprep.subr.mxu0 0.0
    %4446 = vmatpush1.msra.mxu0 0.0
    %4447 = vmatprep.subr.mxu0 0.0
    %4448 = vmatpush1.msra.mxu0 0.0
    %4449 = vmatprep.subr.mxu0 0.0
    %4450 = vmatpush1.msra.mxu0 0.0
    %4451 = vmatprep.subr.mxu0 0.0
    %4452 = vmatpush1.msra.mxu0 0.0
    %4453 = vmatprep.subr.mxu0 0.0
    %4454 = vmatpush1.msra.mxu0 0.0
    %4455 = vmatprep.subr.mxu0 0.0
    %4456 = vmatpush1.msra.mxu0 0.0
    %4457 = vmatprep.subr.mxu0 0.0
    %4458 = vmatpush1.msra.mxu0 0.0
    %4459 = vmatprep.subr.mxu0 0.0
    %4460 = vmatpush1.msra.mxu0 0.0
    %4461 = vmatprep.subr.mxu0 0.0
    %4462 = vmatpush1.msra.mxu0 0.0
    %4463 = vmatprep.subr.mxu0 0.0
    %4464 = vmatpush1.msra.mxu0 0.0
    %4465 = vmatprep.subr.mxu0 0.0
    %4466 = vmatpush1.msra.mxu0 0.0
    %4467 = vmatprep.mubr.f32.mxu0 0.0
    %4468 = vmatmul.mubr.f32.gmra.mrb[0].mxu0 %v4401
    %v4469 = vpop.f32.mrb[0].mxu0
    %v4470 = vadd.f32 0.0, %v4469
    %v4471 = vpop.f32.mrb[0].mxu0
    %4472 = vdwg.mxu0
    %v4473 = vmul.f32 %v4470, %v4470
    %4475 = vrot.lane.b32.xlu0 %v4473, 112
    %v4476 = vpop.permute.xlu0 %4475
    %v4478 = vadd.f32 %v4473, %v4476
    %v4480 = vsel %vm104, %v4478, 0
    %4482 = vmatprep.subr.mxu0 0.0
    %4483 = vmatpush1.msra.mxu0 %v93
    %4484 = vmatprep.subr.mxu0 0.0
    %4485 = vmatpush1.msra.mxu0 %v94
    %4486 = vmatprep.subr.mxu0 0.0
    %4487 = vmatpush1.msra.mxu0 0.0
    %4488 = vmatprep.subr.mxu0 0.0
    %4489 = vmatpush1.msra.mxu0 0.0
    %4490 = vmatprep.subr.mxu0 0.0
    %4491 = vmatpush1.msra.mxu0 0.0
    %4492 = vmatprep.subr.mxu0 0.0
    %4493 = vmatpush1.msra.mxu0 0.0
    %4494 = vmatprep.subr.mxu0 0.0
    %4495 = vmatpush1.msra.mxu0 0.0
    %4496 = vmatprep.subr.mxu0 0.0
    %4497 = vmatpush1.msra.mxu0 0.0
    %4498 = vmatprep.subr.mxu0 0.0
    %4499 = vmatpush1.msra.mxu0 0.0
    %4500 = vmatprep.subr.mxu0 0.0
    %4501 = vmatpush1.msra.mxu0 0.0
    %4502 = vmatprep.subr.mxu0 0.0
    %4503 = vmatpush1.msra.mxu0 0.0
    %4504 = vmatprep.subr.mxu0 0.0
    %4505 = vmatpush1.msra.mxu0 0.0
    %4506 = vmatprep.subr.mxu0 0.0
    %4507 = vmatpush1.msra.mxu0 0.0
    %4508 = vmatprep.subr.mxu0 0.0
    %4509 = vmatpush1.msra.mxu0 0.0
    %4510 = vmatprep.subr.mxu0 0.0
    %4511 = vmatpush1.msra.mxu0 0.0
    %4512 = vmatprep.subr.mxu0 0.0
    %4513 = vmatpush1.msra.mxu0 0.0
    %4514 = vmatprep.subr.mxu0 0.0
    %4515 = vmatpush1.msra.mxu0 0.0
    %4516 = vmatprep.subr.mxu0 0.0
    %4517 = vmatpush1.msra.mxu0 0.0
    %4518 = vmatprep.subr.mxu0 0.0
    %4519 = vmatpush1.msra.mxu0 0.0
    %4520 = vmatprep.subr.mxu0 0.0
    %4521 = vmatpush1.msra.mxu0 0.0
    %4522 = vmatprep.subr.mxu0 0.0
    %4523 = vmatpush1.msra.mxu0 0.0
    %4524 = vmatprep.subr.mxu0 0.0
    %4525 = vmatpush1.msra.mxu0 0.0
    %4526 = vmatprep.subr.mxu0 0.0
    %4527 = vmatpush1.msra.mxu0 0.0
    %4528 = vmatprep.subr.mxu0 0.0
    %4529 = vmatpush1.msra.mxu0 0.0
    %4530 = vmatprep.subr.mxu0 0.0
    %4531 = vmatpush1.msra.mxu0 0.0
    %4532 = vmatprep.subr.mxu0 0.0
    %4533 = vmatpush1.msra.mxu0 0.0
    %4534 = vmatprep.subr.mxu0 0.0
    %4535 = vmatpush1.msra.mxu0 0.0
    %4536 = vmatprep.subr.mxu0 0.0
    %4537 = vmatpush1.msra.mxu0 0.0
    %4538 = vmatprep.subr.mxu0 0.0
    %4539 = vmatpush1.msra.mxu0 0.0
    %4540 = vmatprep.subr.mxu0 0.0
    %4541 = vmatpush1.msra.mxu0 0.0
    %4542 = vmatprep.subr.mxu0 0.0
    %4543 = vmatpush1.msra.mxu0 0.0
    %4544 = vmatprep.subr.mxu0 0.0
    %4545 = vmatpush1.msra.mxu0 0.0
    %4546 = vmatprep.mubr.f32.mxu0 0.0
    %4547 = vmatmul.mubr.f32.gmra.mrb[0].mxu0 %v4480
    %v4548 = vpop.f32.mrb[0].mxu0
    %v4549 = vadd.f32 %v1276, %v4548
    %v4550 = vpop.f32.mrb[0].mxu0
    %4551 = vdwg.mxu0
    %4553 = vrot.lane.b32.xlu0 %v4549, 96
    %v4554 = vpop.permute.xlu0 %4553
    %v4556 = vadd.f32 %v4008, %v4554
    %v4557 = vxor.u32 %v4556, 2147483648
    %v4558 = vmul.f32 %v4557, 1.442695
    %v4559 = vpow.pop %v4558
    %v4560 = vadd.f32 %v4559, 1.0
    %v4561 = vrcp.pop %v4560
    %v4562 = vmul.f32 1.0, %v4561
    %v4563 = vtanh.pop %v4026
    %4565 = vrot.lane.b32.xlu0 %v4563, 64
    %v4566 = vpop.permute.xlu0 %4565
    %v4568 = vmul.f32 %v4562, %v4566
    %4570 = vrot.lane.b32.xlu0 %v4568, 64
    %v4571 = vpop.permute.xlu0 %4570
    %4573 = vst.msk [vmem:[#allocation9 + $0x8] sm:$0xff] %vm2011, %v4571
    %v4574 = vld [vmem:[#allocation2 + $0x30] sm:$0xff]
    %4575 = vrot.lane.b32.xlu0 %v4568, 32
    %v4576 = vpop.permute.xlu0 %4575
    %v4577 = vsel %vm719, %v4576, 0
    %4579 = vmatprep.subr.mxu0 0.0
    %4580 = vmatpush1.msra.mxu0 %v81
    %4581 = vmatprep.subr.mxu0 0.0
    %4582 = vmatpush1.msra.mxu0 %v82
    %4583 = vmatprep.subr.mxu0 0.0
    %4584 = vmatpush1.msra.mxu0 %v83
    %4585 = vmatprep.subr.mxu0 0.0
    %4586 = vmatpush1.msra.mxu0 %v84
    %4587 = vmatprep.subr.mxu0 0.0
    %4588 = vmatpush1.msra.mxu0 0.0
    %4589 = vmatprep.subr.mxu0 0.0
    %4590 = vmatpush1.msra.mxu0 0.0
    %4591 = vmatprep.subr.mxu0 0.0
    %4592 = vmatpush1.msra.mxu0 0.0
    %4593 = vmatprep.subr.mxu0 0.0
    %4594 = vmatpush1.msra.mxu0 0.0
    %4595 = vmatprep.subr.mxu0 0.0
    %4596 = vmatpush1.msra.mxu0 0.0
    %4597 = vmatprep.subr.mxu0 0.0
    %4598 = vmatpush1.msra.mxu0 0.0
    %4599 = vmatprep.subr.mxu0 0.0
    %4600 = vmatpush1.msra.mxu0 0.0
    %4601 = vmatprep.subr.mxu0 0.0
    %4602 = vmatpush1.msra.mxu0 0.0
    %4603 = vmatprep.subr.mxu0 0.0
    %4604 = vmatpush1.msra.mxu0 0.0
    %4605 = vmatprep.subr.mxu0 0.0
    %4606 = vmatpush1.msra.mxu0 0.0
    %4607 = vmatprep.subr.mxu0 0.0
    %4608 = vmatpush1.msra.mxu0 0.0
    %4609 = vmatprep.subr.mxu0 0.0
    %4610 = vmatpush1.msra.mxu0 0.0
    %4611 = vmatprep.subr.mxu0 0.0
    %4612 = vmatpush1.msra.mxu0 0.0
    %4613 = vmatprep.subr.mxu0 0.0
    %4614 = vmatpush1.msra.mxu0 0.0
    %4615 = vmatprep.subr.mxu0 0.0
    %4616 = vmatpush1.msra.mxu0 0.0
    %4617 = vmatprep.subr.mxu0 0.0
    %4618 = vmatpush1.msra.mxu0 0.0
    %4619 = vmatprep.subr.mxu0 0.0
    %4620 = vmatpush1.msra.mxu0 0.0
    %4621 = vmatprep.subr.mxu0 0.0
    %4622 = vmatpush1.msra.mxu0 0.0
    %4623 = vmatprep.subr.mxu0 0.0
    %4624 = vmatpush1.msra.mxu0 0.0
    %4625 = vmatprep.subr.mxu0 0.0
    %4626 = vmatpush1.msra.mxu0 0.0
    %4627 = vmatprep.subr.mxu0 0.0
    %4628 = vmatpush1.msra.mxu0 0.0
    %4629 = vmatprep.subr.mxu0 0.0
    %4630 = vmatpush1.msra.mxu0 0.0
    %4631 = vmatprep.subr.mxu0 0.0
    %4632 = vmatpush1.msra.mxu0 0.0
    %4633 = vmatprep.subr.mxu0 0.0
    %4634 = vmatpush1.msra.mxu0 0.0
    %4635 = vmatprep.subr.mxu0 0.0
    %4636 = vmatpush1.msra.mxu0 0.0
    %4637 = vmatprep.subr.mxu0 0.0
    %4638 = vmatpush1.msra.mxu0 0.0
    %4639 = vmatprep.subr.mxu0 0.0
    %4640 = vmatpush1.msra.mxu0 0.0
    %4641 = vmatprep.subr.mxu0 0.0
    %4642 = vmatpush1.msra.mxu0 0.0
    %4643 = vmatprep.mubr.f32.mxu0 0.0
    %4644 = vmatmul.mubr.f32.gmra.mrb[0].mxu0 %v4577
    %v4645 = vpop.f32.mrb[0].mxu0
    %v4646 = vadd.f32 0.0, %v4645
    %v4647 = vpop.f32.mrb[0].mxu0
    %4648 = vdwg.mxu0
    %v4649 = vadd.f32 %v4574, %v4646
    %v4650 = vxor.u32 %v4649, 2147483648
    %v4651 = vmul.f32 %v4650, 1.442695
    %v4652 = vpow.pop %v4651
    %v4653 = vadd.f32 %v4652, 1.0
    %v4654 = vrcp.pop %v4653
    %v4655 = vmul.f32 1.0, %v4654
    %v4656 = vtanh.pop %v4649
    %v4657 = vmul.f32 %v4655, %v4026
    %4659 = vrot.lane.b32.xlu0 %v4656, 64
    %v4660 = vpop.permute.xlu0 %4659
    %v4662 = vmul.f32 %v4655, %v4660
    %4664 = vrot.lane.b32.xlu0 %v4662, 32
    %v4665 = vpop.permute.xlu0 %4664
    %v4667 = vadd.f32 %v4657, %v4665
    %4669 = vrot.lane.b32.xlu0 %v4667, 96
    %v4670 = vpop.permute.xlu0 %4669
    %v4671 = vsel %vm719, %v4670, 0
    %4673 = vmatprep.subr.mxu0 0.0
    %4674 = vmatpush1.msra.mxu0 %v86
    %4675 = vmatprep.subr.mxu0 0.0
    %4676 = vmatpush1.msra.mxu0 %v87
    %4677 = vmatprep.subr.mxu0 0.0
    %4678 = vmatpush1.msra.mxu0 %v88
    %4679 = vmatprep.subr.mxu0 0.0
    %4680 = vmatpush1.msra.mxu0 %v89
    %4681 = vmatprep.subr.mxu0 0.0
    %4682 = vmatpush1.msra.mxu0 0.0
    %4683 = vmatprep.subr.mxu0 0.0
    %4684 = vmatpush1.msra.mxu0 0.0
    %4685 = vmatprep.subr.mxu0 0.0
    %4686 = vmatpush1.msra.mxu0 0.0
    %4687 = vmatprep.subr.mxu0 0.0
    %4688 = vmatpush1.msra.mxu0 0.0
    %4689 = vmatprep.subr.mxu0 0.0
    %4690 = vmatpush1.msra.mxu0 0.0
    %4691 = vmatprep.subr.mxu0 0.0
    %4692 = vmatpush1.msra.mxu0 0.0
    %4693 = vmatprep.subr.mxu0 0.0
    %4694 = vmatpush1.msra.mxu0 0.0
    %4695 = vmatprep.subr.mxu0 0.0
    %4696 = vmatpush1.msra.mxu0 0.0
    %4697 = vmatprep.subr.mxu0 0.0
    %4698 = vmatpush1.msra.mxu0 0.0
    %4699 = vmatprep.subr.mxu0 0.0
    %4700 = vmatpush1.msra.mxu0 0.0
    %4701 = vmatprep.subr.mxu0 0.0
    %4702 = vmatpush1.msra.mxu0 0.0
    %4703 = vmatprep.subr.mxu0 0.0
    %4704 = vmatpush1.msra.mxu0 0.0
    %4705 = vmatprep.subr.mxu0 0.0
    %4706 = vmatpush1.msra.mxu0 0.0
    %4707 = vmatprep.subr.mxu0 0.0
    %4708 = vmatpush1.msra.mxu0 0.0
    %4709 = vmatprep.subr.mxu0 0.0
    %4710 = vmatpush1.msra.mxu0 0.0
    %4711 = vmatprep.subr.mxu0 0.0
    %4712 = vmatpush1.msra.mxu0 0.0
    %4713 = vmatprep.subr.mxu0 0.0
    %4714 = vmatpush1.msra.mxu0 0.0
    %4715 = vmatprep.subr.mxu0 0.0
    %4716 = vmatpush1.msra.mxu0 0.0
    %4717 = vmatprep.subr.mxu0 0.0
    %4718 = vmatpush1.msra.mxu0 0.0
    %4719 = vmatprep.subr.mxu0 0.0
    %4720 = vmatpush1.msra.mxu0 0.0
    %4721 = vmatprep.subr.mxu0 0.0
    %4722 = vmatpush1.msra.mxu0 0.0
    %4723 = vmatprep.subr.mxu0 0.0
    %4724 = vmatpush1.msra.mxu0 0.0
    %4725 = vmatprep.subr.mxu0 0.0
    %4726 = vmatpush1.msra.mxu0 0.0
    %4727 = vmatprep.subr.mxu0 0.0
    %4728 = vmatpush1.msra.mxu0 0.0
    %4729 = vmatprep.subr.mxu0 0.0
    %4730 = vmatpush1.msra.mxu0 0.0
    %4731 = vmatprep.subr.mxu0 0.0
    %4732 = vmatpush1.msra.mxu0 0.0
    %4733 = vmatprep.subr.mxu0 0.0
    %4734 = vmatpush1.msra.mxu0 0.0
    %4735 = vmatprep.subr.mxu0 0.0
    %4736 = vmatpush1.msra.mxu0 0.0
    %4737 = vmatprep.mubr.f32.mxu0 0.0
    %4738 = vmatmul.mubr.f32.gmra.mrb[0].mxu0 %v4671
    %v4739 = vpop.f32.mrb[0].mxu0
    %v4740 = vadd.f32 %v816, %v4739
    %v4741 = vpop.f32.mrb[0].mxu0
    %4742 = vdwg.mxu0
    %v4743 = vtanh.pop %v4740
    %v4744 = vmul.f32 %v4743, 3.1415927
    %v4745 = vmul.f32 %v4744, 0.5
    %v4746 = vand.u32 2147483647, %v4745
    %vm4747 = vcmp.le.f32.partialorder %v4746, 0.7853982
    %vm4748 = vcmp.lt.s32.totalorder %v4745, 0
    %v4749 = vand.u32 %v4745, 2139095040
    %v4750 = vshrl.u32 %v4749, 23
    %v4751 = vsub.s32 %v4750, 127
    %v4752 = vand.u32 2147483647, %v4745
    %v4753 = vand.u32 %v4752, 8388607
    %v4754 = vor.u32 %v4753, 8388608
    %v4755 = vsub.s32 0, %v4754
    %v4756 = vadd.s32 %v4751, 1
    %vm4757 = vcmp.gt.s32.totalorder %v4756, 0
    %v4758 = vsel %vm4757, %v4756, 0
    %v4759 = vshrl.u32 %v4758, 5
    %v4760 = vand.u32 %v4758, 31
    %v4761 = vsub.s32 32, %v4760
    %v4762 = vshrl.u32 683565275, %v4761
    %v4763 = vshll.u32 683565275, %v4760
    %v4764 = vshrl.u32 2475754826, %v4761
    %v4765 = vor.u32 %v4763, %v4764
    %v4766 = vshll.u32 2475754826, %v4760
    %v4767 = vshrl.u32 2131351028, %v4761
    %v4768 = vor.u32 %v4766, %v4767
    %v4769 = vshll.u32 2131351028, %v4760
    %v4770 = vshrl.u32 2102212464, %v4761
    %v4771 = vor.u32 %v4769, %v4770
    %v4772 = vshll.u32 2102212464, %v4760
    %v4773 = vshrl.u32 920167782, %v4761
    %v4774 = vor.u32 %v4772, %v4773
    %v4775 = vshll.u32 920167782, %v4760
    %v4776 = vshrl.u32 1326507024, %v4761
    %v4777 = vor.u32 %v4775, %v4776
    %vm4778 = vcmp.lt.s32.totalorder %v4759, 1
    %vm4779 = vcmp.lt.s32.totalorder %v4759, 2
    %vm4780 = vcmp.lt.s32.totalorder %v4759, 3
    %vm4781 = vcmp.lt.s32.totalorder %v4759, 4
    %v4782 = vsel %vm4778, %v4762, %v4765
    %v4783 = vsel %vm4781, %v4771, 2102212464
    %v4784 = vsel %vm4780, %v4768, %v4783
    %v4785 = vsel %vm4779, %v4782, %v4784
    %v4786 = vsel %vm4778, %v4765, %v4768
    %v4787 = vsel %vm4781, %v4774, 920167782
    %v4788 = vsel %vm4780, %v4771, %v4787
    %v4789 = vsel %vm4779, %v4786, %v4788
    %v4790 = vsel %vm4778, %v4768, %v4771
    %v4791 = vsel %vm4781, %v4777, 1326507024
    %v4792 = vsel %vm4780, %v4774, %v4791
    %v4793 = vsel %vm4779, %v4790, %v4792
    %v4794 = vshll.u32 %v4754, 8
    %v4795 = vmul.u32.u64.compose %v4794, %v4793
    %v4796 = vextract.low.u32 %v4795
    %v4797 = vextract.high.u32 %v4795
    %v4798 = vmul.u32.u64.compose %v4794, %v4789
    %v4799 = vextract.low.u32 %v4798
    %v4800 = vextract.high.u32 %v4798
    %v4801 = vmul.u32 %v4794, %v4785
    %v4802 = vadd.s32 %v4797, %v4799
    %vm4803 = vc.u32 %v4797, %v4799
    %v4804 = vadd.s32 %v4800, 1
    %v4805 = vsel %vm4803, %v4804, %v4800
    %v4806 = vadd.s32 %v4801, %v4805
    %v4807 = vadd.s32 %v4806, 536870912
    %v4808 = vshrl.u32 %v4807, 30
    %v4809 = vshll.u32 %v4808, 30
    %v4810 = vsub.s32 %v4806, %v4809
    %vm4811 = vcmp.lt.s32.totalorder %v4810, 0
    %v4812 = vsub.s32 0, %v4810
    %v4813 = vsel %vm4811, %v4812, %v4810
    %v4814 = vclz %v4813
    %v4815 = vsub.s32 %v4814, 2
    %vm4816 = vcmp.gt.s32.totalorder 0, %v4815
    %v4817 = vsel %vm4816, 0, %v4815
    %v4818 = vsub.s32 32, %v4817
    %v4819 = vshll.u32 %v4810, %v4817
    %v4820 = vshrl.u32 %v4802, %v4818
    %v4821 = vor.u32 %v4819, %v4820
    %v4822 = vsub.s32 4294967266, %v4817
    %v4823 = vadd.s32 %v4822, 127
    %v4824 = vshll.u32 %v4823, 23
    %v4825 = vor.u32 4788187, %v4824
    %v4826 = vand.u32 2147483647, %v4825
    %v4828 = vcvt.s32.f32 %v4821
    %v4829 = vmul.f32 %v4828, %v4826
    %v4830 = vxor.u32 %v4829, 2147483648
    %v4831 = vsel %vm4748, %v4830, %v4829
    %v4832 = vsub.s32 4, %v4808
    %v4833 = vsel %vm4748, %v4832, %v4808
    %v4834 = vsel %vm4747, %v4745, %v4831
    %v4835 = vsel %vm4747, 0, %v4833
    %v4836 = vcosq.f32.pop %v4834
    %v4837 = vsinq.f32.pop %v4834
    %vm4838 = vweird.f32 %v4745
    %v4839 = vand.u32 %v4835, 3
    %vm4840 = vcmp.lt.s32.totalorder %v4839, 2
    %vm4841 = vcmp.eq.s32.totalorder %v4839, 0
    %v4842 = vxor.u32 %v4837, 2147483648
    %v4843 = vsel %vm4841, %v4836, %v4842
    %vm4844 = vcmp.eq.s32.totalorder %v4839, 2
    %v4845 = vxor.u32 %v4836, 2147483648
    %v4846 = vsel %vm4844, %v4845, %v4837
    %v4847 = vsel %vm4840, %v4843, %v4846
    %v4848 = vsel %vm4838, nan, %v4847
    %v4849 = vand.u32 2147483647, %v4745
    %vm4850 = vcmp.le.f32.partialorder %v4849, 0.7853982
    %vm4851 = vcmp.lt.s32.totalorder %v4745, 0
    %v4852 = vand.u32 %v4745, 2139095040
    %v4853 = vshrl.u32 %v4852, 23
    %v4854 = vsub.s32 %v4853, 127
    %v4855 = vand.u32 2147483647, %v4745
    %v4856 = vand.u32 %v4855, 8388607
    %v4857 = vor.u32 %v4856, 8388608
    %v4858 = vsub.s32 0, %v4857
    %v4859 = vadd.s32 %v4854, 1
    %vm4860 = vcmp.gt.s32.totalorder %v4859, 0
    %v4861 = vsel %vm4860, %v4859, 0
    %v4862 = vshrl.u32 %v4861, 5
    %v4863 = vand.u32 %v4861, 31
    %v4864 = vsub.s32 32, %v4863
    %v4865 = vshrl.u32 683565275, %v4864
    %v4866 = vshll.u32 683565275, %v4863
    %v4867 = vshrl.u32 2475754826, %v4864
    %v4868 = vor.u32 %v4866, %v4867
    %v4869 = vshll.u32 2475754826, %v4863
    %v4870 = vshrl.u32 2131351028, %v4864
    %v4871 = vor.u32 %v4869, %v4870
    %v4872 = vshll.u32 2131351028, %v4863
    %v4873 = vshrl.u32 2102212464, %v4864
    %v4874 = vor.u32 %v4872, %v4873
    %v4875 = vshll.u32 2102212464, %v4863
    %v4876 = vshrl.u32 920167782, %v4864
    %v4877 = vor.u32 %v4875, %v4876
    %v4878 = vshll.u32 920167782, %v4863
    %v4879 = vshrl.u32 1326507024, %v4864
    %v4880 = vor.u32 %v4878, %v4879
    %vm4881 = vcmp.lt.s32.totalorder %v4862, 1
    %vm4882 = vcmp.lt.s32.totalorder %v4862, 2
    %vm4883 = vcmp.lt.s32.totalorder %v4862, 3
    %vm4884 = vcmp.lt.s32.totalorder %v4862, 4
    %v4885 = vsel %vm4881, %v4865, %v4868
    %v4886 = vsel %vm4884, %v4874, 2102212464
    %v4887 = vsel %vm4883, %v4871, %v4886
    %v4888 = vsel %vm4882, %v4885, %v4887
    %v4889 = vsel %vm4881, %v4868, %v4871
    %v4890 = vsel %vm4884, %v4877, 920167782
    %v4891 = vsel %vm4883, %v4874, %v4890
    %v4892 = vsel %vm4882, %v4889, %v4891
    %v4893 = vsel %vm4881, %v4871, %v4874
    %v4894 = vsel %vm4884, %v4880, 1326507024
    %v4895 = vsel %vm4883, %v4877, %v4894
    %v4896 = vsel %vm4882, %v4893, %v4895
    %v4897 = vshll.u32 %v4857, 8
    %v4898 = vmul.u32.u64.compose %v4897, %v4896
    %v4899 = vextract.low.u32 %v4898
    %v4900 = vextract.high.u32 %v4898
    %v4901 = vmul.u32.u64.compose %v4897, %v4892
    %v4902 = vextract.low.u32 %v4901
    %v4903 = vextract.high.u32 %v4901
    %v4904 = vmul.u32 %v4897, %v4888
    %v4905 = vadd.s32 %v4900, %v4902
    %vm4906 = vc.u32 %v4900, %v4902
    %v4907 = vadd.s32 %v4903, 1
    %v4908 = vsel %vm4906, %v4907, %v4903
    %v4909 = vadd.s32 %v4904, %v4908
    %v4910 = vadd.s32 %v4909, 536870912
    %v4911 = vshrl.u32 %v4910, 30
    %v4912 = vshll.u32 %v4911, 30
    %v4913 = vsub.s32 %v4909, %v4912
    %vm4914 = vcmp.lt.s32.totalorder %v4913, 0
    %v4915 = vsub.s32 0, %v4913
    %v4916 = vsel %vm4914, %v4915, %v4913
    %v4917 = vclz %v4916
    %v4918 = vsub.s32 %v4917, 2
    %vm4919 = vcmp.gt.s32.totalorder 0, %v4918
    %v4920 = vsel %vm4919, 0, %v4918
    %v4921 = vsub.s32 32, %v4920
    %v4922 = vshll.u32 %v4913, %v4920
    %v4923 = vshrl.u32 %v4905, %v4921
    %v4924 = vor.u32 %v4922, %v4923
    %v4925 = vsub.s32 4294967266, %v4920
    %v4926 = vadd.s32 %v4925, 127
    %v4927 = vshll.u32 %v4926, 23
    %v4928 = vor.u32 4788187, %v4927
    %v4929 = vand.u32 2147483647, %v4928
    %v4931 = vcvt.s32.f32 %v4924
    %v4932 = vmul.f32 %v4931, %v4929
    %v4933 = vxor.u32 %v4932, 2147483648
    %v4934 = vsel %vm4851, %v4933, %v4932
    %v4935 = vsub.s32 4, %v4911
    %v4936 = vsel %vm4851, %v4935, %v4911
    %v4937 = vsel %vm4850, %v4745, %v4934
    %v4938 = vsel %vm4850, 0, %v4936
    %v4939 = vcosq.f32.pop %v4937
    %v4940 = vsinq.f32.pop %v4937
    %vm4941 = vweird.f32 %v4745
    %v4942 = vadd.s32 %v4938, 3
    %v4943 = vand.u32 %v4942, 3
    %vm4944 = vcmp.lt.s32.totalorder %v4943, 2
    %vm4945 = vcmp.eq.s32.totalorder %v4943, 0
    %v4946 = vxor.u32 %v4940, 2147483648
    %v4947 = vsel %vm4945, %v4939, %v4946
    %vm4948 = vcmp.eq.s32.totalorder %v4943, 2
    %v4949 = vxor.u32 %v4939, 2147483648
    %v4950 = vsel %vm4948, %v4949, %v4940
    %v4951 = vsel %vm4944, %v4947, %v4950
    %v4952 = vsel %vm4941, nan, %v4951
    %4954 = vrot.lane.b32.xlu0 %v4952, 4
    %v4955 = vpop.permute.xlu0 %4954
    %v4957 = vsel %vm1107, %v4848, %v4955
    %v4959 = vsel %vm1109, %v4957, 0
    %4961 = vmatprep.subr.mxu0 0.0
    %4962 = vmatpush1.msra.mxu0 %v96
    %4963 = vmatprep.subr.mxu0 0.0
    %4964 = vmatpush1.msra.mxu0 0.0
    %4965 = vmatprep.subr.mxu0 0.0
    %4966 = vmatpush1.msra.mxu0 0.0
    %4967 = vmatprep.subr.mxu0 0.0
    %4968 = vmatpush1.msra.mxu0 0.0
    %4969 = vmatprep.subr.mxu0 0.0
    %4970 = vmatpush1.msra.mxu0 0.0
    %4971 = vmatprep.subr.mxu0 0.0
    %4972 = vmatpush1.msra.mxu0 0.0
    %4973 = vmatprep.subr.mxu0 0.0
    %4974 = vmatpush1.msra.mxu0 0.0
    %4975 = vmatprep.subr.mxu0 0.0
    %4976 = vmatpush1.msra.mxu0 0.0
    %4977 = vmatprep.subr.mxu0 0.0
    %4978 = vmatpush1.msra.mxu0 0.0
    %4979 = vmatprep.subr.mxu0 0.0
    %4980 = vmatpush1.msra.mxu0 0.0
    %4981 = vmatprep.subr.mxu0 0.0
    %4982 = vmatpush1.msra.mxu0 0.0
    %4983 = vmatprep.subr.mxu0 0.0
    %4984 = vmatpush1.msra.mxu0 0.0
    %4985 = vmatprep.subr.mxu0 0.0
    %4986 = vmatpush1.msra.mxu0 0.0
    %4987 = vmatprep.subr.mxu0 0.0
    %4988 = vmatpush1.msra.mxu0 0.0
    %4989 = vmatprep.subr.mxu0 0.0
    %4990 = vmatpush1.msra.mxu0 0.0
    %4991 = vmatprep.subr.mxu0 0.0
    %4992 = vmatpush1.msra.mxu0 0.0
    %4993 = vmatprep.subr.mxu0 0.0
    %4994 = vmatpush1.msra.mxu0 0.0
    %4995 = vmatprep.subr.mxu0 0.0
    %4996 = vmatpush1.msra.mxu0 0.0
    %4997 = vmatprep.subr.mxu0 0.0
    %4998 = vmatpush1.msra.mxu0 0.0
    %4999 = vmatprep.subr.mxu0 0.0
    %5000 = vmatpush1.msra.mxu0 0.0
    %5001 = vmatprep.subr.mxu0 0.0
    %5002 = vmatpush1.msra.mxu0 0.0
    %5003 = vmatprep.subr.mxu0 0.0
    %5004 = vmatpush1.msra.mxu0 0.0
    %5005 = vmatprep.subr.mxu0 0.0
    %5006 = vmatpush1.msra.mxu0 0.0
    %5007 = vmatprep.subr.mxu0 0.0
    %5008 = vmatpush1.msra.mxu0 0.0
    %5009 = vmatprep.subr.mxu0 0.0
    %5010 = vmatpush1.msra.mxu0 0.0
    %5011 = vmatprep.subr.mxu0 0.0
    %5012 = vmatpush1.msra.mxu0 0.0
    %5013 = vmatprep.subr.mxu0 0.0
    %5014 = vmatpush1.msra.mxu0 0.0
    %5015 = vmatprep.subr.mxu0 0.0
    %5016 = vmatpush1.msra.mxu0 0.0
    %5017 = vmatprep.subr.mxu0 0.0
    %5018 = vmatpush1.msra.mxu0 0.0
    %5019 = vmatprep.subr.mxu0 0.0
    %5020 = vmatpush1.msra.mxu0 0.0
    %5021 = vmatprep.subr.mxu0 0.0
    %5022 = vmatpush1.msra.mxu0 0.0
    %5023 = vmatprep.subr.mxu0 0.0
    %5024 = vmatpush1.msra.mxu0 0.0
    %5025 = vmatprep.mubr.f32.mxu0 0.0
    %5026 = vmatmul.mubr.f32.gmra.mrb[0].mxu0 %v4959
    %v5027 = vpop.f32.mrb[0].mxu0
    %v5028 = vadd.f32 0.0, %v5027
    %v5029 = vpop.f32.mrb[0].mxu0
    %5030 = vdwg.mxu0
    %5032 = vrot.lane.b32.xlu0 %v5028, 112
    %v5033 = vpop.permute.xlu0 %5032
    %v5035 = vmul.f32 %v5028, %v5033
    %5037 = vrot.lane.b32.xlu0 %v5035, 96
    %v5038 = vpop.permute.xlu0 %5037
    %v5040 = vmul.f32 %v5035, %v5038
    %v5042 = vsel %vm104, %v5040, 0
    %5044 = vmatprep.subr.mxu0 0.0
    %5045 = vmatpush1.msra.mxu0 %v91
    %5046 = vmatprep.subr.mxu0 0.0
    %5047 = vmatpush1.msra.mxu0 %v92
    %5048 = vmatprep.subr.mxu0 0.0
    %5049 = vmatpush1.msra.mxu0 0.0
    %5050 = vmatprep.subr.mxu0 0.0
    %5051 = vmatpush1.msra.mxu0 0.0
    %5052 = vmatprep.subr.mxu0 0.0
    %5053 = vmatpush1.msra.mxu0 0.0
    %5054 = vmatprep.subr.mxu0 0.0
    %5055 = vmatpush1.msra.mxu0 0.0
    %5056 = vmatprep.subr.mxu0 0.0
    %5057 = vmatpush1.msra.mxu0 0.0
    %5058 = vmatprep.subr.mxu0 0.0
    %5059 = vmatpush1.msra.mxu0 0.0
    %5060 = vmatprep.subr.mxu0 0.0
    %5061 = vmatpush1.msra.mxu0 0.0
    %5062 = vmatprep.subr.mxu0 0.0
    %5063 = vmatpush1.msra.mxu0 0.0
    %5064 = vmatprep.subr.mxu0 0.0
    %5065 = vmatpush1.msra.mxu0 0.0
    %5066 = vmatprep.subr.mxu0 0.0
    %5067 = vmatpush1.msra.mxu0 0.0
    %5068 = vmatprep.subr.mxu0 0.0
    %5069 = vmatpush1.msra.mxu0 0.0
    %5070 = vmatprep.subr.mxu0 0.0
    %5071 = vmatpush1.msra.mxu0 0.0
    %5072 = vmatprep.subr.mxu0 0.0
    %5073 = vmatpush1.msra.mxu0 0.0
    %5074 = vmatprep.subr.mxu0 0.0
    %5075 = vmatpush1.msra.mxu0 0.0
    %5076 = vmatprep.subr.mxu0 0.0
    %5077 = vmatpush1.msra.mxu0 0.0
    %5078 = vmatprep.subr.mxu0 0.0
    %5079 = vmatpush1.msra.mxu0 0.0
    %5080 = vmatprep.subr.mxu0 0.0
    %5081 = vmatpush1.msra.mxu0 0.0
    %5082 = vmatprep.subr.mxu0 0.0
    %5083 = vmatpush1.msra.mxu0 0.0
    %5084 = vmatprep.subr.mxu0 0.0
    %5085 = vmatpush1.msra.mxu0 0.0
    %5086 = vmatprep.subr.mxu0 0.0
    %5087 = vmatpush1.msra.mxu0 0.0
    %5088 = vmatprep.subr.mxu0 0.0
    %5089 = vmatpush1.msra.mxu0 0.0
    %5090 = vmatprep.subr.mxu0 0.0
    %5091 = vmatpush1.msra.mxu0 0.0
    %5092 = vmatprep.subr.mxu0 0.0
    %5093 = vmatpush1.msra.mxu0 0.0
    %5094 = vmatprep.subr.mxu0 0.0
    %5095 = vmatpush1.msra.mxu0 0.0
    %5096 = vmatprep.subr.mxu0 0.0
    %5097 = vmatpush1.msra.mxu0 0.0
    %5098 = vmatprep.subr.mxu0 0.0
    %5099 = vmatpush1.msra.mxu0 0.0
    %5100 = vmatprep.subr.mxu0 0.0
    %5101 = vmatpush1.msra.mxu0 0.0
    %5102 = vmatprep.subr.mxu0 0.0
    %5103 = vmatpush1.msra.mxu0 0.0
    %5104 = vmatprep.subr.mxu0 0.0
    %5105 = vmatpush1.msra.mxu0 0.0
    %5106 = vmatprep.subr.mxu0 0.0
    %5107 = vmatpush1.msra.mxu0 0.0
    %5108 = vmatprep.mubr.f32.mxu0 0.0
    %5109 = vmatmul.mubr.f32.gmra.mrb[0].mxu0 %v5042
    %v5110 = vpop.f32.mrb[0].mxu0
    %v5111 = vadd.f32 0.0, %v5110
    %v5112 = vpop.f32.mrb[0].mxu0
    %5113 = vdwg.mxu0
    %v5114 = vmul.f32 %v5111, %v5111
    %5116 = vrot.lane.b32.xlu0 %v5114, 112
    %v5117 = vpop.permute.xlu0 %5116
    %v5119 = vadd.f32 %v5114, %v5117
    %v5121 = vsel %vm104, %v5119, 0
    %5123 = vmatprep.subr.mxu0 0.0
    %5124 = vmatpush1.msra.mxu0 %v93
    %5125 = vmatprep.subr.mxu0 0.0
    %5126 = vmatpush1.msra.mxu0 %v94
    %5127 = vmatprep.subr.mxu0 0.0
    %5128 = vmatpush1.msra.mxu0 0.0
    %5129 = vmatprep.subr.mxu0 0.0
    %5130 = vmatpush1.msra.mxu0 0.0
    %5131 = vmatprep.subr.mxu0 0.0
    %5132 = vmatpush1.msra.mxu0 0.0
    %5133 = vmatprep.subr.mxu0 0.0
    %5134 = vmatpush1.msra.mxu0 0.0
    %5135 = vmatprep.subr.mxu0 0.0
    %5136 = vmatpush1.msra.mxu0 0.0
    %5137 = vmatprep.subr.mxu0 0.0
    %5138 = vmatpush1.msra.mxu0 0.0
    %5139 = vmatprep.subr.mxu0 0.0
    %5140 = vmatpush1.msra.mxu0 0.0
    %5141 = vmatprep.subr.mxu0 0.0
    %5142 = vmatpush1.msra.mxu0 0.0
    %5143 = vmatprep.subr.mxu0 0.0
    %5144 = vmatpush1.msra.mxu0 0.0
    %5145 = vmatprep.subr.mxu0 0.0
    %5146 = vmatpush1.msra.mxu0 0.0
    %5147 = vmatprep.subr.mxu0 0.0
    %5148 = vmatpush1.msra.mxu0 0.0
    %5149 = vmatprep.subr.mxu0 0.0
    %5150 = vmatpush1.msra.mxu0 0.0
    %5151 = vmatprep.subr.mxu0 0.0
    %5152 = vmatpush1.msra.mxu0 0.0
    %5153 = vmatprep.subr.mxu0 0.0
    %5154 = vmatpush1.msra.mxu0 0.0
    %5155 = vmatprep.subr.mxu0 0.0
    %5156 = vmatpush1.msra.mxu0 0.0
    %5157 = vmatprep.subr.mxu0 0.0
    %5158 = vmatpush1.msra.mxu0 0.0
    %5159 = vmatprep.subr.mxu0 0.0
    %5160 = vmatpush1.msra.mxu0 0.0
    %5161 = vmatprep.subr.mxu0 0.0
    %5162 = vmatpush1.msra.mxu0 0.0
    %5163 = vmatprep.subr.mxu0 0.0
    %5164 = vmatpush1.msra.mxu0 0.0
    %5165 = vmatprep.subr.mxu0 0.0
    %5166 = vmatpush1.msra.mxu0 0.0
    %5167 = vmatprep.subr.mxu0 0.0
    %5168 = vmatpush1.msra.mxu0 0.0
    %5169 = vmatprep.subr.mxu0 0.0
    %5170 = vmatpush1.msra.mxu0 0.0
    %5171 = vmatprep.subr.mxu0 0.0
    %5172 = vmatpush1.msra.mxu0 0.0
    %5173 = vmatprep.subr.mxu0 0.0
    %5174 = vmatpush1.msra.mxu0 0.0
    %5175 = vmatprep.subr.mxu0 0.0
    %5176 = vmatpush1.msra.mxu0 0.0
    %5177 = vmatprep.subr.mxu0 0.0
    %5178 = vmatpush1.msra.mxu0 0.0
    %5179 = vmatprep.subr.mxu0 0.0
    %5180 = vmatpush1.msra.mxu0 0.0
    %5181 = vmatprep.subr.mxu0 0.0
    %5182 = vmatpush1.msra.mxu0 0.0
    %5183 = vmatprep.subr.mxu0 0.0
    %5184 = vmatpush1.msra.mxu0 0.0
    %5185 = vmatprep.subr.mxu0 0.0
    %5186 = vmatpush1.msra.mxu0 0.0
    %5187 = vmatprep.mubr.f32.mxu0 0.0
    %5188 = vmatmul.mubr.f32.gmra.mrb[0].mxu0 %v5121
    %v5189 = vpop.f32.mrb[0].mxu0
    %v5190 = vadd.f32 %v1276, %v5189
    %v5191 = vpop.f32.mrb[0].mxu0
    %5192 = vdwg.mxu0
    %5194 = vrot.lane.b32.xlu0 %v5190, 96
    %v5195 = vpop.permute.xlu0 %5194
    %v5197 = vadd.f32 %v4649, %v5195
    %v5198 = vxor.u32 %v5197, 2147483648
    %v5199 = vmul.f32 %v5198, 1.442695
    %v5200 = vpow.pop %v5199
    %v5201 = vadd.f32 %v5200, 1.0
    %v5202 = vrcp.pop %v5201
    %v5203 = vmul.f32 1.0, %v5202
    %v5204 = vtanh.pop %v4667
    %5206 = vrot.lane.b32.xlu0 %v5204, 64
    %v5207 = vpop.permute.xlu0 %5206
    %v5209 = vmul.f32 %v5203, %v5207
    %5211 = vrot.lane.b32.xlu0 %v5209, 96
    %v5212 = vpop.permute.xlu0 %5211
    %5214 = vst.msk [vmem:[#allocation9 + $0x8] sm:$0xff] %vm2653, %v5212
    %v5215 = vld [vmem:[#allocation2 + $0x38] sm:$0xff]
    %5216 = vrot.lane.b32.xlu0 %v5209, 32
    %v5217 = vpop.permute.xlu0 %5216
    %v5218 = vsel %vm719, %v5217, 0
    %5220 = vmatprep.subr.mxu0 0.0
    %5221 = vmatpush1.msra.mxu0 %v81
    %5222 = vmatprep.subr.mxu0 0.0
    %5223 = vmatpush1.msra.mxu0 %v82
    %5224 = vmatprep.subr.mxu0 0.0
    %5225 = vmatpush1.msra.mxu0 %v83
    %5226 = vmatprep.subr.mxu0 0.0
    %5227 = vmatpush1.msra.mxu0 %v84
    %5228 = vmatprep.subr.mxu0 0.0
    %5229 = vmatpush1.msra.mxu0 0.0
    %5230 = vmatprep.subr.mxu0 0.0
    %5231 = vmatpush1.msra.mxu0 0.0
    %5232 = vmatprep.subr.mxu0 0.0
    %5233 = vmatpush1.msra.mxu0 0.0
    %5234 = vmatprep.subr.mxu0 0.0
    %5235 = vmatpush1.msra.mxu0 0.0
    %5236 = vmatprep.subr.mxu0 0.0
    %5237 = vmatpush1.msra.mxu0 0.0
    %5238 = vmatprep.subr.mxu0 0.0
    %5239 = vmatpush1.msra.mxu0 0.0
    %5240 = vmatprep.subr.mxu0 0.0
    %5241 = vmatpush1.msra.mxu0 0.0
    %5242 = vmatprep.subr.mxu0 0.0
    %5243 = vmatpush1.msra.mxu0 0.0
    %5244 = vmatprep.subr.mxu0 0.0
    %5245 = vmatpush1.msra.mxu0 0.0
    %5246 = vmatprep.subr.mxu0 0.0
    %5247 = vmatpush1.msra.mxu0 0.0
    %5248 = vmatprep.subr.mxu0 0.0
    %5249 = vmatpush1.msra.mxu0 0.0
    %5250 = vmatprep.subr.mxu0 0.0
    %5251 = vmatpush1.msra.mxu0 0.0
    %5252 = vmatprep.subr.mxu0 0.0
    %5253 = vmatpush1.msra.mxu0 0.0
    %5254 = vmatprep.subr.mxu0 0.0
    %5255 = vmatpush1.msra.mxu0 0.0
    %5256 = vmatprep.subr.mxu0 0.0
    %5257 = vmatpush1.msra.mxu0 0.0
    %5258 = vmatprep.subr.mxu0 0.0
    %5259 = vmatpush1.msra.mxu0 0.0
    %5260 = vmatprep.subr.mxu0 0.0
    %5261 = vmatpush1.msra.mxu0 0.0
    %5262 = vmatprep.subr.mxu0 0.0
    %5263 = vmatpush1.msra.mxu0 0.0
    %5264 = vmatprep.subr.mxu0 0.0
    %5265 = vmatpush1.msra.mxu0 0.0
    %5266 = vmatprep.subr.mxu0 0.0
    %5267 = vmatpush1.msra.mxu0 0.0
    %5268 = vmatprep.subr.mxu0 0.0
    %5269 = vmatpush1.msra.mxu0 0.0
    %5270 = vmatprep.subr.mxu0 0.0
    %5271 = vmatpush1.msra.mxu0 0.0
    %5272 = vmatprep.subr.mxu0 0.0
    %5273 = vmatpush1.msra.mxu0 0.0
    %5274 = vmatprep.subr.mxu0 0.0
    %5275 = vmatpush1.msra.mxu0 0.0
    %5276 = vmatprep.subr.mxu0 0.0
    %5277 = vmatpush1.msra.mxu0 0.0
    %5278 = vmatprep.subr.mxu0 0.0
    %5279 = vmatpush1.msra.mxu0 0.0
    %5280 = vmatprep.subr.mxu0 0.0
    %5281 = vmatpush1.msra.mxu0 0.0
    %5282 = vmatprep.subr.mxu0 0.0
    %5283 = vmatpush1.msra.mxu0 0.0
    %5284 = vmatprep.mubr.f32.mxu0 0.0
    %5285 = vmatmul.mubr.f32.gmra.mrb[0].mxu0 %v5218
    %v5286 = vpop.f32.mrb[0].mxu0
    %v5287 = vadd.f32 0.0, %v5286
    %v5288 = vpop.f32.mrb[0].mxu0
    %5289 = vdwg.mxu0
    %v5290 = vadd.f32 %v5215, %v5287
    %v5291 = vxor.u32 %v5290, 2147483648
    %v5292 = vmul.f32 %v5291, 1.442695
    %v5293 = vpow.pop %v5292
    %v5294 = vadd.f32 %v5293, 1.0
    %v5295 = vrcp.pop %v5294
    %v5296 = vmul.f32 1.0, %v5295
    %v5297 = vtanh.pop %v5290
    %v5298 = vmul.f32 %v5296, %v4667
    %5300 = vrot.lane.b32.xlu0 %v5297, 64
    %v5301 = vpop.permute.xlu0 %5300
    %v5303 = vmul.f32 %v5296, %v5301
    %5305 = vrot.lane.b32.xlu0 %v5303, 32
    %v5306 = vpop.permute.xlu0 %5305
    %v5308 = vadd.f32 %v5298, %v5306
    %5310 = vrot.lane.b32.xlu0 %v5308, 96
    %v5311 = vpop.permute.xlu0 %5310
    %v5312 = vsel %vm719, %v5311, 0
    %5314 = vmatprep.subr.mxu0 0.0
    %5315 = vmatpush1.msra.mxu0 %v86
    %5316 = vmatprep.subr.mxu0 0.0
    %5317 = vmatpush1.msra.mxu0 %v87
    %5318 = vmatprep.subr.mxu0 0.0
    %5319 = vmatpush1.msra.mxu0 %v88
    %5320 = vmatprep.subr.mxu0 0.0
    %5321 = vmatpush1.msra.mxu0 %v89
    %5322 = vmatprep.subr.mxu0 0.0
    %5323 = vmatpush1.msra.mxu0 0.0
    %5324 = vmatprep.subr.mxu0 0.0
    %5325 = vmatpush1.msra.mxu0 0.0
    %5326 = vmatprep.subr.mxu0 0.0
    %5327 = vmatpush1.msra.mxu0 0.0
    %5328 = vmatprep.subr.mxu0 0.0
    %5329 = vmatpush1.msra.mxu0 0.0
    %5330 = vmatprep.subr.mxu0 0.0
    %5331 = vmatpush1.msra.mxu0 0.0
    %5332 = vmatprep.subr.mxu0 0.0
    %5333 = vmatpush1.msra.mxu0 0.0
    %5334 = vmatprep.subr.mxu0 0.0
    %5335 = vmatpush1.msra.mxu0 0.0
    %5336 = vmatprep.subr.mxu0 0.0
    %5337 = vmatpush1.msra.mxu0 0.0
    %5338 = vmatprep.subr.mxu0 0.0
    %5339 = vmatpush1.msra.mxu0 0.0
    %5340 = vmatprep.subr.mxu0 0.0
    %5341 = vmatpush1.msra.mxu0 0.0
    %5342 = vmatprep.subr.mxu0 0.0
    %5343 = vmatpush1.msra.mxu0 0.0
    %5344 = vmatprep.subr.mxu0 0.0
    %5345 = vmatpush1.msra.mxu0 0.0
    %5346 = vmatprep.subr.mxu0 0.0
    %5347 = vmatpush1.msra.mxu0 0.0
    %5348 = vmatprep.subr.mxu0 0.0
    %5349 = vmatpush1.msra.mxu0 0.0
    %5350 = vmatprep.subr.mxu0 0.0
    %5351 = vmatpush1.msra.mxu0 0.0
    %5352 = vmatprep.subr.mxu0 0.0
    %5353 = vmatpush1.msra.mxu0 0.0
    %5354 = vmatprep.subr.mxu0 0.0
    %5355 = vmatpush1.msra.mxu0 0.0
    %5356 = vmatprep.subr.mxu0 0.0
    %5357 = vmatpush1.msra.mxu0 0.0
    %5358 = vmatprep.subr.mxu0 0.0
    %5359 = vmatpush1.msra.mxu0 0.0
    %5360 = vmatprep.subr.mxu0 0.0
    %5361 = vmatpush1.msra.mxu0 0.0
    %5362 = vmatprep.subr.mxu0 0.0
    %5363 = vmatpush1.msra.mxu0 0.0
    %5364 = vmatprep.subr.mxu0 0.0
    %5365 = vmatpush1.msra.mxu0 0.0
    %5366 = vmatprep.subr.mxu0 0.0
    %5367 = vmatpush1.msra.mxu0 0.0
    %5368 = vmatprep.subr.mxu0 0.0
    %5369 = vmatpush1.msra.mxu0 0.0
    %5370 = vmatprep.subr.mxu0 0.0
    %5371 = vmatpush1.msra.mxu0 0.0
    %5372 = vmatprep.subr.mxu0 0.0
    %5373 = vmatpush1.msra.mxu0 0.0
    %5374 = vmatprep.subr.mxu0 0.0
    %5375 = vmatpush1.msra.mxu0 0.0
    %5376 = vmatprep.subr.mxu0 0.0
    %5377 = vmatpush1.msra.mxu0 0.0
    %5378 = vmatprep.mubr.f32.mxu0 0.0
    %5379 = vmatmul.mubr.f32.gmra.mrb[0].mxu0 %v5312
    %v5380 = vpop.f32.mrb[0].mxu0
    %v5381 = vadd.f32 %v816, %v5380
    %v5382 = vpop.f32.mrb[0].mxu0
    %5383 = vdwg.mxu0
    %v5384 = vtanh.pop %v5381
    %v5385 = vmul.f32 %v5384, 3.1415927
    %v5386 = vmul.f32 %v5385, 0.5
    %v5387 = vand.u32 2147483647, %v5386
    %vm5388 = vcmp.le.f32.partialorder %v5387, 0.7853982
    %vm5389 = vcmp.lt.s32.totalorder %v5386, 0
    %v5390 = vand.u32 %v5386, 2139095040
    %v5391 = vshrl.u32 %v5390, 23
    %v5392 = vsub.s32 %v5391, 127
    %v5393 = vand.u32 2147483647, %v5386
    %v5394 = vand.u32 %v5393, 8388607
    %v5395 = vor.u32 %v5394, 8388608
    %v5396 = vsub.s32 0, %v5395
    %v5397 = vadd.s32 %v5392, 1
    %vm5398 = vcmp.gt.s32.totalorder %v5397, 0
    %v5399 = vsel %vm5398, %v5397, 0
    %v5400 = vshrl.u32 %v5399, 5
    %v5401 = vand.u32 %v5399, 31
    %v5402 = vsub.s32 32, %v5401
    %v5403 = vshrl.u32 683565275, %v5402
    %v5404 = vshll.u32 683565275, %v5401
    %v5405 = vshrl.u32 2475754826, %v5402
    %v5406 = vor.u32 %v5404, %v5405
    %v5407 = vshll.u32 2475754826, %v5401
    %v5408 = vshrl.u32 2131351028, %v5402
    %v5409 = vor.u32 %v5407, %v5408
    %v5410 = vshll.u32 2131351028, %v5401
    %v5411 = vshrl.u32 2102212464, %v5402
    %v5412 = vor.u32 %v5410, %v5411
    %v5413 = vshll.u32 2102212464, %v5401
    %v5414 = vshrl.u32 920167782, %v5402
    %v5415 = vor.u32 %v5413, %v5414
    %v5416 = vshll.u32 920167782, %v5401
    %v5417 = vshrl.u32 1326507024, %v5402
    %v5418 = vor.u32 %v5416, %v5417
    %vm5419 = vcmp.lt.s32.totalorder %v5400, 1
    %vm5420 = vcmp.lt.s32.totalorder %v5400, 2
    %vm5421 = vcmp.lt.s32.totalorder %v5400, 3
    %vm5422 = vcmp.lt.s32.totalorder %v5400, 4
    %v5423 = vsel %vm5419, %v5403, %v5406
    %v5424 = vsel %vm5422, %v5412, 2102212464
    %v5425 = vsel %vm5421, %v5409, %v5424
    %v5426 = vsel %vm5420, %v5423, %v5425
    %v5427 = vsel %vm5419, %v5406, %v5409
    %v5428 = vsel %vm5422, %v5415, 920167782
    %v5429 = vsel %vm5421, %v5412, %v5428
    %v5430 = vsel %vm5420, %v5427, %v5429
    %v5431 = vsel %vm5419, %v5409, %v5412
    %v5432 = vsel %vm5422, %v5418, 1326507024
    %v5433 = vsel %vm5421, %v5415, %v5432
    %v5434 = vsel %vm5420, %v5431, %v5433
    %v5435 = vshll.u32 %v5395, 8
    %v5436 = vmul.u32.u64.compose %v5435, %v5434
    %v5437 = vextract.low.u32 %v5436
    %v5438 = vextract.high.u32 %v5436
    %v5439 = vmul.u32.u64.compose %v5435, %v5430
    %v5440 = vextract.low.u32 %v5439
    %v5441 = vextract.high.u32 %v5439
    %v5442 = vmul.u32 %v5435, %v5426
    %v5443 = vadd.s32 %v5438, %v5440
    %vm5444 = vc.u32 %v5438, %v5440
    %v5445 = vadd.s32 %v5441, 1
    %v5446 = vsel %vm5444, %v5445, %v5441
    %v5447 = vadd.s32 %v5442, %v5446
    %v5448 = vadd.s32 %v5447, 536870912
    %v5449 = vshrl.u32 %v5448, 30
    %v5450 = vshll.u32 %v5449, 30
    %v5451 = vsub.s32 %v5447, %v5450
    %vm5452 = vcmp.lt.s32.totalorder %v5451, 0
    %v5453 = vsub.s32 0, %v5451
    %v5454 = vsel %vm5452, %v5453, %v5451
    %v5455 = vclz %v5454
    %v5456 = vsub.s32 %v5455, 2
    %vm5457 = vcmp.gt.s32.totalorder 0, %v5456
    %v5458 = vsel %vm5457, 0, %v5456
    %v5459 = vsub.s32 32, %v5458
    %v5460 = vshll.u32 %v5451, %v5458
    %v5461 = vshrl.u32 %v5443, %v5459
    %v5462 = vor.u32 %v5460, %v5461
    %v5463 = vsub.s32 4294967266, %v5458
    %v5464 = vadd.s32 %v5463, 127
    %v5465 = vshll.u32 %v5464, 23
    %v5466 = vor.u32 4788187, %v5465
    %v5467 = vand.u32 2147483647, %v5466
    %v5469 = vcvt.s32.f32 %v5462
    %v5470 = vmul.f32 %v5469, %v5467
    %v5471 = vxor.u32 %v5470, 2147483648
    %v5472 = vsel %vm5389, %v5471, %v5470
    %v5473 = vsub.s32 4, %v5449
    %v5474 = vsel %vm5389, %v5473, %v5449
    %v5475 = vsel %vm5388, %v5386, %v5472
    %v5476 = vsel %vm5388, 0, %v5474
    %v5477 = vcosq.f32.pop %v5475
    %v5478 = vsinq.f32.pop %v5475
    %vm5479 = vweird.f32 %v5386
    %v5480 = vand.u32 %v5476, 3
    %vm5481 = vcmp.lt.s32.totalorder %v5480, 2
    %vm5482 = vcmp.eq.s32.totalorder %v5480, 0
    %v5483 = vxor.u32 %v5478, 2147483648
    %v5484 = vsel %vm5482, %v5477, %v5483
    %vm5485 = vcmp.eq.s32.totalorder %v5480, 2
    %v5486 = vxor.u32 %v5477, 2147483648
    %v5487 = vsel %vm5485, %v5486, %v5478
    %v5488 = vsel %vm5481, %v5484, %v5487
    %v5489 = vsel %vm5479, nan, %v5488
    %v5490 = vand.u32 2147483647, %v5386
    %vm5491 = vcmp.le.f32.partialorder %v5490, 0.7853982
    %vm5492 = vcmp.lt.s32.totalorder %v5386, 0
    %v5493 = vand.u32 %v5386, 2139095040
    %v5494 = vshrl.u32 %v5493, 23
    %v5495 = vsub.s32 %v5494, 127
    %v5496 = vand.u32 2147483647, %v5386
    %v5497 = vand.u32 %v5496, 8388607
    %v5498 = vor.u32 %v5497, 8388608
    %v5499 = vsub.s32 0, %v5498
    %v5500 = vadd.s32 %v5495, 1
    %vm5501 = vcmp.gt.s32.totalorder %v5500, 0
    %v5502 = vsel %vm5501, %v5500, 0
    %v5503 = vshrl.u32 %v5502, 5
    %v5504 = vand.u32 %v5502, 31
    %v5505 = vsub.s32 32, %v5504
    %v5506 = vshrl.u32 683565275, %v5505
    %v5507 = vshll.u32 683565275, %v5504
    %v5508 = vshrl.u32 2475754826, %v5505
    %v5509 = vor.u32 %v5507, %v5508
    %v5510 = vshll.u32 2475754826, %v5504
    %v5511 = vshrl.u32 2131351028, %v5505
    %v5512 = vor.u32 %v5510, %v5511
    %v5513 = vshll.u32 2131351028, %v5504
    %v5514 = vshrl.u32 2102212464, %v5505
    %v5515 = vor.u32 %v5513, %v5514
    %v5516 = vshll.u32 2102212464, %v5504
    %v5517 = vshrl.u32 920167782, %v5505
    %v5518 = vor.u32 %v5516, %v5517
    %v5519 = vshll.u32 920167782, %v5504
    %v5520 = vshrl.u32 1326507024, %v5505
    %v5521 = vor.u32 %v5519, %v5520
    %vm5522 = vcmp.lt.s32.totalorder %v5503, 1
    %vm5523 = vcmp.lt.s32.totalorder %v5503, 2
    %vm5524 = vcmp.lt.s32.totalorder %v5503, 3
    %vm5525 = vcmp.lt.s32.totalorder %v5503, 4
    %v5526 = vsel %vm5522, %v5506, %v5509
    %v5527 = vsel %vm5525, %v5515, 2102212464
    %v5528 = vsel %vm5524, %v5512, %v5527
    %v5529 = vsel %vm5523, %v5526, %v5528
    %v5530 = vsel %vm5522, %v5509, %v5512
    %v5531 = vsel %vm5525, %v5518, 920167782
    %v5532 = vsel %vm5524, %v5515, %v5531
    %v5533 = vsel %vm5523, %v5530, %v5532
    %v5534 = vsel %vm5522, %v5512, %v5515
    %v5535 = vsel %vm5525, %v5521, 1326507024
    %v5536 = vsel %vm5524, %v5518, %v5535
    %v5537 = vsel %vm5523, %v5534, %v5536
    %v5538 = vshll.u32 %v5498, 8
    %v5539 = vmul.u32.u64.compose %v5538, %v5537
    %v5540 = vextract.low.u32 %v5539
    %v5541 = vextract.high.u32 %v5539
    %v5542 = vmul.u32.u64.compose %v5538, %v5533
    %v5543 = vextract.low.u32 %v5542
    %v5544 = vextract.high.u32 %v5542
    %v5545 = vmul.u32 %v5538, %v5529
    %v5546 = vadd.s32 %v5541, %v5543
    %vm5547 = vc.u32 %v5541, %v5543
    %v5548 = vadd.s32 %v5544, 1
    %v5549 = vsel %vm5547, %v5548, %v5544
    %v5550 = vadd.s32 %v5545, %v5549
    %v5551 = vadd.s32 %v5550, 536870912
    %v5552 = vshrl.u32 %v5551, 30
    %v5553 = vshll.u32 %v5552, 30
    %v5554 = vsub.s32 %v5550, %v5553
    %vm5555 = vcmp.lt.s32.totalorder %v5554, 0
    %v5556 = vsub.s32 0, %v5554
    %v5557 = vsel %vm5555, %v5556, %v5554
    %v5558 = vclz %v5557
    %v5559 = vsub.s32 %v5558, 2
    %vm5560 = vcmp.gt.s32.totalorder 0, %v5559
    %v5561 = vsel %vm5560, 0, %v5559
    %v5562 = vsub.s32 32, %v5561
    %v5563 = vshll.u32 %v5554, %v5561
    %v5564 = vshrl.u32 %v5546, %v5562
    %v5565 = vor.u32 %v5563, %v5564
    %v5566 = vsub.s32 4294967266, %v5561
    %v5567 = vadd.s32 %v5566, 127
    %v5568 = vshll.u32 %v5567, 23
    %v5569 = vor.u32 4788187, %v5568
    %v5570 = vand.u32 2147483647, %v5569
    %v5572 = vcvt.s32.f32 %v5565
    %v5573 = vmul.f32 %v5572, %v5570
    %v5574 = vxor.u32 %v5573, 2147483648
    %v5575 = vsel %vm5492, %v5574, %v5573
    %v5576 = vsub.s32 4, %v5552
    %v5577 = vsel %vm5492, %v5576, %v5552
    %v5578 = vsel %vm5491, %v5386, %v5575
    %v5579 = vsel %vm5491, 0, %v5577
    %v5580 = vcosq.f32.pop %v5578
    %v5581 = vsinq.f32.pop %v5578
    %vm5582 = vweird.f32 %v5386
    %v5583 = vadd.s32 %v5579, 3
    %v5584 = vand.u32 %v5583, 3
    %vm5585 = vcmp.lt.s32.totalorder %v5584, 2
    %vm5586 = vcmp.eq.s32.totalorder %v5584, 0
    %v5587 = vxor.u32 %v5581, 2147483648
    %v5588 = vsel %vm5586, %v5580, %v5587
    %vm5589 = vcmp.eq.s32.totalorder %v5584, 2
    %v5590 = vxor.u32 %v5580, 2147483648
    %v5591 = vsel %vm5589, %v5590, %v5581
    %v5592 = vsel %vm5585, %v5588, %v5591
    %v5593 = vsel %vm5582, nan, %v5592
    %5595 = vrot.lane.b32.xlu0 %v5593, 4
    %v5596 = vpop.permute.xlu0 %5595
    %v5598 = vsel %vm1107, %v5489, %v5596
    %v5600 = vsel %vm1109, %v5598, 0
    %5602 = vmatprep.subr.mxu0 0.0
    %5603 = vmatpush1.msra.mxu0 %v96
    %5604 = vmatprep.subr.mxu0 0.0
    %5605 = vmatpush1.msra.mxu0 0.0
    %5606 = vmatprep.subr.mxu0 0.0
    %5607 = vmatpush1.msra.mxu0 0.0
    %5608 = vmatprep.subr.mxu0 0.0
    %5609 = vmatpush1.msra.mxu0 0.0
    %5610 = vmatprep.subr.mxu0 0.0
    %5611 = vmatpush1.msra.mxu0 0.0
    %5612 = vmatprep.subr.mxu0 0.0
    %5613 = vmatpush1.msra.mxu0 0.0
    %5614 = vmatprep.subr.mxu0 0.0
    %5615 = vmatpush1.msra.mxu0 0.0
    %5616 = vmatprep.subr.mxu0 0.0
    %5617 = vmatpush1.msra.mxu0 0.0
    %5618 = vmatprep.subr.mxu0 0.0
    %5619 = vmatpush1.msra.mxu0 0.0
    %5620 = vmatprep.subr.mxu0 0.0
    %5621 = vmatpush1.msra.mxu0 0.0
    %5622 = vmatprep.subr.mxu0 0.0
    %5623 = vmatpush1.msra.mxu0 0.0
    %5624 = vmatprep.subr.mxu0 0.0
    %5625 = vmatpush1.msra.mxu0 0.0
    %5626 = vmatprep.subr.mxu0 0.0
    %5627 = vmatpush1.msra.mxu0 0.0
    %5628 = vmatprep.subr.mxu0 0.0
    %5629 = vmatpush1.msra.mxu0 0.0
    %5630 = vmatprep.subr.mxu0 0.0
    %5631 = vmatpush1.msra.mxu0 0.0
    %5632 = vmatprep.subr.mxu0 0.0
    %5633 = vmatpush1.msra.mxu0 0.0
    %5634 = vmatprep.subr.mxu0 0.0
    %5635 = vmatpush1.msra.mxu0 0.0
    %5636 = vmatprep.subr.mxu0 0.0
    %5637 = vmatpush1.msra.mxu0 0.0
    %5638 = vmatprep.subr.mxu0 0.0
    %5639 = vmatpush1.msra.mxu0 0.0
    %5640 = vmatprep.subr.mxu0 0.0
    %5641 = vmatpush1.msra.mxu0 0.0
    %5642 = vmatprep.subr.mxu0 0.0
    %5643 = vmatpush1.msra.mxu0 0.0
    %5644 = vmatprep.subr.mxu0 0.0
    %5645 = vmatpush1.msra.mxu0 0.0
    %5646 = vmatprep.subr.mxu0 0.0
    %5647 = vmatpush1.msra.mxu0 0.0
    %5648 = vmatprep.subr.mxu0 0.0
    %5649 = vmatpush1.msra.mxu0 0.0
    %5650 = vmatprep.subr.mxu0 0.0
    %5651 = vmatpush1.msra.mxu0 0.0
    %5652 = vmatprep.subr.mxu0 0.0
    %5653 = vmatpush1.msra.mxu0 0.0
    %5654 = vmatprep.subr.mxu0 0.0
    %5655 = vmatpush1.msra.mxu0 0.0
    %5656 = vmatprep.subr.mxu0 0.0
    %5657 = vmatpush1.msra.mxu0 0.0
    %5658 = vmatprep.subr.mxu0 0.0
    %5659 = vmatpush1.msra.mxu0 0.0
    %5660 = vmatprep.subr.mxu0 0.0
    %5661 = vmatpush1.msra.mxu0 0.0
    %5662 = vmatprep.subr.mxu0 0.0
    %5663 = vmatpush1.msra.mxu0 0.0
    %5664 = vmatprep.subr.mxu0 0.0
    %5665 = vmatpush1.msra.mxu0 0.0
    %5666 = vmatprep.mubr.f32.mxu0 0.0
    %5667 = vmatmul.mubr.f32.gmra.mrb[0].mxu0 %v5600
    %v5668 = vpop.f32.mrb[0].mxu0
    %v5669 = vadd.f32 0.0, %v5668
    %v5670 = vpop.f32.mrb[0].mxu0
    %5671 = vdwg.mxu0
    %5673 = vrot.lane.b32.xlu0 %v5669, 112
    %v5674 = vpop.permute.xlu0 %5673
    %v5676 = vmul.f32 %v5669, %v5674
    %5678 = vrot.lane.b32.xlu0 %v5676, 96
    %v5679 = vpop.permute.xlu0 %5678
    %v5681 = vmul.f32 %v5676, %v5679
    %v5683 = vsel %vm104, %v5681, 0
    %5685 = vmatprep.subr.mxu0 0.0
    %5686 = vmatpush1.msra.mxu0 %v91
    %5687 = vmatprep.subr.mxu0 0.0
    %5688 = vmatpush1.msra.mxu0 %v92
    %5689 = vmatprep.subr.mxu0 0.0
    %5690 = vmatpush1.msra.mxu0 0.0
    %5691 = vmatprep.subr.mxu0 0.0
    %5692 = vmatpush1.msra.mxu0 0.0
    %5693 = vmatprep.subr.mxu0 0.0
    %5694 = vmatpush1.msra.mxu0 0.0
    %5695 = vmatprep.subr.mxu0 0.0
    %5696 = vmatpush1.msra.mxu0 0.0
    %5697 = vmatprep.subr.mxu0 0.0
    %5698 = vmatpush1.msra.mxu0 0.0
    %5699 = vmatprep.subr.mxu0 0.0
    %5700 = vmatpush1.msra.mxu0 0.0
    %5701 = vmatprep.subr.mxu0 0.0
    %5702 = vmatpush1.msra.mxu0 0.0
    %5703 = vmatprep.subr.mxu0 0.0
    %5704 = vmatpush1.msra.mxu0 0.0
    %5705 = vmatprep.subr.mxu0 0.0
    %5706 = vmatpush1.msra.mxu0 0.0
    %5707 = vmatprep.subr.mxu0 0.0
    %5708 = vmatpush1.msra.mxu0 0.0
    %5709 = vmatprep.subr.mxu0 0.0
    %5710 = vmatpush1.msra.mxu0 0.0
    %5711 = vmatprep.subr.mxu0 0.0
    %5712 = vmatpush1.msra.mxu0 0.0
    %5713 = vmatprep.subr.mxu0 0.0
    %5714 = vmatpush1.msra.mxu0 0.0
    %5715 = vmatprep.subr.mxu0 0.0
    %5716 = vmatpush1.msra.mxu0 0.0
    %5717 = vmatprep.subr.mxu0 0.0
    %5718 = vmatpush1.msra.mxu0 0.0
    %5719 = vmatprep.subr.mxu0 0.0
    %5720 = vmatpush1.msra.mxu0 0.0
    %5721 = vmatprep.subr.mxu0 0.0
    %5722 = vmatpush1.msra.mxu0 0.0
    %5723 = vmatprep.subr.mxu0 0.0
    %5724 = vmatpush1.msra.mxu0 0.0
    %5725 = vmatprep.subr.mxu0 0.0
    %5726 = vmatpush1.msra.mxu0 0.0
    %5727 = vmatprep.subr.mxu0 0.0
    %5728 = vmatpush1.msra.mxu0 0.0
    %5729 = vmatprep.subr.mxu0 0.0
    %5730 = vmatpush1.msra.mxu0 0.0
    %5731 = vmatprep.subr.mxu0 0.0
    %5732 = vmatpush1.msra.mxu0 0.0
    %5733 = vmatprep.subr.mxu0 0.0
    %5734 = vmatpush1.msra.mxu0 0.0
    %5735 = vmatprep.subr.mxu0 0.0
    %5736 = vmatpush1.msra.mxu0 0.0
    %5737 = vmatprep.subr.mxu0 0.0
    %5738 = vmatpush1.msra.mxu0 0.0
    %5739 = vmatprep.subr.mxu0 0.0
    %5740 = vmatpush1.msra.mxu0 0.0
    %5741 = vmatprep.subr.mxu0 0.0
    %5742 = vmatpush1.msra.mxu0 0.0
    %5743 = vmatprep.subr.mxu0 0.0
    %5744 = vmatpush1.msra.mxu0 0.0
    %5745 = vmatprep.subr.mxu0 0.0
    %5746 = vmatpush1.msra.mxu0 0.0
    %5747 = vmatprep.subr.mxu0 0.0
    %5748 = vmatpush1.msra.mxu0 0.0
    %5749 = vmatprep.mubr.f32.mxu0 0.0
    %5750 = vmatmul.mubr.f32.gmra.mrb[0].mxu0 %v5683
    %v5751 = vpop.f32.mrb[0].mxu0
    %v5752 = vadd.f32 0.0, %v5751
    %v5753 = vpop.f32.mrb[0].mxu0
    %5754 = vdwg.mxu0
    %v5755 = vmul.f32 %v5752, %v5752
    %5757 = vrot.lane.b32.xlu0 %v5755, 112
    %v5758 = vpop.permute.xlu0 %5757
    %v5760 = vadd.f32 %v5755, %v5758
    %v5762 = vsel %vm104, %v5760, 0
    %5764 = vmatprep.subr.mxu0 0.0
    %5765 = vmatpush1.msra.mxu0 %v93
    %5766 = vmatprep.subr.mxu0 0.0
    %5767 = vmatpush1.msra.mxu0 %v94
    %5768 = vmatprep.subr.mxu0 0.0
    %5769 = vmatpush1.msra.mxu0 0.0
    %5770 = vmatprep.subr.mxu0 0.0
    %5771 = vmatpush1.msra.mxu0 0.0
    %5772 = vmatprep.subr.mxu0 0.0
    %5773 = vmatpush1.msra.mxu0 0.0
    %5774 = vmatprep.subr.mxu0 0.0
    %5775 = vmatpush1.msra.mxu0 0.0
    %5776 = vmatprep.subr.mxu0 0.0
    %5777 = vmatpush1.msra.mxu0 0.0
    %5778 = vmatprep.subr.mxu0 0.0
    %5779 = vmatpush1.msra.mxu0 0.0
    %5780 = vmatprep.subr.mxu0 0.0
    %5781 = vmatpush1.msra.mxu0 0.0
    %5782 = vmatprep.subr.mxu0 0.0
    %5783 = vmatpush1.msra.mxu0 0.0
    %5784 = vmatprep.subr.mxu0 0.0
    %5785 = vmatpush1.msra.mxu0 0.0
    %5786 = vmatprep.subr.mxu0 0.0
    %5787 = vmatpush1.msra.mxu0 0.0
    %5788 = vmatprep.subr.mxu0 0.0
    %5789 = vmatpush1.msra.mxu0 0.0
    %5790 = vmatprep.subr.mxu0 0.0
    %5791 = vmatpush1.msra.mxu0 0.0
    %5792 = vmatprep.subr.mxu0 0.0
    %5793 = vmatpush1.msra.mxu0 0.0
    %5794 = vmatprep.subr.mxu0 0.0
    %5795 = vmatpush1.msra.mxu0 0.0
    %5796 = vmatprep.subr.mxu0 0.0
    %5797 = vmatpush1.msra.mxu0 0.0
    %5798 = vmatprep.subr.mxu0 0.0
    %5799 = vmatpush1.msra.mxu0 0.0
    %5800 = vmatprep.subr.mxu0 0.0
    %5801 = vmatpush1.msra.mxu0 0.0
    %5802 = vmatprep.subr.mxu0 0.0
    %5803 = vmatpush1.msra.mxu0 0.0
    %5804 = vmatprep.subr.mxu0 0.0
    %5805 = vmatpush1.msra.mxu0 0.0
    %5806 = vmatprep.subr.mxu0 0.0
    %5807 = vmatpush1.msra.mxu0 0.0
    %5808 = vmatprep.subr.mxu0 0.0
    %5809 = vmatpush1.msra.mxu0 0.0
    %5810 = vmatprep.subr.mxu0 0.0
    %5811 = vmatpush1.msra.mxu0 0.0
    %5812 = vmatprep.subr.mxu0 0.0
    %5813 = vmatpush1.msra.mxu0 0.0
    %5814 = vmatprep.subr.mxu0 0.0
    %5815 = vmatpush1.msra.mxu0 0.0
    %5816 = vmatprep.subr.mxu0 0.0
    %5817 = vmatpush1.msra.mxu0 0.0
    %5818 = vmatprep.subr.mxu0 0.0
    %5819 = vmatpush1.msra.mxu0 0.0
    %5820 = vmatprep.subr.mxu0 0.0
    %5821 = vmatpush1.msra.mxu0 0.0
    %5822 = vmatprep.subr.mxu0 0.0
    %5823 = vmatpush1.msra.mxu0 0.0
    %5824 = vmatprep.subr.mxu0 0.0
    %5825 = vmatpush1.msra.mxu0 0.0
    %5826 = vmatprep.subr.mxu0 0.0
    %5827 = vmatpush1.msra.mxu0 0.0
    %5828 = vmatprep.mubr.f32.mxu0 0.0
    %5829 = vmatmul.mubr.f32.gmra.mrb[0].mxu0 %v5762
    %v5830 = vpop.f32.mrb[0].mxu0
    %v5831 = vadd.f32 %v1276, %v5830
    %v5832 = vpop.f32.mrb[0].mxu0
    %5833 = vdwg.mxu0
    %5835 = vrot.lane.b32.xlu0 %v5831, 96
    %v5836 = vpop.permute.xlu0 %5835
    %v5838 = vadd.f32 %v5290, %v5836
    %v5839 = vxor.u32 %v5838, 2147483648
    %v5840 = vmul.f32 %v5839, 1.442695
    %v5841 = vpow.pop %v5840
    %v5842 = vadd.f32 %v5841, 1.0
    %v5843 = vrcp.pop %v5842
    %v5844 = vmul.f32 1.0, %v5843
    %v5845 = vtanh.pop %v5308
    %5847 = vrot.lane.b32.xlu0 %v5845, 64
    %v5848 = vpop.permute.xlu0 %5847
    %v5850 = vmul.f32 %v5844, %v5848
    %5851 = vst.msk [vmem:[#allocation9 + $0x8] sm:$0xff] %vm3291, %v5850
    %5853 = vrot.lane.b32.xlu0 %v5850, 32
    %v5854 = vpop.permute.xlu0 %5853
    %5856 = vst.msk [vmem:[#allocation10] sm:$0xff] %vm719, %v5854
    %5858 = vst.msk [vmem:[#allocation12] sm:$0xff] %vm719, %v5311
    // Predicated region
    $region54: #{tpu_custom_call.1} parent=1 // pred_check
      _
    $region55: #{tpu_custom_call.1} parent=1 // pred_check_branch
      %5860 = sbr.rel (0) target = $region57
    $region56: #{tpu_custom_call.1} parent=1 // pred_region
      %s5862 = ssub.s32 256, 256
      %5863 = vsyncadd [#allocation5], %s5862
      %s5865 = sshll.u32 [#allocation9], 4
      %s5866 = int_to_ptr.vmem [resolvable:$true] %s5865
      %5868 = dma.vmem_to_hbm [thread:$0]  %s5866, 256, %s10, [#allocation5]
    $region57: #{tpu_custom_call.1} parent=1 // pred_fallthru
      _
    // Predicated region
    $region58: #{tpu_custom_call.1} parent=1 // pred_check
      _
    $region59: #{tpu_custom_call.1} parent=1 // pred_check_branch
      %5870 = sbr.rel (0) target = $region61
    $region60: #{tpu_custom_call.1} parent=1 // pred_region
      %s5872 = ssub.s32 128, 128
      %5873 = vsyncadd [#allocation11], %s5872
      %s5875 = sshll.u32 [#allocation10], 4
      %s5876 = int_to_ptr.vmem [resolvable:$true] %s5875
      %5878 = dma.vmem_to_hbm [thread:$0]  %s5876, 128, %s11, [#allocation11]
    $region61: #{tpu_custom_call.1} parent=1 // pred_fallthru
      _
    // Predicated region
    $region62: #{tpu_custom_call.1} parent=1 // pred_check
      _
    $region63: #{tpu_custom_call.1} parent=1 // pred_check_branch
      %5880 = sbr.rel (0) target = $region65
    $region64: #{tpu_custom_call.1} parent=1 // pred_region
      %s5882 = ssub.s32 128, 128
      %5883 = vsyncadd [#allocation11], %s5882
      %s5885 = sshll.u32 [#allocation12], 4
      %s5886 = int_to_ptr.vmem [resolvable:$true] %s5885
      %5888 = dma.vmem_to_hbm [thread:$0]  %s5886, 128, %s12, [#allocation11]
    $region65: #{tpu_custom_call.1} parent=1 // pred_fallthru
      _
    // Predicated region
    $region66: #{tpu_custom_call.1} parent=1 // pred_check
      _
    $region67: #{tpu_custom_call.1} parent=1 // pred_check_branch
      %5890 = sbr.rel (0) target = $region69
    $region68: #{tpu_custom_call.1} parent=1 // pred_region
      %5891 = dma.done [#allocation5], 256
    $region69: #{tpu_custom_call.1} parent=1 // pred_fallthru
      _
    // Predicated region
    $region70: #{tpu_custom_call.1} parent=1 // pred_check
      _
    $region71: #{tpu_custom_call.1} parent=1 // pred_check_branch
      %5893 = sbr.rel (0) target = $region73
    $region72: #{tpu_custom_call.1} parent=1 // pred_region
      %5894 = dma.done [#allocation11], 128
    $region73: #{tpu_custom_call.1} parent=1 // pred_fallthru
      _
    // Predicated region
    $region74: #{tpu_custom_call.1} parent=1 // pred_check
      _
    $region75: #{tpu_custom_call.1} parent=1 // pred_check_branch
      %5896 = sbr.rel (0) target = $region77
    $region76: #{tpu_custom_call.1} parent=1 // pred_region
      %5897 = dma.done [#allocation11], 128
    $region77: #{tpu_custom_call.1} parent=1 // pred_fallthru
      _
    %5898 = vsyncpa [#allocation4], 1
    %5899 = vsyncpa [#allocation7], 1
    %5900 = vsyncpa [#allocation5], 1
    %5901 = vsyncpa [#allocation11], 1

</llo_original>
